<compile_context>
chip_gen: v6e
topology: v6e:2x2x1
jax: 0.10.0
libtpu: 0.0.40
codegen_flags: <defaults>
</compile_context>

<pallas_src>
import jax
import jax.numpy as jnp
from jax.experimental import pallas as pl
from jax.experimental.pallas import tpu as pltpu

_HIGHEST = jax.lax.Precision.HIGHEST
_NEG = -1e30  # finite "minus infinity": one-hot MXU gathers never see inf/NaN


def _dg(a, b, contract):
    """dot_general with f32 accumulation.

    HIGHEST keeps the one-hot gathers/scatters exact in f32 (needed to match
    the f32 reference at 1e-4); the scatter and out_proj could be relaxed to
    DEFAULT (single bf16 pass, ~3x less MXU work) if the accuracy budget allows.
    """
    return jax.lax.dot_general(
        a, b, (contract, ((), ())),
        precision=_HIGHEST, preferred_element_type=jnp.float32)


def _hg_fused_kernel(row_ref, col_ref, xwt_ref, ewt_ref, wa_ref, ba_ref,
                     wo_ref, bo_ref,
                     out_ref, s_ref, m_ref, l_ref, acc_ref):
    """One pass over E tiles: scores + online segment softmax + fused scatter/out_proj."""
    t = pl.program_id(0)
    n_nodes = xwt_ref.shape[1]
    n_hedges = ewt_ref.shape[1]
    te = row_ref.shape[-1]

    @pl.when(t == 0)
    def _():
        m_ref[...] = jnp.full(m_ref.shape, _NEG, dtype=jnp.float32)
        l_ref[...] = jnp.zeros(l_ref.shape, jnp.float32)
        acc_ref[...] = jnp.zeros(acc_ref.shape, jnp.float32)

    row_ids = row_ref[0]                                    # (1, TE) int32, lane-dense
    col_ids = col_ref[0]                                    # (1, TE) int32

    # One-hot incidence masks (node/hyperedge on sublanes, incidence on lanes).
    # Pad incidences (index == -1) give an all-zero column -> exact no-op below.
    node_hit = jax.lax.broadcasted_iota(jnp.int32, (n_nodes, te), 0) == row_ids
    hedge_hit = jax.lax.broadcasted_iota(jnp.int32, (n_hedges, te), 0) == col_ids
    node_hit_f = node_hit.astype(jnp.float32)               # reused below (gather+scatter)
    hedge_hit_f = hedge_hit.astype(jnp.float32)

    # Gather the pre-projected (hoisted) features: exact one-hot matmuls on the MXU.
    x_i = _dg(xwt_ref[...], node_hit_f, ((1,), (0,)))        # (D, TE)
    e_j = _dg(ewt_ref[...], hedge_hit_f, ((1,), (0,)))       # (D, TE)

    att_in = jnp.tanh(x_i + e_j)                             # (D, TE)
    # Attention scores directly in lane-dense (1, TE) layout.
    scores = _dg(wa_ref[...], att_in, ((1,), (0,))) + ba_ref[...]   # (1, TE)
    s_ref[...] = scores[None]

    # Flash-style online per-node softmax statistics.
    z = jnp.where(node_hit, scores, _NEG)                    # (N, TE)
    m_old = m_ref[...]                                       # (N, 1)
    m_new = jnp.maximum(m_old, jnp.max(z, axis=1, keepdims=True))
    alpha = jnp.exp(m_old - m_new)                           # (N, 1) rescale factor

    # Per-incidence gather of m_new (exact: at most one hit per column).
    m_pe = jnp.sum(jnp.where(node_hit, m_new, 0.0), axis=0, keepdims=True)   # (1, TE)
    p = jnp.exp(scores - m_pe)                               # (1, TE)

    # Weighted one-hot mask reused for both the sum-exp and the message scatter.
    weighted_hit = node_hit_f * p                            # (N, TE)
    l_ref[...] = alpha * l_ref[...] + jnp.sum(weighted_hit, axis=1, keepdims=True)
    m_ref[...] = m_new
    # Fused scatter_add of the messages: acc = alpha*acc + onehot^T @ (p * e_j).
    acc_ref[...] = alpha * acc_ref[...] + _dg(weighted_hit, e_j, ((1,), (1,)))  # (N, D)

    @pl.when(t == pl.num_programs(0) - 1)
    def _():
        l = l_ref[...]
        inv_l = jnp.where(l > 0.0, 1.0 / l, 0.0)             # isolated-node guard
        node_upd = acc_ref[...] * inv_l                      # (N, D)
        out_ref[...] = _dg(node_upd, wo_ref[...], ((1,), (0,))) + bo_ref[...]


def _hg_attw_kernel(row_ref, s_ref, m_ref, l_ref, att_ref):
    """Tiny follow-up pass: att_w = exp(score - m[row]) / l[row] (no feature matmuls)."""
    n_nodes = m_ref.shape[0]
    te = row_ref.shape[-1]
    node_hit = jax.lax.broadcasted_iota(jnp.int32, (n_nodes, te), 0) == row_ref[0]
    m_pe = jnp.sum(jnp.where(node_hit, m_ref[...], 0.0), axis=0, keepdims=True)  # (1, TE)
    l_pe = jnp.sum(jnp.where(node_hit, l_ref[...], 0.0), axis=0, keepdims=True)  # (1, TE)
    inv_l = jnp.where(l_pe > 0.0, 1.0 / l_pe, 0.0)           # pad / isolated guard
    att_ref[...] = (jnp.exp(s_ref[0] - m_pe) * inv_l)[None]


def hypergraph_conv_attention(x, e, hyperedge_index, params, *, tile_e=1024,
                              vmem_limit_bytes=48 * 1024 * 1024):
    """Pallas forward of HypergraphConvWithAttention.

    params = (Wn, bn, We, be, Wa, ba, Wo, bo), weights stored (in_dim, out_dim).
    Returns (out [N, out_dim], att_weights [E])."""
    wn, bn, we, be, wa, ba, wo, bo = params
    n = x.shape[0]
    m_h = e.shape[0]
    d = wn.shape[1]
    num_e = hyperedge_index.shape[1]
    assert tile_e % 128 == 0, "tile_e must be a multiple of 128 (lane width)"

    # Hoisted projections: once per node / hyperedge instead of once per incidence.
    xw_t = (jnp.dot(x, wn, precision=_HIGHEST) + bn).T       # (D, N)
    ew_t = (jnp.dot(e, we, precision=_HIGHEST) + be).T       # (D, M)

    # Pad E to a tile multiple; pad incidences use index -1 (exact no-op in-kernel).
    num_tiles = -(-num_e // tile_e)
    e_pad = num_tiles * tile_e
    row = hyperedge_index[0].astype(jnp.int32)
    col = hyperedge_index[1].astype(jnp.int32)
    row3 = jnp.pad(row, (0, e_pad - num_e), constant_values=-1).reshape(num_tiles, 1, tile_e)
    col3 = jnp.pad(col, (0, e_pad - num_e), constant_values=-1).reshape(num_tiles, 1, tile_e)

    tiled = pl.BlockSpec((1, 1, tile_e), lambda t: (t, 0, 0))     # lane-dense E blocks
    res = lambda shape: pl.BlockSpec(shape, lambda t: (0, 0))     # resident blocks

    out, scores3, m_max, l_sum = pl.pallas_call(
        _hg_fused_kernel,
        out_shape=(
            jax.ShapeDtypeStruct((n, d), jnp.float32),                  # node outputs
            jax.ShapeDtypeStruct((num_tiles, 1, tile_e), jnp.float32),  # raw scores
            jax.ShapeDtypeStruct((n, 1), jnp.float32),                  # per-node running max
            jax.ShapeDtypeStruct((n, 1), jnp.float32),                  # per-node sum of exp
        ),
        grid_spec=pltpu.PrefetchScalarGridSpec(
            num_scalar_prefetch=0,
            grid=(num_tiles,),
            in_specs=[
                tiled,                     # row indices
                tiled,                     # col indices
                res((d, n)),               # (x @ Wn + bn)^T
                res((d, m_h)),             # (e @ We + be)^T
                res((1, d)),               # att_proj W
                res((1, 1)),               # att_proj b
                res((d, d)),               # out_proj W
                res((1, d)),               # out_proj b
            ],
            out_specs=(
                res((n, d)),               # out (written on last tile)
                tiled,                     # scores
                res((n, 1)),               # m
                res((n, 1)),               # l
            ),
            scratch_shapes=[pltpu.VMEM((n, d), jnp.float32)],           # resident accumulator
        ),
        compiler_params=pltpu.CompilerParams(
            dimension_semantics=("arbitrary",),        # online reduction across E tiles
            vmem_limit_bytes=vmem_limit_bytes),        # stay under v7x's 64 MiB VMEM
    )(row3, col3, xw_t, ew_t, wa, ba, wo, bo)

    attw3 = pl.pallas_call(
        _hg_attw_kernel,
        out_shape=jax.ShapeDtypeStruct((num_tiles, 1, tile_e), jnp.float32),
        grid_spec=pltpu.PrefetchScalarGridSpec(
            num_scalar_prefetch=0,
            grid=(num_tiles,),
            in_specs=[tiled, tiled, res((n, 1)), res((n, 1))],
            out_specs=tiled,
        ),
        compiler_params=pltpu.CompilerParams(
            dimension_semantics=("parallel",),         # tiles are independent here
            vmem_limit_bytes=vmem_limit_bytes),
    )(row3, scores3, m_max, l_sum)

    return out, attw3.reshape(e_pad)[:num_e]


def hypergraph_conv_attention_reference(x, e, hyperedge_index, params):
    """Pure-JAX replica of the PyTorch forward (segment softmax + scatter_add)."""
    wn, bn, we, be, wa, ba, wo, bo = params
    row = hyperedge_index[0]
    col = hyperedge_index[1]
    n = x.shape[0]
    x_i = jnp.dot(x[row], wn, precision=_HIGHEST) + bn
    e_j = jnp.dot(e[col], we, precision=_HIGHEST) + be
    att_in = jnp.tanh(x_i + e_j)
    scores = jnp.sum(att_in * wa, axis=-1) + ba[0, 0]
    seg_max = jax.ops.segment_max(scores, row, num_segments=n)
    p = jnp.exp(scores - seg_max[row])
    denom = jax.ops.segment_sum(p, row, num_segments=n)
    att_w = p / denom[row]
    msgs = e_j * att_w[:, None]
    node_updates = jax.ops.segment_sum(msgs, row, num_segments=n)
    out = jnp.dot(node_updates, wo, precision=_HIGHEST) + bo
    return out, att_w


if __name__ == "__main__":
    key = jax.random.PRNGKey(0)
    ks = jax.random.split(key, 12)

    num_nodes, num_hedges, num_inc = 64, 16, 1800
    in_node_dim, in_edge_dim, out_dim = 32, 16, 32

    x = jax.random.normal(ks[0], (num_nodes, in_node_dim), dtype=jnp.float32)
    e = jax.random.normal(ks[1], (num_hedges, in_edge_dim), dtype=jnp.float32)
    # Last 8 nodes get no incidence -> exercises the isolated-node (l == 0) guard.
    row = jax.random.randint(ks[2], (num_inc,), 0, num_nodes - 8, dtype=jnp.int32)
    col = jax.random.randint(ks[3], (num_inc,), 0, num_hedges, dtype=jnp.int32)
    hyperedge_index = jnp.stack([row, col], axis=0)

    def init(k, shape, scale):
        return (scale * jax.random.normal(k, shape)).astype(jnp.float32)

    params = (
        init(ks[4], (in_node_dim, out_dim), in_node_dim ** -0.5),   # node_proj W
        init(ks[5], (1, out_dim), 0.1),                             # node_proj b
        init(ks[6], (in_edge_dim, out_dim), in_edge_dim ** -0.5),   # edge_proj W
        init(ks[7], (1, out_dim), 0.1),                             # edge_proj b
        init(ks[8], (1, out_dim), out_dim ** -0.5),                 # att_proj W
        init(ks[9], (1, 1), 0.1),                                   # att_proj b
        init(ks[10], (out_dim, out_dim), out_dim ** -0.5),          # out_proj W
        init(ks[11], (1, out_dim), 0.1),                            # out_proj b
    )

    # num_inc (1800) is deliberately not a multiple of tile_e: the wrapper pads with
    # row = col = -1, which the kernels treat as exact no-ops.
    out, att_w = hypergraph_conv_attention(x, e, hyperedge_index, params, tile_e=512)
    out = jax.block_until_ready(out)
    att_w = jax.block_until_ready(att_w)

    out_ref, att_ref = hypergraph_conv_attention_reference(x, e, hyperedge_index, params)

    assert out.shape == (num_nodes, out_dim)
    assert att_w.shape == (num_inc,)
    assert jnp.allclose(out, out_ref, rtol=2e-4, atol=2e-4), (
        float(jnp.max(jnp.abs(out - out_ref))))
    assert jnp.allclose(att_w, att_ref, rtol=2e-4, atol=2e-4), (
        float(jnp.max(jnp.abs(att_w - att_ref))))

    print("KERNEL_OK")
</pallas_src>

<mosaic_0001>
module attributes {stable_mosaic.version = 11 : i64} {
  func.func @_hg_fused_kernel(%arg0: i32, %arg1: memref<1x1x512xi32, #tpu.memory_space<vmem>>, %arg2: memref<1x1x512xi32, #tpu.memory_space<vmem>>, %arg3: memref<32x64xf32, #tpu.memory_space<vmem>>, %arg4: memref<32x16xf32, #tpu.memory_space<vmem>>, %arg5: memref<1x32xf32, #tpu.memory_space<vmem>>, %arg6: memref<1x1xf32, #tpu.memory_space<vmem>>, %arg7: memref<32x32xf32, #tpu.memory_space<vmem>>, %arg8: memref<1x32xf32, #tpu.memory_space<vmem>>, %arg9: memref<64x32xf32, #tpu.memory_space<vmem>>, %arg10: memref<1x1x512xf32, #tpu.memory_space<vmem>>, %arg11: memref<64x1xf32, #tpu.memory_space<vmem>>, %arg12: memref<64x1xf32, #tpu.memory_space<vmem>>, %arg13: memref<64x32xf32, #tpu.memory_space<vmem>>) attributes {dimension_semantics = [#tpu.dimension_semantics<arbitrary>], iteration_bounds = array<i64: 4>, scalar_prefetch = 0 : i64, scratch_operands = 1 : i64, tpu.core_type = #tpu.core_type<tc>, window_params = [{transform_indices = @transform_0, window_bounds = array<i64: 1, 1, 512>}, {transform_indices = @transform_1, window_bounds = array<i64: 1, 1, 512>}, {pipeline_mode = #tpu.pipeline_mode<synchronous>, transform_indices = @transform_2, window_bounds = array<i64: 32, 64>}, {pipeline_mode = #tpu.pipeline_mode<synchronous>, transform_indices = @transform_3, window_bounds = array<i64: 32, 16>}, {pipeline_mode = #tpu.pipeline_mode<synchronous>, transform_indices = @transform_4, window_bounds = array<i64: 1, 32>}, {pipeline_mode = #tpu.pipeline_mode<synchronous>, transform_indices = @transform_5, window_bounds = array<i64: 1, 1>}, {pipeline_mode = #tpu.pipeline_mode<synchronous>, transform_indices = @transform_6, window_bounds = array<i64: 32, 32>}, {pipeline_mode = #tpu.pipeline_mode<synchronous>, transform_indices = @transform_7, window_bounds = array<i64: 1, 32>}, {pipeline_mode = #tpu.pipeline_mode<synchronous>, transform_indices = @transform_8, window_bounds = array<i64: 64, 32>}, {transform_indices = @transform_9, window_bounds = array<i64: 1, 1, 512>}, {pipeline_mode = #tpu.pipeline_mode<synchronous>, transform_indices = @transform_10, window_bounds = array<i64: 64, 1>}, {pipeline_mode = #tpu.pipeline_mode<synchronous>, transform_indices = @transform_11, window_bounds = array<i64: 64, 1>}]} {
    %c0_i32 = arith.constant 0 : i32
    %0 = arith.cmpi eq, %arg0, %c0_i32 : i32
    %1 = arith.extui %0 : i1 to i32
    %c0_i32_0 = arith.constant 0 : i32
    %2 = arith.cmpi ne, %1, %c0_i32_0 : i32
    scf.if %2 {
      %cst_38 = arith.constant -1.000000e+30 : f32
      %66 = vector.broadcast %cst_38 : f32 to vector<64x1xf32>
      %c0_39 = arith.constant 0 : index
      %c0_40 = arith.constant 0 : index
      %67 = vector.load %arg11[%c0_39, %c0_40] : memref<64x1xf32, #tpu.memory_space<vmem>>, vector<64x1xf32>
      tpu.vector_store %arg11[%c0_39, %c0_40], %66 {strides = array<i32>} : memref<64x1xf32, #tpu.memory_space<vmem>>, vector<64x1xf32>,
      %cst_41 = arith.constant 0.000000e+00 : f32
      %68 = vector.broadcast %cst_41 : f32 to vector<64x1xf32>
      %c0_42 = arith.constant 0 : index
      %c0_43 = arith.constant 0 : index
      %69 = vector.load %arg12[%c0_42, %c0_43] : memref<64x1xf32, #tpu.memory_space<vmem>>, vector<64x1xf32>
      tpu.vector_store %arg12[%c0_42, %c0_43], %68 {strides = array<i32>} : memref<64x1xf32, #tpu.memory_space<vmem>>, vector<64x1xf32>,
      %cst_44 = arith.constant 0.000000e+00 : f32
      %70 = vector.broadcast %cst_44 : f32 to vector<64x32xf32>
      %c0_45 = arith.constant 0 : index
      %c0_46 = arith.constant 0 : index
      %71 = vector.load %arg13[%c0_45, %c0_46] : memref<64x32xf32, #tpu.memory_space<vmem>>, vector<64x32xf32>
      tpu.vector_store %arg13[%c0_45, %c0_46], %70 {strides = array<i32>} : memref<64x32xf32, #tpu.memory_space<vmem>>, vector<64x32xf32>,
    } else {
    }
    %c0 = arith.constant 0 : index
    %c0_1 = arith.constant 0 : index
    %c0_2 = arith.constant 0 : index
    %3 = vector.load %arg1[%c0, %c0_1, %c0_2] : memref<1x1x512xi32, #tpu.memory_space<vmem>>, vector<1x1x512xi32>
    %4 = vector.shape_cast %3 : vector<1x1x512xi32> to vector<1x512xi32>
    %c0_3 = arith.constant 0 : index
    %c0_4 = arith.constant 0 : index
    %c0_5 = arith.constant 0 : index
    %5 = vector.load %arg2[%c0_3, %c0_4, %c0_5] : memref<1x1x512xi32, #tpu.memory_space<vmem>>, vector<1x1x512xi32>
    %6 = vector.shape_cast %5 : vector<1x1x512xi32> to vector<1x512xi32>
    %7 = tpu.iota {dimensions = array<i32: 0>} : vector<64x512xi32>
    %8 = vector.broadcast %4 : vector<1x512xi32> to vector<64x512xi32>
    %9 = arith.cmpi eq, %7, %8 : vector<64x512xi32>
    %10 = tpu.iota {dimensions = array<i32: 0>} : vector<16x512xi32>
    %11 = vector.broadcast %6 : vector<1x512xi32> to vector<16x512xi32>
    %12 = arith.cmpi eq, %10, %11 : vector<16x512xi32>
    %13 = arith.extui %9 : vector<64x512xi1> to vector<64x512xi32>
    %14 = arith.sitofp %13 : vector<64x512xi32> to vector<64x512xf32>
    %15 = arith.extui %12 : vector<16x512xi1> to vector<16x512xi32>
    %16 = arith.sitofp %15 : vector<16x512xi32> to vector<16x512xf32>
    %c0_6 = arith.constant 0 : index
    %c0_7 = arith.constant 0 : index
    %17 = vector.load %arg3[%c0_6, %c0_7] : memref<32x64xf32, #tpu.memory_space<vmem>>, vector<32x64xf32>
    %cst = arith.constant dense<0.000000e+00> : vector<32x512xf32>
    %18 = tpu.matmul %17, %14, %cst {dimension_numbers = #tpu.dot_dimension_numbers<[1], [0], [0], [1], [0, 0, 1, 1], [], []>, precision = #tpu.contract_precision<fp32>} : vector<32x64xf32>, vector<64x512xf32>, vector<32x512xf32> -> vector<32x512xf32>
    %c0_8 = arith.constant 0 : index
    %c0_9 = arith.constant 0 : index
    %19 = vector.load %arg4[%c0_8, %c0_9] : memref<32x16xf32, #tpu.memory_space<vmem>>, vector<32x16xf32>
    %cst_10 = arith.constant dense<0.000000e+00> : vector<32x512xf32>
    %20 = tpu.matmul %19, %16, %cst_10 {dimension_numbers = #tpu.dot_dimension_numbers<[1], [0], [0], [1], [0, 0, 1, 1], [], []>, precision = #tpu.contract_precision<fp32>} : vector<32x16xf32>, vector<16x512xf32>, vector<32x512xf32> -> vector<32x512xf32>
    %21 = arith.addf %18, %20 : vector<32x512xf32>
    %22 = math.tanh %21 : vector<32x512xf32>
    %c0_11 = arith.constant 0 : index
    %c0_12 = arith.constant 0 : index
    %23 = vector.load %arg5[%c0_11, %c0_12] : memref<1x32xf32, #tpu.memory_space<vmem>>, vector<1x32xf32>
    %cst_13 = arith.constant dense<0.000000e+00> : vector<1x512xf32>
    %24 = tpu.matmul %23, %22, %cst_13 {dimension_numbers = #tpu.dot_dimension_numbers<[1], [0], [0], [1], [0, 0, 1, 1], [], []>, precision = #tpu.contract_precision<fp32>} : vector<1x32xf32>, vector<32x512xf32>, vector<1x512xf32> -> vector<1x512xf32>
    %c0_14 = arith.constant 0 : index
    %c0_15 = arith.constant 0 : index
    %25 = vector.load %arg6[%c0_14, %c0_15] : memref<1x1xf32, #tpu.memory_space<vmem>>, vector<1x1xf32>
    %26 = vector.broadcast %25 : vector<1x1xf32> to vector<1x512xf32>
    %27 = arith.addf %24, %26 : vector<1x512xf32>
    %28 = vector.shape_cast %27 : vector<1x512xf32> to vector<1x1x512xf32>
    %c0_16 = arith.constant 0 : index
    %c0_17 = arith.constant 0 : index
    %c0_18 = arith.constant 0 : index
    %29 = vector.load %arg10[%c0_16, %c0_17, %c0_18] : memref<1x1x512xf32, #tpu.memory_space<vmem>>, vector<1x1x512xf32>
    tpu.vector_store %arg10[%c0_16, %c0_17, %c0_18], %28 {strides = array<i32>} : memref<1x1x512xf32, #tpu.memory_space<vmem>>, vector<1x1x512xf32>,
    %cst_19 = arith.constant -1.000000e+30 : f32
    %30 = vector.shape_cast %27 : vector<1x512xf32> to vector<1x512xf32>
    %31 = vector.broadcast %30 : vector<1x512xf32> to vector<64x512xf32>
    %32 = vector.broadcast %cst_19 : f32 to vector<64x512xf32>
    %33 = arith.select %9, %31, %32 : vector<64x512xi1>, vector<64x512xf32>
    %c0_20 = arith.constant 0 : index
    %c0_21 = arith.constant 0 : index
    %34 = vector.load %arg11[%c0_20, %c0_21] : memref<64x1xf32, #tpu.memory_space<vmem>>, vector<64x1xf32>
    %cst_22 = arith.constant dense<0xFF800000> : vector<64xf32>
    %35 = vector.multi_reduction <maximumf>, %33, %cst_22 [1] : vector<64x512xf32> to vector<64xf32>
    %36 = vector.shape_cast %35 : vector<64xf32> to vector<64x1xf32>
    %37 = arith.maximumf %34, %36 : vector<64x1xf32>
    %38 = arith.subf %34, %37 : vector<64x1xf32>
    %39 = math.exp %38 : vector<64x1xf32>
    %cst_23 = arith.constant 0.000000e+00 : f32
    %40 = vector.shape_cast %37 : vector<64x1xf32> to vector<64x1xf32>
    %41 = vector.broadcast %40 : vector<64x1xf32> to vector<64x512xf32>
    %42 = vector.broadcast %cst_23 : f32 to vector<64x512xf32>
    %43 = arith.select %9, %41, %42 : vector<64x512xi1>, vector<64x512xf32>
    %cst_24 = arith.constant dense<0.000000e+00> : vector<512xf32>
    %44 = vector.multi_reduction <add>, %43, %cst_24 [0] : vector<64x512xf32> to vector<512xf32>
    %45 = vector.shape_cast %44 : vector<512xf32> to vector<1x512xf32>
    %46 = arith.subf %27, %45 : vector<1x512xf32>
    %47 = math.exp %46 : vector<1x512xf32>
    %48 = vector.broadcast %47 : vector<1x512xf32> to vector<64x512xf32>
    %49 = arith.mulf %14, %48 : vector<64x512xf32>
    %c0_25 = arith.constant 0 : index
    %c0_26 = arith.constant 0 : index
    %50 = vector.load %arg12[%c0_25, %c0_26] : memref<64x1xf32, #tpu.memory_space<vmem>>, vector<64x1xf32>
    %51 = arith.mulf %39, %50 : vector<64x1xf32>
    %cst_27 = arith.constant dense<0.000000e+00> : vector<64xf32>
    %52 = vector.multi_reduction <add>, %49, %cst_27 [1] : vector<64x512xf32> to vector<64xf32>
    %53 = vector.shape_cast %52 : vector<64xf32> to vector<64x1xf32>
    %54 = arith.addf %51, %53 : vector<64x1xf32>
    %c0_28 = arith.constant 0 : index
    %c0_29 = arith.constant 0 : index
    %55 = vector.load %arg12[%c0_28, %c0_29] : memref<64x1xf32, #tpu.memory_space<vmem>>, vector<64x1xf32>
    tpu.vector_store %arg12[%c0_28, %c0_29], %54 {strides = array<i32>} : memref<64x1xf32, #tpu.memory_space<vmem>>, vector<64x1xf32>,
    %c0_30 = arith.constant 0 : index
    %c0_31 = arith.constant 0 : index
    %56 = vector.load %arg11[%c0_30, %c0_31] : memref<64x1xf32, #tpu.memory_space<vmem>>, vector<64x1xf32>
    tpu.vector_store %arg11[%c0_30, %c0_31], %37 {strides = array<i32>} : memref<64x1xf32, #tpu.memory_space<vmem>>, vector<64x1xf32>,
    %c0_32 = arith.constant 0 : index
    %c0_33 = arith.constant 0 : index
    %57 = vector.load %arg13[%c0_32, %c0_33] : memref<64x32xf32, #tpu.memory_space<vmem>>, vector<64x32xf32>
    %58 = vector.broadcast %39 : vector<64x1xf32> to vector<64x32xf32>
    %59 = arith.mulf %58, %57 : vector<64x32xf32>
    %cst_34 = arith.constant dense<0.000000e+00> : vector<64x32xf32>
    %60 = tpu.matmul %49, %20, %cst_34 {dimension_numbers = #tpu.dot_dimension_numbers<[1], [1], [0], [0], [0, 0, 1, 0], [], []>, precision = #tpu.contract_precision<fp32>} : vector<64x512xf32>, vector<32x512xf32>, vector<64x32xf32> -> vector<64x32xf32>
    %61 = arith.addf %59, %60 : vector<64x32xf32>
    %c0_35 = arith.constant 0 : index
    %c0_36 = arith.constant 0 : index
    %62 = vector.load %arg13[%c0_35, %c0_36] : memref<64x32xf32, #tpu.memory_space<vmem>>, vector<64x32xf32>
    tpu.vector_store %arg13[%c0_35, %c0_36], %61 {strides = array<i32>} : memref<64x32xf32, #tpu.memory_space<vmem>>, vector<64x32xf32>,
    %c3_i32 = arith.constant 3 : i32
    %63 = arith.cmpi eq, %arg0, %c3_i32 : i32
    %64 = arith.extui %63 : i1 to i32
    %c0_i32_37 = arith.constant 0 : i32
    %65 = arith.cmpi ne, %64, %c0_i32_37 : i32
    scf.if %65 {
      %c0_38 = arith.constant 0 : index
      %c0_39 = arith.constant 0 : index
      %66 = vector.load %arg12[%c0_38, %c0_39] : memref<64x1xf32, #tpu.memory_space<vmem>>, vector<64x1xf32>
      %cst_40 = arith.constant 0.000000e+00 : f32
      %67 = vector.broadcast %cst_40 : f32 to vector<64x1xf32>
      %68 = arith.cmpf ogt, %66, %67 : vector<64x1xf32>
      %cst_41 = arith.constant 1.000000e+00 : f32
      %69 = vector.broadcast %cst_41 : f32 to vector<64x1xf32>
      %70 = arith.divf %69, %66 : vector<64x1xf32>
      %cst_42 = arith.constant 0.000000e+00 : f32
      %71 = vector.broadcast %cst_42 : f32 to vector<64x1xf32>
      %72 = arith.select %68, %70, %71 : vector<64x1xi1>, vector<64x1xf32>
      %c0_43 = arith.constant 0 : index
      %c0_44 = arith.constant 0 : index
      %73 = vector.load %arg13[%c0_43, %c0_44] : memref<64x32xf32, #tpu.memory_space<vmem>>, vector<64x32xf32>
      %74 = vector.broadcast %72 : vector<64x1xf32> to vector<64x32xf32>
      %75 = arith.mulf %73, %74 : vector<64x32xf32>
      %c0_45 = arith.constant 0 : index
      %c0_46 = arith.constant 0 : index
      %76 = vector.load %arg7[%c0_45, %c0_46] : memref<32x32xf32, #tpu.memory_space<vmem>>, vector<32x32xf32>
      %cst_47 = arith.constant dense<0.000000e+00> : vector<64x32xf32>
      %77 = tpu.matmul %75, %76, %cst_47 {dimension_numbers = #tpu.dot_dimension_numbers<[1], [0], [0], [1], [0, 0, 1, 1], [], []>, precision = #tpu.contract_precision<fp32>} : vector<64x32xf32>, vector<32x32xf32>, vector<64x32xf32> -> vector<64x32xf32>
      %c0_48 = arith.constant 0 : index
      %c0_49 = arith.constant 0 : index
      %78 = vector.load %arg8[%c0_48, %c0_49] : memref<1x32xf32, #tpu.memory_space<vmem>>, vector<1x32xf32>
      %79 = vector.broadcast %78 : vector<1x32xf32> to vector<64x32xf32>
      %80 = arith.addf %77, %79 : vector<64x32xf32>
      %c0_50 = arith.constant 0 : index
      %c0_51 = arith.constant 0 : index
      %81 = vector.load %arg9[%c0_50, %c0_51] : memref<64x32xf32, #tpu.memory_space<vmem>>, vector<64x32xf32>
      tpu.vector_store %arg9[%c0_50, %c0_51], %80 {strides = array<i32>} : memref<64x32xf32, #tpu.memory_space<vmem>>, vector<64x32xf32>,
    } else {
    }
    return
  }
  func.func @transform_0(%arg0: i32) -> (i32, i32, i32) {
    %c0_i32 = arith.constant 0 : i32
    %c0_i32_0 = arith.constant 0 : i32
    %c0_i32_1 = arith.constant 0 : i32
    return %arg0, %c0_i32, %c0_i32_0 : i32, i32, i32
  }
  func.func @transform_1(%arg0: i32) -> (i32, i32, i32) {
    %c0_i32 = arith.constant 0 : i32
    %c0_i32_0 = arith.constant 0 : i32
    %c0_i32_1 = arith.constant 0 : i32
    return %arg0, %c0_i32, %c0_i32_0 : i32, i32, i32
  }
  func.func @transform_2(%arg0: i32) -> (i32, i32) {
    %c0_i32 = arith.constant 0 : i32
    %c0_i32_0 = arith.constant 0 : i32
    %c0_i32_1 = arith.constant 0 : i32
    return %c0_i32, %c0_i32_0 : i32, i32
  }
  func.func @transform_3(%arg0: i32) -> (i32, i32) {
    %c0_i32 = arith.constant 0 : i32
    %c0_i32_0 = arith.constant 0 : i32
    %c0_i32_1 = arith.constant 0 : i32
    return %c0_i32, %c0_i32_0 : i32, i32
  }
  func.func @transform_4(%arg0: i32) -> (i32, i32) {
    %c0_i32 = arith.constant 0 : i32
    %c0_i32_0 = arith.constant 0 : i32
    %c0_i32_1 = arith.constant 0 : i32
    return %c0_i32, %c0_i32_0 : i32, i32
  }
  func.func @transform_5(%arg0: i32) -> (i32, i32) {
    %c0_i32 = arith.constant 0 : i32
    %c0_i32_0 = arith.constant 0 : i32
    %c0_i32_1 = arith.constant 0 : i32
    return %c0_i32, %c0_i32_0 : i32, i32
  }
  func.func @transform_6(%arg0: i32) -> (i32, i32) {
    %c0_i32 = arith.constant 0 : i32
    %c0_i32_0 = arith.constant 0 : i32
    %c0_i32_1 = arith.constant 0 : i32
    return %c0_i32, %c0_i32_0 : i32, i32
  }
  func.func @transform_7(%arg0: i32) -> (i32, i32) {
    %c0_i32 = arith.constant 0 : i32
    %c0_i32_0 = arith.constant 0 : i32
    %c0_i32_1 = arith.constant 0 : i32
    return %c0_i32, %c0_i32_0 : i32, i32
  }
  func.func @transform_8(%arg0: i32) -> (i32, i32) {
    %c0_i32 = arith.constant 0 : i32
    %c0_i32_0 = arith.constant 0 : i32
    %c0_i32_1 = arith.constant 0 : i32
    return %c0_i32, %c0_i32_0 : i32, i32
  }
  func.func @transform_9(%arg0: i32) -> (i32, i32, i32) {
    %c0_i32 = arith.constant 0 : i32
    %c0_i32_0 = arith.constant 0 : i32
    %c0_i32_1 = arith.constant 0 : i32
    return %arg0, %c0_i32, %c0_i32_0 : i32, i32, i32
  }
  func.func @transform_10(%arg0: i32) -> (i32, i32) {
    %c0_i32 = arith.constant 0 : i32
    %c0_i32_0 = arith.constant 0 : i32
    %c0_i32_1 = arith.constant 0 : i32
    return %c0_i32, %c0_i32_0 : i32, i32
  }
  func.func @transform_11(%arg0: i32) -> (i32, i32) {
    %c0_i32 = arith.constant 0 : i32
    %c0_i32_0 = arith.constant 0 : i32
    %c0_i32_1 = arith.constant 0 : i32
    return %c0_i32, %c0_i32_0 : i32, i32
  }
}

</mosaic_0001>

<llo_original>
// kernel: tpu_custom_call.1
$region0: #{tpu_custom_call.1}
  #allocation0 [shape = 'u32[]', space=smem, size = 0x4, offset = 0x4, fixed_abs, tag = 'smem constant byte address 0x4 - core index']
  #allocation1 [shape = 'u32[144,128]{1,0:T(1,128)}', space=vmem, size = 0x12000, scoped, tag = 'internal scratch']
  #allocation2 [shape = 'f32[64,32]{1,0:T(8,128)}', space=vmem, size = 0x8000, scoped, tag = 'scratch operand']
  #allocation3 [shape = 'f32[1,1]{1,0:T(1,128)S(1)}', space=vmem, size = 0x200, scoped, tag = 'scoped memory for tpu_custom_call.1']
  %s0 = inlined_call_operand.vmem [shape: s32[4,1,512], index: 0, kind: input, shape index: {}]
  %s1 = inlined_call_operand.hbm [shape: s32[4,1,512], index: 1, kind: input, shape index: {}]
  %s2 = inlined_call_operand.vmem [shape: f32[32,64], index: 2, kind: input, shape index: {}]
  %s3 = inlined_call_operand.vmem [shape: f32[32,16], index: 3, kind: input, shape index: {}]
  %s4 = inlined_call_operand.vmem [shape: f32[1,32], index: 4, kind: input, shape index: {}]
  %s5 = inlined_call_operand.<no memory space> [shape: f32[1,1], index: 5, kind: input, shape index: {}]
  %s6 = inlined_call_operand.hbm [shape: f32[32,32], index: 6, kind: input, shape index: {}]
  %s7 = inlined_call_operand.vmem [shape: f32[1,32], index: 7, kind: input, shape index: {}]
  %s8 = inlined_call_operand.vmem [shape: f32[64,32], index: 8, kind: output, shape index: {0}]
  %s9 = inlined_call_operand.hbm [shape: f32[4,1,512], index: 9, kind: output, shape index: {1}]
  %s10 = inlined_call_operand.vmem [shape: f32[64,1], index: 10, kind: output, shape index: {2}]
  %s11 = inlined_call_operand.vmem [shape: f32[64,1], index: 11, kind: output, shape index: {3}]
  %12 = xla_tuple %s8, %s9, %s10, %s11
  %s13 = sld [smem:[#allocation0]]
  $region105: #{tpu_custom_call.1} parent=0
    _
  %s15 = ssub.s32 1, %s13
  %s16 = scalar_select 0, %s15, %s13
  %v17 = vstv %s5
  %18 = vst [vmem:[#allocation3] sm:$0x1] %v17
  $region1: #{tpu_custom_call.1} parent=0
    #allocation4 [shape = 'u8[4096]{0}', space=vmem, size = 0x1000, scoped, tag = 'input window, operand 1']
    #allocation5 [shape = 's32[2]{0}', space=sflag, size = 0x8, scoped, tag = 'scoped memory for tpu_custom_call.1']
    #allocation6 [shape = 's32[2]{0}', space=sflag, size = 0x8, scoped, tag = 'scoped memory for tpu_custom_call.1']
    #allocation7 [shape = 'u8[16384]{0}', space=vmem, size = 0x4000, scoped, tag = 'input window, operand 6, single buffered']
    #allocation8 [shape = 's32[1]{0}', space=sflag, size = 0x4, scoped, tag = 'scoped memory for tpu_custom_call.1']
    #allocation9 [shape = 'u8[4096]{0}', space=vmem, size = 0x1000, scoped, tag = 'output window, operand 1']
    %19 = vsyncpa [#allocation5], 0
    %s20 = scalar_lea.sflag [#allocation5], 1
    %21 = vsyncpa %s20, 0
    %22 = vsyncpa [#allocation8], 0
    %23 = vsyncpa [#allocation6], 0
    %s24 = scalar_lea.sflag [#allocation6], 1
    %25 = vsyncpa %s24, 0
    loop: start=0, step=1, limit=6
    $region2: #{tpu_custom_call.1} parent=1 // loop_pre_header
      _
    $region3: #{tpu_custom_call.1} parent=1 // loop_header
      %s27 = sphi 0, %s31
      %p28 = scmp.ge.s32.totalorder %s27, 6
      %s37 = sphi 0, %s39
      %s40 = sphi 0, %s37
      %s41 = sphi 0, %s40
      %s57 = sphi 0, %s41
      %s63 = sphi 0, %s65
      %s66 = sphi 0, %s63
      %s67 = sphi 0, %s66
      %s83 = sphi 0, %s67
      %s87 = sphi 0, %s87
      %s89 = sphi 0, %s87
      %s90 = sphi 0, %s89
      %s104 = sphi 0, %s90
      %s108 = sphi 0, %s108
      %s110 = sphi 0, %s108
      %s111 = sphi 0, %s110
      %s125 = sphi 0, %s111
      %s129 = sphi 0, %s129
      %s131 = sphi 0, %s129
      %s132 = sphi 0, %s131
      %s146 = sphi 0, %s132
      %s150 = sphi 0, %s150
      %s152 = sphi 0, %s150
      %s153 = sphi 0, %s152
      %s167 = sphi 0, %s153
      %s171 = sphi 0, %s171
      %s173 = sphi 0, %s171
      %s174 = sphi 0, %s173
      %s188 = sphi 0, %s174
      %s192 = sphi 0, %s192
      %s194 = sphi 0, %s192
      %s195 = sphi 0, %s194
      %s209 = sphi 0, %s195
      %s213 = sphi 0, %s213
      %s215 = sphi 0, %s213
      %s216 = sphi 0, %s215
      %s230 = sphi 0, %s216
      %s236 = sphi 0, %s238
      %s239 = sphi 0, %s236
      %s240 = sphi 0, %s239
      %s256 = sphi 0, %s240
      %s260 = sphi 0, %s260
      %s262 = sphi 0, %s260
      %s263 = sphi 0, %s262
      %s277 = sphi 0, %s263
      %s281 = sphi 0, %s281
      %s283 = sphi 0, %s281
      %s284 = sphi 0, %s283
      %s298 = sphi 0, %s284
    $region4: #{tpu_custom_call.1} parent=1 // loop_header_branch
      %30 = sbr.rel (%p28) target = $region8
    $region5: #{tpu_custom_call.1} parent=1 // loop_body
      %s32 = ssub.s32 %s27, 1
      %s33 = ssub.s32 %s27, 2
      %s34 = sadd.s32 %s27, 1
      %s35 = ssub.s32 %s27, %s34
      %p36 = scmp.eq.s32.totalorder %s35, 0
      %s38 = sadd.s32 %s37, 1
      %s39 = scalar_select %p36, %s37, %s38
      %p42 = pneg %p36
      %p43 = scmp.eq.s32.totalorder %s27, 3
      %p44 = por %p42, %p43
      %p45 = scmp.ne.s32.totalorder %s37, %s40
      %p46 = scmp.eq.s32.totalorder %s27, 0
      %p47 = por %p45, %p46
      %p48 = scmp.ne.s32.totalorder %s37, %s40
      %p49 = scmp.eq.s32.totalorder %s32, 3
      %p50 = por %p48, %p49
      %p51 = scmp.ne.s32.totalorder %s40, %s41
      %p52 = scmp.eq.s32.totalorder %s32, 0
      %p53 = por %p51, %p52
      %p54 = scmp.ne.s32.totalorder %s40, %s41
      %p55 = scmp.eq.s32.totalorder %s33, 3
      %p56 = por %p54, %p55
      %p58 = scmp.ne.s32.totalorder %s41, %s57
      %p59 = scmp.eq.s32.totalorder %s33, 0
      %p60 = por %p58, %p59
      %s61 = ssub.s32 %s27, %s34
      %p62 = scmp.eq.s32.totalorder %s61, 0
      %s64 = sadd.s32 %s63, 1
      %s65 = scalar_select %p62, %s63, %s64
      %p68 = pneg %p62
      %p69 = scmp.eq.s32.totalorder %s27, 3
      %p70 = por %p68, %p69
      %p71 = scmp.ne.s32.totalorder %s63, %s66
      %p72 = scmp.eq.s32.totalorder %s27, 0
      %p73 = por %p71, %p72
      %p74 = scmp.ne.s32.totalorder %s63, %s66
      %p75 = scmp.eq.s32.totalorder %s32, 3
      %p76 = por %p74, %p75
      %p77 = scmp.ne.s32.totalorder %s66, %s67
      %p78 = scmp.eq.s32.totalorder %s32, 0
      %p79 = por %p77, %p78
      %p80 = scmp.ne.s32.totalorder %s66, %s67
      %p81 = scmp.eq.s32.totalorder %s33, 3
      %p82 = por %p80, %p81
      %p84 = scmp.ne.s32.totalorder %s67, %s83
      %p85 = scmp.eq.s32.totalorder %s33, 0
      %p86 = por %p84, %p85
      %s88 = sadd.s32 %s87, 1
      %p91 = scmp.eq.s32.totalorder %s27, 3
      %p92 = scmp.ne.s32.totalorder %s87, %s89
      %p93 = scmp.eq.s32.totalorder %s27, 0
      %p94 = por %p92, %p93
      %p95 = scmp.ne.s32.totalorder %s87, %s89
      %p96 = scmp.eq.s32.totalorder %s32, 3
      %p97 = por %p95, %p96
      %p98 = scmp.ne.s32.totalorder %s89, %s90
      %p99 = scmp.eq.s32.totalorder %s32, 0
      %p100 = por %p98, %p99
      %p101 = scmp.ne.s32.totalorder %s89, %s90
      %p102 = scmp.eq.s32.totalorder %s33, 3
      %p103 = por %p101, %p102
      %p105 = scmp.ne.s32.totalorder %s90, %s104
      %p106 = scmp.eq.s32.totalorder %s33, 0
      %p107 = por %p105, %p106
      %s109 = sadd.s32 %s108, 1
      %p112 = scmp.eq.s32.totalorder %s27, 3
      %p113 = scmp.ne.s32.totalorder %s108, %s110
      %p114 = scmp.eq.s32.totalorder %s27, 0
      %p115 = por %p113, %p114
      %p116 = scmp.ne.s32.totalorder %s108, %s110
      %p117 = scmp.eq.s32.totalorder %s32, 3
      %p118 = por %p116, %p117
      %p119 = scmp.ne.s32.totalorder %s110, %s111
      %p120 = scmp.eq.s32.totalorder %s32, 0
      %p121 = por %p119, %p120
      %p122 = scmp.ne.s32.totalorder %s110, %s111
      %p123 = scmp.eq.s32.totalorder %s33, 3
      %p124 = por %p122, %p123
      %p126 = scmp.ne.s32.totalorder %s111, %s125
      %p127 = scmp.eq.s32.totalorder %s33, 0
      %p128 = por %p126, %p127
      %s130 = sadd.s32 %s129, 1
      %p133 = scmp.eq.s32.totalorder %s27, 3
      %p134 = scmp.ne.s32.totalorder %s129, %s131
      %p135 = scmp.eq.s32.totalorder %s27, 0
      %p136 = por %p134, %p135
      %p137 = scmp.ne.s32.totalorder %s129, %s131
      %p138 = scmp.eq.s32.totalorder %s32, 3
      %p139 = por %p137, %p138
      %p140 = scmp.ne.s32.totalorder %s131, %s132
      %p141 = scmp.eq.s32.totalorder %s32, 0
      %p142 = por %p140, %p141
      %p143 = scmp.ne.s32.totalorder %s131, %s132
      %p144 = scmp.eq.s32.totalorder %s33, 3
      %p145 = por %p143, %p144
      %p147 = scmp.ne.s32.totalorder %s132, %s146
      %p148 = scmp.eq.s32.totalorder %s33, 0
      %p149 = por %p147, %p148
      %s151 = sadd.s32 %s150, 1
      %p154 = scmp.eq.s32.totalorder %s27, 3
      %p155 = scmp.ne.s32.totalorder %s150, %s152
      %p156 = scmp.eq.s32.totalorder %s27, 0
      %p157 = por %p155, %p156
      %p158 = scmp.ne.s32.totalorder %s150, %s152
      %p159 = scmp.eq.s32.totalorder %s32, 3
      %p160 = por %p158, %p159
      %p161 = scmp.ne.s32.totalorder %s152, %s153
      %p162 = scmp.eq.s32.totalorder %s32, 0
      %p163 = por %p161, %p162
      %p164 = scmp.ne.s32.totalorder %s152, %s153
      %p165 = scmp.eq.s32.totalorder %s33, 3
      %p166 = por %p164, %p165
      %p168 = scmp.ne.s32.totalorder %s153, %s167
      %p169 = scmp.eq.s32.totalorder %s33, 0
      %p170 = por %p168, %p169
      %s172 = sadd.s32 %s171, 1
      %p175 = scmp.eq.s32.totalorder %s27, 3
      %p176 = scmp.ne.s32.totalorder %s171, %s173
      %p177 = scmp.eq.s32.totalorder %s27, 0
      %p178 = por %p176, %p177
      %p179 = scmp.ne.s32.totalorder %s171, %s173
      %p180 = scmp.eq.s32.totalorder %s32, 3
      %p181 = por %p179, %p180
      %p182 = scmp.ne.s32.totalorder %s173, %s174
      %p183 = scmp.eq.s32.totalorder %s32, 0
      %p184 = por %p182, %p183
      %p185 = scmp.ne.s32.totalorder %s173, %s174
      %p186 = scmp.eq.s32.totalorder %s33, 3
      %p187 = por %p185, %p186
      %p189 = scmp.ne.s32.totalorder %s174, %s188
      %p190 = scmp.eq.s32.totalorder %s33, 0
      %p191 = por %p189, %p190
      %s193 = sadd.s32 %s192, 1
      %p196 = scmp.eq.s32.totalorder %s27, 3
      %p197 = scmp.ne.s32.totalorder %s192, %s194
      %p198 = scmp.eq.s32.totalorder %s27, 0
      %p199 = por %p197, %p198
      %p200 = scmp.ne.s32.totalorder %s192, %s194
      %p201 = scmp.eq.s32.totalorder %s32, 3
      %p202 = por %p200, %p201
      %p203 = scmp.ne.s32.totalorder %s194, %s195
      %p204 = scmp.eq.s32.totalorder %s32, 0
      %p205 = por %p203, %p204
      %p206 = scmp.ne.s32.totalorder %s194, %s195
      %p207 = scmp.eq.s32.totalorder %s33, 3
      %p208 = por %p206, %p207
      %p210 = scmp.ne.s32.totalorder %s195, %s209
      %p211 = scmp.eq.s32.totalorder %s33, 0
      %p212 = por %p210, %p211
      %s214 = sadd.s32 %s213, 1
      %p217 = scmp.eq.s32.totalorder %s27, 3
      %p218 = scmp.ne.s32.totalorder %s213, %s215
      %p219 = scmp.eq.s32.totalorder %s27, 0
      %p220 = por %p218, %p219
      %p221 = scmp.ne.s32.totalorder %s213, %s215
      %p222 = scmp.eq.s32.totalorder %s32, 3
      %p223 = por %p221, %p222
      %p224 = scmp.ne.s32.totalorder %s215, %s216
      %p225 = scmp.eq.s32.totalorder %s32, 0
      %p226 = por %p224, %p225
      %p227 = scmp.ne.s32.totalorder %s215, %s216
      %p228 = scmp.eq.s32.totalorder %s33, 3
      %p229 = por %p227, %p228
      %p231 = scmp.ne.s32.totalorder %s216, %s230
      %p232 = scmp.eq.s32.totalorder %s33, 0
      %p233 = por %p231, %p232
      %s234 = ssub.s32 %s27, %s34
      %p235 = scmp.eq.s32.totalorder %s234, 0
      %s237 = sadd.s32 %s236, 1
      %s238 = scalar_select %p235, %s236, %s237
      %p241 = pneg %p235
      %p242 = scmp.eq.s32.totalorder %s27, 3
      %p243 = por %p241, %p242
      %p244 = scmp.ne.s32.totalorder %s236, %s239
      %p245 = scmp.eq.s32.totalorder %s27, 0
      %p246 = por %p244, %p245
      %p247 = scmp.ne.s32.totalorder %s236, %s239
      %p248 = scmp.eq.s32.totalorder %s32, 3
      %p249 = por %p247, %p248
      %p250 = scmp.ne.s32.totalorder %s239, %s240
      %p251 = scmp.eq.s32.totalorder %s32, 0
      %p252 = por %p250, %p251
      %p253 = scmp.ne.s32.totalorder %s239, %s240
      %p254 = scmp.eq.s32.totalorder %s33, 3
      %p255 = por %p253, %p254
      %p257 = scmp.ne.s32.totalorder %s240, %s256
      %p258 = scmp.eq.s32.totalorder %s33, 0
      %p259 = por %p257, %p258
      %s261 = sadd.s32 %s260, 1
      %p264 = scmp.eq.s32.totalorder %s27, 3
      %p265 = scmp.ne.s32.totalorder %s260, %s262
      %p266 = scmp.eq.s32.totalorder %s27, 0
      %p267 = por %p265, %p266
      %p268 = scmp.ne.s32.totalorder %s260, %s262
      %p269 = scmp.eq.s32.totalorder %s32, 3
      %p270 = por %p268, %p269
      %p271 = scmp.ne.s32.totalorder %s262, %s263
      %p272 = scmp.eq.s32.totalorder %s32, 0
      %p273 = por %p271, %p272
      %p274 = scmp.ne.s32.totalorder %s262, %s263
      %p275 = scmp.eq.s32.totalorder %s33, 3
      %p276 = por %p274, %p275
      %p278 = scmp.ne.s32.totalorder %s263, %s277
      %p279 = scmp.eq.s32.totalorder %s33, 0
      %p280 = por %p278, %p279
      %s282 = sadd.s32 %s281, 1
      %p285 = scmp.eq.s32.totalorder %s27, 3
      %p286 = scmp.ne.s32.totalorder %s281, %s283
      %p287 = scmp.eq.s32.totalorder %s27, 0
      %p288 = por %p286, %p287
      %p289 = scmp.ne.s32.totalorder %s281, %s283
      %p290 = scmp.eq.s32.totalorder %s32, 3
      %p291 = por %p289, %p290
      %p292 = scmp.ne.s32.totalorder %s283, %s284
      %p293 = scmp.eq.s32.totalorder %s32, 0
      %p294 = por %p292, %p293
      %p295 = scmp.ne.s32.totalorder %s283, %s284
      %p296 = scmp.eq.s32.totalorder %s33, 3
      %p297 = por %p295, %p296
      %p299 = scmp.ne.s32.totalorder %s284, %s298
      %p300 = scmp.eq.s32.totalorder %s33, 0
      %p301 = por %p299, %p300
      %p302 = scmp.le.s32.totalorder 1, %s27
      %p303 = scmp.lt.s32.totalorder %s27, 5
      %p304 = pnand %p302, %p303
      %p305 = pneg %p304
      // Predicated region
      $region9: #{tpu_custom_call.1} parent=5 // pred_check
        _
      $region10: #{tpu_custom_call.1} parent=5 // pred_check_branch
        %307 = sbr.rel (%p304) target = $region12
      $region11: #{tpu_custom_call.1} parent=5 // pred_region
        %s308 = ssub.s32 %s27, 1
        // Predicated region
        $region13: #{tpu_custom_call.1} parent=11 // pred_check
          %p309 = pneg %p100
        $region14: #{tpu_custom_call.1} parent=11 // pred_check_branch
          %311 = sbr.rel (%p309) target = $region16
        $region15: #{tpu_custom_call.1} parent=11 // pred_region
          _
        $region16: #{tpu_custom_call.1} parent=11 // pred_fallthru
          _
        // Predicated region
        $region17: #{tpu_custom_call.1} parent=11 // pred_check
          %p312 = pneg %p121
        $region18: #{tpu_custom_call.1} parent=11 // pred_check_branch
          %314 = sbr.rel (%p312) target = $region20
        $region19: #{tpu_custom_call.1} parent=11 // pred_region
          _
        $region20: #{tpu_custom_call.1} parent=11 // pred_fallthru
          _
        // Predicated region
        $region21: #{tpu_custom_call.1} parent=11 // pred_check
          %p315 = pneg %p142
        $region22: #{tpu_custom_call.1} parent=11 // pred_check_branch
          %317 = sbr.rel (%p315) target = $region24
        $region23: #{tpu_custom_call.1} parent=11 // pred_region
          _
        $region24: #{tpu_custom_call.1} parent=11 // pred_fallthru
          _
        // Predicated region
        $region25: #{tpu_custom_call.1} parent=11 // pred_check
          %p318 = pneg %p163
        $region26: #{tpu_custom_call.1} parent=11 // pred_check_branch
          %320 = sbr.rel (%p318) target = $region28
        $region27: #{tpu_custom_call.1} parent=11 // pred_region
          _
        $region28: #{tpu_custom_call.1} parent=11 // pred_fallthru
          _
        // Predicated region
        $region29: #{tpu_custom_call.1} parent=11 // pred_check
          %p321 = pneg %p184
        $region30: #{tpu_custom_call.1} parent=11 // pred_check_branch
          %323 = sbr.rel (%p321) target = $region32
        $region31: #{tpu_custom_call.1} parent=11 // pred_region
          %s325 = ssub.s32 512, 512
          %326 = vsyncadd [#allocation8], %s325
          %s327 = sshll.u32 [#allocation7], 4
          %s328 = int_to_ptr.vmem [resolvable:$true] %s327
          %333 = dma.hbm_to_vmem [thread:$0]  %s6, 512, %s328, [#allocation8], 128, 128, 8
        $region32: #{tpu_custom_call.1} parent=11 // pred_fallthru
          _
        // Predicated region
        $region33: #{tpu_custom_call.1} parent=11 // pred_check
          %p334 = pneg %p205
        $region34: #{tpu_custom_call.1} parent=11 // pred_check_branch
          %336 = sbr.rel (%p334) target = $region36
        $region35: #{tpu_custom_call.1} parent=11 // pred_region
          _
        $region36: #{tpu_custom_call.1} parent=11 // pred_fallthru
          _
      $region12: #{tpu_custom_call.1} parent=5 // pred_fallthru
        _
      %p337 = scmp.lt.s32.totalorder %s27, 4
      // Predicated region
      $region37: #{tpu_custom_call.1} parent=5 // pred_check
        %p338 = pneg %p337
      $region38: #{tpu_custom_call.1} parent=5 // pred_check_branch
        %340 = sbr.rel (%p338) target = $region40
      $region39: #{tpu_custom_call.1} parent=5 // pred_region
        // Predicated region
        $region41: #{tpu_custom_call.1} parent=39 // pred_check
          %p341 = pneg %p47
        $region42: #{tpu_custom_call.1} parent=39 // pred_check_branch
          %343 = sbr.rel (%p341) target = $region44
        $region43: #{tpu_custom_call.1} parent=39 // pred_region
          %p344 = scmp.lt.s32.totalorder %s27, 3
          %s345 = scalar_select %p344, %s27, 3
          %s346 = smul.addr %s345, 4
          %s347 = scalar_lea.vmem %s0, %s346
        $region44: #{tpu_custom_call.1} parent=39 // pred_fallthru
          _
        // Predicated region
        $region45: #{tpu_custom_call.1} parent=39 // pred_check
          %p348 = pneg %p73
        $region46: #{tpu_custom_call.1} parent=39 // pred_check_branch
          %350 = sbr.rel (%p348) target = $region48
        $region47: #{tpu_custom_call.1} parent=39 // pred_region
          %s351 = sand.u32 %s63, 1
          %s352 = scalar_lea.sflag [#allocation5], %s351
          %s353 = sand.u32 %s63, 1
          %s354 = smul.addr %s353, 4
          %s355 = scalar_lea.vmem [#allocation4], %s354
          %s357 = ssub.s32 64, 64
          %358 = vsyncadd %s352, %s357
          %s359 = smul.addr %s27, 4
          %s360 = smul.addr %s359, 16
          %s361 = scalar_lea.hbm %s1, %s360
          %s363 = sshll.u32 %s355, 4
          %s364 = int_to_ptr.vmem [resolvable:$true] %s363
          %366 = dma.hbm_to_vmem [thread:$0]  %s361, 64, %s364, %s352
        $region48: #{tpu_custom_call.1} parent=39 // pred_fallthru
          _
      $region40: #{tpu_custom_call.1} parent=5 // pred_fallthru
        _
      %p367 = scmp.le.s32.totalorder 1, %s27
      %p368 = scmp.lt.s32.totalorder %s27, 5
      %p369 = pnand %p367, %p368
      %p370 = pneg %p369
      // Predicated region
      $region49: #{tpu_custom_call.1} parent=5 // pred_check
        _
      $region50: #{tpu_custom_call.1} parent=5 // pred_check_branch
        %372 = sbr.rel (%p369) target = $region52
      $region51: #{tpu_custom_call.1} parent=5 // pred_region
        %s373 = ssub.s32 %s27, 1
        %s374 = sand.u32 %s66, 1
        %s375 = scalar_lea.sflag [#allocation5], %s374
        %s376 = sand.u32 %s66, 1
        %s377 = smul.addr %s376, 4
        %s378 = scalar_lea.vmem [#allocation4], %s377
        // Predicated region
        $region53: #{tpu_custom_call.1} parent=51 // pred_check
          %p379 = pneg %p79
        $region54: #{tpu_custom_call.1} parent=51 // pred_check_branch
          %381 = sbr.rel (%p379) target = $region56
        $region55: #{tpu_custom_call.1} parent=51 // pred_region
          %382 = dma.done %s375, 64
        $region56: #{tpu_custom_call.1} parent=51 // pred_fallthru
          _
        // Predicated region
        $region57: #{tpu_custom_call.1} parent=51 // pred_check
          %p383 = pneg %p184
        $region58: #{tpu_custom_call.1} parent=51 // pred_check_branch
          %385 = sbr.rel (%p383) target = $region60
        $region59: #{tpu_custom_call.1} parent=51 // pred_region
          %386 = dma.done [#allocation8], 512
        $region60: #{tpu_custom_call.1} parent=51 // pred_fallthru
          _
        %p387 = scmp.lt.s32.totalorder %s32, 3
        %s388 = scalar_select %p387, %s32, 3
        %s389 = smul.addr %s388, 4
        %s390 = scalar_lea.vmem %s0, %s389
        %p391 = pneg %p53
        %p392 = pneg %p50
        %s393 = sand.u32 %s66, 1
        %s394 = scalar_lea.sflag [#allocation5], %s393
        %s395 = sand.u32 %s66, 1
        %s396 = smul.addr %s395, 4
        %s397 = scalar_lea.vmem [#allocation4], %s396
        %p398 = pneg %p79
        %p399 = pneg %p76
        %p400 = pneg %p100
        %p401 = pneg %p97
        %p402 = pneg %p121
        %p403 = pneg %p118
        %p404 = pneg %p142
        %p405 = pneg %p139
        %p406 = pneg %p163
        %p407 = pneg %p160
        %p408 = pneg %p184
        %p409 = pneg %p181
        %p410 = pneg %p205
        %p411 = pneg %p202
        %p412 = pneg %p226
        %p413 = pneg %p223
        %p414 = pneg %p252
        %p415 = pneg %p249
        %s416 = sand.u32 %s239, 1
        %s417 = scalar_lea.sflag [#allocation6], %s416
        %s418 = sand.u32 %s239, 1
        %s419 = smul.addr %s418, 4
        %s420 = scalar_lea.vmem [#allocation9], %s419
        %p421 = pneg %p273
        %p422 = pneg %p270
        %p423 = pneg %p294
        %p424 = pneg %p291
        %p425 = scmp.lt.s32.totalorder %s32, 3
        %s426 = scalar_select %p425, %s32, 3
        %s427 = smul.addr %s426, 4
        %s428 = scalar_lea.vmem %s0, %s427
        %p429 = scmp.eq.s32.totalorder %s32, 0
        // Predicated region
        $region61: #{tpu_custom_call.1} parent=51 // pred_check
          %p430 = pneg %p429
        $region62: #{tpu_custom_call.1} parent=51 // pred_check_branch
          %432 = sbr.rel (%p430) target = $region64
        $region63: #{tpu_custom_call.1} parent=51 // pred_region
          %vm433 = vcmask 7168
          %434 = vst.msk [vmem:[%s10] sm:$0xff] %vm433, -1e+30
          %435 = vst.msk [vmem:[%s10 + $0x8] sm:$0xff] %vm433, -1e+30
          %436 = vst.msk [vmem:[%s10 + $0x10] sm:$0xff] %vm433, -1e+30
          %437 = vst.msk [vmem:[%s10 + $0x18] sm:$0xff] %vm433, -1e+30
          %438 = vst.msk [vmem:[%s10 + $0x20] sm:$0xff] %vm433, -1e+30
          %439 = vst.msk [vmem:[%s10 + $0x28] sm:$0xff] %vm433, -1e+30
          %440 = vst.msk [vmem:[%s10 + $0x30] sm:$0xff] %vm433, -1e+30
          %441 = vst.msk [vmem:[%s10 + $0x38] sm:$0xff] %vm433, -1e+30
          %442 = vst.msk [vmem:[%s11] sm:$0xff] %vm433, 0.0
          %443 = vst.msk [vmem:[%s11 + $0x8] sm:$0xff] %vm433, 0.0
          %444 = vst.msk [vmem:[%s11 + $0x10] sm:$0xff] %vm433, 0.0
          %445 = vst.msk [vmem:[%s11 + $0x18] sm:$0xff] %vm433, 0.0
          %446 = vst.msk [vmem:[%s11 + $0x20] sm:$0xff] %vm433, 0.0
          %447 = vst.msk [vmem:[%s11 + $0x28] sm:$0xff] %vm433, 0.0
          %448 = vst.msk [vmem:[%s11 + $0x30] sm:$0xff] %vm433, 0.0
          %449 = vst.msk [vmem:[%s11 + $0x38] sm:$0xff] %vm433, 0.0
          %vm450 = vcmask 261120
          %451 = vst.msk [vmem:[#allocation2] sm:$0xff] %vm450, 0.0
          %452 = vst.msk [vmem:[#allocation2 + $0x8] sm:$0xff] %vm450, 0.0
          %453 = vst.msk [vmem:[#allocation2 + $0x10] sm:$0xff] %vm450, 0.0
          %454 = vst.msk [vmem:[#allocation2 + $0x18] sm:$0xff] %vm450, 0.0
          %455 = vst.msk [vmem:[#allocation2 + $0x20] sm:$0xff] %vm450, 0.0
          %456 = vst.msk [vmem:[#allocation2 + $0x28] sm:$0xff] %vm450, 0.0
          %457 = vst.msk [vmem:[#allocation2 + $0x30] sm:$0xff] %vm450, 0.0
          %458 = vst.msk [vmem:[#allocation2 + $0x38] sm:$0xff] %vm450, 0.0
        $region64: #{tpu_custom_call.1} parent=51 // pred_fallthru
          _
        %v459 = vld [vmem:[%s428] sm:$0xf]
        %v460 = vld [vmem:[%s378] sm:$0xf]
        %v461 = vlaneseq
        %v462 = vshrl.u32 %v461, 7
        %v463 = vadd.s32 %v462, 8
        %v464 = vadd.s32 %v462, 16
        %v465 = vadd.s32 %v462, 24
        %v466 = vadd.s32 %v462, 32
        %v467 = vadd.s32 %v462, 40
        %v468 = vadd.s32 %v462, 48
        %v469 = vadd.s32 %v462, 56
        %v470 = vlaneseq
        %v471 = vshrl.u32 %v470, 7
        %v472 = vsub.s32 0, %v471
        %v473 = vrot.slane %v459, %v472
        %v474 = vlaneseq
        %v475 = vshrl.u32 %v474, 7
        %v476 = vsub.s32 1, %v475
        %v477 = vrot.slane %v459, %v476
        %v478 = vlaneseq
        %v479 = vshrl.u32 %v478, 7
        %v480 = vsub.s32 2, %v479
        %v481 = vrot.slane %v459, %v480
        %v482 = vlaneseq
        %v483 = vshrl.u32 %v482, 7
        %v484 = vsub.s32 3, %v483
        %v485 = vrot.slane %v459, %v484
        %vm486 = vcmp.eq.s32.totalorder %v462, %v473
        %vm487 = vcmp.eq.s32.totalorder %v462, %v477
        %vm488 = vcmp.eq.s32.totalorder %v462, %v481
        %vm489 = vcmp.eq.s32.totalorder %v462, %v485
        %vm490 = vcmp.eq.s32.totalorder %v463, %v473
        %vm491 = vcmp.eq.s32.totalorder %v463, %v477
        %vm492 = vcmp.eq.s32.totalorder %v463, %v481
        %vm493 = vcmp.eq.s32.totalorder %v463, %v485
        %vm494 = vcmp.eq.s32.totalorder %v464, %v473
        %vm495 = vcmp.eq.s32.totalorder %v464, %v477
        %vm496 = vcmp.eq.s32.totalorder %v464, %v481
        %vm497 = vcmp.eq.s32.totalorder %v464, %v485
        %vm498 = vcmp.eq.s32.totalorder %v465, %v473
        %vm499 = vcmp.eq.s32.totalorder %v465, %v477
        %vm500 = vcmp.eq.s32.totalorder %v465, %v481
        %vm501 = vcmp.eq.s32.totalorder %v465, %v485
        %vm502 = vcmp.eq.s32.totalorder %v466, %v473
        %vm503 = vcmp.eq.s32.totalorder %v466, %v477
        %vm504 = vcmp.eq.s32.totalorder %v466, %v481
        %vm505 = vcmp.eq.s32.totalorder %v466, %v485
        %vm506 = vcmp.eq.s32.totalorder %v467, %v473
        %vm507 = vcmp.eq.s32.totalorder %v467, %v477
        %vm508 = vcmp.eq.s32.totalorder %v467, %v481
        %vm509 = vcmp.eq.s32.totalorder %v467, %v485
        %vm510 = vcmp.eq.s32.totalorder %v468, %v473
        %vm511 = vcmp.eq.s32.totalorder %v468, %v477
        %vm512 = vcmp.eq.s32.totalorder %v468, %v481
        %vm513 = vcmp.eq.s32.totalorder %v468, %v485
        %vm514 = vcmp.eq.s32.totalorder %v469, %v473
        %vm515 = vcmp.eq.s32.totalorder %v469, %v477
        %vm516 = vcmp.eq.s32.totalorder %v469, %v481
        %vm517 = vcmp.eq.s32.totalorder %v469, %v485
        %v518 = vlaneseq
        %v519 = vshrl.u32 %v518, 7
        %v520 = vsub.s32 0, %v519
        %v521 = vrot.slane %v460, %v520
        %v522 = vlaneseq
        %v523 = vshrl.u32 %v522, 7
        %v524 = vsub.s32 1, %v523
        %v525 = vrot.slane %v460, %v524
        %v526 = vlaneseq
        %v527 = vshrl.u32 %v526, 7
        %v528 = vsub.s32 2, %v527
        %v529 = vrot.slane %v460, %v528
        %v530 = vlaneseq
        %v531 = vshrl.u32 %v530, 7
        %v532 = vsub.s32 3, %v531
        %v533 = vrot.slane %v460, %v532
        %vm534 = vcmp.eq.s32.totalorder %v462, %v521
        %vm535 = vcmp.eq.s32.totalorder %v462, %v525
        %vm536 = vcmp.eq.s32.totalorder %v462, %v529
        %vm537 = vcmp.eq.s32.totalorder %v462, %v533
        %vm538 = vcmp.eq.s32.totalorder %v463, %v521
        %vm539 = vcmp.eq.s32.totalorder %v463, %v525
        %vm540 = vcmp.eq.s32.totalorder %v463, %v529
        %vm541 = vcmp.eq.s32.totalorder %v463, %v533
        %v542 = vsel %vm486, 1, 0
        %v543 = vsel %vm487, 1, 0
        %v544 = vsel %vm488, 1, 0
        %v545 = vsel %vm489, 1, 0
        %v546 = vsel %vm490, 1, 0
        %v547 = vsel %vm491, 1, 0
        %v548 = vsel %vm492, 1, 0
        %v549 = vsel %vm493, 1, 0
        %v550 = vsel %vm494, 1, 0
        %v551 = vsel %vm495, 1, 0
        %v552 = vsel %vm496, 1, 0
        %v553 = vsel %vm497, 1, 0
        %v554 = vsel %vm498, 1, 0
        %v555 = vsel %vm499, 1, 0
        %v556 = vsel %vm500, 1, 0
        %v557 = vsel %vm501, 1, 0
        %v558 = vsel %vm502, 1, 0
        %v559 = vsel %vm503, 1, 0
        %v560 = vsel %vm504, 1, 0
        %v561 = vsel %vm505, 1, 0
        %v562 = vsel %vm506, 1, 0
        %v563 = vsel %vm507, 1, 0
        %v564 = vsel %vm508, 1, 0
        %v565 = vsel %vm509, 1, 0
        %v566 = vsel %vm510, 1, 0
        %v567 = vsel %vm511, 1, 0
        %v568 = vsel %vm512, 1, 0
        %v569 = vsel %vm513, 1, 0
        %v570 = vsel %vm514, 1, 0
        %v571 = vsel %vm515, 1, 0
        %v572 = vsel %vm516, 1, 0
        %v573 = vsel %vm517, 1, 0
        %v574 = vcvt.s32.f32 %v542
        %v575 = vcvt.s32.f32 %v543
        %v576 = vcvt.s32.f32 %v544
        %v577 = vcvt.s32.f32 %v545
        %v578 = vcvt.s32.f32 %v546
        %v579 = vcvt.s32.f32 %v547
        %v580 = vcvt.s32.f32 %v548
        %v581 = vcvt.s32.f32 %v549
        %v582 = vcvt.s32.f32 %v550
        %v583 = vcvt.s32.f32 %v551
        %v584 = vcvt.s32.f32 %v552
        %v585 = vcvt.s32.f32 %v553
        %v586 = vcvt.s32.f32 %v554
        %v587 = vcvt.s32.f32 %v555
        %v588 = vcvt.s32.f32 %v556
        %v589 = vcvt.s32.f32 %v557
        %v590 = vcvt.s32.f32 %v558
        %v591 = vcvt.s32.f32 %v559
        %v592 = vcvt.s32.f32 %v560
        %v593 = vcvt.s32.f32 %v561
        %v594 = vcvt.s32.f32 %v562
        %v595 = vcvt.s32.f32 %v563
        %v596 = vcvt.s32.f32 %v564
        %v597 = vcvt.s32.f32 %v565
        %v598 = vcvt.s32.f32 %v566
        %v599 = vcvt.s32.f32 %v567
        %v600 = vcvt.s32.f32 %v568
        %v601 = vcvt.s32.f32 %v569
        %v602 = vcvt.s32.f32 %v570
        %v603 = vcvt.s32.f32 %v571
        %v604 = vcvt.s32.f32 %v572
        %v605 = vcvt.s32.f32 %v573
        %v606 = vsel %vm534, 1, 0
        %v607 = vsel %vm535, 1, 0
        %v608 = vsel %vm536, 1, 0
        %v609 = vsel %vm537, 1, 0
        %v610 = vsel %vm538, 1, 0
        %v611 = vsel %vm539, 1, 0
        %v612 = vsel %vm540, 1, 0
        %v613 = vsel %vm541, 1, 0
        %v614 = vcvt.s32.f32 %v606
        %v615 = vcvt.s32.f32 %v607
        %v616 = vcvt.s32.f32 %v608
        %v617 = vcvt.s32.f32 %v609
        %v618 = vcvt.s32.f32 %v610
        %v619 = vcvt.s32.f32 %v611
        %v620 = vcvt.s32.f32 %v612
        %v621 = vcvt.s32.f32 %v613
        %v622 = vld [vmem:[%s2] sm:$0xff]
        %v623 = vld [vmem:[%s2 + $0x8] sm:$0xff]
        %v624 = vld [vmem:[%s2 + $0x10] sm:$0xff]
        %v625 = vld [vmem:[%s2 + $0x18] sm:$0xff]
        %v626 = vld [vmem:[%s3] sm:$0xff]
        %v627 = vld [vmem:[%s3 + $0x8] sm:$0xff]
        %v628 = vld [vmem:[%s3 + $0x10] sm:$0xff]
        %v629 = vld [vmem:[%s3 + $0x18] sm:$0xff]
        %vm630 = vcmask 130048
        %v632 = vsel %vm630, %v626, 0
        %v635 = vsel %vm630, %v627, 0
        %v638 = vsel %vm630, %v628, 0
        %v641 = vsel %vm630, %v629, 0
        %643 = vmatprep.subr.mxu0 0.0
        %644 = vmatpush1.msra.mxu0 0.0
        %645 = vmatprep.subr.mxu0 0.0
        %646 = vmatpush1.msra.mxu0 0.0
        %647 = vmatprep.subr.mxu0 0.0
        %648 = vmatpush1.msra.mxu0 0.0
        %649 = vmatprep.subr.mxu0 0.0
        %650 = vmatpush1.msra.mxu0 0.0
        %651 = vmatprep.subr.mxu0 0.0
        %652 = vmatpush1.msra.mxu0 0.0
        %653 = vmatprep.subr.mxu0 0.0
        %654 = vmatpush1.msra.mxu0 0.0
        %655 = vmatprep.subr.mxu0 0.0
        %656 = vmatpush1.msra.mxu0 0.0
        %657 = vmatprep.subr.mxu0 0.0
        %658 = vmatpush1.msra.mxu0 0.0
        %659 = vmatprep.subr.mxu0 0.0
        %660 = vmatpush1.msra.mxu0 0.0
        %661 = vmatprep.subr.mxu0 0.0
        %662 = vmatpush1.msra.mxu0 0.0
        %663 = vmatprep.subr.mxu0 0.0
        %664 = vmatpush1.msra.mxu0 0.0
        %665 = vmatprep.subr.mxu0 0.0
        %666 = vmatpush1.msra.mxu0 0.0
        %667 = vmatprep.subr.mxu0 0.0
        %668 = vmatpush1.msra.mxu0 0.0
        %669 = vmatprep.subr.mxu0 0.0
        %670 = vmatpush1.msra.mxu0 0.0
        %v671 = vand.u32 %v619, 4294901760
        %672 = vmatprep.subr.mxu0 %v671
        %v673 = vand.u32 %v618, 4294901760
        %674 = vmatpush1.msra.mxu0 %v673
        %v675 = vand.u32 %v615, 4294901760
        %676 = vmatprep.subr.mxu0 %v675
        %v677 = vand.u32 %v614, 4294901760
        %678 = vmatpush1.msra.mxu0 %v677
        %679 = vmatprep.subr.mxu0 0.0
        %680 = vmatpush2.msra.mxu0 0.0
        %681 = vmatprep.subr.mxu0 0.0
        %682 = vmatpush2.msra.mxu0 0.0
        %683 = vmatprep.subr.mxu0 0.0
        %684 = vmatpush2.msra.mxu0 0.0
        %685 = vmatprep.subr.mxu0 0.0
        %686 = vmatpush2.msra.mxu0 0.0
        %687 = vmatprep.subr.mxu0 0.0
        %688 = vmatpush2.msra.mxu0 0.0
        %689 = vmatprep.subr.mxu0 0.0
        %690 = vmatpush2.msra.mxu0 0.0
        %691 = vmatprep.subr.mxu0 0.0
        %692 = vmatpush2.msra.mxu0 0.0
        %693 = vmatprep.subr.mxu0 0.0
        %694 = vmatpush2.msra.mxu0 0.0
        %695 = vmatprep.subr.mxu0 0.0
        %696 = vmatpush2.msra.mxu0 0.0
        %697 = vmatprep.subr.mxu0 0.0
        %698 = vmatpush2.msra.mxu0 0.0
        %699 = vmatprep.subr.mxu0 0.0
        %700 = vmatpush2.msra.mxu0 0.0
        %701 = vmatprep.subr.mxu0 0.0
        %702 = vmatpush2.msra.mxu0 0.0
        %703 = vmatprep.subr.mxu0 0.0
        %704 = vmatpush2.msra.mxu0 0.0
        %705 = vmatprep.subr.mxu0 0.0
        %706 = vmatpush2.msra.mxu0 0.0
        %707 = vmatprep.subr.mxu0 0.0
        %708 = vmatpush2.msra.mxu0 0.0
        %709 = vmatprep.subr.mxu0 0.0
        %710 = vmatpush2.msra.mxu0 0.0
        %711 = vmatprep.mubr.f32.mxu0 0.0
        %v712 = vand.u32 %v632, 4294901760
        %v713 = vsub.f32 %v632, %v712
        %v714 = vand.u32 %v713, 4294901760
        %v715 = vsub.f32 %v713, %v714
        %v716 = vand.u32 %v715, 4294901760
        %717 = vmatmul.mubr.f32.gmra.mxu0 %v716
        %v718 = vpop.f32.mrf.mxu0
        %v719 = vadd.f32 0.0, %v718
        %v720 = vpop.f32.mrf.mxu0
        %v721 = vadd.f32 0.0, %v720
        %722 = vmatprep.mubr.f32.mxu0 0.0
        %v723 = vand.u32 %v635, 4294901760
        %v724 = vsub.f32 %v635, %v723
        %v725 = vand.u32 %v724, 4294901760
        %v726 = vsub.f32 %v724, %v725
        %v727 = vand.u32 %v726, 4294901760
        %728 = vmatmul.mubr.f32.gmra.mxu0 %v727
        %v729 = vpop.f32.mrf.mxu0
        %v730 = vadd.f32 0.0, %v729
        %v731 = vpop.f32.mrf.mxu0
        %v732 = vadd.f32 0.0, %v731
        %733 = vmatprep.mubr.f32.mxu0 0.0
        %v734 = vand.u32 %v638, 4294901760
        %v735 = vsub.f32 %v638, %v734
        %v736 = vand.u32 %v735, 4294901760
        %v737 = vsub.f32 %v735, %v736
        %v738 = vand.u32 %v737, 4294901760
        %739 = vmatmul.mubr.f32.gmra.mxu0 %v738
        %v740 = vpop.f32.mrf.mxu0
        %v741 = vadd.f32 0.0, %v740
        %v742 = vpop.f32.mrf.mxu0
        %v743 = vadd.f32 0.0, %v742
        %744 = vmatprep.mubr.f32.mxu0 0.0
        %v745 = vand.u32 %v641, 4294901760
        %v746 = vsub.f32 %v641, %v745
        %v747 = vand.u32 %v746, 4294901760
        %v748 = vsub.f32 %v746, %v747
        %v749 = vand.u32 %v748, 4294901760
        %750 = vmatmul.mubr.f32.gmra.mxu0 %v749
        %v751 = vpop.f32.mrf.mxu0
        %v752 = vadd.f32 0.0, %v751
        %v753 = vpop.f32.mrf.mxu0
        %v754 = vadd.f32 0.0, %v753
        %755 = vdwg.mxu0
        %756 = vmatprep.subr.mxu0 0.0
        %757 = vmatpush1.msra.mxu0 0.0
        %758 = vmatprep.subr.mxu0 0.0
        %759 = vmatpush1.msra.mxu0 0.0
        %760 = vmatprep.subr.mxu0 0.0
        %761 = vmatpush1.msra.mxu0 0.0
        %762 = vmatprep.subr.mxu0 0.0
        %763 = vmatpush1.msra.mxu0 0.0
        %764 = vmatprep.subr.mxu0 0.0
        %765 = vmatpush1.msra.mxu0 0.0
        %766 = vmatprep.subr.mxu0 0.0
        %767 = vmatpush1.msra.mxu0 0.0
        %768 = vmatprep.subr.mxu0 0.0
        %769 = vmatpush1.msra.mxu0 0.0
        %770 = vmatprep.subr.mxu0 0.0
        %771 = vmatpush1.msra.mxu0 0.0
        %772 = vmatprep.subr.mxu0 0.0
        %773 = vmatpush1.msra.mxu0 0.0
        %774 = vmatprep.subr.mxu0 0.0
        %775 = vmatpush1.msra.mxu0 0.0
        %776 = vmatprep.subr.mxu0 0.0
        %777 = vmatpush1.msra.mxu0 0.0
        %778 = vmatprep.subr.mxu0 0.0
        %779 = vmatpush1.msra.mxu0 0.0
        %780 = vmatprep.subr.mxu0 0.0
        %781 = vmatpush1.msra.mxu0 0.0
        %782 = vmatprep.subr.mxu0 0.0
        %783 = vmatpush1.msra.mxu0 0.0
        %v784 = vand.u32 %v619, 4294901760
        %v785 = vsub.f32 %v619, %v784
        %v786 = vand.u32 %v785, 4294901760
        %v787 = vsub.f32 %v785, %v786
        %v788 = vand.u32 %v787, 4294901760
        %789 = vmatprep.subr.mxu0 %v788
        %v790 = vand.u32 %v618, 4294901760
        %v791 = vsub.f32 %v618, %v790
        %v792 = vand.u32 %v791, 4294901760
        %v793 = vsub.f32 %v791, %v792
        %v794 = vand.u32 %v793, 4294901760
        %795 = vmatpush1.msra.mxu0 %v794
        %v796 = vand.u32 %v615, 4294901760
        %v797 = vsub.f32 %v615, %v796
        %v798 = vand.u32 %v797, 4294901760
        %v799 = vsub.f32 %v797, %v798
        %v800 = vand.u32 %v799, 4294901760
        %801 = vmatprep.subr.mxu0 %v800
        %v802 = vand.u32 %v614, 4294901760
        %v803 = vsub.f32 %v614, %v802
        %v804 = vand.u32 %v803, 4294901760
        %v805 = vsub.f32 %v803, %v804
        %v806 = vand.u32 %v805, 4294901760
        %807 = vmatpush1.msra.mxu0 %v806
        %808 = vmatprep.subr.mxu0 0.0
        %809 = vmatpush2.msra.mxu0 0.0
        %810 = vmatprep.subr.mxu0 0.0
        %811 = vmatpush2.msra.mxu0 0.0
        %812 = vmatprep.subr.mxu0 0.0
        %813 = vmatpush2.msra.mxu0 0.0
        %814 = vmatprep.subr.mxu0 0.0
        %815 = vmatpush2.msra.mxu0 0.0
        %816 = vmatprep.subr.mxu0 0.0
        %817 = vmatpush2.msra.mxu0 0.0
        %818 = vmatprep.subr.mxu0 0.0
        %819 = vmatpush2.msra.mxu0 0.0
        %820 = vmatprep.subr.mxu0 0.0
        %821 = vmatpush2.msra.mxu0 0.0
        %822 = vmatprep.subr.mxu0 0.0
        %823 = vmatpush2.msra.mxu0 0.0
        %824 = vmatprep.subr.mxu0 0.0
        %825 = vmatpush2.msra.mxu0 0.0
        %826 = vmatprep.subr.mxu0 0.0
        %827 = vmatpush2.msra.mxu0 0.0
        %828 = vmatprep.subr.mxu0 0.0
        %829 = vmatpush2.msra.mxu0 0.0
        %830 = vmatprep.subr.mxu0 0.0
        %831 = vmatpush2.msra.mxu0 0.0
        %832 = vmatprep.subr.mxu0 0.0
        %833 = vmatpush2.msra.mxu0 0.0
        %834 = vmatprep.subr.mxu0 0.0
        %835 = vmatpush2.msra.mxu0 0.0
        %836 = vmatprep.subr.mxu0 0.0
        %837 = vmatpush2.msra.mxu0 0.0
        %838 = vmatprep.subr.mxu0 0.0
        %839 = vmatpush2.msra.mxu0 0.0
        %840 = vmatprep.mubr.f32.mxu0 0.0
        %v841 = vand.u32 %v632, 4294901760
        %842 = vmatmul.mubr.f32.gmra.mxu0 %v841
        %v843 = vpop.f32.mrf.mxu0
        %v844 = vadd.f32 %v719, %v843
        %v845 = vpop.f32.mrf.mxu0
        %v846 = vadd.f32 %v721, %v845
        %847 = vmatprep.mubr.f32.mxu0 0.0
        %v848 = vand.u32 %v635, 4294901760
        %849 = vmatmul.mubr.f32.gmra.mxu0 %v848
        %v850 = vpop.f32.mrf.mxu0
        %v851 = vadd.f32 %v730, %v850
        %v852 = vpop.f32.mrf.mxu0
        %v853 = vadd.f32 %v732, %v852
        %854 = vmatprep.mubr.f32.mxu0 0.0
        %v855 = vand.u32 %v638, 4294901760
        %856 = vmatmul.mubr.f32.gmra.mxu0 %v855
        %v857 = vpop.f32.mrf.mxu0
        %v858 = vadd.f32 %v741, %v857
        %v859 = vpop.f32.mrf.mxu0
        %v860 = vadd.f32 %v743, %v859
        %861 = vmatprep.mubr.f32.mxu0 0.0
        %v862 = vand.u32 %v641, 4294901760
        %863 = vmatmul.mubr.f32.gmra.mxu0 %v862
        %v864 = vpop.f32.mrf.mxu0
        %v865 = vadd.f32 %v752, %v864
        %v866 = vpop.f32.mrf.mxu0
        %v867 = vadd.f32 %v754, %v866
        %868 = vdwg.mxu0
        %869 = vmatprep.subr.mxu0 0.0
        %870 = vmatpush1.msra.mxu0 0.0
        %871 = vmatprep.subr.mxu0 0.0
        %872 = vmatpush1.msra.mxu0 0.0
        %873 = vmatprep.subr.mxu0 0.0
        %874 = vmatpush1.msra.mxu0 0.0
        %875 = vmatprep.subr.mxu0 0.0
        %876 = vmatpush1.msra.mxu0 0.0
        %877 = vmatprep.subr.mxu0 0.0
        %878 = vmatpush1.msra.mxu0 0.0
        %879 = vmatprep.subr.mxu0 0.0
        %880 = vmatpush1.msra.mxu0 0.0
        %881 = vmatprep.subr.mxu0 0.0
        %882 = vmatpush1.msra.mxu0 0.0
        %883 = vmatprep.subr.mxu0 0.0
        %884 = vmatpush1.msra.mxu0 0.0
        %885 = vmatprep.subr.mxu0 0.0
        %886 = vmatpush1.msra.mxu0 0.0
        %887 = vmatprep.subr.mxu0 0.0
        %888 = vmatpush1.msra.mxu0 0.0
        %889 = vmatprep.subr.mxu0 0.0
        %890 = vmatpush1.msra.mxu0 0.0
        %891 = vmatprep.subr.mxu0 0.0
        %892 = vmatpush1.msra.mxu0 0.0
        %893 = vmatprep.subr.mxu0 0.0
        %894 = vmatpush1.msra.mxu0 0.0
        %895 = vmatprep.subr.mxu0 0.0
        %896 = vmatpush1.msra.mxu0 0.0
        %v897 = vand.u32 %v619, 4294901760
        %v898 = vsub.f32 %v619, %v897
        %899 = vmatprep.subr.mxu0 %v898
        %v900 = vand.u32 %v618, 4294901760
        %v901 = vsub.f32 %v618, %v900
        %902 = vmatpush1.msra.mxu0 %v901
        %v903 = vand.u32 %v615, 4294901760
        %v904 = vsub.f32 %v615, %v903
        %905 = vmatprep.subr.mxu0 %v904
        %v906 = vand.u32 %v614, 4294901760
        %v907 = vsub.f32 %v614, %v906
        %908 = vmatpush1.msra.mxu0 %v907
        %909 = vmatprep.subr.mxu0 0.0
        %910 = vmatpush2.msra.mxu0 0.0
        %911 = vmatprep.subr.mxu0 0.0
        %912 = vmatpush2.msra.mxu0 0.0
        %913 = vmatprep.subr.mxu0 0.0
        %914 = vmatpush2.msra.mxu0 0.0
        %915 = vmatprep.subr.mxu0 0.0
        %916 = vmatpush2.msra.mxu0 0.0
        %917 = vmatprep.subr.mxu0 0.0
        %918 = vmatpush2.msra.mxu0 0.0
        %919 = vmatprep.subr.mxu0 0.0
        %920 = vmatpush2.msra.mxu0 0.0
        %921 = vmatprep.subr.mxu0 0.0
        %922 = vmatpush2.msra.mxu0 0.0
        %923 = vmatprep.subr.mxu0 0.0
        %924 = vmatpush2.msra.mxu0 0.0
        %925 = vmatprep.subr.mxu0 0.0
        %926 = vmatpush2.msra.mxu0 0.0
        %927 = vmatprep.subr.mxu0 0.0
        %928 = vmatpush2.msra.mxu0 0.0
        %929 = vmatprep.subr.mxu0 0.0
        %930 = vmatpush2.msra.mxu0 0.0
        %931 = vmatprep.subr.mxu0 0.0
        %932 = vmatpush2.msra.mxu0 0.0
        %933 = vmatprep.subr.mxu0 0.0
        %934 = vmatpush2.msra.mxu0 0.0
        %935 = vmatprep.subr.mxu0 0.0
        %936 = vmatpush2.msra.mxu0 0.0
        %937 = vmatprep.subr.mxu0 0.0
        %938 = vmatpush2.msra.mxu0 0.0
        %939 = vmatprep.subr.mxu0 0.0
        %940 = vmatpush2.msra.mxu0 0.0
        %941 = vmatprep.mubr.f32.mxu0 0.0
        %v942 = vand.u32 %v632, 4294901760
        %v943 = vsub.f32 %v632, %v942
        %944 = vmatmul.mubr.f32.gmra.mxu0 %v943
        %v945 = vpop.f32.mrf.mxu0
        %v946 = vadd.f32 %v844, %v945
        %v947 = vpop.f32.mrf.mxu0
        %v948 = vadd.f32 %v846, %v947
        %949 = vmatprep.mubr.f32.mxu0 0.0
        %v950 = vand.u32 %v635, 4294901760
        %v951 = vsub.f32 %v635, %v950
        %952 = vmatmul.mubr.f32.gmra.mxu0 %v951
        %v953 = vpop.f32.mrf.mxu0
        %v954 = vadd.f32 %v851, %v953
        %v955 = vpop.f32.mrf.mxu0
        %v956 = vadd.f32 %v853, %v955
        %957 = vmatprep.mubr.f32.mxu0 0.0
        %v958 = vand.u32 %v638, 4294901760
        %v959 = vsub.f32 %v638, %v958
        %960 = vmatmul.mubr.f32.gmra.mxu0 %v959
        %v961 = vpop.f32.mrf.mxu0
        %v962 = vadd.f32 %v858, %v961
        %v963 = vpop.f32.mrf.mxu0
        %v964 = vadd.f32 %v860, %v963
        %965 = vmatprep.mubr.f32.mxu0 0.0
        %v966 = vand.u32 %v641, 4294901760
        %v967 = vsub.f32 %v641, %v966
        %968 = vmatmul.mubr.f32.gmra.mxu0 %v967
        %v969 = vpop.f32.mrf.mxu0
        %v970 = vadd.f32 %v865, %v969
        %v971 = vpop.f32.mrf.mxu0
        %v972 = vadd.f32 %v867, %v971
        %973 = vdwg.mxu0
        %974 = vmatprep.subr.mxu0 0.0
        %975 = vmatpush1.msra.mxu0 0.0
        %976 = vmatprep.subr.mxu0 0.0
        %977 = vmatpush1.msra.mxu0 0.0
        %978 = vmatprep.subr.mxu0 0.0
        %979 = vmatpush1.msra.mxu0 0.0
        %980 = vmatprep.subr.mxu0 0.0
        %981 = vmatpush1.msra.mxu0 0.0
        %982 = vmatprep.subr.mxu0 0.0
        %983 = vmatpush1.msra.mxu0 0.0
        %984 = vmatprep.subr.mxu0 0.0
        %985 = vmatpush1.msra.mxu0 0.0
        %986 = vmatprep.subr.mxu0 0.0
        %987 = vmatpush1.msra.mxu0 0.0
        %988 = vmatprep.subr.mxu0 0.0
        %989 = vmatpush1.msra.mxu0 0.0
        %990 = vmatprep.subr.mxu0 0.0
        %991 = vmatpush1.msra.mxu0 0.0
        %992 = vmatprep.subr.mxu0 0.0
        %993 = vmatpush1.msra.mxu0 0.0
        %994 = vmatprep.subr.mxu0 0.0
        %995 = vmatpush1.msra.mxu0 0.0
        %996 = vmatprep.subr.mxu0 0.0
        %997 = vmatpush1.msra.mxu0 0.0
        %998 = vmatprep.subr.mxu0 0.0
        %999 = vmatpush1.msra.mxu0 0.0
        %1000 = vmatprep.subr.mxu0 0.0
        %1001 = vmatpush1.msra.mxu0 0.0
        %v1002 = vand.u32 %v619, 4294901760
        %1003 = vmatprep.subr.mxu0 %v1002
        %v1004 = vand.u32 %v618, 4294901760
        %1005 = vmatpush1.msra.mxu0 %v1004
        %v1006 = vand.u32 %v615, 4294901760
        %1007 = vmatprep.subr.mxu0 %v1006
        %v1008 = vand.u32 %v614, 4294901760
        %1009 = vmatpush1.msra.mxu0 %v1008
        %1010 = vmatprep.subr.mxu0 0.0
        %1011 = vmatpush2.msra.mxu0 0.0
        %1012 = vmatprep.subr.mxu0 0.0
        %1013 = vmatpush2.msra.mxu0 0.0
        %1014 = vmatprep.subr.mxu0 0.0
        %1015 = vmatpush2.msra.mxu0 0.0
        %1016 = vmatprep.subr.mxu0 0.0
        %1017 = vmatpush2.msra.mxu0 0.0
        %1018 = vmatprep.subr.mxu0 0.0
        %1019 = vmatpush2.msra.mxu0 0.0
        %1020 = vmatprep.subr.mxu0 0.0
        %1021 = vmatpush2.msra.mxu0 0.0
        %1022 = vmatprep.subr.mxu0 0.0
        %1023 = vmatpush2.msra.mxu0 0.0
        %1024 = vmatprep.subr.mxu0 0.0
        %1025 = vmatpush2.msra.mxu0 0.0
        %1026 = vmatprep.subr.mxu0 0.0
        %1027 = vmatpush2.msra.mxu0 0.0
        %1028 = vmatprep.subr.mxu0 0.0
        %1029 = vmatpush2.msra.mxu0 0.0
        %1030 = vmatprep.subr.mxu0 0.0
        %1031 = vmatpush2.msra.mxu0 0.0
        %1032 = vmatprep.subr.mxu0 0.0
        %1033 = vmatpush2.msra.mxu0 0.0
        %1034 = vmatprep.subr.mxu0 0.0
        %1035 = vmatpush2.msra.mxu0 0.0
        %1036 = vmatprep.subr.mxu0 0.0
        %1037 = vmatpush2.msra.mxu0 0.0
        %1038 = vmatprep.subr.mxu0 0.0
        %1039 = vmatpush2.msra.mxu0 0.0
        %1040 = vmatprep.subr.mxu0 0.0
        %1041 = vmatpush2.msra.mxu0 0.0
        %1042 = vmatprep.mubr.f32.mxu0 0.0
        %v1043 = vand.u32 %v632, 4294901760
        %v1044 = vsub.f32 %v632, %v1043
        %v1045 = vand.u32 %v1044, 4294901760
        %1046 = vmatmul.mubr.f32.gmra.mxu0 %v1045
        %v1047 = vpop.f32.mrf.mxu0
        %v1048 = vadd.f32 %v946, %v1047
        %v1049 = vpop.f32.mrf.mxu0
        %v1050 = vadd.f32 %v948, %v1049
        %1051 = vmatprep.mubr.f32.mxu0 0.0
        %v1052 = vand.u32 %v635, 4294901760
        %v1053 = vsub.f32 %v635, %v1052
        %v1054 = vand.u32 %v1053, 4294901760
        %1055 = vmatmul.mubr.f32.gmra.mxu0 %v1054
        %v1056 = vpop.f32.mrf.mxu0
        %v1057 = vadd.f32 %v954, %v1056
        %v1058 = vpop.f32.mrf.mxu0
        %v1059 = vadd.f32 %v956, %v1058
        %1060 = vmatprep.mubr.f32.mxu0 0.0
        %v1061 = vand.u32 %v638, 4294901760
        %v1062 = vsub.f32 %v638, %v1061
        %v1063 = vand.u32 %v1062, 4294901760
        %1064 = vmatmul.mubr.f32.gmra.mxu0 %v1063
        %v1065 = vpop.f32.mrf.mxu0
        %v1066 = vadd.f32 %v962, %v1065
        %v1067 = vpop.f32.mrf.mxu0
        %v1068 = vadd.f32 %v964, %v1067
        %1069 = vmatprep.mubr.f32.mxu0 0.0
        %v1070 = vand.u32 %v641, 4294901760
        %v1071 = vsub.f32 %v641, %v1070
        %v1072 = vand.u32 %v1071, 4294901760
        %1073 = vmatmul.mubr.f32.gmra.mxu0 %v1072
        %v1074 = vpop.f32.mrf.mxu0
        %v1075 = vadd.f32 %v970, %v1074
        %v1076 = vpop.f32.mrf.mxu0
        %v1077 = vadd.f32 %v972, %v1076
        %1078 = vdwg.mxu0
        %1079 = vmatprep.subr.mxu0 0.0
        %1080 = vmatpush1.msra.mxu0 0.0
        %1081 = vmatprep.subr.mxu0 0.0
        %1082 = vmatpush1.msra.mxu0 0.0
        %1083 = vmatprep.subr.mxu0 0.0
        %1084 = vmatpush1.msra.mxu0 0.0
        %1085 = vmatprep.subr.mxu0 0.0
        %1086 = vmatpush1.msra.mxu0 0.0
        %1087 = vmatprep.subr.mxu0 0.0
        %1088 = vmatpush1.msra.mxu0 0.0
        %1089 = vmatprep.subr.mxu0 0.0
        %1090 = vmatpush1.msra.mxu0 0.0
        %1091 = vmatprep.subr.mxu0 0.0
        %1092 = vmatpush1.msra.mxu0 0.0
        %1093 = vmatprep.subr.mxu0 0.0
        %1094 = vmatpush1.msra.mxu0 0.0
        %1095 = vmatprep.subr.mxu0 0.0
        %1096 = vmatpush1.msra.mxu0 0.0
        %1097 = vmatprep.subr.mxu0 0.0
        %1098 = vmatpush1.msra.mxu0 0.0
        %1099 = vmatprep.subr.mxu0 0.0
        %1100 = vmatpush1.msra.mxu0 0.0
        %1101 = vmatprep.subr.mxu0 0.0
        %1102 = vmatpush1.msra.mxu0 0.0
        %1103 = vmatprep.subr.mxu0 0.0
        %1104 = vmatpush1.msra.mxu0 0.0
        %1105 = vmatprep.subr.mxu0 0.0
        %1106 = vmatpush1.msra.mxu0 0.0
        %v1107 = vand.u32 %v619, 4294901760
        %v1108 = vsub.f32 %v619, %v1107
        %v1109 = vand.u32 %v1108, 4294901760
        %1110 = vmatprep.subr.mxu0 %v1109
        %v1111 = vand.u32 %v618, 4294901760
        %v1112 = vsub.f32 %v618, %v1111
        %v1113 = vand.u32 %v1112, 4294901760
        %1114 = vmatpush1.msra.mxu0 %v1113
        %v1115 = vand.u32 %v615, 4294901760
        %v1116 = vsub.f32 %v615, %v1115
        %v1117 = vand.u32 %v1116, 4294901760
        %1118 = vmatprep.subr.mxu0 %v1117
        %v1119 = vand.u32 %v614, 4294901760
        %v1120 = vsub.f32 %v614, %v1119
        %v1121 = vand.u32 %v1120, 4294901760
        %1122 = vmatpush1.msra.mxu0 %v1121
        %1123 = vmatprep.subr.mxu0 0.0
        %1124 = vmatpush2.msra.mxu0 0.0
        %1125 = vmatprep.subr.mxu0 0.0
        %1126 = vmatpush2.msra.mxu0 0.0
        %1127 = vmatprep.subr.mxu0 0.0
        %1128 = vmatpush2.msra.mxu0 0.0
        %1129 = vmatprep.subr.mxu0 0.0
        %1130 = vmatpush2.msra.mxu0 0.0
        %1131 = vmatprep.subr.mxu0 0.0
        %1132 = vmatpush2.msra.mxu0 0.0
        %1133 = vmatprep.subr.mxu0 0.0
        %1134 = vmatpush2.msra.mxu0 0.0
        %1135 = vmatprep.subr.mxu0 0.0
        %1136 = vmatpush2.msra.mxu0 0.0
        %1137 = vmatprep.subr.mxu0 0.0
        %1138 = vmatpush2.msra.mxu0 0.0
        %1139 = vmatprep.subr.mxu0 0.0
        %1140 = vmatpush2.msra.mxu0 0.0
        %1141 = vmatprep.subr.mxu0 0.0
        %1142 = vmatpush2.msra.mxu0 0.0
        %1143 = vmatprep.subr.mxu0 0.0
        %1144 = vmatpush2.msra.mxu0 0.0
        %1145 = vmatprep.subr.mxu0 0.0
        %1146 = vmatpush2.msra.mxu0 0.0
        %1147 = vmatprep.subr.mxu0 0.0
        %1148 = vmatpush2.msra.mxu0 0.0
        %1149 = vmatprep.subr.mxu0 0.0
        %1150 = vmatpush2.msra.mxu0 0.0
        %1151 = vmatprep.subr.mxu0 0.0
        %1152 = vmatpush2.msra.mxu0 0.0
        %1153 = vmatprep.subr.mxu0 0.0
        %1154 = vmatpush2.msra.mxu0 0.0
        %1155 = vmatprep.mubr.f32.mxu0 0.0
        %v1156 = vand.u32 %v632, 4294901760
        %1157 = vmatmul.mubr.f32.gmra.mxu0 %v1156
        %v1158 = vpop.f32.mrf.mxu0
        %v1159 = vadd.f32 %v1048, %v1158
        %v1160 = vpop.f32.mrf.mxu0
        %v1161 = vadd.f32 %v1050, %v1160
        %1162 = vmatprep.mubr.f32.mxu0 0.0
        %v1163 = vand.u32 %v635, 4294901760
        %1164 = vmatmul.mubr.f32.gmra.mxu0 %v1163
        %v1165 = vpop.f32.mrf.mxu0
        %v1166 = vadd.f32 %v1057, %v1165
        %v1167 = vpop.f32.mrf.mxu0
        %v1168 = vadd.f32 %v1059, %v1167
        %1169 = vmatprep.mubr.f32.mxu0 0.0
        %v1170 = vand.u32 %v638, 4294901760
        %1171 = vmatmul.mubr.f32.gmra.mxu0 %v1170
        %v1172 = vpop.f32.mrf.mxu0
        %v1173 = vadd.f32 %v1066, %v1172
        %v1174 = vpop.f32.mrf.mxu0
        %v1175 = vadd.f32 %v1068, %v1174
        %1176 = vmatprep.mubr.f32.mxu0 0.0
        %v1177 = vand.u32 %v641, 4294901760
        %1178 = vmatmul.mubr.f32.gmra.mxu0 %v1177
        %v1179 = vpop.f32.mrf.mxu0
        %v1180 = vadd.f32 %v1075, %v1179
        %v1181 = vpop.f32.mrf.mxu0
        %v1182 = vadd.f32 %v1077, %v1181
        %1183 = vdwg.mxu0
        %1184 = vmatprep.subr.mxu0 0.0
        %1185 = vmatpush1.msra.mxu0 0.0
        %1186 = vmatprep.subr.mxu0 0.0
        %1187 = vmatpush1.msra.mxu0 0.0
        %1188 = vmatprep.subr.mxu0 0.0
        %1189 = vmatpush1.msra.mxu0 0.0
        %1190 = vmatprep.subr.mxu0 0.0
        %1191 = vmatpush1.msra.mxu0 0.0
        %1192 = vmatprep.subr.mxu0 0.0
        %1193 = vmatpush1.msra.mxu0 0.0
        %1194 = vmatprep.subr.mxu0 0.0
        %1195 = vmatpush1.msra.mxu0 0.0
        %1196 = vmatprep.subr.mxu0 0.0
        %1197 = vmatpush1.msra.mxu0 0.0
        %1198 = vmatprep.subr.mxu0 0.0
        %1199 = vmatpush1.msra.mxu0 0.0
        %1200 = vmatprep.subr.mxu0 0.0
        %1201 = vmatpush1.msra.mxu0 0.0
        %1202 = vmatprep.subr.mxu0 0.0
        %1203 = vmatpush1.msra.mxu0 0.0
        %1204 = vmatprep.subr.mxu0 0.0
        %1205 = vmatpush1.msra.mxu0 0.0
        %1206 = vmatprep.subr.mxu0 0.0
        %1207 = vmatpush1.msra.mxu0 0.0
        %1208 = vmatprep.subr.mxu0 0.0
        %1209 = vmatpush1.msra.mxu0 0.0
        %1210 = vmatprep.subr.mxu0 0.0
        %1211 = vmatpush1.msra.mxu0 0.0
        %v1212 = vand.u32 %v619, 4294901760
        %1213 = vmatprep.subr.mxu0 %v1212
        %v1214 = vand.u32 %v618, 4294901760
        %1215 = vmatpush1.msra.mxu0 %v1214
        %v1216 = vand.u32 %v615, 4294901760
        %1217 = vmatprep.subr.mxu0 %v1216
        %v1218 = vand.u32 %v614, 4294901760
        %1219 = vmatpush1.msra.mxu0 %v1218
        %1220 = vmatprep.subr.mxu0 0.0
        %1221 = vmatpush2.msra.mxu0 0.0
        %1222 = vmatprep.subr.mxu0 0.0
        %1223 = vmatpush2.msra.mxu0 0.0
        %1224 = vmatprep.subr.mxu0 0.0
        %1225 = vmatpush2.msra.mxu0 0.0
        %1226 = vmatprep.subr.mxu0 0.0
        %1227 = vmatpush2.msra.mxu0 0.0
        %1228 = vmatprep.subr.mxu0 0.0
        %1229 = vmatpush2.msra.mxu0 0.0
        %1230 = vmatprep.subr.mxu0 0.0
        %1231 = vmatpush2.msra.mxu0 0.0
        %1232 = vmatprep.subr.mxu0 0.0
        %1233 = vmatpush2.msra.mxu0 0.0
        %1234 = vmatprep.subr.mxu0 0.0
        %1235 = vmatpush2.msra.mxu0 0.0
        %1236 = vmatprep.subr.mxu0 0.0
        %1237 = vmatpush2.msra.mxu0 0.0
        %1238 = vmatprep.subr.mxu0 0.0
        %1239 = vmatpush2.msra.mxu0 0.0
        %1240 = vmatprep.subr.mxu0 0.0
        %1241 = vmatpush2.msra.mxu0 0.0
        %1242 = vmatprep.subr.mxu0 0.0
        %1243 = vmatpush2.msra.mxu0 0.0
        %1244 = vmatprep.subr.mxu0 0.0
        %1245 = vmatpush2.msra.mxu0 0.0
        %1246 = vmatprep.subr.mxu0 0.0
        %1247 = vmatpush2.msra.mxu0 0.0
        %1248 = vmatprep.subr.mxu0 0.0
        %1249 = vmatpush2.msra.mxu0 0.0
        %1250 = vmatprep.subr.mxu0 0.0
        %1251 = vmatpush2.msra.mxu0 0.0
        %1252 = vmatprep.mubr.f32.mxu0 0.0
        %v1253 = vand.u32 %v632, 4294901760
        %1254 = vmatmul.mubr.f32.gmra.mxu0 %v1253
        %v1255 = vpop.f32.mrf.mxu0
        %v1256 = vadd.f32 %v1159, %v1255
        %v1257 = vpop.f32.mrf.mxu0
        %v1258 = vadd.f32 %v1161, %v1257
        %1259 = vmatprep.mubr.f32.mxu0 0.0
        %v1260 = vand.u32 %v635, 4294901760
        %1261 = vmatmul.mubr.f32.gmra.mxu0 %v1260
        %v1262 = vpop.f32.mrf.mxu0
        %v1263 = vadd.f32 %v1166, %v1262
        %v1264 = vpop.f32.mrf.mxu0
        %v1265 = vadd.f32 %v1168, %v1264
        %1266 = vmatprep.mubr.f32.mxu0 0.0
        %v1267 = vand.u32 %v638, 4294901760
        %1268 = vmatmul.mubr.f32.gmra.mxu0 %v1267
        %v1269 = vpop.f32.mrf.mxu0
        %v1270 = vadd.f32 %v1173, %v1269
        %v1271 = vpop.f32.mrf.mxu0
        %v1272 = vadd.f32 %v1175, %v1271
        %1273 = vmatprep.mubr.f32.mxu0 0.0
        %v1274 = vand.u32 %v641, 4294901760
        %1275 = vmatmul.mubr.f32.gmra.mxu0 %v1274
        %v1276 = vpop.f32.mrf.mxu0
        %v1277 = vadd.f32 %v1180, %v1276
        %v1278 = vpop.f32.mrf.mxu0
        %v1279 = vadd.f32 %v1182, %v1278
        %1280 = vdwg.mxu0
        %1281 = vmatprep.subr.mxu0 0.0
        %1282 = vmatpush1.msra.mxu0 0.0
        %1283 = vmatprep.subr.mxu0 0.0
        %1284 = vmatpush1.msra.mxu0 0.0
        %1285 = vmatprep.subr.mxu0 0.0
        %1286 = vmatpush1.msra.mxu0 0.0
        %1287 = vmatprep.subr.mxu0 0.0
        %1288 = vmatpush1.msra.mxu0 0.0
        %1289 = vmatprep.subr.mxu0 0.0
        %1290 = vmatpush1.msra.mxu0 0.0
        %1291 = vmatprep.subr.mxu0 0.0
        %1292 = vmatpush1.msra.mxu0 0.0
        %1293 = vmatprep.subr.mxu0 0.0
        %1294 = vmatpush1.msra.mxu0 0.0
        %1295 = vmatprep.subr.mxu0 0.0
        %1296 = vmatpush1.msra.mxu0 0.0
        %1297 = vmatprep.subr.mxu0 0.0
        %1298 = vmatpush1.msra.mxu0 0.0
        %1299 = vmatprep.subr.mxu0 0.0
        %1300 = vmatpush1.msra.mxu0 0.0
        %1301 = vmatprep.subr.mxu0 0.0
        %1302 = vmatpush1.msra.mxu0 0.0
        %1303 = vmatprep.subr.mxu0 0.0
        %1304 = vmatpush1.msra.mxu0 0.0
        %1305 = vmatprep.subr.mxu0 0.0
        %1306 = vmatpush1.msra.mxu0 0.0
        %1307 = vmatprep.subr.mxu0 0.0
        %1308 = vmatpush1.msra.mxu0 0.0
        %v1309 = vand.u32 %v621, 4294901760
        %1310 = vmatprep.subr.mxu0 %v1309
        %v1311 = vand.u32 %v620, 4294901760
        %1312 = vmatpush1.msra.mxu0 %v1311
        %v1313 = vand.u32 %v617, 4294901760
        %1314 = vmatprep.subr.mxu0 %v1313
        %v1315 = vand.u32 %v616, 4294901760
        %1316 = vmatpush1.msra.mxu0 %v1315
        %1317 = vmatprep.subr.mxu0 0.0
        %1318 = vmatpush2.msra.mxu0 0.0
        %1319 = vmatprep.subr.mxu0 0.0
        %1320 = vmatpush2.msra.mxu0 0.0
        %1321 = vmatprep.subr.mxu0 0.0
        %1322 = vmatpush2.msra.mxu0 0.0
        %1323 = vmatprep.subr.mxu0 0.0
        %1324 = vmatpush2.msra.mxu0 0.0
        %1325 = vmatprep.subr.mxu0 0.0
        %1326 = vmatpush2.msra.mxu0 0.0
        %1327 = vmatprep.subr.mxu0 0.0
        %1328 = vmatpush2.msra.mxu0 0.0
        %1329 = vmatprep.subr.mxu0 0.0
        %1330 = vmatpush2.msra.mxu0 0.0
        %1331 = vmatprep.subr.mxu0 0.0
        %1332 = vmatpush2.msra.mxu0 0.0
        %1333 = vmatprep.subr.mxu0 0.0
        %1334 = vmatpush2.msra.mxu0 0.0
        %1335 = vmatprep.subr.mxu0 0.0
        %1336 = vmatpush2.msra.mxu0 0.0
        %1337 = vmatprep.subr.mxu0 0.0
        %1338 = vmatpush2.msra.mxu0 0.0
        %1339 = vmatprep.subr.mxu0 0.0
        %1340 = vmatpush2.msra.mxu0 0.0
        %1341 = vmatprep.subr.mxu0 0.0
        %1342 = vmatpush2.msra.mxu0 0.0
        %1343 = vmatprep.subr.mxu0 0.0
        %1344 = vmatpush2.msra.mxu0 0.0
        %1345 = vmatprep.subr.mxu0 0.0
        %1346 = vmatpush2.msra.mxu0 0.0
        %1347 = vmatprep.subr.mxu0 0.0
        %1348 = vmatpush2.msra.mxu0 0.0
        %1349 = vmatprep.mubr.f32.mxu0 0.0
        %v1350 = vand.u32 %v632, 4294901760
        %v1351 = vsub.f32 %v632, %v1350
        %v1352 = vand.u32 %v1351, 4294901760
        %v1353 = vsub.f32 %v1351, %v1352
        %v1354 = vand.u32 %v1353, 4294901760
        %1355 = vmatmul.mubr.f32.gmra.mxu0 %v1354
        %v1356 = vpop.f32.mrf.mxu0
        %v1357 = vadd.f32 0.0, %v1356
        %v1358 = vpop.f32.mrf.mxu0
        %v1359 = vadd.f32 0.0, %v1358
        %1360 = vmatprep.mubr.f32.mxu0 0.0
        %v1361 = vand.u32 %v635, 4294901760
        %v1362 = vsub.f32 %v635, %v1361
        %v1363 = vand.u32 %v1362, 4294901760
        %v1364 = vsub.f32 %v1362, %v1363
        %v1365 = vand.u32 %v1364, 4294901760
        %1366 = vmatmul.mubr.f32.gmra.mxu0 %v1365
        %v1367 = vpop.f32.mrf.mxu0
        %v1368 = vadd.f32 0.0, %v1367
        %v1369 = vpop.f32.mrf.mxu0
        %v1370 = vadd.f32 0.0, %v1369
        %1371 = vmatprep.mubr.f32.mxu0 0.0
        %v1372 = vand.u32 %v638, 4294901760
        %v1373 = vsub.f32 %v638, %v1372
        %v1374 = vand.u32 %v1373, 4294901760
        %v1375 = vsub.f32 %v1373, %v1374
        %v1376 = vand.u32 %v1375, 4294901760
        %1377 = vmatmul.mubr.f32.gmra.mxu0 %v1376
        %v1378 = vpop.f32.mrf.mxu0
        %v1379 = vadd.f32 0.0, %v1378
        %v1380 = vpop.f32.mrf.mxu0
        %v1381 = vadd.f32 0.0, %v1380
        %1382 = vmatprep.mubr.f32.mxu0 0.0
        %v1383 = vand.u32 %v641, 4294901760
        %v1384 = vsub.f32 %v641, %v1383
        %v1385 = vand.u32 %v1384, 4294901760
        %v1386 = vsub.f32 %v1384, %v1385
        %v1387 = vand.u32 %v1386, 4294901760
        %1388 = vmatmul.mubr.f32.gmra.mxu0 %v1387
        %v1389 = vpop.f32.mrf.mxu0
        %v1390 = vadd.f32 0.0, %v1389
        %v1391 = vpop.f32.mrf.mxu0
        %v1392 = vadd.f32 0.0, %v1391
        %1393 = vdwg.mxu0
        %1394 = vmatprep.subr.mxu0 0.0
        %1395 = vmatpush1.msra.mxu0 0.0
        %1396 = vmatprep.subr.mxu0 0.0
        %1397 = vmatpush1.msra.mxu0 0.0
        %1398 = vmatprep.subr.mxu0 0.0
        %1399 = vmatpush1.msra.mxu0 0.0
        %1400 = vmatprep.subr.mxu0 0.0
        %1401 = vmatpush1.msra.mxu0 0.0
        %1402 = vmatprep.subr.mxu0 0.0
        %1403 = vmatpush1.msra.mxu0 0.0
        %1404 = vmatprep.subr.mxu0 0.0
        %1405 = vmatpush1.msra.mxu0 0.0
        %1406 = vmatprep.subr.mxu0 0.0
        %1407 = vmatpush1.msra.mxu0 0.0
        %1408 = vmatprep.subr.mxu0 0.0
        %1409 = vmatpush1.msra.mxu0 0.0
        %1410 = vmatprep.subr.mxu0 0.0
        %1411 = vmatpush1.msra.mxu0 0.0
        %1412 = vmatprep.subr.mxu0 0.0
        %1413 = vmatpush1.msra.mxu0 0.0
        %1414 = vmatprep.subr.mxu0 0.0
        %1415 = vmatpush1.msra.mxu0 0.0
        %1416 = vmatprep.subr.mxu0 0.0
        %1417 = vmatpush1.msra.mxu0 0.0
        %1418 = vmatprep.subr.mxu0 0.0
        %1419 = vmatpush1.msra.mxu0 0.0
        %1420 = vmatprep.subr.mxu0 0.0
        %1421 = vmatpush1.msra.mxu0 0.0
        %v1422 = vand.u32 %v621, 4294901760
        %v1423 = vsub.f32 %v621, %v1422
        %v1424 = vand.u32 %v1423, 4294901760
        %v1425 = vsub.f32 %v1423, %v1424
        %v1426 = vand.u32 %v1425, 4294901760
        %1427 = vmatprep.subr.mxu0 %v1426
        %v1428 = vand.u32 %v620, 4294901760
        %v1429 = vsub.f32 %v620, %v1428
        %v1430 = vand.u32 %v1429, 4294901760
        %v1431 = vsub.f32 %v1429, %v1430
        %v1432 = vand.u32 %v1431, 4294901760
        %1433 = vmatpush1.msra.mxu0 %v1432
        %v1434 = vand.u32 %v617, 4294901760
        %v1435 = vsub.f32 %v617, %v1434
        %v1436 = vand.u32 %v1435, 4294901760
        %v1437 = vsub.f32 %v1435, %v1436
        %v1438 = vand.u32 %v1437, 4294901760
        %1439 = vmatprep.subr.mxu0 %v1438
        %v1440 = vand.u32 %v616, 4294901760
        %v1441 = vsub.f32 %v616, %v1440
        %v1442 = vand.u32 %v1441, 4294901760
        %v1443 = vsub.f32 %v1441, %v1442
        %v1444 = vand.u32 %v1443, 4294901760
        %1445 = vmatpush1.msra.mxu0 %v1444
        %1446 = vmatprep.subr.mxu0 0.0
        %1447 = vmatpush2.msra.mxu0 0.0
        %1448 = vmatprep.subr.mxu0 0.0
        %1449 = vmatpush2.msra.mxu0 0.0
        %1450 = vmatprep.subr.mxu0 0.0
        %1451 = vmatpush2.msra.mxu0 0.0
        %1452 = vmatprep.subr.mxu0 0.0
        %1453 = vmatpush2.msra.mxu0 0.0
        %1454 = vmatprep.subr.mxu0 0.0
        %1455 = vmatpush2.msra.mxu0 0.0
        %1456 = vmatprep.subr.mxu0 0.0
        %1457 = vmatpush2.msra.mxu0 0.0
        %1458 = vmatprep.subr.mxu0 0.0
        %1459 = vmatpush2.msra.mxu0 0.0
        %1460 = vmatprep.subr.mxu0 0.0
        %1461 = vmatpush2.msra.mxu0 0.0
        %1462 = vmatprep.subr.mxu0 0.0
        %1463 = vmatpush2.msra.mxu0 0.0
        %1464 = vmatprep.subr.mxu0 0.0
        %1465 = vmatpush2.msra.mxu0 0.0
        %1466 = vmatprep.subr.mxu0 0.0
        %1467 = vmatpush2.msra.mxu0 0.0
        %1468 = vmatprep.subr.mxu0 0.0
        %1469 = vmatpush2.msra.mxu0 0.0
        %1470 = vmatprep.subr.mxu0 0.0
        %1471 = vmatpush2.msra.mxu0 0.0
        %1472 = vmatprep.subr.mxu0 0.0
        %1473 = vmatpush2.msra.mxu0 0.0
        %1474 = vmatprep.subr.mxu0 0.0
        %1475 = vmatpush2.msra.mxu0 0.0
        %1476 = vmatprep.subr.mxu0 0.0
        %1477 = vmatpush2.msra.mxu0 0.0
        %1478 = vmatprep.mubr.f32.mxu0 0.0
        %v1479 = vand.u32 %v632, 4294901760
        %1480 = vmatmul.mubr.f32.gmra.mxu0 %v1479
        %v1481 = vpop.f32.mrf.mxu0
        %v1482 = vadd.f32 %v1357, %v1481
        %v1483 = vpop.f32.mrf.mxu0
        %v1484 = vadd.f32 %v1359, %v1483
        %1485 = vmatprep.mubr.f32.mxu0 0.0
        %v1486 = vand.u32 %v635, 4294901760
        %1487 = vmatmul.mubr.f32.gmra.mxu0 %v1486
        %v1488 = vpop.f32.mrf.mxu0
        %v1489 = vadd.f32 %v1368, %v1488
        %v1490 = vpop.f32.mrf.mxu0
        %v1491 = vadd.f32 %v1370, %v1490
        %1492 = vmatprep.mubr.f32.mxu0 0.0
        %v1493 = vand.u32 %v638, 4294901760
        %1494 = vmatmul.mubr.f32.gmra.mxu0 %v1493
        %v1495 = vpop.f32.mrf.mxu0
        %v1496 = vadd.f32 %v1379, %v1495
        %v1497 = vpop.f32.mrf.mxu0
        %v1498 = vadd.f32 %v1381, %v1497
        %1499 = vmatprep.mubr.f32.mxu0 0.0
        %v1500 = vand.u32 %v641, 4294901760
        %1501 = vmatmul.mubr.f32.gmra.mxu0 %v1500
        %v1502 = vpop.f32.mrf.mxu0
        %v1503 = vadd.f32 %v1390, %v1502
        %v1504 = vpop.f32.mrf.mxu0
        %v1505 = vadd.f32 %v1392, %v1504
        %1506 = vdwg.mxu0
        %1507 = vmatprep.subr.mxu0 0.0
        %1508 = vmatpush1.msra.mxu0 0.0
        %1509 = vmatprep.subr.mxu0 0.0
        %1510 = vmatpush1.msra.mxu0 0.0
        %1511 = vmatprep.subr.mxu0 0.0
        %1512 = vmatpush1.msra.mxu0 0.0
        %1513 = vmatprep.subr.mxu0 0.0
        %1514 = vmatpush1.msra.mxu0 0.0
        %1515 = vmatprep.subr.mxu0 0.0
        %1516 = vmatpush1.msra.mxu0 0.0
        %1517 = vmatprep.subr.mxu0 0.0
        %1518 = vmatpush1.msra.mxu0 0.0
        %1519 = vmatprep.subr.mxu0 0.0
        %1520 = vmatpush1.msra.mxu0 0.0
        %1521 = vmatprep.subr.mxu0 0.0
        %1522 = vmatpush1.msra.mxu0 0.0
        %1523 = vmatprep.subr.mxu0 0.0
        %1524 = vmatpush1.msra.mxu0 0.0
        %1525 = vmatprep.subr.mxu0 0.0
        %1526 = vmatpush1.msra.mxu0 0.0
        %1527 = vmatprep.subr.mxu0 0.0
        %1528 = vmatpush1.msra.mxu0 0.0
        %1529 = vmatprep.subr.mxu0 0.0
        %1530 = vmatpush1.msra.mxu0 0.0
        %1531 = vmatprep.subr.mxu0 0.0
        %1532 = vmatpush1.msra.mxu0 0.0
        %1533 = vmatprep.subr.mxu0 0.0
        %1534 = vmatpush1.msra.mxu0 0.0
        %v1535 = vand.u32 %v621, 4294901760
        %v1536 = vsub.f32 %v621, %v1535
        %1537 = vmatprep.subr.mxu0 %v1536
        %v1538 = vand.u32 %v620, 4294901760
        %v1539 = vsub.f32 %v620, %v1538
        %1540 = vmatpush1.msra.mxu0 %v1539
        %v1541 = vand.u32 %v617, 4294901760
        %v1542 = vsub.f32 %v617, %v1541
        %1543 = vmatprep.subr.mxu0 %v1542
        %v1544 = vand.u32 %v616, 4294901760
        %v1545 = vsub.f32 %v616, %v1544
        %1546 = vmatpush1.msra.mxu0 %v1545
        %1547 = vmatprep.subr.mxu0 0.0
        %1548 = vmatpush2.msra.mxu0 0.0
        %1549 = vmatprep.subr.mxu0 0.0
        %1550 = vmatpush2.msra.mxu0 0.0
        %1551 = vmatprep.subr.mxu0 0.0
        %1552 = vmatpush2.msra.mxu0 0.0
        %1553 = vmatprep.subr.mxu0 0.0
        %1554 = vmatpush2.msra.mxu0 0.0
        %1555 = vmatprep.subr.mxu0 0.0
        %1556 = vmatpush2.msra.mxu0 0.0
        %1557 = vmatprep.subr.mxu0 0.0
        %1558 = vmatpush2.msra.mxu0 0.0
        %1559 = vmatprep.subr.mxu0 0.0
        %1560 = vmatpush2.msra.mxu0 0.0
        %1561 = vmatprep.subr.mxu0 0.0
        %1562 = vmatpush2.msra.mxu0 0.0
        %1563 = vmatprep.subr.mxu0 0.0
        %1564 = vmatpush2.msra.mxu0 0.0
        %1565 = vmatprep.subr.mxu0 0.0
        %1566 = vmatpush2.msra.mxu0 0.0
        %1567 = vmatprep.subr.mxu0 0.0
        %1568 = vmatpush2.msra.mxu0 0.0
        %1569 = vmatprep.subr.mxu0 0.0
        %1570 = vmatpush2.msra.mxu0 0.0
        %1571 = vmatprep.subr.mxu0 0.0
        %1572 = vmatpush2.msra.mxu0 0.0
        %1573 = vmatprep.subr.mxu0 0.0
        %1574 = vmatpush2.msra.mxu0 0.0
        %1575 = vmatprep.subr.mxu0 0.0
        %1576 = vmatpush2.msra.mxu0 0.0
        %1577 = vmatprep.subr.mxu0 0.0
        %1578 = vmatpush2.msra.mxu0 0.0
        %1579 = vmatprep.mubr.f32.mxu0 0.0
        %v1580 = vand.u32 %v632, 4294901760
        %v1581 = vsub.f32 %v632, %v1580
        %1582 = vmatmul.mubr.f32.gmra.mxu0 %v1581
        %v1583 = vpop.f32.mrf.mxu0
        %v1584 = vadd.f32 %v1482, %v1583
        %v1585 = vpop.f32.mrf.mxu0
        %v1586 = vadd.f32 %v1484, %v1585
        %1587 = vmatprep.mubr.f32.mxu0 0.0
        %v1588 = vand.u32 %v635, 4294901760
        %v1589 = vsub.f32 %v635, %v1588
        %1590 = vmatmul.mubr.f32.gmra.mxu0 %v1589
        %v1591 = vpop.f32.mrf.mxu0
        %v1592 = vadd.f32 %v1489, %v1591
        %v1593 = vpop.f32.mrf.mxu0
        %v1594 = vadd.f32 %v1491, %v1593
        %1595 = vmatprep.mubr.f32.mxu0 0.0
        %v1596 = vand.u32 %v638, 4294901760
        %v1597 = vsub.f32 %v638, %v1596
        %1598 = vmatmul.mubr.f32.gmra.mxu0 %v1597
        %v1599 = vpop.f32.mrf.mxu0
        %v1600 = vadd.f32 %v1496, %v1599
        %v1601 = vpop.f32.mrf.mxu0
        %v1602 = vadd.f32 %v1498, %v1601
        %1603 = vmatprep.mubr.f32.mxu0 0.0
        %v1604 = vand.u32 %v641, 4294901760
        %v1605 = vsub.f32 %v641, %v1604
        %1606 = vmatmul.mubr.f32.gmra.mxu0 %v1605
        %v1607 = vpop.f32.mrf.mxu0
        %v1608 = vadd.f32 %v1503, %v1607
        %v1609 = vpop.f32.mrf.mxu0
        %v1610 = vadd.f32 %v1505, %v1609
        %1611 = vdwg.mxu0
        %1612 = vmatprep.subr.mxu0 0.0
        %1613 = vmatpush1.msra.mxu0 0.0
        %1614 = vmatprep.subr.mxu0 0.0
        %1615 = vmatpush1.msra.mxu0 0.0
        %1616 = vmatprep.subr.mxu0 0.0
        %1617 = vmatpush1.msra.mxu0 0.0
        %1618 = vmatprep.subr.mxu0 0.0
        %1619 = vmatpush1.msra.mxu0 0.0
        %1620 = vmatprep.subr.mxu0 0.0
        %1621 = vmatpush1.msra.mxu0 0.0
        %1622 = vmatprep.subr.mxu0 0.0
        %1623 = vmatpush1.msra.mxu0 0.0
        %1624 = vmatprep.subr.mxu0 0.0
        %1625 = vmatpush1.msra.mxu0 0.0
        %1626 = vmatprep.subr.mxu0 0.0
        %1627 = vmatpush1.msra.mxu0 0.0
        %1628 = vmatprep.subr.mxu0 0.0
        %1629 = vmatpush1.msra.mxu0 0.0
        %1630 = vmatprep.subr.mxu0 0.0
        %1631 = vmatpush1.msra.mxu0 0.0
        %1632 = vmatprep.subr.mxu0 0.0
        %1633 = vmatpush1.msra.mxu0 0.0
        %1634 = vmatprep.subr.mxu0 0.0
        %1635 = vmatpush1.msra.mxu0 0.0
        %1636 = vmatprep.subr.mxu0 0.0
        %1637 = vmatpush1.msra.mxu0 0.0
        %1638 = vmatprep.subr.mxu0 0.0
        %1639 = vmatpush1.msra.mxu0 0.0
        %v1640 = vand.u32 %v621, 4294901760
        %1641 = vmatprep.subr.mxu0 %v1640
        %v1642 = vand.u32 %v620, 4294901760
        %1643 = vmatpush1.msra.mxu0 %v1642
        %v1644 = vand.u32 %v617, 4294901760
        %1645 = vmatprep.subr.mxu0 %v1644
        %v1646 = vand.u32 %v616, 4294901760
        %1647 = vmatpush1.msra.mxu0 %v1646
        %1648 = vmatprep.subr.mxu0 0.0
        %1649 = vmatpush2.msra.mxu0 0.0
        %1650 = vmatprep.subr.mxu0 0.0
        %1651 = vmatpush2.msra.mxu0 0.0
        %1652 = vmatprep.subr.mxu0 0.0
        %1653 = vmatpush2.msra.mxu0 0.0
        %1654 = vmatprep.subr.mxu0 0.0
        %1655 = vmatpush2.msra.mxu0 0.0
        %1656 = vmatprep.subr.mxu0 0.0
        %1657 = vmatpush2.msra.mxu0 0.0
        %1658 = vmatprep.subr.mxu0 0.0
        %1659 = vmatpush2.msra.mxu0 0.0
        %1660 = vmatprep.subr.mxu0 0.0
        %1661 = vmatpush2.msra.mxu0 0.0
        %1662 = vmatprep.subr.mxu0 0.0
        %1663 = vmatpush2.msra.mxu0 0.0
        %1664 = vmatprep.subr.mxu0 0.0
        %1665 = vmatpush2.msra.mxu0 0.0
        %1666 = vmatprep.subr.mxu0 0.0
        %1667 = vmatpush2.msra.mxu0 0.0
        %1668 = vmatprep.subr.mxu0 0.0
        %1669 = vmatpush2.msra.mxu0 0.0
        %1670 = vmatprep.subr.mxu0 0.0
        %1671 = vmatpush2.msra.mxu0 0.0
        %1672 = vmatprep.subr.mxu0 0.0
        %1673 = vmatpush2.msra.mxu0 0.0
        %1674 = vmatprep.subr.mxu0 0.0
        %1675 = vmatpush2.msra.mxu0 0.0
        %1676 = vmatprep.subr.mxu0 0.0
        %1677 = vmatpush2.msra.mxu0 0.0
        %1678 = vmatprep.subr.mxu0 0.0
        %1679 = vmatpush2.msra.mxu0 0.0
        %1680 = vmatprep.mubr.f32.mxu0 0.0
        %v1681 = vand.u32 %v632, 4294901760
        %v1682 = vsub.f32 %v632, %v1681
        %v1683 = vand.u32 %v1682, 4294901760
        %1684 = vmatmul.mubr.f32.gmra.mxu0 %v1683
        %v1685 = vpop.f32.mrf.mxu0
        %v1686 = vadd.f32 %v1584, %v1685
        %v1687 = vpop.f32.mrf.mxu0
        %v1688 = vadd.f32 %v1586, %v1687
        %1689 = vmatprep.mubr.f32.mxu0 0.0
        %v1690 = vand.u32 %v635, 4294901760
        %v1691 = vsub.f32 %v635, %v1690
        %v1692 = vand.u32 %v1691, 4294901760
        %1693 = vmatmul.mubr.f32.gmra.mxu0 %v1692
        %v1694 = vpop.f32.mrf.mxu0
        %v1695 = vadd.f32 %v1592, %v1694
        %v1696 = vpop.f32.mrf.mxu0
        %v1697 = vadd.f32 %v1594, %v1696
        %1698 = vmatprep.mubr.f32.mxu0 0.0
        %v1699 = vand.u32 %v638, 4294901760
        %v1700 = vsub.f32 %v638, %v1699
        %v1701 = vand.u32 %v1700, 4294901760
        %1702 = vmatmul.mubr.f32.gmra.mxu0 %v1701
        %v1703 = vpop.f32.mrf.mxu0
        %v1704 = vadd.f32 %v1600, %v1703
        %v1705 = vpop.f32.mrf.mxu0
        %v1706 = vadd.f32 %v1602, %v1705
        %1707 = vmatprep.mubr.f32.mxu0 0.0
        %v1708 = vand.u32 %v641, 4294901760
        %v1709 = vsub.f32 %v641, %v1708
        %v1710 = vand.u32 %v1709, 4294901760
        %1711 = vmatmul.mubr.f32.gmra.mxu0 %v1710
        %v1712 = vpop.f32.mrf.mxu0
        %v1713 = vadd.f32 %v1608, %v1712
        %v1714 = vpop.f32.mrf.mxu0
        %v1715 = vadd.f32 %v1610, %v1714
        %1716 = vdwg.mxu0
        %1717 = vmatprep.subr.mxu0 0.0
        %1718 = vmatpush1.msra.mxu0 0.0
        %1719 = vmatprep.subr.mxu0 0.0
        %1720 = vmatpush1.msra.mxu0 0.0
        %1721 = vmatprep.subr.mxu0 0.0
        %1722 = vmatpush1.msra.mxu0 0.0
        %1723 = vmatprep.subr.mxu0 0.0
        %1724 = vmatpush1.msra.mxu0 0.0
        %1725 = vmatprep.subr.mxu0 0.0
        %1726 = vmatpush1.msra.mxu0 0.0
        %1727 = vmatprep.subr.mxu0 0.0
        %1728 = vmatpush1.msra.mxu0 0.0
        %1729 = vmatprep.subr.mxu0 0.0
        %1730 = vmatpush1.msra.mxu0 0.0
        %1731 = vmatprep.subr.mxu0 0.0
        %1732 = vmatpush1.msra.mxu0 0.0
        %1733 = vmatprep.subr.mxu0 0.0
        %1734 = vmatpush1.msra.mxu0 0.0
        %1735 = vmatprep.subr.mxu0 0.0
        %1736 = vmatpush1.msra.mxu0 0.0
        %1737 = vmatprep.subr.mxu0 0.0
        %1738 = vmatpush1.msra.mxu0 0.0
        %1739 = vmatprep.subr.mxu0 0.0
        %1740 = vmatpush1.msra.mxu0 0.0
        %1741 = vmatprep.subr.mxu0 0.0
        %1742 = vmatpush1.msra.mxu0 0.0
        %1743 = vmatprep.subr.mxu0 0.0
        %1744 = vmatpush1.msra.mxu0 0.0
        %v1745 = vand.u32 %v621, 4294901760
        %v1746 = vsub.f32 %v621, %v1745
        %v1747 = vand.u32 %v1746, 4294901760
        %1748 = vmatprep.subr.mxu0 %v1747
        %v1749 = vand.u32 %v620, 4294901760
        %v1750 = vsub.f32 %v620, %v1749
        %v1751 = vand.u32 %v1750, 4294901760
        %1752 = vmatpush1.msra.mxu0 %v1751
        %v1753 = vand.u32 %v617, 4294901760
        %v1754 = vsub.f32 %v617, %v1753
        %v1755 = vand.u32 %v1754, 4294901760
        %1756 = vmatprep.subr.mxu0 %v1755
        %v1757 = vand.u32 %v616, 4294901760
        %v1758 = vsub.f32 %v616, %v1757
        %v1759 = vand.u32 %v1758, 4294901760
        %1760 = vmatpush1.msra.mxu0 %v1759
        %1761 = vmatprep.subr.mxu0 0.0
        %1762 = vmatpush2.msra.mxu0 0.0
        %1763 = vmatprep.subr.mxu0 0.0
        %1764 = vmatpush2.msra.mxu0 0.0
        %1765 = vmatprep.subr.mxu0 0.0
        %1766 = vmatpush2.msra.mxu0 0.0
        %1767 = vmatprep.subr.mxu0 0.0
        %1768 = vmatpush2.msra.mxu0 0.0
        %1769 = vmatprep.subr.mxu0 0.0
        %1770 = vmatpush2.msra.mxu0 0.0
        %1771 = vmatprep.subr.mxu0 0.0
        %1772 = vmatpush2.msra.mxu0 0.0
        %1773 = vmatprep.subr.mxu0 0.0
        %1774 = vmatpush2.msra.mxu0 0.0
        %1775 = vmatprep.subr.mxu0 0.0
        %1776 = vmatpush2.msra.mxu0 0.0
        %1777 = vmatprep.subr.mxu0 0.0
        %1778 = vmatpush2.msra.mxu0 0.0
        %1779 = vmatprep.subr.mxu0 0.0
        %1780 = vmatpush2.msra.mxu0 0.0
        %1781 = vmatprep.subr.mxu0 0.0
        %1782 = vmatpush2.msra.mxu0 0.0
        %1783 = vmatprep.subr.mxu0 0.0
        %1784 = vmatpush2.msra.mxu0 0.0
        %1785 = vmatprep.subr.mxu0 0.0
        %1786 = vmatpush2.msra.mxu0 0.0
        %1787 = vmatprep.subr.mxu0 0.0
        %1788 = vmatpush2.msra.mxu0 0.0
        %1789 = vmatprep.subr.mxu0 0.0
        %1790 = vmatpush2.msra.mxu0 0.0
        %1791 = vmatprep.subr.mxu0 0.0
        %1792 = vmatpush2.msra.mxu0 0.0
        %1793 = vmatprep.mubr.f32.mxu0 0.0
        %v1794 = vand.u32 %v632, 4294901760
        %1795 = vmatmul.mubr.f32.gmra.mxu0 %v1794
        %v1796 = vpop.f32.mrf.mxu0
        %v1797 = vadd.f32 %v1686, %v1796
        %v1798 = vpop.f32.mrf.mxu0
        %v1799 = vadd.f32 %v1688, %v1798
        %1800 = vmatprep.mubr.f32.mxu0 0.0
        %v1801 = vand.u32 %v635, 4294901760
        %1802 = vmatmul.mubr.f32.gmra.mxu0 %v1801
        %v1803 = vpop.f32.mrf.mxu0
        %v1804 = vadd.f32 %v1695, %v1803
        %v1805 = vpop.f32.mrf.mxu0
        %v1806 = vadd.f32 %v1697, %v1805
        %1807 = vmatprep.mubr.f32.mxu0 0.0
        %v1808 = vand.u32 %v638, 4294901760
        %1809 = vmatmul.mubr.f32.gmra.mxu0 %v1808
        %v1810 = vpop.f32.mrf.mxu0
        %v1811 = vadd.f32 %v1704, %v1810
        %v1812 = vpop.f32.mrf.mxu0
        %v1813 = vadd.f32 %v1706, %v1812
        %1814 = vmatprep.mubr.f32.mxu0 0.0
        %v1815 = vand.u32 %v641, 4294901760
        %1816 = vmatmul.mubr.f32.gmra.mxu0 %v1815
        %v1817 = vpop.f32.mrf.mxu0
        %v1818 = vadd.f32 %v1713, %v1817
        %v1819 = vpop.f32.mrf.mxu0
        %v1820 = vadd.f32 %v1715, %v1819
        %1821 = vdwg.mxu0
        %1822 = vmatprep.subr.mxu0 0.0
        %1823 = vmatpush1.msra.mxu0 0.0
        %1824 = vmatprep.subr.mxu0 0.0
        %1825 = vmatpush1.msra.mxu0 0.0
        %1826 = vmatprep.subr.mxu0 0.0
        %1827 = vmatpush1.msra.mxu0 0.0
        %1828 = vmatprep.subr.mxu0 0.0
        %1829 = vmatpush1.msra.mxu0 0.0
        %1830 = vmatprep.subr.mxu0 0.0
        %1831 = vmatpush1.msra.mxu0 0.0
        %1832 = vmatprep.subr.mxu0 0.0
        %1833 = vmatpush1.msra.mxu0 0.0
        %1834 = vmatprep.subr.mxu0 0.0
        %1835 = vmatpush1.msra.mxu0 0.0
        %1836 = vmatprep.subr.mxu0 0.0
        %1837 = vmatpush1.msra.mxu0 0.0
        %1838 = vmatprep.subr.mxu0 0.0
        %1839 = vmatpush1.msra.mxu0 0.0
        %1840 = vmatprep.subr.mxu0 0.0
        %1841 = vmatpush1.msra.mxu0 0.0
        %1842 = vmatprep.subr.mxu0 0.0
        %1843 = vmatpush1.msra.mxu0 0.0
        %1844 = vmatprep.subr.mxu0 0.0
        %1845 = vmatpush1.msra.mxu0 0.0
        %1846 = vmatprep.subr.mxu0 0.0
        %1847 = vmatpush1.msra.mxu0 0.0
        %1848 = vmatprep.subr.mxu0 0.0
        %1849 = vmatpush1.msra.mxu0 0.0
        %v1850 = vand.u32 %v621, 4294901760
        %1851 = vmatprep.subr.mxu0 %v1850
        %v1852 = vand.u32 %v620, 4294901760
        %1853 = vmatpush1.msra.mxu0 %v1852
        %v1854 = vand.u32 %v617, 4294901760
        %1855 = vmatprep.subr.mxu0 %v1854
        %v1856 = vand.u32 %v616, 4294901760
        %1857 = vmatpush1.msra.mxu0 %v1856
        %1858 = vmatprep.subr.mxu0 0.0
        %1859 = vmatpush2.msra.mxu0 0.0
        %1860 = vmatprep.subr.mxu0 0.0
        %1861 = vmatpush2.msra.mxu0 0.0
        %1862 = vmatprep.subr.mxu0 0.0
        %1863 = vmatpush2.msra.mxu0 0.0
        %1864 = vmatprep.subr.mxu0 0.0
        %1865 = vmatpush2.msra.mxu0 0.0
        %1866 = vmatprep.subr.mxu0 0.0
        %1867 = vmatpush2.msra.mxu0 0.0
        %1868 = vmatprep.subr.mxu0 0.0
        %1869 = vmatpush2.msra.mxu0 0.0
        %1870 = vmatprep.subr.mxu0 0.0
        %1871 = vmatpush2.msra.mxu0 0.0
        %1872 = vmatprep.subr.mxu0 0.0
        %1873 = vmatpush2.msra.mxu0 0.0
        %1874 = vmatprep.subr.mxu0 0.0
        %1875 = vmatpush2.msra.mxu0 0.0
        %1876 = vmatprep.subr.mxu0 0.0
        %1877 = vmatpush2.msra.mxu0 0.0
        %1878 = vmatprep.subr.mxu0 0.0
        %1879 = vmatpush2.msra.mxu0 0.0
        %1880 = vmatprep.subr.mxu0 0.0
        %1881 = vmatpush2.msra.mxu0 0.0
        %1882 = vmatprep.subr.mxu0 0.0
        %1883 = vmatpush2.msra.mxu0 0.0
        %1884 = vmatprep.subr.mxu0 0.0
        %1885 = vmatpush2.msra.mxu0 0.0
        %1886 = vmatprep.subr.mxu0 0.0
        %1887 = vmatpush2.msra.mxu0 0.0
        %1888 = vmatprep.subr.mxu0 0.0
        %1889 = vmatpush2.msra.mxu0 0.0
        %1890 = vmatprep.mubr.f32.mxu0 0.0
        %v1891 = vand.u32 %v632, 4294901760
        %1892 = vmatmul.mubr.f32.gmra.mxu0 %v1891
        %v1893 = vpop.f32.mrf.mxu0
        %v1894 = vadd.f32 %v1797, %v1893
        %v1895 = vpop.f32.mrf.mxu0
        %v1896 = vadd.f32 %v1799, %v1895
        %1897 = vmatprep.mubr.f32.mxu0 0.0
        %v1898 = vand.u32 %v635, 4294901760
        %1899 = vmatmul.mubr.f32.gmra.mxu0 %v1898
        %v1900 = vpop.f32.mrf.mxu0
        %v1901 = vadd.f32 %v1804, %v1900
        %v1902 = vpop.f32.mrf.mxu0
        %v1903 = vadd.f32 %v1806, %v1902
        %1904 = vmatprep.mubr.f32.mxu0 0.0
        %v1905 = vand.u32 %v638, 4294901760
        %1906 = vmatmul.mubr.f32.gmra.mxu0 %v1905
        %v1907 = vpop.f32.mrf.mxu0
        %v1908 = vadd.f32 %v1811, %v1907
        %v1909 = vpop.f32.mrf.mxu0
        %v1910 = vadd.f32 %v1813, %v1909
        %1911 = vmatprep.mubr.f32.mxu0 0.0
        %v1912 = vand.u32 %v641, 4294901760
        %1913 = vmatmul.mubr.f32.gmra.mxu0 %v1912
        %v1914 = vpop.f32.mrf.mxu0
        %v1915 = vadd.f32 %v1818, %v1914
        %v1916 = vpop.f32.mrf.mxu0
        %v1917 = vadd.f32 %v1820, %v1916
        %1918 = vdwg.mxu0
        %vm1919 = vcmask 523264
        %v1921 = vsel %vm1919, %v622, 0
        %v1924 = vsel %vm1919, %v623, 0
        %v1927 = vsel %vm1919, %v624, 0
        %v1930 = vsel %vm1919, %v625, 0
        %1932 = vmatprep.subr.mxu0 0.0
        %1933 = vmatpush1.msra.mxu0 0.0
        %1934 = vmatprep.subr.mxu0 0.0
        %1935 = vmatpush1.msra.mxu0 0.0
        %1936 = vmatprep.subr.mxu0 0.0
        %1937 = vmatpush1.msra.mxu0 0.0
        %1938 = vmatprep.subr.mxu0 0.0
        %1939 = vmatpush1.msra.mxu0 0.0
        %1940 = vmatprep.subr.mxu0 0.0
        %1941 = vmatpush1.msra.mxu0 0.0
        %1942 = vmatprep.subr.mxu0 0.0
        %1943 = vmatpush1.msra.mxu0 0.0
        %1944 = vmatprep.subr.mxu0 0.0
        %1945 = vmatpush1.msra.mxu0 0.0
        %1946 = vmatprep.subr.mxu0 0.0
        %1947 = vmatpush1.msra.mxu0 0.0
        %v1948 = vand.u32 %v603, 4294901760
        %1949 = vmatprep.subr.mxu0 %v1948
        %v1950 = vand.u32 %v602, 4294901760
        %1951 = vmatpush1.msra.mxu0 %v1950
        %v1952 = vand.u32 %v599, 4294901760
        %1953 = vmatprep.subr.mxu0 %v1952
        %v1954 = vand.u32 %v598, 4294901760
        %1955 = vmatpush1.msra.mxu0 %v1954
        %v1956 = vand.u32 %v595, 4294901760
        %1957 = vmatprep.subr.mxu0 %v1956
        %v1958 = vand.u32 %v594, 4294901760
        %1959 = vmatpush1.msra.mxu0 %v1958
        %v1960 = vand.u32 %v591, 4294901760
        %1961 = vmatprep.subr.mxu0 %v1960
        %v1962 = vand.u32 %v590, 4294901760
        %1963 = vmatpush1.msra.mxu0 %v1962
        %v1964 = vand.u32 %v587, 4294901760
        %1965 = vmatprep.subr.mxu0 %v1964
        %v1966 = vand.u32 %v586, 4294901760
        %1967 = vmatpush1.msra.mxu0 %v1966
        %v1968 = vand.u32 %v583, 4294901760
        %1969 = vmatprep.subr.mxu0 %v1968
        %v1970 = vand.u32 %v582, 4294901760
        %1971 = vmatpush1.msra.mxu0 %v1970
        %v1972 = vand.u32 %v579, 4294901760
        %1973 = vmatprep.subr.mxu0 %v1972
        %v1974 = vand.u32 %v578, 4294901760
        %1975 = vmatpush1.msra.mxu0 %v1974
        %v1976 = vand.u32 %v575, 4294901760
        %1977 = vmatprep.subr.mxu0 %v1976
        %v1978 = vand.u32 %v574, 4294901760
        %1979 = vmatpush1.msra.mxu0 %v1978
        %1980 = vmatprep.subr.mxu0 0.0
        %1981 = vmatpush2.msra.mxu0 0.0
        %1982 = vmatprep.subr.mxu0 0.0
        %1983 = vmatpush2.msra.mxu0 0.0
        %1984 = vmatprep.subr.mxu0 0.0
        %1985 = vmatpush2.msra.mxu0 0.0
        %1986 = vmatprep.subr.mxu0 0.0
        %1987 = vmatpush2.msra.mxu0 0.0
        %1988 = vmatprep.subr.mxu0 0.0
        %1989 = vmatpush2.msra.mxu0 0.0
        %1990 = vmatprep.subr.mxu0 0.0
        %1991 = vmatpush2.msra.mxu0 0.0
        %1992 = vmatprep.subr.mxu0 0.0
        %1993 = vmatpush2.msra.mxu0 0.0
        %1994 = vmatprep.subr.mxu0 0.0
        %1995 = vmatpush2.msra.mxu0 0.0
        %1996 = vmatprep.subr.mxu0 0.0
        %1997 = vmatpush2.msra.mxu0 0.0
        %1998 = vmatprep.subr.mxu0 0.0
        %1999 = vmatpush2.msra.mxu0 0.0
        %2000 = vmatprep.subr.mxu0 0.0
        %2001 = vmatpush2.msra.mxu0 0.0
        %2002 = vmatprep.subr.mxu0 0.0
        %2003 = vmatpush2.msra.mxu0 0.0
        %2004 = vmatprep.subr.mxu0 0.0
        %2005 = vmatpush2.msra.mxu0 0.0
        %2006 = vmatprep.subr.mxu0 0.0
        %2007 = vmatpush2.msra.mxu0 0.0
        %2008 = vmatprep.subr.mxu0 0.0
        %2009 = vmatpush2.msra.mxu0 0.0
        %2010 = vmatprep.subr.mxu0 0.0
        %2011 = vmatpush2.msra.mxu0 0.0
        %2012 = vmatprep.mubr.f32.mxu0 0.0
        %v2013 = vand.u32 %v1921, 4294901760
        %v2014 = vsub.f32 %v1921, %v2013
        %v2015 = vand.u32 %v2014, 4294901760
        %v2016 = vsub.f32 %v2014, %v2015
        %v2017 = vand.u32 %v2016, 4294901760
        %2018 = vmatmul.mubr.f32.gmra.mxu0 %v2017
        %v2019 = vpop.f32.mrf.mxu0
        %v2020 = vadd.f32 %v1256, %v2019
        %v2021 = vpop.f32.mrf.mxu0
        %v2022 = vadd.f32 %v1258, %v2021
        %2023 = vmatprep.mubr.f32.mxu0 0.0
        %v2024 = vand.u32 %v1924, 4294901760
        %v2025 = vsub.f32 %v1924, %v2024
        %v2026 = vand.u32 %v2025, 4294901760
        %v2027 = vsub.f32 %v2025, %v2026
        %v2028 = vand.u32 %v2027, 4294901760
        %2029 = vmatmul.mubr.f32.gmra.mxu0 %v2028
        %v2030 = vpop.f32.mrf.mxu0
        %v2031 = vadd.f32 %v1263, %v2030
        %v2032 = vpop.f32.mrf.mxu0
        %v2033 = vadd.f32 %v1265, %v2032
        %2034 = vmatprep.mubr.f32.mxu0 0.0
        %v2035 = vand.u32 %v1927, 4294901760
        %v2036 = vsub.f32 %v1927, %v2035
        %v2037 = vand.u32 %v2036, 4294901760
        %v2038 = vsub.f32 %v2036, %v2037
        %v2039 = vand.u32 %v2038, 4294901760
        %2040 = vmatmul.mubr.f32.gmra.mxu0 %v2039
        %v2041 = vpop.f32.mrf.mxu0
        %v2042 = vadd.f32 %v1270, %v2041
        %v2043 = vpop.f32.mrf.mxu0
        %v2044 = vadd.f32 %v1272, %v2043
        %2045 = vmatprep.mubr.f32.mxu0 0.0
        %v2046 = vand.u32 %v1930, 4294901760
        %v2047 = vsub.f32 %v1930, %v2046
        %v2048 = vand.u32 %v2047, 4294901760
        %v2049 = vsub.f32 %v2047, %v2048
        %v2050 = vand.u32 %v2049, 4294901760
        %2051 = vmatmul.mubr.f32.gmra.mxu0 %v2050
        %v2052 = vpop.f32.mrf.mxu0
        %v2053 = vadd.f32 %v1277, %v2052
        %v2054 = vpop.f32.mrf.mxu0
        %v2055 = vadd.f32 %v1279, %v2054
        %2056 = vdwg.mxu0
        %2057 = vmatprep.subr.mxu0 0.0
        %2058 = vmatpush1.msra.mxu0 0.0
        %2059 = vmatprep.subr.mxu0 0.0
        %2060 = vmatpush1.msra.mxu0 0.0
        %2061 = vmatprep.subr.mxu0 0.0
        %2062 = vmatpush1.msra.mxu0 0.0
        %2063 = vmatprep.subr.mxu0 0.0
        %2064 = vmatpush1.msra.mxu0 0.0
        %2065 = vmatprep.subr.mxu0 0.0
        %2066 = vmatpush1.msra.mxu0 0.0
        %2067 = vmatprep.subr.mxu0 0.0
        %2068 = vmatpush1.msra.mxu0 0.0
        %2069 = vmatprep.subr.mxu0 0.0
        %2070 = vmatpush1.msra.mxu0 0.0
        %2071 = vmatprep.subr.mxu0 0.0
        %2072 = vmatpush1.msra.mxu0 0.0
        %v2073 = vand.u32 %v603, 4294901760
        %v2074 = vsub.f32 %v603, %v2073
        %v2075 = vand.u32 %v2074, 4294901760
        %v2076 = vsub.f32 %v2074, %v2075
        %v2077 = vand.u32 %v2076, 4294901760
        %2078 = vmatprep.subr.mxu0 %v2077
        %v2079 = vand.u32 %v602, 4294901760
        %v2080 = vsub.f32 %v602, %v2079
        %v2081 = vand.u32 %v2080, 4294901760
        %v2082 = vsub.f32 %v2080, %v2081
        %v2083 = vand.u32 %v2082, 4294901760
        %2084 = vmatpush1.msra.mxu0 %v2083
        %v2085 = vand.u32 %v599, 4294901760
        %v2086 = vsub.f32 %v599, %v2085
        %v2087 = vand.u32 %v2086, 4294901760
        %v2088 = vsub.f32 %v2086, %v2087
        %v2089 = vand.u32 %v2088, 4294901760
        %2090 = vmatprep.subr.mxu0 %v2089
        %v2091 = vand.u32 %v598, 4294901760
        %v2092 = vsub.f32 %v598, %v2091
        %v2093 = vand.u32 %v2092, 4294901760
        %v2094 = vsub.f32 %v2092, %v2093
        %v2095 = vand.u32 %v2094, 4294901760
        %2096 = vmatpush1.msra.mxu0 %v2095
        %v2097 = vand.u32 %v595, 4294901760
        %v2098 = vsub.f32 %v595, %v2097
        %v2099 = vand.u32 %v2098, 4294901760
        %v2100 = vsub.f32 %v2098, %v2099
        %v2101 = vand.u32 %v2100, 4294901760
        %2102 = vmatprep.subr.mxu0 %v2101
        %v2103 = vand.u32 %v594, 4294901760
        %v2104 = vsub.f32 %v594, %v2103
        %v2105 = vand.u32 %v2104, 4294901760
        %v2106 = vsub.f32 %v2104, %v2105
        %v2107 = vand.u32 %v2106, 4294901760
        %2108 = vmatpush1.msra.mxu0 %v2107
        %v2109 = vand.u32 %v591, 4294901760
        %v2110 = vsub.f32 %v591, %v2109
        %v2111 = vand.u32 %v2110, 4294901760
        %v2112 = vsub.f32 %v2110, %v2111
        %v2113 = vand.u32 %v2112, 4294901760
        %2114 = vmatprep.subr.mxu0 %v2113
        %v2115 = vand.u32 %v590, 4294901760
        %v2116 = vsub.f32 %v590, %v2115
        %v2117 = vand.u32 %v2116, 4294901760
        %v2118 = vsub.f32 %v2116, %v2117
        %v2119 = vand.u32 %v2118, 4294901760
        %2120 = vmatpush1.msra.mxu0 %v2119
        %v2121 = vand.u32 %v587, 4294901760
        %v2122 = vsub.f32 %v587, %v2121
        %v2123 = vand.u32 %v2122, 4294901760
        %v2124 = vsub.f32 %v2122, %v2123
        %v2125 = vand.u32 %v2124, 4294901760
        %2126 = vmatprep.subr.mxu0 %v2125
        %v2127 = vand.u32 %v586, 4294901760
        %v2128 = vsub.f32 %v586, %v2127
        %v2129 = vand.u32 %v2128, 4294901760
        %v2130 = vsub.f32 %v2128, %v2129
        %v2131 = vand.u32 %v2130, 4294901760
        %2132 = vmatpush1.msra.mxu0 %v2131
        %v2133 = vand.u32 %v583, 4294901760
        %v2134 = vsub.f32 %v583, %v2133
        %v2135 = vand.u32 %v2134, 4294901760
        %v2136 = vsub.f32 %v2134, %v2135
        %v2137 = vand.u32 %v2136, 4294901760
        %2138 = vmatprep.subr.mxu0 %v2137
        %v2139 = vand.u32 %v582, 4294901760
        %v2140 = vsub.f32 %v582, %v2139
        %v2141 = vand.u32 %v2140, 4294901760
        %v2142 = vsub.f32 %v2140, %v2141
        %v2143 = vand.u32 %v2142, 4294901760
        %2144 = vmatpush1.msra.mxu0 %v2143
        %v2145 = vand.u32 %v579, 4294901760
        %v2146 = vsub.f32 %v579, %v2145
        %v2147 = vand.u32 %v2146, 4294901760
        %v2148 = vsub.f32 %v2146, %v2147
        %v2149 = vand.u32 %v2148, 4294901760
        %2150 = vmatprep.subr.mxu0 %v2149
        %v2151 = vand.u32 %v578, 4294901760
        %v2152 = vsub.f32 %v578, %v2151
        %v2153 = vand.u32 %v2152, 4294901760
        %v2154 = vsub.f32 %v2152, %v2153
        %v2155 = vand.u32 %v2154, 4294901760
        %2156 = vmatpush1.msra.mxu0 %v2155
        %v2157 = vand.u32 %v575, 4294901760
        %v2158 = vsub.f32 %v575, %v2157
        %v2159 = vand.u32 %v2158, 4294901760
        %v2160 = vsub.f32 %v2158, %v2159
        %v2161 = vand.u32 %v2160, 4294901760
        %2162 = vmatprep.subr.mxu0 %v2161
        %v2163 = vand.u32 %v574, 4294901760
        %v2164 = vsub.f32 %v574, %v2163
        %v2165 = vand.u32 %v2164, 4294901760
        %v2166 = vsub.f32 %v2164, %v2165
        %v2167 = vand.u32 %v2166, 4294901760
        %2168 = vmatpush1.msra.mxu0 %v2167
        %2169 = vmatprep.subr.mxu0 0.0
        %2170 = vmatpush2.msra.mxu0 0.0
        %2171 = vmatprep.subr.mxu0 0.0
        %2172 = vmatpush2.msra.mxu0 0.0
        %2173 = vmatprep.subr.mxu0 0.0
        %2174 = vmatpush2.msra.mxu0 0.0
        %2175 = vmatprep.subr.mxu0 0.0
        %2176 = vmatpush2.msra.mxu0 0.0
        %2177 = vmatprep.subr.mxu0 0.0
        %2178 = vmatpush2.msra.mxu0 0.0
        %2179 = vmatprep.subr.mxu0 0.0
        %2180 = vmatpush2.msra.mxu0 0.0
        %2181 = vmatprep.subr.mxu0 0.0
        %2182 = vmatpush2.msra.mxu0 0.0
        %2183 = vmatprep.subr.mxu0 0.0
        %2184 = vmatpush2.msra.mxu0 0.0
        %2185 = vmatprep.subr.mxu0 0.0
        %2186 = vmatpush2.msra.mxu0 0.0
        %2187 = vmatprep.subr.mxu0 0.0
        %2188 = vmatpush2.msra.mxu0 0.0
        %2189 = vmatprep.subr.mxu0 0.0
        %2190 = vmatpush2.msra.mxu0 0.0
        %2191 = vmatprep.subr.mxu0 0.0
        %2192 = vmatpush2.msra.mxu0 0.0
        %2193 = vmatprep.subr.mxu0 0.0
        %2194 = vmatpush2.msra.mxu0 0.0
        %2195 = vmatprep.subr.mxu0 0.0
        %2196 = vmatpush2.msra.mxu0 0.0
        %2197 = vmatprep.subr.mxu0 0.0
        %2198 = vmatpush2.msra.mxu0 0.0
        %2199 = vmatprep.subr.mxu0 0.0
        %2200 = vmatpush2.msra.mxu0 0.0
        %2201 = vmatprep.mubr.f32.mxu0 0.0
        %v2202 = vand.u32 %v1921, 4294901760
        %2203 = vmatmul.mubr.f32.gmra.mxu0 %v2202
        %v2204 = vpop.f32.mrf.mxu0
        %v2205 = vadd.f32 %v2020, %v2204
        %v2206 = vpop.f32.mrf.mxu0
        %v2207 = vadd.f32 %v2022, %v2206
        %2208 = vmatprep.mubr.f32.mxu0 0.0
        %v2209 = vand.u32 %v1924, 4294901760
        %2210 = vmatmul.mubr.f32.gmra.mxu0 %v2209
        %v2211 = vpop.f32.mrf.mxu0
        %v2212 = vadd.f32 %v2031, %v2211
        %v2213 = vpop.f32.mrf.mxu0
        %v2214 = vadd.f32 %v2033, %v2213
        %2215 = vmatprep.mubr.f32.mxu0 0.0
        %v2216 = vand.u32 %v1927, 4294901760
        %2217 = vmatmul.mubr.f32.gmra.mxu0 %v2216
        %v2218 = vpop.f32.mrf.mxu0
        %v2219 = vadd.f32 %v2042, %v2218
        %v2220 = vpop.f32.mrf.mxu0
        %v2221 = vadd.f32 %v2044, %v2220
        %2222 = vmatprep.mubr.f32.mxu0 0.0
        %v2223 = vand.u32 %v1930, 4294901760
        %2224 = vmatmul.mubr.f32.gmra.mxu0 %v2223
        %v2225 = vpop.f32.mrf.mxu0
        %v2226 = vadd.f32 %v2053, %v2225
        %v2227 = vpop.f32.mrf.mxu0
        %v2228 = vadd.f32 %v2055, %v2227
        %2229 = vdwg.mxu0
        %2230 = vmatprep.subr.mxu0 0.0
        %2231 = vmatpush1.msra.mxu0 0.0
        %2232 = vmatprep.subr.mxu0 0.0
        %2233 = vmatpush1.msra.mxu0 0.0
        %2234 = vmatprep.subr.mxu0 0.0
        %2235 = vmatpush1.msra.mxu0 0.0
        %2236 = vmatprep.subr.mxu0 0.0
        %2237 = vmatpush1.msra.mxu0 0.0
        %2238 = vmatprep.subr.mxu0 0.0
        %2239 = vmatpush1.msra.mxu0 0.0
        %2240 = vmatprep.subr.mxu0 0.0
        %2241 = vmatpush1.msra.mxu0 0.0
        %2242 = vmatprep.subr.mxu0 0.0
        %2243 = vmatpush1.msra.mxu0 0.0
        %2244 = vmatprep.subr.mxu0 0.0
        %2245 = vmatpush1.msra.mxu0 0.0
        %v2246 = vand.u32 %v603, 4294901760
        %v2247 = vsub.f32 %v603, %v2246
        %2248 = vmatprep.subr.mxu0 %v2247
        %v2249 = vand.u32 %v602, 4294901760
        %v2250 = vsub.f32 %v602, %v2249
        %2251 = vmatpush1.msra.mxu0 %v2250
        %v2252 = vand.u32 %v599, 4294901760
        %v2253 = vsub.f32 %v599, %v2252
        %2254 = vmatprep.subr.mxu0 %v2253
        %v2255 = vand.u32 %v598, 4294901760
        %v2256 = vsub.f32 %v598, %v2255
        %2257 = vmatpush1.msra.mxu0 %v2256
        %v2258 = vand.u32 %v595, 4294901760
        %v2259 = vsub.f32 %v595, %v2258
        %2260 = vmatprep.subr.mxu0 %v2259
        %v2261 = vand.u32 %v594, 4294901760
        %v2262 = vsub.f32 %v594, %v2261
        %2263 = vmatpush1.msra.mxu0 %v2262
        %v2264 = vand.u32 %v591, 4294901760
        %v2265 = vsub.f32 %v591, %v2264
        %2266 = vmatprep.subr.mxu0 %v2265
        %v2267 = vand.u32 %v590, 4294901760
        %v2268 = vsub.f32 %v590, %v2267
        %2269 = vmatpush1.msra.mxu0 %v2268
        %v2270 = vand.u32 %v587, 4294901760
        %v2271 = vsub.f32 %v587, %v2270
        %2272 = vmatprep.subr.mxu0 %v2271
        %v2273 = vand.u32 %v586, 4294901760
        %v2274 = vsub.f32 %v586, %v2273
        %2275 = vmatpush1.msra.mxu0 %v2274
        %v2276 = vand.u32 %v583, 4294901760
        %v2277 = vsub.f32 %v583, %v2276
        %2278 = vmatprep.subr.mxu0 %v2277
        %v2279 = vand.u32 %v582, 4294901760
        %v2280 = vsub.f32 %v582, %v2279
        %2281 = vmatpush1.msra.mxu0 %v2280
        %v2282 = vand.u32 %v579, 4294901760
        %v2283 = vsub.f32 %v579, %v2282
        %2284 = vmatprep.subr.mxu0 %v2283
        %v2285 = vand.u32 %v578, 4294901760
        %v2286 = vsub.f32 %v578, %v2285
        %2287 = vmatpush1.msra.mxu0 %v2286
        %v2288 = vand.u32 %v575, 4294901760
        %v2289 = vsub.f32 %v575, %v2288
        %2290 = vmatprep.subr.mxu0 %v2289
        %v2291 = vand.u32 %v574, 4294901760
        %v2292 = vsub.f32 %v574, %v2291
        %2293 = vmatpush1.msra.mxu0 %v2292
        %2294 = vmatprep.subr.mxu0 0.0
        %2295 = vmatpush2.msra.mxu0 0.0
        %2296 = vmatprep.subr.mxu0 0.0
        %2297 = vmatpush2.msra.mxu0 0.0
        %2298 = vmatprep.subr.mxu0 0.0
        %2299 = vmatpush2.msra.mxu0 0.0
        %2300 = vmatprep.subr.mxu0 0.0
        %2301 = vmatpush2.msra.mxu0 0.0
        %2302 = vmatprep.subr.mxu0 0.0
        %2303 = vmatpush2.msra.mxu0 0.0
        %2304 = vmatprep.subr.mxu0 0.0
        %2305 = vmatpush2.msra.mxu0 0.0
        %2306 = vmatprep.subr.mxu0 0.0
        %2307 = vmatpush2.msra.mxu0 0.0
        %2308 = vmatprep.subr.mxu0 0.0
        %2309 = vmatpush2.msra.mxu0 0.0
        %2310 = vmatprep.subr.mxu0 0.0
        %2311 = vmatpush2.msra.mxu0 0.0
        %2312 = vmatprep.subr.mxu0 0.0
        %2313 = vmatpush2.msra.mxu0 0.0
        %2314 = vmatprep.subr.mxu0 0.0
        %2315 = vmatpush2.msra.mxu0 0.0
        %2316 = vmatprep.subr.mxu0 0.0
        %2317 = vmatpush2.msra.mxu0 0.0
        %2318 = vmatprep.subr.mxu0 0.0
        %2319 = vmatpush2.msra.mxu0 0.0
        %2320 = vmatprep.subr.mxu0 0.0
        %2321 = vmatpush2.msra.mxu0 0.0
        %2322 = vmatprep.subr.mxu0 0.0
        %2323 = vmatpush2.msra.mxu0 0.0
        %2324 = vmatprep.subr.mxu0 0.0
        %2325 = vmatpush2.msra.mxu0 0.0
        %2326 = vmatprep.mubr.f32.mxu0 0.0
        %v2327 = vand.u32 %v1921, 4294901760
        %v2328 = vsub.f32 %v1921, %v2327
        %2329 = vmatmul.mubr.f32.gmra.mxu0 %v2328
        %v2330 = vpop.f32.mrf.mxu0
        %v2331 = vadd.f32 %v2205, %v2330
        %v2332 = vpop.f32.mrf.mxu0
        %v2333 = vadd.f32 %v2207, %v2332
        %2334 = vmatprep.mubr.f32.mxu0 0.0
        %v2335 = vand.u32 %v1924, 4294901760
        %v2336 = vsub.f32 %v1924, %v2335
        %2337 = vmatmul.mubr.f32.gmra.mxu0 %v2336
        %v2338 = vpop.f32.mrf.mxu0
        %v2339 = vadd.f32 %v2212, %v2338
        %v2340 = vpop.f32.mrf.mxu0
        %v2341 = vadd.f32 %v2214, %v2340
        %2342 = vmatprep.mubr.f32.mxu0 0.0
        %v2343 = vand.u32 %v1927, 4294901760
        %v2344 = vsub.f32 %v1927, %v2343
        %2345 = vmatmul.mubr.f32.gmra.mxu0 %v2344
        %v2346 = vpop.f32.mrf.mxu0
        %v2347 = vadd.f32 %v2219, %v2346
        %v2348 = vpop.f32.mrf.mxu0
        %v2349 = vadd.f32 %v2221, %v2348
        %2350 = vmatprep.mubr.f32.mxu0 0.0
        %v2351 = vand.u32 %v1930, 4294901760
        %v2352 = vsub.f32 %v1930, %v2351
        %2353 = vmatmul.mubr.f32.gmra.mxu0 %v2352
        %v2354 = vpop.f32.mrf.mxu0
        %v2355 = vadd.f32 %v2226, %v2354
        %v2356 = vpop.f32.mrf.mxu0
        %v2357 = vadd.f32 %v2228, %v2356
        %2358 = vdwg.mxu0
        %2359 = vmatprep.subr.mxu0 0.0
        %2360 = vmatpush1.msra.mxu0 0.0
        %2361 = vmatprep.subr.mxu0 0.0
        %2362 = vmatpush1.msra.mxu0 0.0
        %2363 = vmatprep.subr.mxu0 0.0
        %2364 = vmatpush1.msra.mxu0 0.0
        %2365 = vmatprep.subr.mxu0 0.0
        %2366 = vmatpush1.msra.mxu0 0.0
        %2367 = vmatprep.subr.mxu0 0.0
        %2368 = vmatpush1.msra.mxu0 0.0
        %2369 = vmatprep.subr.mxu0 0.0
        %2370 = vmatpush1.msra.mxu0 0.0
        %2371 = vmatprep.subr.mxu0 0.0
        %2372 = vmatpush1.msra.mxu0 0.0
        %2373 = vmatprep.subr.mxu0 0.0
        %2374 = vmatpush1.msra.mxu0 0.0
        %v2375 = vand.u32 %v603, 4294901760
        %2376 = vmatprep.subr.mxu0 %v2375
        %v2377 = vand.u32 %v602, 4294901760
        %2378 = vmatpush1.msra.mxu0 %v2377
        %v2379 = vand.u32 %v599, 4294901760
        %2380 = vmatprep.subr.mxu0 %v2379
        %v2381 = vand.u32 %v598, 4294901760
        %2382 = vmatpush1.msra.mxu0 %v2381
        %v2383 = vand.u32 %v595, 4294901760
        %2384 = vmatprep.subr.mxu0 %v2383
        %v2385 = vand.u32 %v594, 4294901760
        %2386 = vmatpush1.msra.mxu0 %v2385
        %v2387 = vand.u32 %v591, 4294901760
        %2388 = vmatprep.subr.mxu0 %v2387
        %v2389 = vand.u32 %v590, 4294901760
        %2390 = vmatpush1.msra.mxu0 %v2389
        %v2391 = vand.u32 %v587, 4294901760
        %2392 = vmatprep.subr.mxu0 %v2391
        %v2393 = vand.u32 %v586, 4294901760
        %2394 = vmatpush1.msra.mxu0 %v2393
        %v2395 = vand.u32 %v583, 4294901760
        %2396 = vmatprep.subr.mxu0 %v2395
        %v2397 = vand.u32 %v582, 4294901760
        %2398 = vmatpush1.msra.mxu0 %v2397
        %v2399 = vand.u32 %v579, 4294901760
        %2400 = vmatprep.subr.mxu0 %v2399
        %v2401 = vand.u32 %v578, 4294901760
        %2402 = vmatpush1.msra.mxu0 %v2401
        %v2403 = vand.u32 %v575, 4294901760
        %2404 = vmatprep.subr.mxu0 %v2403
        %v2405 = vand.u32 %v574, 4294901760
        %2406 = vmatpush1.msra.mxu0 %v2405
        %2407 = vmatprep.subr.mxu0 0.0
        %2408 = vmatpush2.msra.mxu0 0.0
        %2409 = vmatprep.subr.mxu0 0.0
        %2410 = vmatpush2.msra.mxu0 0.0
        %2411 = vmatprep.subr.mxu0 0.0
        %2412 = vmatpush2.msra.mxu0 0.0
        %2413 = vmatprep.subr.mxu0 0.0
        %2414 = vmatpush2.msra.mxu0 0.0
        %2415 = vmatprep.subr.mxu0 0.0
        %2416 = vmatpush2.msra.mxu0 0.0
        %2417 = vmatprep.subr.mxu0 0.0
        %2418 = vmatpush2.msra.mxu0 0.0
        %2419 = vmatprep.subr.mxu0 0.0
        %2420 = vmatpush2.msra.mxu0 0.0
        %2421 = vmatprep.subr.mxu0 0.0
        %2422 = vmatpush2.msra.mxu0 0.0
        %2423 = vmatprep.subr.mxu0 0.0
        %2424 = vmatpush2.msra.mxu0 0.0
        %2425 = vmatprep.subr.mxu0 0.0
        %2426 = vmatpush2.msra.mxu0 0.0
        %2427 = vmatprep.subr.mxu0 0.0
        %2428 = vmatpush2.msra.mxu0 0.0
        %2429 = vmatprep.subr.mxu0 0.0
        %2430 = vmatpush2.msra.mxu0 0.0
        %2431 = vmatprep.subr.mxu0 0.0
        %2432 = vmatpush2.msra.mxu0 0.0
        %2433 = vmatprep.subr.mxu0 0.0
        %2434 = vmatpush2.msra.mxu0 0.0
        %2435 = vmatprep.subr.mxu0 0.0
        %2436 = vmatpush2.msra.mxu0 0.0
        %2437 = vmatprep.subr.mxu0 0.0
        %2438 = vmatpush2.msra.mxu0 0.0
        %2439 = vmatprep.mubr.f32.mxu0 0.0
        %v2440 = vand.u32 %v1921, 4294901760
        %v2441 = vsub.f32 %v1921, %v2440
        %v2442 = vand.u32 %v2441, 4294901760
        %2443 = vmatmul.mubr.f32.gmra.mxu0 %v2442
        %v2444 = vpop.f32.mrf.mxu0
        %v2445 = vadd.f32 %v2331, %v2444
        %v2446 = vpop.f32.mrf.mxu0
        %v2447 = vadd.f32 %v2333, %v2446
        %2448 = vmatprep.mubr.f32.mxu0 0.0
        %v2449 = vand.u32 %v1924, 4294901760
        %v2450 = vsub.f32 %v1924, %v2449
        %v2451 = vand.u32 %v2450, 4294901760
        %2452 = vmatmul.mubr.f32.gmra.mxu0 %v2451
        %v2453 = vpop.f32.mrf.mxu0
        %v2454 = vadd.f32 %v2339, %v2453
        %v2455 = vpop.f32.mrf.mxu0
        %v2456 = vadd.f32 %v2341, %v2455
        %2457 = vmatprep.mubr.f32.mxu0 0.0
        %v2458 = vand.u32 %v1927, 4294901760
        %v2459 = vsub.f32 %v1927, %v2458
        %v2460 = vand.u32 %v2459, 4294901760
        %2461 = vmatmul.mubr.f32.gmra.mxu0 %v2460
        %v2462 = vpop.f32.mrf.mxu0
        %v2463 = vadd.f32 %v2347, %v2462
        %v2464 = vpop.f32.mrf.mxu0
        %v2465 = vadd.f32 %v2349, %v2464
        %2466 = vmatprep.mubr.f32.mxu0 0.0
        %v2467 = vand.u32 %v1930, 4294901760
        %v2468 = vsub.f32 %v1930, %v2467
        %v2469 = vand.u32 %v2468, 4294901760
        %2470 = vmatmul.mubr.f32.gmra.mxu0 %v2469
        %v2471 = vpop.f32.mrf.mxu0
        %v2472 = vadd.f32 %v2355, %v2471
        %v2473 = vpop.f32.mrf.mxu0
        %v2474 = vadd.f32 %v2357, %v2473
        %2475 = vdwg.mxu0
        %2476 = vmatprep.subr.mxu0 0.0
        %2477 = vmatpush1.msra.mxu0 0.0
        %2478 = vmatprep.subr.mxu0 0.0
        %2479 = vmatpush1.msra.mxu0 0.0
        %2480 = vmatprep.subr.mxu0 0.0
        %2481 = vmatpush1.msra.mxu0 0.0
        %2482 = vmatprep.subr.mxu0 0.0
        %2483 = vmatpush1.msra.mxu0 0.0
        %2484 = vmatprep.subr.mxu0 0.0
        %2485 = vmatpush1.msra.mxu0 0.0
        %2486 = vmatprep.subr.mxu0 0.0
        %2487 = vmatpush1.msra.mxu0 0.0
        %2488 = vmatprep.subr.mxu0 0.0
        %2489 = vmatpush1.msra.mxu0 0.0
        %2490 = vmatprep.subr.mxu0 0.0
        %2491 = vmatpush1.msra.mxu0 0.0
        %v2492 = vand.u32 %v603, 4294901760
        %v2493 = vsub.f32 %v603, %v2492
        %v2494 = vand.u32 %v2493, 4294901760
        %2495 = vmatprep.subr.mxu0 %v2494
        %v2496 = vand.u32 %v602, 4294901760
        %v2497 = vsub.f32 %v602, %v2496
        %v2498 = vand.u32 %v2497, 4294901760
        %2499 = vmatpush1.msra.mxu0 %v2498
        %v2500 = vand.u32 %v599, 4294901760
        %v2501 = vsub.f32 %v599, %v2500
        %v2502 = vand.u32 %v2501, 4294901760
        %2503 = vmatprep.subr.mxu0 %v2502
        %v2504 = vand.u32 %v598, 4294901760
        %v2505 = vsub.f32 %v598, %v2504
        %v2506 = vand.u32 %v2505, 4294901760
        %2507 = vmatpush1.msra.mxu0 %v2506
        %v2508 = vand.u32 %v595, 4294901760
        %v2509 = vsub.f32 %v595, %v2508
        %v2510 = vand.u32 %v2509, 4294901760
        %2511 = vmatprep.subr.mxu0 %v2510
        %v2512 = vand.u32 %v594, 4294901760
        %v2513 = vsub.f32 %v594, %v2512
        %v2514 = vand.u32 %v2513, 4294901760
        %2515 = vmatpush1.msra.mxu0 %v2514
        %v2516 = vand.u32 %v591, 4294901760
        %v2517 = vsub.f32 %v591, %v2516
        %v2518 = vand.u32 %v2517, 4294901760
        %2519 = vmatprep.subr.mxu0 %v2518
        %v2520 = vand.u32 %v590, 4294901760
        %v2521 = vsub.f32 %v590, %v2520
        %v2522 = vand.u32 %v2521, 4294901760
        %2523 = vmatpush1.msra.mxu0 %v2522
        %v2524 = vand.u32 %v587, 4294901760
        %v2525 = vsub.f32 %v587, %v2524
        %v2526 = vand.u32 %v2525, 4294901760
        %2527 = vmatprep.subr.mxu0 %v2526
        %v2528 = vand.u32 %v586, 4294901760
        %v2529 = vsub.f32 %v586, %v2528
        %v2530 = vand.u32 %v2529, 4294901760
        %2531 = vmatpush1.msra.mxu0 %v2530
        %v2532 = vand.u32 %v583, 4294901760
        %v2533 = vsub.f32 %v583, %v2532
        %v2534 = vand.u32 %v2533, 4294901760
        %2535 = vmatprep.subr.mxu0 %v2534
        %v2536 = vand.u32 %v582, 4294901760
        %v2537 = vsub.f32 %v582, %v2536
        %v2538 = vand.u32 %v2537, 4294901760
        %2539 = vmatpush1.msra.mxu0 %v2538
        %v2540 = vand.u32 %v579, 4294901760
        %v2541 = vsub.f32 %v579, %v2540
        %v2542 = vand.u32 %v2541, 4294901760
        %2543 = vmatprep.subr.mxu0 %v2542
        %v2544 = vand.u32 %v578, 4294901760
        %v2545 = vsub.f32 %v578, %v2544
        %v2546 = vand.u32 %v2545, 4294901760
        %2547 = vmatpush1.msra.mxu0 %v2546
        %v2548 = vand.u32 %v575, 4294901760
        %v2549 = vsub.f32 %v575, %v2548
        %v2550 = vand.u32 %v2549, 4294901760
        %2551 = vmatprep.subr.mxu0 %v2550
        %v2552 = vand.u32 %v574, 4294901760
        %v2553 = vsub.f32 %v574, %v2552
        %v2554 = vand.u32 %v2553, 4294901760
        %2555 = vmatpush1.msra.mxu0 %v2554
        %2556 = vmatprep.subr.mxu0 0.0
        %2557 = vmatpush2.msra.mxu0 0.0
        %2558 = vmatprep.subr.mxu0 0.0
        %2559 = vmatpush2.msra.mxu0 0.0
        %2560 = vmatprep.subr.mxu0 0.0
        %2561 = vmatpush2.msra.mxu0 0.0
        %2562 = vmatprep.subr.mxu0 0.0
        %2563 = vmatpush2.msra.mxu0 0.0
        %2564 = vmatprep.subr.mxu0 0.0
        %2565 = vmatpush2.msra.mxu0 0.0
        %2566 = vmatprep.subr.mxu0 0.0
        %2567 = vmatpush2.msra.mxu0 0.0
        %2568 = vmatprep.subr.mxu0 0.0
        %2569 = vmatpush2.msra.mxu0 0.0
        %2570 = vmatprep.subr.mxu0 0.0
        %2571 = vmatpush2.msra.mxu0 0.0
        %2572 = vmatprep.subr.mxu0 0.0
        %2573 = vmatpush2.msra.mxu0 0.0
        %2574 = vmatprep.subr.mxu0 0.0
        %2575 = vmatpush2.msra.mxu0 0.0
        %2576 = vmatprep.subr.mxu0 0.0
        %2577 = vmatpush2.msra.mxu0 0.0
        %2578 = vmatprep.subr.mxu0 0.0
        %2579 = vmatpush2.msra.mxu0 0.0
        %2580 = vmatprep.subr.mxu0 0.0
        %2581 = vmatpush2.msra.mxu0 0.0
        %2582 = vmatprep.subr.mxu0 0.0
        %2583 = vmatpush2.msra.mxu0 0.0
        %2584 = vmatprep.subr.mxu0 0.0
        %2585 = vmatpush2.msra.mxu0 0.0
        %2586 = vmatprep.subr.mxu0 0.0
        %2587 = vmatpush2.msra.mxu0 0.0
        %2588 = vmatprep.mubr.f32.mxu0 0.0
        %v2589 = vand.u32 %v1921, 4294901760
        %2590 = vmatmul.mubr.f32.gmra.mxu0 %v2589
        %v2591 = vpop.f32.mrf.mxu0
        %v2592 = vadd.f32 %v2445, %v2591
        %v2593 = vpop.f32.mrf.mxu0
        %v2594 = vadd.f32 %v2447, %v2593
        %2595 = vmatprep.mubr.f32.mxu0 0.0
        %v2596 = vand.u32 %v1924, 4294901760
        %2597 = vmatmul.mubr.f32.gmra.mxu0 %v2596
        %v2598 = vpop.f32.mrf.mxu0
        %v2599 = vadd.f32 %v2454, %v2598
        %v2600 = vpop.f32.mrf.mxu0
        %v2601 = vadd.f32 %v2456, %v2600
        %2602 = vmatprep.mubr.f32.mxu0 0.0
        %v2603 = vand.u32 %v1927, 4294901760
        %2604 = vmatmul.mubr.f32.gmra.mxu0 %v2603
        %v2605 = vpop.f32.mrf.mxu0
        %v2606 = vadd.f32 %v2463, %v2605
        %v2607 = vpop.f32.mrf.mxu0
        %v2608 = vadd.f32 %v2465, %v2607
        %2609 = vmatprep.mubr.f32.mxu0 0.0
        %v2610 = vand.u32 %v1930, 4294901760
        %2611 = vmatmul.mubr.f32.gmra.mxu0 %v2610
        %v2612 = vpop.f32.mrf.mxu0
        %v2613 = vadd.f32 %v2472, %v2612
        %v2614 = vpop.f32.mrf.mxu0
        %v2615 = vadd.f32 %v2474, %v2614
        %2616 = vdwg.mxu0
        %2617 = vmatprep.subr.mxu0 0.0
        %2618 = vmatpush1.msra.mxu0 0.0
        %2619 = vmatprep.subr.mxu0 0.0
        %2620 = vmatpush1.msra.mxu0 0.0
        %2621 = vmatprep.subr.mxu0 0.0
        %2622 = vmatpush1.msra.mxu0 0.0
        %2623 = vmatprep.subr.mxu0 0.0
        %2624 = vmatpush1.msra.mxu0 0.0
        %2625 = vmatprep.subr.mxu0 0.0
        %2626 = vmatpush1.msra.mxu0 0.0
        %2627 = vmatprep.subr.mxu0 0.0
        %2628 = vmatpush1.msra.mxu0 0.0
        %2629 = vmatprep.subr.mxu0 0.0
        %2630 = vmatpush1.msra.mxu0 0.0
        %2631 = vmatprep.subr.mxu0 0.0
        %2632 = vmatpush1.msra.mxu0 0.0
        %v2633 = vand.u32 %v603, 4294901760
        %2634 = vmatprep.subr.mxu0 %v2633
        %v2635 = vand.u32 %v602, 4294901760
        %2636 = vmatpush1.msra.mxu0 %v2635
        %v2637 = vand.u32 %v599, 4294901760
        %2638 = vmatprep.subr.mxu0 %v2637
        %v2639 = vand.u32 %v598, 4294901760
        %2640 = vmatpush1.msra.mxu0 %v2639
        %v2641 = vand.u32 %v595, 4294901760
        %2642 = vmatprep.subr.mxu0 %v2641
        %v2643 = vand.u32 %v594, 4294901760
        %2644 = vmatpush1.msra.mxu0 %v2643
        %v2645 = vand.u32 %v591, 4294901760
        %2646 = vmatprep.subr.mxu0 %v2645
        %v2647 = vand.u32 %v590, 4294901760
        %2648 = vmatpush1.msra.mxu0 %v2647
        %v2649 = vand.u32 %v587, 4294901760
        %2650 = vmatprep.subr.mxu0 %v2649
        %v2651 = vand.u32 %v586, 4294901760
        %2652 = vmatpush1.msra.mxu0 %v2651
        %v2653 = vand.u32 %v583, 4294901760
        %2654 = vmatprep.subr.mxu0 %v2653
        %v2655 = vand.u32 %v582, 4294901760
        %2656 = vmatpush1.msra.mxu0 %v2655
        %v2657 = vand.u32 %v579, 4294901760
        %2658 = vmatprep.subr.mxu0 %v2657
        %v2659 = vand.u32 %v578, 4294901760
        %2660 = vmatpush1.msra.mxu0 %v2659
        %v2661 = vand.u32 %v575, 4294901760
        %2662 = vmatprep.subr.mxu0 %v2661
        %v2663 = vand.u32 %v574, 4294901760
        %2664 = vmatpush1.msra.mxu0 %v2663
        %2665 = vmatprep.subr.mxu0 0.0
        %2666 = vmatpush2.msra.mxu0 0.0
        %2667 = vmatprep.subr.mxu0 0.0
        %2668 = vmatpush2.msra.mxu0 0.0
        %2669 = vmatprep.subr.mxu0 0.0
        %2670 = vmatpush2.msra.mxu0 0.0
        %2671 = vmatprep.subr.mxu0 0.0
        %2672 = vmatpush2.msra.mxu0 0.0
        %2673 = vmatprep.subr.mxu0 0.0
        %2674 = vmatpush2.msra.mxu0 0.0
        %2675 = vmatprep.subr.mxu0 0.0
        %2676 = vmatpush2.msra.mxu0 0.0
        %2677 = vmatprep.subr.mxu0 0.0
        %2678 = vmatpush2.msra.mxu0 0.0
        %2679 = vmatprep.subr.mxu0 0.0
        %2680 = vmatpush2.msra.mxu0 0.0
        %2681 = vmatprep.subr.mxu0 0.0
        %2682 = vmatpush2.msra.mxu0 0.0
        %2683 = vmatprep.subr.mxu0 0.0
        %2684 = vmatpush2.msra.mxu0 0.0
        %2685 = vmatprep.subr.mxu0 0.0
        %2686 = vmatpush2.msra.mxu0 0.0
        %2687 = vmatprep.subr.mxu0 0.0
        %2688 = vmatpush2.msra.mxu0 0.0
        %2689 = vmatprep.subr.mxu0 0.0
        %2690 = vmatpush2.msra.mxu0 0.0
        %2691 = vmatprep.subr.mxu0 0.0
        %2692 = vmatpush2.msra.mxu0 0.0
        %2693 = vmatprep.subr.mxu0 0.0
        %2694 = vmatpush2.msra.mxu0 0.0
        %2695 = vmatprep.subr.mxu0 0.0
        %2696 = vmatpush2.msra.mxu0 0.0
        %2697 = vmatprep.mubr.f32.mxu0 0.0
        %v2698 = vand.u32 %v1921, 4294901760
        %2699 = vmatmul.mubr.f32.gmra.mxu0 %v2698
        %v2700 = vpop.f32.mrf.mxu0
        %v2701 = vadd.f32 %v2592, %v2700
        %v2702 = vpop.f32.mrf.mxu0
        %v2703 = vadd.f32 %v2594, %v2702
        %2704 = vmatprep.mubr.f32.mxu0 0.0
        %v2705 = vand.u32 %v1924, 4294901760
        %2706 = vmatmul.mubr.f32.gmra.mxu0 %v2705
        %v2707 = vpop.f32.mrf.mxu0
        %v2708 = vadd.f32 %v2599, %v2707
        %v2709 = vpop.f32.mrf.mxu0
        %v2710 = vadd.f32 %v2601, %v2709
        %2711 = vmatprep.mubr.f32.mxu0 0.0
        %v2712 = vand.u32 %v1927, 4294901760
        %2713 = vmatmul.mubr.f32.gmra.mxu0 %v2712
        %v2714 = vpop.f32.mrf.mxu0
        %v2715 = vadd.f32 %v2606, %v2714
        %v2716 = vpop.f32.mrf.mxu0
        %v2717 = vadd.f32 %v2608, %v2716
        %2718 = vmatprep.mubr.f32.mxu0 0.0
        %v2719 = vand.u32 %v1930, 4294901760
        %2720 = vmatmul.mubr.f32.gmra.mxu0 %v2719
        %v2721 = vpop.f32.mrf.mxu0
        %v2722 = vadd.f32 %v2613, %v2721
        %v2723 = vpop.f32.mrf.mxu0
        %v2724 = vadd.f32 %v2615, %v2723
        %2725 = vdwg.mxu0
        %2726 = vmatprep.subr.mxu0 0.0
        %2727 = vmatpush1.msra.mxu0 0.0
        %2728 = vmatprep.subr.mxu0 0.0
        %2729 = vmatpush1.msra.mxu0 0.0
        %2730 = vmatprep.subr.mxu0 0.0
        %2731 = vmatpush1.msra.mxu0 0.0
        %2732 = vmatprep.subr.mxu0 0.0
        %2733 = vmatpush1.msra.mxu0 0.0
        %2734 = vmatprep.subr.mxu0 0.0
        %2735 = vmatpush1.msra.mxu0 0.0
        %2736 = vmatprep.subr.mxu0 0.0
        %2737 = vmatpush1.msra.mxu0 0.0
        %2738 = vmatprep.subr.mxu0 0.0
        %2739 = vmatpush1.msra.mxu0 0.0
        %2740 = vmatprep.subr.mxu0 0.0
        %2741 = vmatpush1.msra.mxu0 0.0
        %v2742 = vand.u32 %v605, 4294901760
        %2743 = vmatprep.subr.mxu0 %v2742
        %v2744 = vand.u32 %v604, 4294901760
        %2745 = vmatpush1.msra.mxu0 %v2744
        %v2746 = vand.u32 %v601, 4294901760
        %2747 = vmatprep.subr.mxu0 %v2746
        %v2748 = vand.u32 %v600, 4294901760
        %2749 = vmatpush1.msra.mxu0 %v2748
        %v2750 = vand.u32 %v597, 4294901760
        %2751 = vmatprep.subr.mxu0 %v2750
        %v2752 = vand.u32 %v596, 4294901760
        %2753 = vmatpush1.msra.mxu0 %v2752
        %v2754 = vand.u32 %v593, 4294901760
        %2755 = vmatprep.subr.mxu0 %v2754
        %v2756 = vand.u32 %v592, 4294901760
        %2757 = vmatpush1.msra.mxu0 %v2756
        %v2758 = vand.u32 %v589, 4294901760
        %2759 = vmatprep.subr.mxu0 %v2758
        %v2760 = vand.u32 %v588, 4294901760
        %2761 = vmatpush1.msra.mxu0 %v2760
        %v2762 = vand.u32 %v585, 4294901760
        %2763 = vmatprep.subr.mxu0 %v2762
        %v2764 = vand.u32 %v584, 4294901760
        %2765 = vmatpush1.msra.mxu0 %v2764
        %v2766 = vand.u32 %v581, 4294901760
        %2767 = vmatprep.subr.mxu0 %v2766
        %v2768 = vand.u32 %v580, 4294901760
        %2769 = vmatpush1.msra.mxu0 %v2768
        %v2770 = vand.u32 %v577, 4294901760
        %2771 = vmatprep.subr.mxu0 %v2770
        %v2772 = vand.u32 %v576, 4294901760
        %2773 = vmatpush1.msra.mxu0 %v2772
        %2774 = vmatprep.subr.mxu0 0.0
        %2775 = vmatpush2.msra.mxu0 0.0
        %2776 = vmatprep.subr.mxu0 0.0
        %2777 = vmatpush2.msra.mxu0 0.0
        %2778 = vmatprep.subr.mxu0 0.0
        %2779 = vmatpush2.msra.mxu0 0.0
        %2780 = vmatprep.subr.mxu0 0.0
        %2781 = vmatpush2.msra.mxu0 0.0
        %2782 = vmatprep.subr.mxu0 0.0
        %2783 = vmatpush2.msra.mxu0 0.0
        %2784 = vmatprep.subr.mxu0 0.0
        %2785 = vmatpush2.msra.mxu0 0.0
        %2786 = vmatprep.subr.mxu0 0.0
        %2787 = vmatpush2.msra.mxu0 0.0
        %2788 = vmatprep.subr.mxu0 0.0
        %2789 = vmatpush2.msra.mxu0 0.0
        %2790 = vmatprep.subr.mxu0 0.0
        %2791 = vmatpush2.msra.mxu0 0.0
        %2792 = vmatprep.subr.mxu0 0.0
        %2793 = vmatpush2.msra.mxu0 0.0
        %2794 = vmatprep.subr.mxu0 0.0
        %2795 = vmatpush2.msra.mxu0 0.0
        %2796 = vmatprep.subr.mxu0 0.0
        %2797 = vmatpush2.msra.mxu0 0.0
        %2798 = vmatprep.subr.mxu0 0.0
        %2799 = vmatpush2.msra.mxu0 0.0
        %2800 = vmatprep.subr.mxu0 0.0
        %2801 = vmatpush2.msra.mxu0 0.0
        %2802 = vmatprep.subr.mxu0 0.0
        %2803 = vmatpush2.msra.mxu0 0.0
        %2804 = vmatprep.subr.mxu0 0.0
        %2805 = vmatpush2.msra.mxu0 0.0
        %2806 = vmatprep.mubr.f32.mxu0 0.0
        %v2807 = vand.u32 %v1921, 4294901760
        %v2808 = vsub.f32 %v1921, %v2807
        %v2809 = vand.u32 %v2808, 4294901760
        %v2810 = vsub.f32 %v2808, %v2809
        %v2811 = vand.u32 %v2810, 4294901760
        %2812 = vmatmul.mubr.f32.gmra.mxu0 %v2811
        %v2813 = vpop.f32.mrf.mxu0
        %v2814 = vadd.f32 %v1894, %v2813
        %v2815 = vpop.f32.mrf.mxu0
        %v2816 = vadd.f32 %v1896, %v2815
        %2817 = vmatprep.mubr.f32.mxu0 0.0
        %v2818 = vand.u32 %v1924, 4294901760
        %v2819 = vsub.f32 %v1924, %v2818
        %v2820 = vand.u32 %v2819, 4294901760
        %v2821 = vsub.f32 %v2819, %v2820
        %v2822 = vand.u32 %v2821, 4294901760
        %2823 = vmatmul.mubr.f32.gmra.mxu0 %v2822
        %v2824 = vpop.f32.mrf.mxu0
        %v2825 = vadd.f32 %v1901, %v2824
        %v2826 = vpop.f32.mrf.mxu0
        %v2827 = vadd.f32 %v1903, %v2826
        %2828 = vmatprep.mubr.f32.mxu0 0.0
        %v2829 = vand.u32 %v1927, 4294901760
        %v2830 = vsub.f32 %v1927, %v2829
        %v2831 = vand.u32 %v2830, 4294901760
        %v2832 = vsub.f32 %v2830, %v2831
        %v2833 = vand.u32 %v2832, 4294901760
        %2834 = vmatmul.mubr.f32.gmra.mxu0 %v2833
        %v2835 = vpop.f32.mrf.mxu0
        %v2836 = vadd.f32 %v1908, %v2835
        %v2837 = vpop.f32.mrf.mxu0
        %v2838 = vadd.f32 %v1910, %v2837
        %2839 = vmatprep.mubr.f32.mxu0 0.0
        %v2840 = vand.u32 %v1930, 4294901760
        %v2841 = vsub.f32 %v1930, %v2840
        %v2842 = vand.u32 %v2841, 4294901760
        %v2843 = vsub.f32 %v2841, %v2842
        %v2844 = vand.u32 %v2843, 4294901760
        %2845 = vmatmul.mubr.f32.gmra.mxu0 %v2844
        %v2846 = vpop.f32.mrf.mxu0
        %v2847 = vadd.f32 %v1915, %v2846
        %v2848 = vpop.f32.mrf.mxu0
        %v2849 = vadd.f32 %v1917, %v2848
        %2850 = vdwg.mxu0
        %2851 = vmatprep.subr.mxu0 0.0
        %2852 = vmatpush1.msra.mxu0 0.0
        %2853 = vmatprep.subr.mxu0 0.0
        %2854 = vmatpush1.msra.mxu0 0.0
        %2855 = vmatprep.subr.mxu0 0.0
        %2856 = vmatpush1.msra.mxu0 0.0
        %2857 = vmatprep.subr.mxu0 0.0
        %2858 = vmatpush1.msra.mxu0 0.0
        %2859 = vmatprep.subr.mxu0 0.0
        %2860 = vmatpush1.msra.mxu0 0.0
        %2861 = vmatprep.subr.mxu0 0.0
        %2862 = vmatpush1.msra.mxu0 0.0
        %2863 = vmatprep.subr.mxu0 0.0
        %2864 = vmatpush1.msra.mxu0 0.0
        %2865 = vmatprep.subr.mxu0 0.0
        %2866 = vmatpush1.msra.mxu0 0.0
        %v2867 = vand.u32 %v605, 4294901760
        %v2868 = vsub.f32 %v605, %v2867
        %v2869 = vand.u32 %v2868, 4294901760
        %v2870 = vsub.f32 %v2868, %v2869
        %v2871 = vand.u32 %v2870, 4294901760
        %2872 = vmatprep.subr.mxu0 %v2871
        %v2873 = vand.u32 %v604, 4294901760
        %v2874 = vsub.f32 %v604, %v2873
        %v2875 = vand.u32 %v2874, 4294901760
        %v2876 = vsub.f32 %v2874, %v2875
        %v2877 = vand.u32 %v2876, 4294901760
        %2878 = vmatpush1.msra.mxu0 %v2877
        %v2879 = vand.u32 %v601, 4294901760
        %v2880 = vsub.f32 %v601, %v2879
        %v2881 = vand.u32 %v2880, 4294901760
        %v2882 = vsub.f32 %v2880, %v2881
        %v2883 = vand.u32 %v2882, 4294901760
        %2884 = vmatprep.subr.mxu0 %v2883
        %v2885 = vand.u32 %v600, 4294901760
        %v2886 = vsub.f32 %v600, %v2885
        %v2887 = vand.u32 %v2886, 4294901760
        %v2888 = vsub.f32 %v2886, %v2887
        %v2889 = vand.u32 %v2888, 4294901760
        %2890 = vmatpush1.msra.mxu0 %v2889
        %v2891 = vand.u32 %v597, 4294901760
        %v2892 = vsub.f32 %v597, %v2891
        %v2893 = vand.u32 %v2892, 4294901760
        %v2894 = vsub.f32 %v2892, %v2893
        %v2895 = vand.u32 %v2894, 4294901760
        %2896 = vmatprep.subr.mxu0 %v2895
        %v2897 = vand.u32 %v596, 4294901760
        %v2898 = vsub.f32 %v596, %v2897
        %v2899 = vand.u32 %v2898, 4294901760
        %v2900 = vsub.f32 %v2898, %v2899
        %v2901 = vand.u32 %v2900, 4294901760
        %2902 = vmatpush1.msra.mxu0 %v2901
        %v2903 = vand.u32 %v593, 4294901760
        %v2904 = vsub.f32 %v593, %v2903
        %v2905 = vand.u32 %v2904, 4294901760
        %v2906 = vsub.f32 %v2904, %v2905
        %v2907 = vand.u32 %v2906, 4294901760
        %2908 = vmatprep.subr.mxu0 %v2907
        %v2909 = vand.u32 %v592, 4294901760
        %v2910 = vsub.f32 %v592, %v2909
        %v2911 = vand.u32 %v2910, 4294901760
        %v2912 = vsub.f32 %v2910, %v2911
        %v2913 = vand.u32 %v2912, 4294901760
        %2914 = vmatpush1.msra.mxu0 %v2913
        %v2915 = vand.u32 %v589, 4294901760
        %v2916 = vsub.f32 %v589, %v2915
        %v2917 = vand.u32 %v2916, 4294901760
        %v2918 = vsub.f32 %v2916, %v2917
        %v2919 = vand.u32 %v2918, 4294901760
        %2920 = vmatprep.subr.mxu0 %v2919
        %v2921 = vand.u32 %v588, 4294901760
        %v2922 = vsub.f32 %v588, %v2921
        %v2923 = vand.u32 %v2922, 4294901760
        %v2924 = vsub.f32 %v2922, %v2923
        %v2925 = vand.u32 %v2924, 4294901760
        %2926 = vmatpush1.msra.mxu0 %v2925
        %v2927 = vand.u32 %v585, 4294901760
        %v2928 = vsub.f32 %v585, %v2927
        %v2929 = vand.u32 %v2928, 4294901760
        %v2930 = vsub.f32 %v2928, %v2929
        %v2931 = vand.u32 %v2930, 4294901760
        %2932 = vmatprep.subr.mxu0 %v2931
        %v2933 = vand.u32 %v584, 4294901760
        %v2934 = vsub.f32 %v584, %v2933
        %v2935 = vand.u32 %v2934, 4294901760
        %v2936 = vsub.f32 %v2934, %v2935
        %v2937 = vand.u32 %v2936, 4294901760
        %2938 = vmatpush1.msra.mxu0 %v2937
        %v2939 = vand.u32 %v581, 4294901760
        %v2940 = vsub.f32 %v581, %v2939
        %v2941 = vand.u32 %v2940, 4294901760
        %v2942 = vsub.f32 %v2940, %v2941
        %v2943 = vand.u32 %v2942, 4294901760
        %2944 = vmatprep.subr.mxu0 %v2943
        %v2945 = vand.u32 %v580, 4294901760
        %v2946 = vsub.f32 %v580, %v2945
        %v2947 = vand.u32 %v2946, 4294901760
        %v2948 = vsub.f32 %v2946, %v2947
        %v2949 = vand.u32 %v2948, 4294901760
        %2950 = vmatpush1.msra.mxu0 %v2949
        %v2951 = vand.u32 %v577, 4294901760
        %v2952 = vsub.f32 %v577, %v2951
        %v2953 = vand.u32 %v2952, 4294901760
        %v2954 = vsub.f32 %v2952, %v2953
        %v2955 = vand.u32 %v2954, 4294901760
        %2956 = vmatprep.subr.mxu0 %v2955
        %v2957 = vand.u32 %v576, 4294901760
        %v2958 = vsub.f32 %v576, %v2957
        %v2959 = vand.u32 %v2958, 4294901760
        %v2960 = vsub.f32 %v2958, %v2959
        %v2961 = vand.u32 %v2960, 4294901760
        %2962 = vmatpush1.msra.mxu0 %v2961
        %2963 = vmatprep.subr.mxu0 0.0
        %2964 = vmatpush2.msra.mxu0 0.0
        %2965 = vmatprep.subr.mxu0 0.0
        %2966 = vmatpush2.msra.mxu0 0.0
        %2967 = vmatprep.subr.mxu0 0.0
        %2968 = vmatpush2.msra.mxu0 0.0
        %2969 = vmatprep.subr.mxu0 0.0
        %2970 = vmatpush2.msra.mxu0 0.0
        %2971 = vmatprep.subr.mxu0 0.0
        %2972 = vmatpush2.msra.mxu0 0.0
        %2973 = vmatprep.subr.mxu0 0.0
        %2974 = vmatpush2.msra.mxu0 0.0
        %2975 = vmatprep.subr.mxu0 0.0
        %2976 = vmatpush2.msra.mxu0 0.0
        %2977 = vmatprep.subr.mxu0 0.0
        %2978 = vmatpush2.msra.mxu0 0.0
        %2979 = vmatprep.subr.mxu0 0.0
        %2980 = vmatpush2.msra.mxu0 0.0
        %2981 = vmatprep.subr.mxu0 0.0
        %2982 = vmatpush2.msra.mxu0 0.0
        %2983 = vmatprep.subr.mxu0 0.0
        %2984 = vmatpush2.msra.mxu0 0.0
        %2985 = vmatprep.subr.mxu0 0.0
        %2986 = vmatpush2.msra.mxu0 0.0
        %2987 = vmatprep.subr.mxu0 0.0
        %2988 = vmatpush2.msra.mxu0 0.0
        %2989 = vmatprep.subr.mxu0 0.0
        %2990 = vmatpush2.msra.mxu0 0.0
        %2991 = vmatprep.subr.mxu0 0.0
        %2992 = vmatpush2.msra.mxu0 0.0
        %2993 = vmatprep.subr.mxu0 0.0
        %2994 = vmatpush2.msra.mxu0 0.0
        %2995 = vmatprep.mubr.f32.mxu0 0.0
        %v2996 = vand.u32 %v1921, 4294901760
        %2997 = vmatmul.mubr.f32.gmra.mxu0 %v2996
        %v2998 = vpop.f32.mrf.mxu0
        %v2999 = vadd.f32 %v2814, %v2998
        %v3000 = vpop.f32.mrf.mxu0
        %v3001 = vadd.f32 %v2816, %v3000
        %3002 = vmatprep.mubr.f32.mxu0 0.0
        %v3003 = vand.u32 %v1924, 4294901760
        %3004 = vmatmul.mubr.f32.gmra.mxu0 %v3003
        %v3005 = vpop.f32.mrf.mxu0
        %v3006 = vadd.f32 %v2825, %v3005
        %v3007 = vpop.f32.mrf.mxu0
        %v3008 = vadd.f32 %v2827, %v3007
        %3009 = vmatprep.mubr.f32.mxu0 0.0
        %v3010 = vand.u32 %v1927, 4294901760
        %3011 = vmatmul.mubr.f32.gmra.mxu0 %v3010
        %v3012 = vpop.f32.mrf.mxu0
        %v3013 = vadd.f32 %v2836, %v3012
        %v3014 = vpop.f32.mrf.mxu0
        %v3015 = vadd.f32 %v2838, %v3014
        %3016 = vmatprep.mubr.f32.mxu0 0.0
        %v3017 = vand.u32 %v1930, 4294901760
        %3018 = vmatmul.mubr.f32.gmra.mxu0 %v3017
        %v3019 = vpop.f32.mrf.mxu0
        %v3020 = vadd.f32 %v2847, %v3019
        %v3021 = vpop.f32.mrf.mxu0
        %v3022 = vadd.f32 %v2849, %v3021
        %3023 = vdwg.mxu0
        %3024 = vmatprep.subr.mxu0 0.0
        %3025 = vmatpush1.msra.mxu0 0.0
        %3026 = vmatprep.subr.mxu0 0.0
        %3027 = vmatpush1.msra.mxu0 0.0
        %3028 = vmatprep.subr.mxu0 0.0
        %3029 = vmatpush1.msra.mxu0 0.0
        %3030 = vmatprep.subr.mxu0 0.0
        %3031 = vmatpush1.msra.mxu0 0.0
        %3032 = vmatprep.subr.mxu0 0.0
        %3033 = vmatpush1.msra.mxu0 0.0
        %3034 = vmatprep.subr.mxu0 0.0
        %3035 = vmatpush1.msra.mxu0 0.0
        %3036 = vmatprep.subr.mxu0 0.0
        %3037 = vmatpush1.msra.mxu0 0.0
        %3038 = vmatprep.subr.mxu0 0.0
        %3039 = vmatpush1.msra.mxu0 0.0
        %v3040 = vand.u32 %v605, 4294901760
        %v3041 = vsub.f32 %v605, %v3040
        %3042 = vmatprep.subr.mxu0 %v3041
        %v3043 = vand.u32 %v604, 4294901760
        %v3044 = vsub.f32 %v604, %v3043
        %3045 = vmatpush1.msra.mxu0 %v3044
        %v3046 = vand.u32 %v601, 4294901760
        %v3047 = vsub.f32 %v601, %v3046
        %3048 = vmatprep.subr.mxu0 %v3047
        %v3049 = vand.u32 %v600, 4294901760
        %v3050 = vsub.f32 %v600, %v3049
        %3051 = vmatpush1.msra.mxu0 %v3050
        %v3052 = vand.u32 %v597, 4294901760
        %v3053 = vsub.f32 %v597, %v3052
        %3054 = vmatprep.subr.mxu0 %v3053
        %v3055 = vand.u32 %v596, 4294901760
        %v3056 = vsub.f32 %v596, %v3055
        %3057 = vmatpush1.msra.mxu0 %v3056
        %v3058 = vand.u32 %v593, 4294901760
        %v3059 = vsub.f32 %v593, %v3058
        %3060 = vmatprep.subr.mxu0 %v3059
        %v3061 = vand.u32 %v592, 4294901760
        %v3062 = vsub.f32 %v592, %v3061
        %3063 = vmatpush1.msra.mxu0 %v3062
        %v3064 = vand.u32 %v589, 4294901760
        %v3065 = vsub.f32 %v589, %v3064
        %3066 = vmatprep.subr.mxu0 %v3065
        %v3067 = vand.u32 %v588, 4294901760
        %v3068 = vsub.f32 %v588, %v3067
        %3069 = vmatpush1.msra.mxu0 %v3068
        %v3070 = vand.u32 %v585, 4294901760
        %v3071 = vsub.f32 %v585, %v3070
        %3072 = vmatprep.subr.mxu0 %v3071
        %v3073 = vand.u32 %v584, 4294901760
        %v3074 = vsub.f32 %v584, %v3073
        %3075 = vmatpush1.msra.mxu0 %v3074
        %v3076 = vand.u32 %v581, 4294901760
        %v3077 = vsub.f32 %v581, %v3076
        %3078 = vmatprep.subr.mxu0 %v3077
        %v3079 = vand.u32 %v580, 4294901760
        %v3080 = vsub.f32 %v580, %v3079
        %3081 = vmatpush1.msra.mxu0 %v3080
        %v3082 = vand.u32 %v577, 4294901760
        %v3083 = vsub.f32 %v577, %v3082
        %3084 = vmatprep.subr.mxu0 %v3083
        %v3085 = vand.u32 %v576, 4294901760
        %v3086 = vsub.f32 %v576, %v3085
        %3087 = vmatpush1.msra.mxu0 %v3086
        %3088 = vmatprep.subr.mxu0 0.0
        %3089 = vmatpush2.msra.mxu0 0.0
        %3090 = vmatprep.subr.mxu0 0.0
        %3091 = vmatpush2.msra.mxu0 0.0
        %3092 = vmatprep.subr.mxu0 0.0
        %3093 = vmatpush2.msra.mxu0 0.0
        %3094 = vmatprep.subr.mxu0 0.0
        %3095 = vmatpush2.msra.mxu0 0.0
        %3096 = vmatprep.subr.mxu0 0.0
        %3097 = vmatpush2.msra.mxu0 0.0
        %3098 = vmatprep.subr.mxu0 0.0
        %3099 = vmatpush2.msra.mxu0 0.0
        %3100 = vmatprep.subr.mxu0 0.0
        %3101 = vmatpush2.msra.mxu0 0.0
        %3102 = vmatprep.subr.mxu0 0.0
        %3103 = vmatpush2.msra.mxu0 0.0
        %3104 = vmatprep.subr.mxu0 0.0
        %3105 = vmatpush2.msra.mxu0 0.0
        %3106 = vmatprep.subr.mxu0 0.0
        %3107 = vmatpush2.msra.mxu0 0.0
        %3108 = vmatprep.subr.mxu0 0.0
        %3109 = vmatpush2.msra.mxu0 0.0
        %3110 = vmatprep.subr.mxu0 0.0
        %3111 = vmatpush2.msra.mxu0 0.0
        %3112 = vmatprep.subr.mxu0 0.0
        %3113 = vmatpush2.msra.mxu0 0.0
        %3114 = vmatprep.subr.mxu0 0.0
        %3115 = vmatpush2.msra.mxu0 0.0
        %3116 = vmatprep.subr.mxu0 0.0
        %3117 = vmatpush2.msra.mxu0 0.0
        %3118 = vmatprep.subr.mxu0 0.0
        %3119 = vmatpush2.msra.mxu0 0.0
        %3120 = vmatprep.mubr.f32.mxu0 0.0
        %v3121 = vand.u32 %v1921, 4294901760
        %v3122 = vsub.f32 %v1921, %v3121
        %3123 = vmatmul.mubr.f32.gmra.mxu0 %v3122
        %v3124 = vpop.f32.mrf.mxu0
        %v3125 = vadd.f32 %v2999, %v3124
        %v3126 = vpop.f32.mrf.mxu0
        %v3127 = vadd.f32 %v3001, %v3126
        %3128 = vmatprep.mubr.f32.mxu0 0.0
        %v3129 = vand.u32 %v1924, 4294901760
        %v3130 = vsub.f32 %v1924, %v3129
        %3131 = vmatmul.mubr.f32.gmra.mxu0 %v3130
        %v3132 = vpop.f32.mrf.mxu0
        %v3133 = vadd.f32 %v3006, %v3132
        %v3134 = vpop.f32.mrf.mxu0
        %v3135 = vadd.f32 %v3008, %v3134
        %3136 = vmatprep.mubr.f32.mxu0 0.0
        %v3137 = vand.u32 %v1927, 4294901760
        %v3138 = vsub.f32 %v1927, %v3137
        %3139 = vmatmul.mubr.f32.gmra.mxu0 %v3138
        %v3140 = vpop.f32.mrf.mxu0
        %v3141 = vadd.f32 %v3013, %v3140
        %v3142 = vpop.f32.mrf.mxu0
        %v3143 = vadd.f32 %v3015, %v3142
        %3144 = vmatprep.mubr.f32.mxu0 0.0
        %v3145 = vand.u32 %v1930, 4294901760
        %v3146 = vsub.f32 %v1930, %v3145
        %3147 = vmatmul.mubr.f32.gmra.mxu0 %v3146
        %v3148 = vpop.f32.mrf.mxu0
        %v3149 = vadd.f32 %v3020, %v3148
        %v3150 = vpop.f32.mrf.mxu0
        %v3151 = vadd.f32 %v3022, %v3150
        %3152 = vdwg.mxu0
        %3153 = vmatprep.subr.mxu0 0.0
        %3154 = vmatpush1.msra.mxu0 0.0
        %3155 = vmatprep.subr.mxu0 0.0
        %3156 = vmatpush1.msra.mxu0 0.0
        %3157 = vmatprep.subr.mxu0 0.0
        %3158 = vmatpush1.msra.mxu0 0.0
        %3159 = vmatprep.subr.mxu0 0.0
        %3160 = vmatpush1.msra.mxu0 0.0
        %3161 = vmatprep.subr.mxu0 0.0
        %3162 = vmatpush1.msra.mxu0 0.0
        %3163 = vmatprep.subr.mxu0 0.0
        %3164 = vmatpush1.msra.mxu0 0.0
        %3165 = vmatprep.subr.mxu0 0.0
        %3166 = vmatpush1.msra.mxu0 0.0
        %3167 = vmatprep.subr.mxu0 0.0
        %3168 = vmatpush1.msra.mxu0 0.0
        %v3169 = vand.u32 %v605, 4294901760
        %3170 = vmatprep.subr.mxu0 %v3169
        %v3171 = vand.u32 %v604, 4294901760
        %3172 = vmatpush1.msra.mxu0 %v3171
        %v3173 = vand.u32 %v601, 4294901760
        %3174 = vmatprep.subr.mxu0 %v3173
        %v3175 = vand.u32 %v600, 4294901760
        %3176 = vmatpush1.msra.mxu0 %v3175
        %v3177 = vand.u32 %v597, 4294901760
        %3178 = vmatprep.subr.mxu0 %v3177
        %v3179 = vand.u32 %v596, 4294901760
        %3180 = vmatpush1.msra.mxu0 %v3179
        %v3181 = vand.u32 %v593, 4294901760
        %3182 = vmatprep.subr.mxu0 %v3181
        %v3183 = vand.u32 %v592, 4294901760
        %3184 = vmatpush1.msra.mxu0 %v3183
        %v3185 = vand.u32 %v589, 4294901760
        %3186 = vmatprep.subr.mxu0 %v3185
        %v3187 = vand.u32 %v588, 4294901760
        %3188 = vmatpush1.msra.mxu0 %v3187
        %v3189 = vand.u32 %v585, 4294901760
        %3190 = vmatprep.subr.mxu0 %v3189
        %v3191 = vand.u32 %v584, 4294901760
        %3192 = vmatpush1.msra.mxu0 %v3191
        %v3193 = vand.u32 %v581, 4294901760
        %3194 = vmatprep.subr.mxu0 %v3193
        %v3195 = vand.u32 %v580, 4294901760
        %3196 = vmatpush1.msra.mxu0 %v3195
        %v3197 = vand.u32 %v577, 4294901760
        %3198 = vmatprep.subr.mxu0 %v3197
        %v3199 = vand.u32 %v576, 4294901760
        %3200 = vmatpush1.msra.mxu0 %v3199
        %3201 = vmatprep.subr.mxu0 0.0
        %3202 = vmatpush2.msra.mxu0 0.0
        %3203 = vmatprep.subr.mxu0 0.0
        %3204 = vmatpush2.msra.mxu0 0.0
        %3205 = vmatprep.subr.mxu0 0.0
        %3206 = vmatpush2.msra.mxu0 0.0
        %3207 = vmatprep.subr.mxu0 0.0
        %3208 = vmatpush2.msra.mxu0 0.0
        %3209 = vmatprep.subr.mxu0 0.0
        %3210 = vmatpush2.msra.mxu0 0.0
        %3211 = vmatprep.subr.mxu0 0.0
        %3212 = vmatpush2.msra.mxu0 0.0
        %3213 = vmatprep.subr.mxu0 0.0
        %3214 = vmatpush2.msra.mxu0 0.0
        %3215 = vmatprep.subr.mxu0 0.0
        %3216 = vmatpush2.msra.mxu0 0.0
        %3217 = vmatprep.subr.mxu0 0.0
        %3218 = vmatpush2.msra.mxu0 0.0
        %3219 = vmatprep.subr.mxu0 0.0
        %3220 = vmatpush2.msra.mxu0 0.0
        %3221 = vmatprep.subr.mxu0 0.0
        %3222 = vmatpush2.msra.mxu0 0.0
        %3223 = vmatprep.subr.mxu0 0.0
        %3224 = vmatpush2.msra.mxu0 0.0
        %3225 = vmatprep.subr.mxu0 0.0
        %3226 = vmatpush2.msra.mxu0 0.0
        %3227 = vmatprep.subr.mxu0 0.0
        %3228 = vmatpush2.msra.mxu0 0.0
        %3229 = vmatprep.subr.mxu0 0.0
        %3230 = vmatpush2.msra.mxu0 0.0
        %3231 = vmatprep.subr.mxu0 0.0
        %3232 = vmatpush2.msra.mxu0 0.0
        %3233 = vmatprep.mubr.f32.mxu0 0.0
        %v3234 = vand.u32 %v1921, 4294901760
        %v3235 = vsub.f32 %v1921, %v3234
        %v3236 = vand.u32 %v3235, 4294901760
        %3237 = vmatmul.mubr.f32.gmra.mxu0 %v3236
        %v3238 = vpop.f32.mrf.mxu0
        %v3239 = vadd.f32 %v3125, %v3238
        %v3240 = vpop.f32.mrf.mxu0
        %v3241 = vadd.f32 %v3127, %v3240
        %3242 = vmatprep.mubr.f32.mxu0 0.0
        %v3243 = vand.u32 %v1924, 4294901760
        %v3244 = vsub.f32 %v1924, %v3243
        %v3245 = vand.u32 %v3244, 4294901760
        %3246 = vmatmul.mubr.f32.gmra.mxu0 %v3245
        %v3247 = vpop.f32.mrf.mxu0
        %v3248 = vadd.f32 %v3133, %v3247
        %v3249 = vpop.f32.mrf.mxu0
        %v3250 = vadd.f32 %v3135, %v3249
        %3251 = vmatprep.mubr.f32.mxu0 0.0
        %v3252 = vand.u32 %v1927, 4294901760
        %v3253 = vsub.f32 %v1927, %v3252
        %v3254 = vand.u32 %v3253, 4294901760
        %3255 = vmatmul.mubr.f32.gmra.mxu0 %v3254
        %v3256 = vpop.f32.mrf.mxu0
        %v3257 = vadd.f32 %v3141, %v3256
        %v3258 = vpop.f32.mrf.mxu0
        %v3259 = vadd.f32 %v3143, %v3258
        %3260 = vmatprep.mubr.f32.mxu0 0.0
        %v3261 = vand.u32 %v1930, 4294901760
        %v3262 = vsub.f32 %v1930, %v3261
        %v3263 = vand.u32 %v3262, 4294901760
        %3264 = vmatmul.mubr.f32.gmra.mxu0 %v3263
        %v3265 = vpop.f32.mrf.mxu0
        %v3266 = vadd.f32 %v3149, %v3265
        %v3267 = vpop.f32.mrf.mxu0
        %v3268 = vadd.f32 %v3151, %v3267
        %3269 = vdwg.mxu0
        %3270 = vmatprep.subr.mxu0 0.0
        %3271 = vmatpush1.msra.mxu0 0.0
        %3272 = vmatprep.subr.mxu0 0.0
        %3273 = vmatpush1.msra.mxu0 0.0
        %3274 = vmatprep.subr.mxu0 0.0
        %3275 = vmatpush1.msra.mxu0 0.0
        %3276 = vmatprep.subr.mxu0 0.0
        %3277 = vmatpush1.msra.mxu0 0.0
        %3278 = vmatprep.subr.mxu0 0.0
        %3279 = vmatpush1.msra.mxu0 0.0
        %3280 = vmatprep.subr.mxu0 0.0
        %3281 = vmatpush1.msra.mxu0 0.0
        %3282 = vmatprep.subr.mxu0 0.0
        %3283 = vmatpush1.msra.mxu0 0.0
        %3284 = vmatprep.subr.mxu0 0.0
        %3285 = vmatpush1.msra.mxu0 0.0
        %v3286 = vand.u32 %v605, 4294901760
        %v3287 = vsub.f32 %v605, %v3286
        %v3288 = vand.u32 %v3287, 4294901760
        %3289 = vmatprep.subr.mxu0 %v3288
        %v3290 = vand.u32 %v604, 4294901760
        %v3291 = vsub.f32 %v604, %v3290
        %v3292 = vand.u32 %v3291, 4294901760
        %3293 = vmatpush1.msra.mxu0 %v3292
        %v3294 = vand.u32 %v601, 4294901760
        %v3295 = vsub.f32 %v601, %v3294
        %v3296 = vand.u32 %v3295, 4294901760
        %3297 = vmatprep.subr.mxu0 %v3296
        %v3298 = vand.u32 %v600, 4294901760
        %v3299 = vsub.f32 %v600, %v3298
        %v3300 = vand.u32 %v3299, 4294901760
        %3301 = vmatpush1.msra.mxu0 %v3300
        %v3302 = vand.u32 %v597, 4294901760
        %v3303 = vsub.f32 %v597, %v3302
        %v3304 = vand.u32 %v3303, 4294901760
        %3305 = vmatprep.subr.mxu0 %v3304
        %v3306 = vand.u32 %v596, 4294901760
        %v3307 = vsub.f32 %v596, %v3306
        %v3308 = vand.u32 %v3307, 4294901760
        %3309 = vmatpush1.msra.mxu0 %v3308
        %v3310 = vand.u32 %v593, 4294901760
        %v3311 = vsub.f32 %v593, %v3310
        %v3312 = vand.u32 %v3311, 4294901760
        %3313 = vmatprep.subr.mxu0 %v3312
        %v3314 = vand.u32 %v592, 4294901760
        %v3315 = vsub.f32 %v592, %v3314
        %v3316 = vand.u32 %v3315, 4294901760
        %3317 = vmatpush1.msra.mxu0 %v3316
        %v3318 = vand.u32 %v589, 4294901760
        %v3319 = vsub.f32 %v589, %v3318
        %v3320 = vand.u32 %v3319, 4294901760
        %3321 = vmatprep.subr.mxu0 %v3320
        %v3322 = vand.u32 %v588, 4294901760
        %v3323 = vsub.f32 %v588, %v3322
        %v3324 = vand.u32 %v3323, 4294901760
        %3325 = vmatpush1.msra.mxu0 %v3324
        %v3326 = vand.u32 %v585, 4294901760
        %v3327 = vsub.f32 %v585, %v3326
        %v3328 = vand.u32 %v3327, 4294901760
        %3329 = vmatprep.subr.mxu0 %v3328
        %v3330 = vand.u32 %v584, 4294901760
        %v3331 = vsub.f32 %v584, %v3330
        %v3332 = vand.u32 %v3331, 4294901760
        %3333 = vmatpush1.msra.mxu0 %v3332
        %v3334 = vand.u32 %v581, 4294901760
        %v3335 = vsub.f32 %v581, %v3334
        %v3336 = vand.u32 %v3335, 4294901760
        %3337 = vmatprep.subr.mxu0 %v3336
        %v3338 = vand.u32 %v580, 4294901760
        %v3339 = vsub.f32 %v580, %v3338
        %v3340 = vand.u32 %v3339, 4294901760
        %3341 = vmatpush1.msra.mxu0 %v3340
        %v3342 = vand.u32 %v577, 4294901760
        %v3343 = vsub.f32 %v577, %v3342
        %v3344 = vand.u32 %v3343, 4294901760
        %3345 = vmatprep.subr.mxu0 %v3344
        %v3346 = vand.u32 %v576, 4294901760
        %v3347 = vsub.f32 %v576, %v3346
        %v3348 = vand.u32 %v3347, 4294901760
        %3349 = vmatpush1.msra.mxu0 %v3348
        %3350 = vmatprep.subr.mxu0 0.0
        %3351 = vmatpush2.msra.mxu0 0.0
        %3352 = vmatprep.subr.mxu0 0.0
        %3353 = vmatpush2.msra.mxu0 0.0
        %3354 = vmatprep.subr.mxu0 0.0
        %3355 = vmatpush2.msra.mxu0 0.0
        %3356 = vmatprep.subr.mxu0 0.0
        %3357 = vmatpush2.msra.mxu0 0.0
        %3358 = vmatprep.subr.mxu0 0.0
        %3359 = vmatpush2.msra.mxu0 0.0
        %3360 = vmatprep.subr.mxu0 0.0
        %3361 = vmatpush2.msra.mxu0 0.0
        %3362 = vmatprep.subr.mxu0 0.0
        %3363 = vmatpush2.msra.mxu0 0.0
        %3364 = vmatprep.subr.mxu0 0.0
        %3365 = vmatpush2.msra.mxu0 0.0
        %3366 = vmatprep.subr.mxu0 0.0
        %3367 = vmatpush2.msra.mxu0 0.0
        %3368 = vmatprep.subr.mxu0 0.0
        %3369 = vmatpush2.msra.mxu0 0.0
        %3370 = vmatprep.subr.mxu0 0.0
        %3371 = vmatpush2.msra.mxu0 0.0
        %3372 = vmatprep.subr.mxu0 0.0
        %3373 = vmatpush2.msra.mxu0 0.0
        %3374 = vmatprep.subr.mxu0 0.0
        %3375 = vmatpush2.msra.mxu0 0.0
        %3376 = vmatprep.subr.mxu0 0.0
        %3377 = vmatpush2.msra.mxu0 0.0
        %3378 = vmatprep.subr.mxu0 0.0
        %3379 = vmatpush2.msra.mxu0 0.0
        %3380 = vmatprep.subr.mxu0 0.0
        %3381 = vmatpush2.msra.mxu0 0.0
        %3382 = vmatprep.mubr.f32.mxu0 0.0
        %v3383 = vand.u32 %v1921, 4294901760
        %3384 = vmatmul.mubr.f32.gmra.mxu0 %v3383
        %v3385 = vpop.f32.mrf.mxu0
        %v3386 = vadd.f32 %v3239, %v3385
        %v3387 = vpop.f32.mrf.mxu0
        %v3388 = vadd.f32 %v3241, %v3387
        %3389 = vmatprep.mubr.f32.mxu0 0.0
        %v3390 = vand.u32 %v1924, 4294901760
        %3391 = vmatmul.mubr.f32.gmra.mxu0 %v3390
        %v3392 = vpop.f32.mrf.mxu0
        %v3393 = vadd.f32 %v3248, %v3392
        %v3394 = vpop.f32.mrf.mxu0
        %v3395 = vadd.f32 %v3250, %v3394
        %3396 = vmatprep.mubr.f32.mxu0 0.0
        %v3397 = vand.u32 %v1927, 4294901760
        %3398 = vmatmul.mubr.f32.gmra.mxu0 %v3397
        %v3399 = vpop.f32.mrf.mxu0
        %v3400 = vadd.f32 %v3257, %v3399
        %v3401 = vpop.f32.mrf.mxu0
        %v3402 = vadd.f32 %v3259, %v3401
        %3403 = vmatprep.mubr.f32.mxu0 0.0
        %v3404 = vand.u32 %v1930, 4294901760
        %3405 = vmatmul.mubr.f32.gmra.mxu0 %v3404
        %v3406 = vpop.f32.mrf.mxu0
        %v3407 = vadd.f32 %v3266, %v3406
        %v3408 = vpop.f32.mrf.mxu0
        %v3409 = vadd.f32 %v3268, %v3408
        %3410 = vdwg.mxu0
        %3411 = vmatprep.subr.mxu0 0.0
        %3412 = vmatpush1.msra.mxu0 0.0
        %3413 = vmatprep.subr.mxu0 0.0
        %3414 = vmatpush1.msra.mxu0 0.0
        %3415 = vmatprep.subr.mxu0 0.0
        %3416 = vmatpush1.msra.mxu0 0.0
        %3417 = vmatprep.subr.mxu0 0.0
        %3418 = vmatpush1.msra.mxu0 0.0
        %3419 = vmatprep.subr.mxu0 0.0
        %3420 = vmatpush1.msra.mxu0 0.0
        %3421 = vmatprep.subr.mxu0 0.0
        %3422 = vmatpush1.msra.mxu0 0.0
        %3423 = vmatprep.subr.mxu0 0.0
        %3424 = vmatpush1.msra.mxu0 0.0
        %3425 = vmatprep.subr.mxu0 0.0
        %3426 = vmatpush1.msra.mxu0 0.0
        %v3427 = vand.u32 %v605, 4294901760
        %3428 = vmatprep.subr.mxu0 %v3427
        %v3429 = vand.u32 %v604, 4294901760
        %3430 = vmatpush1.msra.mxu0 %v3429
        %v3431 = vand.u32 %v601, 4294901760
        %3432 = vmatprep.subr.mxu0 %v3431
        %v3433 = vand.u32 %v600, 4294901760
        %3434 = vmatpush1.msra.mxu0 %v3433
        %v3435 = vand.u32 %v597, 4294901760
        %3436 = vmatprep.subr.mxu0 %v3435
        %v3437 = vand.u32 %v596, 4294901760
        %3438 = vmatpush1.msra.mxu0 %v3437
        %v3439 = vand.u32 %v593, 4294901760
        %3440 = vmatprep.subr.mxu0 %v3439
        %v3441 = vand.u32 %v592, 4294901760
        %3442 = vmatpush1.msra.mxu0 %v3441
        %v3443 = vand.u32 %v589, 4294901760
        %3444 = vmatprep.subr.mxu0 %v3443
        %v3445 = vand.u32 %v588, 4294901760
        %3446 = vmatpush1.msra.mxu0 %v3445
        %v3447 = vand.u32 %v585, 4294901760
        %3448 = vmatprep.subr.mxu0 %v3447
        %v3449 = vand.u32 %v584, 4294901760
        %3450 = vmatpush1.msra.mxu0 %v3449
        %v3451 = vand.u32 %v581, 4294901760
        %3452 = vmatprep.subr.mxu0 %v3451
        %v3453 = vand.u32 %v580, 4294901760
        %3454 = vmatpush1.msra.mxu0 %v3453
        %v3455 = vand.u32 %v577, 4294901760
        %3456 = vmatprep.subr.mxu0 %v3455
        %v3457 = vand.u32 %v576, 4294901760
        %3458 = vmatpush1.msra.mxu0 %v3457
        %3459 = vmatprep.subr.mxu0 0.0
        %3460 = vmatpush2.msra.mxu0 0.0
        %3461 = vmatprep.subr.mxu0 0.0
        %3462 = vmatpush2.msra.mxu0 0.0
        %3463 = vmatprep.subr.mxu0 0.0
        %3464 = vmatpush2.msra.mxu0 0.0
        %3465 = vmatprep.subr.mxu0 0.0
        %3466 = vmatpush2.msra.mxu0 0.0
        %3467 = vmatprep.subr.mxu0 0.0
        %3468 = vmatpush2.msra.mxu0 0.0
        %3469 = vmatprep.subr.mxu0 0.0
        %3470 = vmatpush2.msra.mxu0 0.0
        %3471 = vmatprep.subr.mxu0 0.0
        %3472 = vmatpush2.msra.mxu0 0.0
        %3473 = vmatprep.subr.mxu0 0.0
        %3474 = vmatpush2.msra.mxu0 0.0
        %3475 = vmatprep.subr.mxu0 0.0
        %3476 = vmatpush2.msra.mxu0 0.0
        %3477 = vmatprep.subr.mxu0 0.0
        %3478 = vmatpush2.msra.mxu0 0.0
        %3479 = vmatprep.subr.mxu0 0.0
        %3480 = vmatpush2.msra.mxu0 0.0
        %3481 = vmatprep.subr.mxu0 0.0
        %3482 = vmatpush2.msra.mxu0 0.0
        %3483 = vmatprep.subr.mxu0 0.0
        %3484 = vmatpush2.msra.mxu0 0.0
        %3485 = vmatprep.subr.mxu0 0.0
        %3486 = vmatpush2.msra.mxu0 0.0
        %3487 = vmatprep.subr.mxu0 0.0
        %3488 = vmatpush2.msra.mxu0 0.0
        %3489 = vmatprep.subr.mxu0 0.0
        %3490 = vmatpush2.msra.mxu0 0.0
        %3491 = vmatprep.mubr.f32.mxu0 0.0
        %v3492 = vand.u32 %v1921, 4294901760
        %3493 = vmatmul.mubr.f32.gmra.mxu0 %v3492
        %v3494 = vpop.f32.mrf.mxu0
        %v3495 = vadd.f32 %v3386, %v3494
        %v3496 = vpop.f32.mrf.mxu0
        %v3497 = vadd.f32 %v3388, %v3496
        %3498 = vmatprep.mubr.f32.mxu0 0.0
        %v3499 = vand.u32 %v1924, 4294901760
        %3500 = vmatmul.mubr.f32.gmra.mxu0 %v3499
        %v3501 = vpop.f32.mrf.mxu0
        %v3502 = vadd.f32 %v3393, %v3501
        %v3503 = vpop.f32.mrf.mxu0
        %v3504 = vadd.f32 %v3395, %v3503
        %3505 = vmatprep.mubr.f32.mxu0 0.0
        %v3506 = vand.u32 %v1927, 4294901760
        %3507 = vmatmul.mubr.f32.gmra.mxu0 %v3506
        %v3508 = vpop.f32.mrf.mxu0
        %v3509 = vadd.f32 %v3400, %v3508
        %v3510 = vpop.f32.mrf.mxu0
        %v3511 = vadd.f32 %v3402, %v3510
        %3512 = vmatprep.mubr.f32.mxu0 0.0
        %v3513 = vand.u32 %v1930, 4294901760
        %3514 = vmatmul.mubr.f32.gmra.mxu0 %v3513
        %v3515 = vpop.f32.mrf.mxu0
        %v3516 = vadd.f32 %v3407, %v3515
        %v3517 = vpop.f32.mrf.mxu0
        %v3518 = vadd.f32 %v3409, %v3517
        %3519 = vdwg.mxu0
        %v3520 = vtanh.pop %v2701
        %v3521 = vtanh.pop %v2703
        %v3522 = vtanh.pop %v3495
        %v3523 = vtanh.pop %v3497
        %v3524 = vtanh.pop %v2708
        %v3525 = vtanh.pop %v2710
        %v3526 = vtanh.pop %v3502
        %v3527 = vtanh.pop %v3504
        %v3528 = vtanh.pop %v2715
        %v3529 = vtanh.pop %v2717
        %v3530 = vtanh.pop %v3509
        %v3531 = vtanh.pop %v3511
        %v3532 = vtanh.pop %v2722
        %v3533 = vtanh.pop %v2724
        %v3534 = vtanh.pop %v3516
        %v3535 = vtanh.pop %v3518
        %v3536 = vld [vmem:[%s4] sm:$0x1]
        %v3537 = vld [vmem:[#allocation3] sm:$0x1]
        %3539 = vset.pattern.permute.xlu0 0
        %3540 = vperm.xlu0 %3539, %v3537
        %v3541 = vpop.permute.xlu0 %3540
        %v3543 = vlaneseq
        %v3544 = vshrl.u32 %v3543, 7
        %v3545 = vsub.s32 0, %v3544
        %v3546 = vrot.slane %v3541, %v3545
        %vm3547 = vcmask 261120
        %v3549 = vsel %vm3547, %v3536, 0
        %3551 = vmatprep.subr.mxu0 0.0
        %3552 = vmatpush1.msra.mxu0 0.0
        %3553 = vmatprep.subr.mxu0 0.0
        %3554 = vmatpush1.msra.mxu0 0.0
        %3555 = vmatprep.subr.mxu0 0.0
        %3556 = vmatpush1.msra.mxu0 0.0
        %3557 = vmatprep.subr.mxu0 0.0
        %3558 = vmatpush1.msra.mxu0 0.0
        %3559 = vmatprep.subr.mxu0 0.0
        %3560 = vmatpush1.msra.mxu0 0.0
        %3561 = vmatprep.subr.mxu0 0.0
        %3562 = vmatpush1.msra.mxu0 0.0
        %3563 = vmatprep.subr.mxu0 0.0
        %3564 = vmatpush1.msra.mxu0 0.0
        %3565 = vmatprep.subr.mxu0 0.0
        %3566 = vmatpush1.msra.mxu0 0.0
        %3567 = vmatprep.subr.mxu0 0.0
        %3568 = vmatpush1.msra.mxu0 0.0
        %3569 = vmatprep.subr.mxu0 0.0
        %3570 = vmatpush1.msra.mxu0 0.0
        %3571 = vmatprep.subr.mxu0 0.0
        %3572 = vmatpush1.msra.mxu0 0.0
        %3573 = vmatprep.subr.mxu0 0.0
        %3574 = vmatpush1.msra.mxu0 0.0
        %v3575 = vand.u32 %v3533, 4294901760
        %3576 = vmatprep.subr.mxu0 %v3575
        %v3577 = vand.u32 %v3532, 4294901760
        %3578 = vmatpush1.msra.mxu0 %v3577
        %v3579 = vand.u32 %v3529, 4294901760
        %3580 = vmatprep.subr.mxu0 %v3579
        %v3581 = vand.u32 %v3528, 4294901760
        %3582 = vmatpush1.msra.mxu0 %v3581
        %v3583 = vand.u32 %v3525, 4294901760
        %3584 = vmatprep.subr.mxu0 %v3583
        %v3585 = vand.u32 %v3524, 4294901760
        %3586 = vmatpush1.msra.mxu0 %v3585
        %v3587 = vand.u32 %v3521, 4294901760
        %3588 = vmatprep.subr.mxu0 %v3587
        %v3589 = vand.u32 %v3520, 4294901760
        %3590 = vmatpush1.msra.mxu0 %v3589
        %3591 = vmatprep.subr.mxu0 0.0
        %3592 = vmatpush2.msra.mxu0 0.0
        %3593 = vmatprep.subr.mxu0 0.0
        %3594 = vmatpush2.msra.mxu0 0.0
        %3595 = vmatprep.subr.mxu0 0.0
        %3596 = vmatpush2.msra.mxu0 0.0
        %3597 = vmatprep.subr.mxu0 0.0
        %3598 = vmatpush2.msra.mxu0 0.0
        %3599 = vmatprep.subr.mxu0 0.0
        %3600 = vmatpush2.msra.mxu0 0.0
        %3601 = vmatprep.subr.mxu0 0.0
        %3602 = vmatpush2.msra.mxu0 0.0
        %3603 = vmatprep.subr.mxu0 0.0
        %3604 = vmatpush2.msra.mxu0 0.0
        %3605 = vmatprep.subr.mxu0 0.0
        %3606 = vmatpush2.msra.mxu0 0.0
        %3607 = vmatprep.subr.mxu0 0.0
        %3608 = vmatpush2.msra.mxu0 0.0
        %3609 = vmatprep.subr.mxu0 0.0
        %3610 = vmatpush2.msra.mxu0 0.0
        %3611 = vmatprep.subr.mxu0 0.0
        %3612 = vmatpush2.msra.mxu0 0.0
        %3613 = vmatprep.subr.mxu0 0.0
        %3614 = vmatpush2.msra.mxu0 0.0
        %3615 = vmatprep.subr.mxu0 0.0
        %3616 = vmatpush2.msra.mxu0 0.0
        %3617 = vmatprep.subr.mxu0 0.0
        %3618 = vmatpush2.msra.mxu0 0.0
        %3619 = vmatprep.subr.mxu0 0.0
        %3620 = vmatpush2.msra.mxu0 0.0
        %3621 = vmatprep.subr.mxu0 0.0
        %3622 = vmatpush2.msra.mxu0 0.0
        %3623 = vmatprep.mubr.f32.mxu0 0.0
        %v3624 = vand.u32 %v3549, 4294901760
        %v3625 = vsub.f32 %v3549, %v3624
        %v3626 = vand.u32 %v3625, 4294901760
        %v3627 = vsub.f32 %v3625, %v3626
        %v3628 = vand.u32 %v3627, 4294901760
        %3629 = vmatmul.mubr.f32.gmra.mxu0 %v3628
        %v3630 = vpop.f32.mrf.mxu0
        %v3631 = vadd.f32 %v3546, %v3630
        %v3632 = vpop.f32.mrf.mxu0
        %v3633 = vadd.f32 %v3546, %v3632
        %3634 = vdwg.mxu0
        %3635 = vmatprep.subr.mxu0 0.0
        %3636 = vmatpush1.msra.mxu0 0.0
        %3637 = vmatprep.subr.mxu0 0.0
        %3638 = vmatpush1.msra.mxu0 0.0
        %3639 = vmatprep.subr.mxu0 0.0
        %3640 = vmatpush1.msra.mxu0 0.0
        %3641 = vmatprep.subr.mxu0 0.0
        %3642 = vmatpush1.msra.mxu0 0.0
        %3643 = vmatprep.subr.mxu0 0.0
        %3644 = vmatpush1.msra.mxu0 0.0
        %3645 = vmatprep.subr.mxu0 0.0
        %3646 = vmatpush1.msra.mxu0 0.0
        %3647 = vmatprep.subr.mxu0 0.0
        %3648 = vmatpush1.msra.mxu0 0.0
        %3649 = vmatprep.subr.mxu0 0.0
        %3650 = vmatpush1.msra.mxu0 0.0
        %3651 = vmatprep.subr.mxu0 0.0
        %3652 = vmatpush1.msra.mxu0 0.0
        %3653 = vmatprep.subr.mxu0 0.0
        %3654 = vmatpush1.msra.mxu0 0.0
        %3655 = vmatprep.subr.mxu0 0.0
        %3656 = vmatpush1.msra.mxu0 0.0
        %3657 = vmatprep.subr.mxu0 0.0
        %3658 = vmatpush1.msra.mxu0 0.0
        %v3659 = vand.u32 %v3533, 4294901760
        %v3660 = vsub.f32 %v3533, %v3659
        %v3661 = vand.u32 %v3660, 4294901760
        %v3662 = vsub.f32 %v3660, %v3661
        %v3663 = vand.u32 %v3662, 4294901760
        %3664 = vmatprep.subr.mxu0 %v3663
        %v3665 = vand.u32 %v3532, 4294901760
        %v3666 = vsub.f32 %v3532, %v3665
        %v3667 = vand.u32 %v3666, 4294901760
        %v3668 = vsub.f32 %v3666, %v3667
        %v3669 = vand.u32 %v3668, 4294901760
        %3670 = vmatpush1.msra.mxu0 %v3669
        %v3671 = vand.u32 %v3529, 4294901760
        %v3672 = vsub.f32 %v3529, %v3671
        %v3673 = vand.u32 %v3672, 4294901760
        %v3674 = vsub.f32 %v3672, %v3673
        %v3675 = vand.u32 %v3674, 4294901760
        %3676 = vmatprep.subr.mxu0 %v3675
        %v3677 = vand.u32 %v3528, 4294901760
        %v3678 = vsub.f32 %v3528, %v3677
        %v3679 = vand.u32 %v3678, 4294901760
        %v3680 = vsub.f32 %v3678, %v3679
        %v3681 = vand.u32 %v3680, 4294901760
        %3682 = vmatpush1.msra.mxu0 %v3681
        %v3683 = vand.u32 %v3525, 4294901760
        %v3684 = vsub.f32 %v3525, %v3683
        %v3685 = vand.u32 %v3684, 4294901760
        %v3686 = vsub.f32 %v3684, %v3685
        %v3687 = vand.u32 %v3686, 4294901760
        %3688 = vmatprep.subr.mxu0 %v3687
        %v3689 = vand.u32 %v3524, 4294901760
        %v3690 = vsub.f32 %v3524, %v3689
        %v3691 = vand.u32 %v3690, 4294901760
        %v3692 = vsub.f32 %v3690, %v3691
        %v3693 = vand.u32 %v3692, 4294901760
        %3694 = vmatpush1.msra.mxu0 %v3693
        %v3695 = vand.u32 %v3521, 4294901760
        %v3696 = vsub.f32 %v3521, %v3695
        %v3697 = vand.u32 %v3696, 4294901760
        %v3698 = vsub.f32 %v3696, %v3697
        %v3699 = vand.u32 %v3698, 4294901760
        %3700 = vmatprep.subr.mxu0 %v3699
        %v3701 = vand.u32 %v3520, 4294901760
        %v3702 = vsub.f32 %v3520, %v3701
        %v3703 = vand.u32 %v3702, 4294901760
        %v3704 = vsub.f32 %v3702, %v3703
        %v3705 = vand.u32 %v3704, 4294901760
        %3706 = vmatpush1.msra.mxu0 %v3705
        %3707 = vmatprep.subr.mxu0 0.0
        %3708 = vmatpush2.msra.mxu0 0.0
        %3709 = vmatprep.subr.mxu0 0.0
        %3710 = vmatpush2.msra.mxu0 0.0
        %3711 = vmatprep.subr.mxu0 0.0
        %3712 = vmatpush2.msra.mxu0 0.0
        %3713 = vmatprep.subr.mxu0 0.0
        %3714 = vmatpush2.msra.mxu0 0.0
        %3715 = vmatprep.subr.mxu0 0.0
        %3716 = vmatpush2.msra.mxu0 0.0
        %3717 = vmatprep.subr.mxu0 0.0
        %3718 = vmatpush2.msra.mxu0 0.0
        %3719 = vmatprep.subr.mxu0 0.0
        %3720 = vmatpush2.msra.mxu0 0.0
        %3721 = vmatprep.subr.mxu0 0.0
        %3722 = vmatpush2.msra.mxu0 0.0
        %3723 = vmatprep.subr.mxu0 0.0
        %3724 = vmatpush2.msra.mxu0 0.0
        %3725 = vmatprep.subr.mxu0 0.0
        %3726 = vmatpush2.msra.mxu0 0.0
        %3727 = vmatprep.subr.mxu0 0.0
        %3728 = vmatpush2.msra.mxu0 0.0
        %3729 = vmatprep.subr.mxu0 0.0
        %3730 = vmatpush2.msra.mxu0 0.0
        %3731 = vmatprep.subr.mxu0 0.0
        %3732 = vmatpush2.msra.mxu0 0.0
        %3733 = vmatprep.subr.mxu0 0.0
        %3734 = vmatpush2.msra.mxu0 0.0
        %3735 = vmatprep.subr.mxu0 0.0
        %3736 = vmatpush2.msra.mxu0 0.0
        %3737 = vmatprep.subr.mxu0 0.0
        %3738 = vmatpush2.msra.mxu0 0.0
        %3739 = vmatprep.mubr.f32.mxu0 0.0
        %v3740 = vand.u32 %v3549, 4294901760
        %3741 = vmatmul.mubr.f32.gmra.mxu0 %v3740
        %v3742 = vpop.f32.mrf.mxu0
        %v3743 = vadd.f32 %v3631, %v3742
        %v3744 = vpop.f32.mrf.mxu0
        %v3745 = vadd.f32 %v3633, %v3744
        %3746 = vdwg.mxu0
        %3747 = vmatprep.subr.mxu0 0.0
        %3748 = vmatpush1.msra.mxu0 0.0
        %3749 = vmatprep.subr.mxu0 0.0
        %3750 = vmatpush1.msra.mxu0 0.0
        %3751 = vmatprep.subr.mxu0 0.0
        %3752 = vmatpush1.msra.mxu0 0.0
        %3753 = vmatprep.subr.mxu0 0.0
        %3754 = vmatpush1.msra.mxu0 0.0
        %3755 = vmatprep.subr.mxu0 0.0
        %3756 = vmatpush1.msra.mxu0 0.0
        %3757 = vmatprep.subr.mxu0 0.0
        %3758 = vmatpush1.msra.mxu0 0.0
        %3759 = vmatprep.subr.mxu0 0.0
        %3760 = vmatpush1.msra.mxu0 0.0
        %3761 = vmatprep.subr.mxu0 0.0
        %3762 = vmatpush1.msra.mxu0 0.0
        %3763 = vmatprep.subr.mxu0 0.0
        %3764 = vmatpush1.msra.mxu0 0.0
        %3765 = vmatprep.subr.mxu0 0.0
        %3766 = vmatpush1.msra.mxu0 0.0
        %3767 = vmatprep.subr.mxu0 0.0
        %3768 = vmatpush1.msra.mxu0 0.0
        %3769 = vmatprep.subr.mxu0 0.0
        %3770 = vmatpush1.msra.mxu0 0.0
        %v3771 = vand.u32 %v3533, 4294901760
        %v3772 = vsub.f32 %v3533, %v3771
        %3773 = vmatprep.subr.mxu0 %v3772
        %v3774 = vand.u32 %v3532, 4294901760
        %v3775 = vsub.f32 %v3532, %v3774
        %3776 = vmatpush1.msra.mxu0 %v3775
        %v3777 = vand.u32 %v3529, 4294901760
        %v3778 = vsub.f32 %v3529, %v3777
        %3779 = vmatprep.subr.mxu0 %v3778
        %v3780 = vand.u32 %v3528, 4294901760
        %v3781 = vsub.f32 %v3528, %v3780
        %3782 = vmatpush1.msra.mxu0 %v3781
        %v3783 = vand.u32 %v3525, 4294901760
        %v3784 = vsub.f32 %v3525, %v3783
        %3785 = vmatprep.subr.mxu0 %v3784
        %v3786 = vand.u32 %v3524, 4294901760
        %v3787 = vsub.f32 %v3524, %v3786
        %3788 = vmatpush1.msra.mxu0 %v3787
        %v3789 = vand.u32 %v3521, 4294901760
        %v3790 = vsub.f32 %v3521, %v3789
        %3791 = vmatprep.subr.mxu0 %v3790
        %v3792 = vand.u32 %v3520, 4294901760
        %v3793 = vsub.f32 %v3520, %v3792
        %3794 = vmatpush1.msra.mxu0 %v3793
        %3795 = vmatprep.subr.mxu0 0.0
        %3796 = vmatpush2.msra.mxu0 0.0
        %3797 = vmatprep.subr.mxu0 0.0
        %3798 = vmatpush2.msra.mxu0 0.0
        %3799 = vmatprep.subr.mxu0 0.0
        %3800 = vmatpush2.msra.mxu0 0.0
        %3801 = vmatprep.subr.mxu0 0.0
        %3802 = vmatpush2.msra.mxu0 0.0
        %3803 = vmatprep.subr.mxu0 0.0
        %3804 = vmatpush2.msra.mxu0 0.0
        %3805 = vmatprep.subr.mxu0 0.0
        %3806 = vmatpush2.msra.mxu0 0.0
        %3807 = vmatprep.subr.mxu0 0.0
        %3808 = vmatpush2.msra.mxu0 0.0
        %3809 = vmatprep.subr.mxu0 0.0
        %3810 = vmatpush2.msra.mxu0 0.0
        %3811 = vmatprep.subr.mxu0 0.0
        %3812 = vmatpush2.msra.mxu0 0.0
        %3813 = vmatprep.subr.mxu0 0.0
        %3814 = vmatpush2.msra.mxu0 0.0
        %3815 = vmatprep.subr.mxu0 0.0
        %3816 = vmatpush2.msra.mxu0 0.0
        %3817 = vmatprep.subr.mxu0 0.0
        %3818 = vmatpush2.msra.mxu0 0.0
        %3819 = vmatprep.subr.mxu0 0.0
        %3820 = vmatpush2.msra.mxu0 0.0
        %3821 = vmatprep.subr.mxu0 0.0
        %3822 = vmatpush2.msra.mxu0 0.0
        %3823 = vmatprep.subr.mxu0 0.0
        %3824 = vmatpush2.msra.mxu0 0.0
        %3825 = vmatprep.subr.mxu0 0.0
        %3826 = vmatpush2.msra.mxu0 0.0
        %3827 = vmatprep.mubr.f32.mxu0 0.0
        %v3828 = vand.u32 %v3549, 4294901760
        %v3829 = vsub.f32 %v3549, %v3828
        %3830 = vmatmul.mubr.f32.gmra.mxu0 %v3829
        %v3831 = vpop.f32.mrf.mxu0
        %v3832 = vadd.f32 %v3743, %v3831
        %v3833 = vpop.f32.mrf.mxu0
        %v3834 = vadd.f32 %v3745, %v3833
        %3835 = vdwg.mxu0
        %3836 = vmatprep.subr.mxu0 0.0
        %3837 = vmatpush1.msra.mxu0 0.0
        %3838 = vmatprep.subr.mxu0 0.0
        %3839 = vmatpush1.msra.mxu0 0.0
        %3840 = vmatprep.subr.mxu0 0.0
        %3841 = vmatpush1.msra.mxu0 0.0
        %3842 = vmatprep.subr.mxu0 0.0
        %3843 = vmatpush1.msra.mxu0 0.0
        %3844 = vmatprep.subr.mxu0 0.0
        %3845 = vmatpush1.msra.mxu0 0.0
        %3846 = vmatprep.subr.mxu0 0.0
        %3847 = vmatpush1.msra.mxu0 0.0
        %3848 = vmatprep.subr.mxu0 0.0
        %3849 = vmatpush1.msra.mxu0 0.0
        %3850 = vmatprep.subr.mxu0 0.0
        %3851 = vmatpush1.msra.mxu0 0.0
        %3852 = vmatprep.subr.mxu0 0.0
        %3853 = vmatpush1.msra.mxu0 0.0
        %3854 = vmatprep.subr.mxu0 0.0
        %3855 = vmatpush1.msra.mxu0 0.0
        %3856 = vmatprep.subr.mxu0 0.0
        %3857 = vmatpush1.msra.mxu0 0.0
        %3858 = vmatprep.subr.mxu0 0.0
        %3859 = vmatpush1.msra.mxu0 0.0
        %v3860 = vand.u32 %v3533, 4294901760
        %3861 = vmatprep.subr.mxu0 %v3860
        %v3862 = vand.u32 %v3532, 4294901760
        %3863 = vmatpush1.msra.mxu0 %v3862
        %v3864 = vand.u32 %v3529, 4294901760
        %3865 = vmatprep.subr.mxu0 %v3864
        %v3866 = vand.u32 %v3528, 4294901760
        %3867 = vmatpush1.msra.mxu0 %v3866
        %v3868 = vand.u32 %v3525, 4294901760
        %3869 = vmatprep.subr.mxu0 %v3868
        %v3870 = vand.u32 %v3524, 4294901760
        %3871 = vmatpush1.msra.mxu0 %v3870
        %v3872 = vand.u32 %v3521, 4294901760
        %3873 = vmatprep.subr.mxu0 %v3872
        %v3874 = vand.u32 %v3520, 4294901760
        %3875 = vmatpush1.msra.mxu0 %v3874
        %3876 = vmatprep.subr.mxu0 0.0
        %3877 = vmatpush2.msra.mxu0 0.0
        %3878 = vmatprep.subr.mxu0 0.0
        %3879 = vmatpush2.msra.mxu0 0.0
        %3880 = vmatprep.subr.mxu0 0.0
        %3881 = vmatpush2.msra.mxu0 0.0
        %3882 = vmatprep.subr.mxu0 0.0
        %3883 = vmatpush2.msra.mxu0 0.0
        %3884 = vmatprep.subr.mxu0 0.0
        %3885 = vmatpush2.msra.mxu0 0.0
        %3886 = vmatprep.subr.mxu0 0.0
        %3887 = vmatpush2.msra.mxu0 0.0
        %3888 = vmatprep.subr.mxu0 0.0
        %3889 = vmatpush2.msra.mxu0 0.0
        %3890 = vmatprep.subr.mxu0 0.0
        %3891 = vmatpush2.msra.mxu0 0.0
        %3892 = vmatprep.subr.mxu0 0.0
        %3893 = vmatpush2.msra.mxu0 0.0
        %3894 = vmatprep.subr.mxu0 0.0
        %3895 = vmatpush2.msra.mxu0 0.0
        %3896 = vmatprep.subr.mxu0 0.0
        %3897 = vmatpush2.msra.mxu0 0.0
        %3898 = vmatprep.subr.mxu0 0.0
        %3899 = vmatpush2.msra.mxu0 0.0
        %3900 = vmatprep.subr.mxu0 0.0
        %3901 = vmatpush2.msra.mxu0 0.0
        %3902 = vmatprep.subr.mxu0 0.0
        %3903 = vmatpush2.msra.mxu0 0.0
        %3904 = vmatprep.subr.mxu0 0.0
        %3905 = vmatpush2.msra.mxu0 0.0
        %3906 = vmatprep.subr.mxu0 0.0
        %3907 = vmatpush2.msra.mxu0 0.0
        %3908 = vmatprep.mubr.f32.mxu0 0.0
        %v3909 = vand.u32 %v3549, 4294901760
        %v3910 = vsub.f32 %v3549, %v3909
        %v3911 = vand.u32 %v3910, 4294901760
        %3912 = vmatmul.mubr.f32.gmra.mxu0 %v3911
        %v3913 = vpop.f32.mrf.mxu0
        %v3914 = vadd.f32 %v3832, %v3913
        %v3915 = vpop.f32.mrf.mxu0
        %v3916 = vadd.f32 %v3834, %v3915
        %3917 = vdwg.mxu0
        %3918 = vmatprep.subr.mxu0 0.0
        %3919 = vmatpush1.msra.mxu0 0.0
        %3920 = vmatprep.subr.mxu0 0.0
        %3921 = vmatpush1.msra.mxu0 0.0
        %3922 = vmatprep.subr.mxu0 0.0
        %3923 = vmatpush1.msra.mxu0 0.0
        %3924 = vmatprep.subr.mxu0 0.0
        %3925 = vmatpush1.msra.mxu0 0.0
        %3926 = vmatprep.subr.mxu0 0.0
        %3927 = vmatpush1.msra.mxu0 0.0
        %3928 = vmatprep.subr.mxu0 0.0
        %3929 = vmatpush1.msra.mxu0 0.0
        %3930 = vmatprep.subr.mxu0 0.0
        %3931 = vmatpush1.msra.mxu0 0.0
        %3932 = vmatprep.subr.mxu0 0.0
        %3933 = vmatpush1.msra.mxu0 0.0
        %3934 = vmatprep.subr.mxu0 0.0
        %3935 = vmatpush1.msra.mxu0 0.0
        %3936 = vmatprep.subr.mxu0 0.0
        %3937 = vmatpush1.msra.mxu0 0.0
        %3938 = vmatprep.subr.mxu0 0.0
        %3939 = vmatpush1.msra.mxu0 0.0
        %3940 = vmatprep.subr.mxu0 0.0
        %3941 = vmatpush1.msra.mxu0 0.0
        %v3942 = vand.u32 %v3533, 4294901760
        %v3943 = vsub.f32 %v3533, %v3942
        %v3944 = vand.u32 %v3943, 4294901760
        %3945 = vmatprep.subr.mxu0 %v3944
        %v3946 = vand.u32 %v3532, 4294901760
        %v3947 = vsub.f32 %v3532, %v3946
        %v3948 = vand.u32 %v3947, 4294901760
        %3949 = vmatpush1.msra.mxu0 %v3948
        %v3950 = vand.u32 %v3529, 4294901760
        %v3951 = vsub.f32 %v3529, %v3950
        %v3952 = vand.u32 %v3951, 4294901760
        %3953 = vmatprep.subr.mxu0 %v3952
        %v3954 = vand.u32 %v3528, 4294901760
        %v3955 = vsub.f32 %v3528, %v3954
        %v3956 = vand.u32 %v3955, 4294901760
        %3957 = vmatpush1.msra.mxu0 %v3956
        %v3958 = vand.u32 %v3525, 4294901760
        %v3959 = vsub.f32 %v3525, %v3958
        %v3960 = vand.u32 %v3959, 4294901760
        %3961 = vmatprep.subr.mxu0 %v3960
        %v3962 = vand.u32 %v3524, 4294901760
        %v3963 = vsub.f32 %v3524, %v3962
        %v3964 = vand.u32 %v3963, 4294901760
        %3965 = vmatpush1.msra.mxu0 %v3964
        %v3966 = vand.u32 %v3521, 4294901760
        %v3967 = vsub.f32 %v3521, %v3966
        %v3968 = vand.u32 %v3967, 4294901760
        %3969 = vmatprep.subr.mxu0 %v3968
        %v3970 = vand.u32 %v3520, 4294901760
        %v3971 = vsub.f32 %v3520, %v3970
        %v3972 = vand.u32 %v3971, 4294901760
        %3973 = vmatpush1.msra.mxu0 %v3972
        %3974 = vmatprep.subr.mxu0 0.0
        %3975 = vmatpush2.msra.mxu0 0.0
        %3976 = vmatprep.subr.mxu0 0.0
        %3977 = vmatpush2.msra.mxu0 0.0
        %3978 = vmatprep.subr.mxu0 0.0
        %3979 = vmatpush2.msra.mxu0 0.0
        %3980 = vmatprep.subr.mxu0 0.0
        %3981 = vmatpush2.msra.mxu0 0.0
        %3982 = vmatprep.subr.mxu0 0.0
        %3983 = vmatpush2.msra.mxu0 0.0
        %3984 = vmatprep.subr.mxu0 0.0
        %3985 = vmatpush2.msra.mxu0 0.0
        %3986 = vmatprep.subr.mxu0 0.0
        %3987 = vmatpush2.msra.mxu0 0.0
        %3988 = vmatprep.subr.mxu0 0.0
        %3989 = vmatpush2.msra.mxu0 0.0
        %3990 = vmatprep.subr.mxu0 0.0
        %3991 = vmatpush2.msra.mxu0 0.0
        %3992 = vmatprep.subr.mxu0 0.0
        %3993 = vmatpush2.msra.mxu0 0.0
        %3994 = vmatprep.subr.mxu0 0.0
        %3995 = vmatpush2.msra.mxu0 0.0
        %3996 = vmatprep.subr.mxu0 0.0
        %3997 = vmatpush2.msra.mxu0 0.0
        %3998 = vmatprep.subr.mxu0 0.0
        %3999 = vmatpush2.msra.mxu0 0.0
        %4000 = vmatprep.subr.mxu0 0.0
        %4001 = vmatpush2.msra.mxu0 0.0
        %4002 = vmatprep.subr.mxu0 0.0
        %4003 = vmatpush2.msra.mxu0 0.0
        %4004 = vmatprep.subr.mxu0 0.0
        %4005 = vmatpush2.msra.mxu0 0.0
        %4006 = vmatprep.mubr.f32.mxu0 0.0
        %v4007 = vand.u32 %v3549, 4294901760
        %4008 = vmatmul.mubr.f32.gmra.mxu0 %v4007
        %v4009 = vpop.f32.mrf.mxu0
        %v4010 = vadd.f32 %v3914, %v4009
        %v4011 = vpop.f32.mrf.mxu0
        %v4012 = vadd.f32 %v3916, %v4011
        %4013 = vdwg.mxu0
        %4014 = vmatprep.subr.mxu0 0.0
        %4015 = vmatpush1.msra.mxu0 0.0
        %4016 = vmatprep.subr.mxu0 0.0
        %4017 = vmatpush1.msra.mxu0 0.0
        %4018 = vmatprep.subr.mxu0 0.0
        %4019 = vmatpush1.msra.mxu0 0.0
        %4020 = vmatprep.subr.mxu0 0.0
        %4021 = vmatpush1.msra.mxu0 0.0
        %4022 = vmatprep.subr.mxu0 0.0
        %4023 = vmatpush1.msra.mxu0 0.0
        %4024 = vmatprep.subr.mxu0 0.0
        %4025 = vmatpush1.msra.mxu0 0.0
        %4026 = vmatprep.subr.mxu0 0.0
        %4027 = vmatpush1.msra.mxu0 0.0
        %4028 = vmatprep.subr.mxu0 0.0
        %4029 = vmatpush1.msra.mxu0 0.0
        %4030 = vmatprep.subr.mxu0 0.0
        %4031 = vmatpush1.msra.mxu0 0.0
        %4032 = vmatprep.subr.mxu0 0.0
        %4033 = vmatpush1.msra.mxu0 0.0
        %4034 = vmatprep.subr.mxu0 0.0
        %4035 = vmatpush1.msra.mxu0 0.0
        %4036 = vmatprep.subr.mxu0 0.0
        %4037 = vmatpush1.msra.mxu0 0.0
        %v4038 = vand.u32 %v3533, 4294901760
        %4039 = vmatprep.subr.mxu0 %v4038
        %v4040 = vand.u32 %v3532, 4294901760
        %4041 = vmatpush1.msra.mxu0 %v4040
        %v4042 = vand.u32 %v3529, 4294901760
        %4043 = vmatprep.subr.mxu0 %v4042
        %v4044 = vand.u32 %v3528, 4294901760
        %4045 = vmatpush1.msra.mxu0 %v4044
        %v4046 = vand.u32 %v3525, 4294901760
        %4047 = vmatprep.subr.mxu0 %v4046
        %v4048 = vand.u32 %v3524, 4294901760
        %4049 = vmatpush1.msra.mxu0 %v4048
        %v4050 = vand.u32 %v3521, 4294901760
        %4051 = vmatprep.subr.mxu0 %v4050
        %v4052 = vand.u32 %v3520, 4294901760
        %4053 = vmatpush1.msra.mxu0 %v4052
        %4054 = vmatprep.subr.mxu0 0.0
        %4055 = vmatpush2.msra.mxu0 0.0
        %4056 = vmatprep.subr.mxu0 0.0
        %4057 = vmatpush2.msra.mxu0 0.0
        %4058 = vmatprep.subr.mxu0 0.0
        %4059 = vmatpush2.msra.mxu0 0.0
        %4060 = vmatprep.subr.mxu0 0.0
        %4061 = vmatpush2.msra.mxu0 0.0
        %4062 = vmatprep.subr.mxu0 0.0
        %4063 = vmatpush2.msra.mxu0 0.0
        %4064 = vmatprep.subr.mxu0 0.0
        %4065 = vmatpush2.msra.mxu0 0.0
        %4066 = vmatprep.subr.mxu0 0.0
        %4067 = vmatpush2.msra.mxu0 0.0
        %4068 = vmatprep.subr.mxu0 0.0
        %4069 = vmatpush2.msra.mxu0 0.0
        %4070 = vmatprep.subr.mxu0 0.0
        %4071 = vmatpush2.msra.mxu0 0.0
        %4072 = vmatprep.subr.mxu0 0.0
        %4073 = vmatpush2.msra.mxu0 0.0
        %4074 = vmatprep.subr.mxu0 0.0
        %4075 = vmatpush2.msra.mxu0 0.0
        %4076 = vmatprep.subr.mxu0 0.0
        %4077 = vmatpush2.msra.mxu0 0.0
        %4078 = vmatprep.subr.mxu0 0.0
        %4079 = vmatpush2.msra.mxu0 0.0
        %4080 = vmatprep.subr.mxu0 0.0
        %4081 = vmatpush2.msra.mxu0 0.0
        %4082 = vmatprep.subr.mxu0 0.0
        %4083 = vmatpush2.msra.mxu0 0.0
        %4084 = vmatprep.subr.mxu0 0.0
        %4085 = vmatpush2.msra.mxu0 0.0
        %4086 = vmatprep.mubr.f32.mxu0 0.0
        %v4087 = vand.u32 %v3549, 4294901760
        %4088 = vmatmul.mubr.f32.gmra.mxu0 %v4087
        %v4089 = vpop.f32.mrf.mxu0
        %v4090 = vadd.f32 %v4010, %v4089
        %v4091 = vpop.f32.mrf.mxu0
        %v4092 = vadd.f32 %v4012, %v4091
        %4093 = vdwg.mxu0
        %4094 = vmatprep.subr.mxu0 0.0
        %4095 = vmatpush1.msra.mxu0 0.0
        %4096 = vmatprep.subr.mxu0 0.0
        %4097 = vmatpush1.msra.mxu0 0.0
        %4098 = vmatprep.subr.mxu0 0.0
        %4099 = vmatpush1.msra.mxu0 0.0
        %4100 = vmatprep.subr.mxu0 0.0
        %4101 = vmatpush1.msra.mxu0 0.0
        %4102 = vmatprep.subr.mxu0 0.0
        %4103 = vmatpush1.msra.mxu0 0.0
        %4104 = vmatprep.subr.mxu0 0.0
        %4105 = vmatpush1.msra.mxu0 0.0
        %4106 = vmatprep.subr.mxu0 0.0
        %4107 = vmatpush1.msra.mxu0 0.0
        %4108 = vmatprep.subr.mxu0 0.0
        %4109 = vmatpush1.msra.mxu0 0.0
        %4110 = vmatprep.subr.mxu0 0.0
        %4111 = vmatpush1.msra.mxu0 0.0
        %4112 = vmatprep.subr.mxu0 0.0
        %4113 = vmatpush1.msra.mxu0 0.0
        %4114 = vmatprep.subr.mxu0 0.0
        %4115 = vmatpush1.msra.mxu0 0.0
        %4116 = vmatprep.subr.mxu0 0.0
        %4117 = vmatpush1.msra.mxu0 0.0
        %v4118 = vand.u32 %v3535, 4294901760
        %4119 = vmatprep.subr.mxu0 %v4118
        %v4120 = vand.u32 %v3534, 4294901760
        %4121 = vmatpush1.msra.mxu0 %v4120
        %v4122 = vand.u32 %v3531, 4294901760
        %4123 = vmatprep.subr.mxu0 %v4122
        %v4124 = vand.u32 %v3530, 4294901760
        %4125 = vmatpush1.msra.mxu0 %v4124
        %v4126 = vand.u32 %v3527, 4294901760
        %4127 = vmatprep.subr.mxu0 %v4126
        %v4128 = vand.u32 %v3526, 4294901760
        %4129 = vmatpush1.msra.mxu0 %v4128
        %v4130 = vand.u32 %v3523, 4294901760
        %4131 = vmatprep.subr.mxu0 %v4130
        %v4132 = vand.u32 %v3522, 4294901760
        %4133 = vmatpush1.msra.mxu0 %v4132
        %4134 = vmatprep.subr.mxu0 0.0
        %4135 = vmatpush2.msra.mxu0 0.0
        %4136 = vmatprep.subr.mxu0 0.0
        %4137 = vmatpush2.msra.mxu0 0.0
        %4138 = vmatprep.subr.mxu0 0.0
        %4139 = vmatpush2.msra.mxu0 0.0
        %4140 = vmatprep.subr.mxu0 0.0
        %4141 = vmatpush2.msra.mxu0 0.0
        %4142 = vmatprep.subr.mxu0 0.0
        %4143 = vmatpush2.msra.mxu0 0.0
        %4144 = vmatprep.subr.mxu0 0.0
        %4145 = vmatpush2.msra.mxu0 0.0
        %4146 = vmatprep.subr.mxu0 0.0
        %4147 = vmatpush2.msra.mxu0 0.0
        %4148 = vmatprep.subr.mxu0 0.0
        %4149 = vmatpush2.msra.mxu0 0.0
        %4150 = vmatprep.subr.mxu0 0.0
        %4151 = vmatpush2.msra.mxu0 0.0
        %4152 = vmatprep.subr.mxu0 0.0
        %4153 = vmatpush2.msra.mxu0 0.0
        %4154 = vmatprep.subr.mxu0 0.0
        %4155 = vmatpush2.msra.mxu0 0.0
        %4156 = vmatprep.subr.mxu0 0.0
        %4157 = vmatpush2.msra.mxu0 0.0
        %4158 = vmatprep.subr.mxu0 0.0
        %4159 = vmatpush2.msra.mxu0 0.0
        %4160 = vmatprep.subr.mxu0 0.0
        %4161 = vmatpush2.msra.mxu0 0.0
        %4162 = vmatprep.subr.mxu0 0.0
        %4163 = vmatpush2.msra.mxu0 0.0
        %4164 = vmatprep.subr.mxu0 0.0
        %4165 = vmatpush2.msra.mxu0 0.0
        %4166 = vmatprep.mubr.f32.mxu0 0.0
        %v4167 = vand.u32 %v3549, 4294901760
        %v4168 = vsub.f32 %v3549, %v4167
        %v4169 = vand.u32 %v4168, 4294901760
        %v4170 = vsub.f32 %v4168, %v4169
        %v4171 = vand.u32 %v4170, 4294901760
        %4172 = vmatmul.mubr.f32.gmra.mxu0 %v4171
        %v4173 = vpop.f32.mrf.mxu0
        %v4174 = vadd.f32 %v3546, %v4173
        %v4175 = vpop.f32.mrf.mxu0
        %v4176 = vadd.f32 %v3546, %v4175
        %4177 = vdwg.mxu0
        %4178 = vmatprep.subr.mxu0 0.0
        %4179 = vmatpush1.msra.mxu0 0.0
        %4180 = vmatprep.subr.mxu0 0.0
        %4181 = vmatpush1.msra.mxu0 0.0
        %4182 = vmatprep.subr.mxu0 0.0
        %4183 = vmatpush1.msra.mxu0 0.0
        %4184 = vmatprep.subr.mxu0 0.0
        %4185 = vmatpush1.msra.mxu0 0.0
        %4186 = vmatprep.subr.mxu0 0.0
        %4187 = vmatpush1.msra.mxu0 0.0
        %4188 = vmatprep.subr.mxu0 0.0
        %4189 = vmatpush1.msra.mxu0 0.0
        %4190 = vmatprep.subr.mxu0 0.0
        %4191 = vmatpush1.msra.mxu0 0.0
        %4192 = vmatprep.subr.mxu0 0.0
        %4193 = vmatpush1.msra.mxu0 0.0
        %4194 = vmatprep.subr.mxu0 0.0
        %4195 = vmatpush1.msra.mxu0 0.0
        %4196 = vmatprep.subr.mxu0 0.0
        %4197 = vmatpush1.msra.mxu0 0.0
        %4198 = vmatprep.subr.mxu0 0.0
        %4199 = vmatpush1.msra.mxu0 0.0
        %4200 = vmatprep.subr.mxu0 0.0
        %4201 = vmatpush1.msra.mxu0 0.0
        %v4202 = vand.u32 %v3535, 4294901760
        %v4203 = vsub.f32 %v3535, %v4202
        %v4204 = vand.u32 %v4203, 4294901760
        %v4205 = vsub.f32 %v4203, %v4204
        %v4206 = vand.u32 %v4205, 4294901760
        %4207 = vmatprep.subr.mxu0 %v4206
        %v4208 = vand.u32 %v3534, 4294901760
        %v4209 = vsub.f32 %v3534, %v4208
        %v4210 = vand.u32 %v4209, 4294901760
        %v4211 = vsub.f32 %v4209, %v4210
        %v4212 = vand.u32 %v4211, 4294901760
        %4213 = vmatpush1.msra.mxu0 %v4212
        %v4214 = vand.u32 %v3531, 4294901760
        %v4215 = vsub.f32 %v3531, %v4214
        %v4216 = vand.u32 %v4215, 4294901760
        %v4217 = vsub.f32 %v4215, %v4216
        %v4218 = vand.u32 %v4217, 4294901760
        %4219 = vmatprep.subr.mxu0 %v4218
        %v4220 = vand.u32 %v3530, 4294901760
        %v4221 = vsub.f32 %v3530, %v4220
        %v4222 = vand.u32 %v4221, 4294901760
        %v4223 = vsub.f32 %v4221, %v4222
        %v4224 = vand.u32 %v4223, 4294901760
        %4225 = vmatpush1.msra.mxu0 %v4224
        %v4226 = vand.u32 %v3527, 4294901760
        %v4227 = vsub.f32 %v3527, %v4226
        %v4228 = vand.u32 %v4227, 4294901760
        %v4229 = vsub.f32 %v4227, %v4228
        %v4230 = vand.u32 %v4229, 4294901760
        %4231 = vmatprep.subr.mxu0 %v4230
        %v4232 = vand.u32 %v3526, 4294901760
        %v4233 = vsub.f32 %v3526, %v4232
        %v4234 = vand.u32 %v4233, 4294901760
        %v4235 = vsub.f32 %v4233, %v4234
        %v4236 = vand.u32 %v4235, 4294901760
        %4237 = vmatpush1.msra.mxu0 %v4236
        %v4238 = vand.u32 %v3523, 4294901760
        %v4239 = vsub.f32 %v3523, %v4238
        %v4240 = vand.u32 %v4239, 4294901760
        %v4241 = vsub.f32 %v4239, %v4240
        %v4242 = vand.u32 %v4241, 4294901760
        %4243 = vmatprep.subr.mxu0 %v4242
        %v4244 = vand.u32 %v3522, 4294901760
        %v4245 = vsub.f32 %v3522, %v4244
        %v4246 = vand.u32 %v4245, 4294901760
        %v4247 = vsub.f32 %v4245, %v4246
        %v4248 = vand.u32 %v4247, 4294901760
        %4249 = vmatpush1.msra.mxu0 %v4248
        %4250 = vmatprep.subr.mxu0 0.0
        %4251 = vmatpush2.msra.mxu0 0.0
        %4252 = vmatprep.subr.mxu0 0.0
        %4253 = vmatpush2.msra.mxu0 0.0
        %4254 = vmatprep.subr.mxu0 0.0
        %4255 = vmatpush2.msra.mxu0 0.0
        %4256 = vmatprep.subr.mxu0 0.0
        %4257 = vmatpush2.msra.mxu0 0.0
        %4258 = vmatprep.subr.mxu0 0.0
        %4259 = vmatpush2.msra.mxu0 0.0
        %4260 = vmatprep.subr.mxu0 0.0
        %4261 = vmatpush2.msra.mxu0 0.0
        %4262 = vmatprep.subr.mxu0 0.0
        %4263 = vmatpush2.msra.mxu0 0.0
        %4264 = vmatprep.subr.mxu0 0.0
        %4265 = vmatpush2.msra.mxu0 0.0
        %4266 = vmatprep.subr.mxu0 0.0
        %4267 = vmatpush2.msra.mxu0 0.0
        %4268 = vmatprep.subr.mxu0 0.0
        %4269 = vmatpush2.msra.mxu0 0.0
        %4270 = vmatprep.subr.mxu0 0.0
        %4271 = vmatpush2.msra.mxu0 0.0
        %4272 = vmatprep.subr.mxu0 0.0
        %4273 = vmatpush2.msra.mxu0 0.0
        %4274 = vmatprep.subr.mxu0 0.0
        %4275 = vmatpush2.msra.mxu0 0.0
        %4276 = vmatprep.subr.mxu0 0.0
        %4277 = vmatpush2.msra.mxu0 0.0
        %4278 = vmatprep.subr.mxu0 0.0
        %4279 = vmatpush2.msra.mxu0 0.0
        %4280 = vmatprep.subr.mxu0 0.0
        %4281 = vmatpush2.msra.mxu0 0.0
        %4282 = vmatprep.mubr.f32.mxu0 0.0
        %v4283 = vand.u32 %v3549, 4294901760
        %4284 = vmatmul.mubr.f32.gmra.mxu0 %v4283
        %v4285 = vpop.f32.mrf.mxu0
        %v4286 = vadd.f32 %v4174, %v4285
        %v4287 = vpop.f32.mrf.mxu0
        %v4288 = vadd.f32 %v4176, %v4287
        %4289 = vdwg.mxu0
        %4290 = vmatprep.subr.mxu0 0.0
        %4291 = vmatpush1.msra.mxu0 0.0
        %4292 = vmatprep.subr.mxu0 0.0
        %4293 = vmatpush1.msra.mxu0 0.0
        %4294 = vmatprep.subr.mxu0 0.0
        %4295 = vmatpush1.msra.mxu0 0.0
        %4296 = vmatprep.subr.mxu0 0.0
        %4297 = vmatpush1.msra.mxu0 0.0
        %4298 = vmatprep.subr.mxu0 0.0
        %4299 = vmatpush1.msra.mxu0 0.0
        %4300 = vmatprep.subr.mxu0 0.0
        %4301 = vmatpush1.msra.mxu0 0.0
        %4302 = vmatprep.subr.mxu0 0.0
        %4303 = vmatpush1.msra.mxu0 0.0
        %4304 = vmatprep.subr.mxu0 0.0
        %4305 = vmatpush1.msra.mxu0 0.0
        %4306 = vmatprep.subr.mxu0 0.0
        %4307 = vmatpush1.msra.mxu0 0.0
        %4308 = vmatprep.subr.mxu0 0.0
        %4309 = vmatpush1.msra.mxu0 0.0
        %4310 = vmatprep.subr.mxu0 0.0
        %4311 = vmatpush1.msra.mxu0 0.0
        %4312 = vmatprep.subr.mxu0 0.0
        %4313 = vmatpush1.msra.mxu0 0.0
        %v4314 = vand.u32 %v3535, 4294901760
        %v4315 = vsub.f32 %v3535, %v4314
        %4316 = vmatprep.subr.mxu0 %v4315
        %v4317 = vand.u32 %v3534, 4294901760
        %v4318 = vsub.f32 %v3534, %v4317
        %4319 = vmatpush1.msra.mxu0 %v4318
        %v4320 = vand.u32 %v3531, 4294901760
        %v4321 = vsub.f32 %v3531, %v4320
        %4322 = vmatprep.subr.mxu0 %v4321
        %v4323 = vand.u32 %v3530, 4294901760
        %v4324 = vsub.f32 %v3530, %v4323
        %4325 = vmatpush1.msra.mxu0 %v4324
        %v4326 = vand.u32 %v3527, 4294901760
        %v4327 = vsub.f32 %v3527, %v4326
        %4328 = vmatprep.subr.mxu0 %v4327
        %v4329 = vand.u32 %v3526, 4294901760
        %v4330 = vsub.f32 %v3526, %v4329
        %4331 = vmatpush1.msra.mxu0 %v4330
        %v4332 = vand.u32 %v3523, 4294901760
        %v4333 = vsub.f32 %v3523, %v4332
        %4334 = vmatprep.subr.mxu0 %v4333
        %v4335 = vand.u32 %v3522, 4294901760
        %v4336 = vsub.f32 %v3522, %v4335
        %4337 = vmatpush1.msra.mxu0 %v4336
        %4338 = vmatprep.subr.mxu0 0.0
        %4339 = vmatpush2.msra.mxu0 0.0
        %4340 = vmatprep.subr.mxu0 0.0
        %4341 = vmatpush2.msra.mxu0 0.0
        %4342 = vmatprep.subr.mxu0 0.0
        %4343 = vmatpush2.msra.mxu0 0.0
        %4344 = vmatprep.subr.mxu0 0.0
        %4345 = vmatpush2.msra.mxu0 0.0
        %4346 = vmatprep.subr.mxu0 0.0
        %4347 = vmatpush2.msra.mxu0 0.0
        %4348 = vmatprep.subr.mxu0 0.0
        %4349 = vmatpush2.msra.mxu0 0.0
        %4350 = vmatprep.subr.mxu0 0.0
        %4351 = vmatpush2.msra.mxu0 0.0
        %4352 = vmatprep.subr.mxu0 0.0
        %4353 = vmatpush2.msra.mxu0 0.0
        %4354 = vmatprep.subr.mxu0 0.0
        %4355 = vmatpush2.msra.mxu0 0.0
        %4356 = vmatprep.subr.mxu0 0.0
        %4357 = vmatpush2.msra.mxu0 0.0
        %4358 = vmatprep.subr.mxu0 0.0
        %4359 = vmatpush2.msra.mxu0 0.0
        %4360 = vmatprep.subr.mxu0 0.0
        %4361 = vmatpush2.msra.mxu0 0.0
        %4362 = vmatprep.subr.mxu0 0.0
        %4363 = vmatpush2.msra.mxu0 0.0
        %4364 = vmatprep.subr.mxu0 0.0
        %4365 = vmatpush2.msra.mxu0 0.0
        %4366 = vmatprep.subr.mxu0 0.0
        %4367 = vmatpush2.msra.mxu0 0.0
        %4368 = vmatprep.subr.mxu0 0.0
        %4369 = vmatpush2.msra.mxu0 0.0
        %4370 = vmatprep.mubr.f32.mxu0 0.0
        %v4371 = vand.u32 %v3549, 4294901760
        %v4372 = vsub.f32 %v3549, %v4371
        %4373 = vmatmul.mubr.f32.gmra.mxu0 %v4372
        %v4374 = vpop.f32.mrf.mxu0
        %v4375 = vadd.f32 %v4286, %v4374
        %v4376 = vpop.f32.mrf.mxu0
        %v4377 = vadd.f32 %v4288, %v4376
        %4378 = vdwg.mxu0
        %4379 = vmatprep.subr.mxu0 0.0
        %4380 = vmatpush1.msra.mxu0 0.0
        %4381 = vmatprep.subr.mxu0 0.0
        %4382 = vmatpush1.msra.mxu0 0.0
        %4383 = vmatprep.subr.mxu0 0.0
        %4384 = vmatpush1.msra.mxu0 0.0
        %4385 = vmatprep.subr.mxu0 0.0
        %4386 = vmatpush1.msra.mxu0 0.0
        %4387 = vmatprep.subr.mxu0 0.0
        %4388 = vmatpush1.msra.mxu0 0.0
        %4389 = vmatprep.subr.mxu0 0.0
        %4390 = vmatpush1.msra.mxu0 0.0
        %4391 = vmatprep.subr.mxu0 0.0
        %4392 = vmatpush1.msra.mxu0 0.0
        %4393 = vmatprep.subr.mxu0 0.0
        %4394 = vmatpush1.msra.mxu0 0.0
        %4395 = vmatprep.subr.mxu0 0.0
        %4396 = vmatpush1.msra.mxu0 0.0
        %4397 = vmatprep.subr.mxu0 0.0
        %4398 = vmatpush1.msra.mxu0 0.0
        %4399 = vmatprep.subr.mxu0 0.0
        %4400 = vmatpush1.msra.mxu0 0.0
        %4401 = vmatprep.subr.mxu0 0.0
        %4402 = vmatpush1.msra.mxu0 0.0
        %v4403 = vand.u32 %v3535, 4294901760
        %4404 = vmatprep.subr.mxu0 %v4403
        %v4405 = vand.u32 %v3534, 4294901760
        %4406 = vmatpush1.msra.mxu0 %v4405
        %v4407 = vand.u32 %v3531, 4294901760
        %4408 = vmatprep.subr.mxu0 %v4407
        %v4409 = vand.u32 %v3530, 4294901760
        %4410 = vmatpush1.msra.mxu0 %v4409
        %v4411 = vand.u32 %v3527, 4294901760
        %4412 = vmatprep.subr.mxu0 %v4411
        %v4413 = vand.u32 %v3526, 4294901760
        %4414 = vmatpush1.msra.mxu0 %v4413
        %v4415 = vand.u32 %v3523, 4294901760
        %4416 = vmatprep.subr.mxu0 %v4415
        %v4417 = vand.u32 %v3522, 4294901760
        %4418 = vmatpush1.msra.mxu0 %v4417
        %4419 = vmatprep.subr.mxu0 0.0
        %4420 = vmatpush2.msra.mxu0 0.0
        %4421 = vmatprep.subr.mxu0 0.0
        %4422 = vmatpush2.msra.mxu0 0.0
        %4423 = vmatprep.subr.mxu0 0.0
        %4424 = vmatpush2.msra.mxu0 0.0
        %4425 = vmatprep.subr.mxu0 0.0
        %4426 = vmatpush2.msra.mxu0 0.0
        %4427 = vmatprep.subr.mxu0 0.0
        %4428 = vmatpush2.msra.mxu0 0.0
        %4429 = vmatprep.subr.mxu0 0.0
        %4430 = vmatpush2.msra.mxu0 0.0
        %4431 = vmatprep.subr.mxu0 0.0
        %4432 = vmatpush2.msra.mxu0 0.0
        %4433 = vmatprep.subr.mxu0 0.0
        %4434 = vmatpush2.msra.mxu0 0.0
        %4435 = vmatprep.subr.mxu0 0.0
        %4436 = vmatpush2.msra.mxu0 0.0
        %4437 = vmatprep.subr.mxu0 0.0
        %4438 = vmatpush2.msra.mxu0 0.0
        %4439 = vmatprep.subr.mxu0 0.0
        %4440 = vmatpush2.msra.mxu0 0.0
        %4441 = vmatprep.subr.mxu0 0.0
        %4442 = vmatpush2.msra.mxu0 0.0
        %4443 = vmatprep.subr.mxu0 0.0
        %4444 = vmatpush2.msra.mxu0 0.0
        %4445 = vmatprep.subr.mxu0 0.0
        %4446 = vmatpush2.msra.mxu0 0.0
        %4447 = vmatprep.subr.mxu0 0.0
        %4448 = vmatpush2.msra.mxu0 0.0
        %4449 = vmatprep.subr.mxu0 0.0
        %4450 = vmatpush2.msra.mxu0 0.0
        %4451 = vmatprep.mubr.f32.mxu0 0.0
        %v4452 = vand.u32 %v3549, 4294901760
        %v4453 = vsub.f32 %v3549, %v4452
        %v4454 = vand.u32 %v4453, 4294901760
        %4455 = vmatmul.mubr.f32.gmra.mxu0 %v4454
        %v4456 = vpop.f32.mrf.mxu0
        %v4457 = vadd.f32 %v4375, %v4456
        %v4458 = vpop.f32.mrf.mxu0
        %v4459 = vadd.f32 %v4377, %v4458
        %4460 = vdwg.mxu0
        %4461 = vmatprep.subr.mxu0 0.0
        %4462 = vmatpush1.msra.mxu0 0.0
        %4463 = vmatprep.subr.mxu0 0.0
        %4464 = vmatpush1.msra.mxu0 0.0
        %4465 = vmatprep.subr.mxu0 0.0
        %4466 = vmatpush1.msra.mxu0 0.0
        %4467 = vmatprep.subr.mxu0 0.0
        %4468 = vmatpush1.msra.mxu0 0.0
        %4469 = vmatprep.subr.mxu0 0.0
        %4470 = vmatpush1.msra.mxu0 0.0
        %4471 = vmatprep.subr.mxu0 0.0
        %4472 = vmatpush1.msra.mxu0 0.0
        %4473 = vmatprep.subr.mxu0 0.0
        %4474 = vmatpush1.msra.mxu0 0.0
        %4475 = vmatprep.subr.mxu0 0.0
        %4476 = vmatpush1.msra.mxu0 0.0
        %4477 = vmatprep.subr.mxu0 0.0
        %4478 = vmatpush1.msra.mxu0 0.0
        %4479 = vmatprep.subr.mxu0 0.0
        %4480 = vmatpush1.msra.mxu0 0.0
        %4481 = vmatprep.subr.mxu0 0.0
        %4482 = vmatpush1.msra.mxu0 0.0
        %4483 = vmatprep.subr.mxu0 0.0
        %4484 = vmatpush1.msra.mxu0 0.0
        %v4485 = vand.u32 %v3535, 4294901760
        %v4486 = vsub.f32 %v3535, %v4485
        %v4487 = vand.u32 %v4486, 4294901760
        %4488 = vmatprep.subr.mxu0 %v4487
        %v4489 = vand.u32 %v3534, 4294901760
        %v4490 = vsub.f32 %v3534, %v4489
        %v4491 = vand.u32 %v4490, 4294901760
        %4492 = vmatpush1.msra.mxu0 %v4491
        %v4493 = vand.u32 %v3531, 4294901760
        %v4494 = vsub.f32 %v3531, %v4493
        %v4495 = vand.u32 %v4494, 4294901760
        %4496 = vmatprep.subr.mxu0 %v4495
        %v4497 = vand.u32 %v3530, 4294901760
        %v4498 = vsub.f32 %v3530, %v4497
        %v4499 = vand.u32 %v4498, 4294901760
        %4500 = vmatpush1.msra.mxu0 %v4499
        %v4501 = vand.u32 %v3527, 4294901760
        %v4502 = vsub.f32 %v3527, %v4501
        %v4503 = vand.u32 %v4502, 4294901760
        %4504 = vmatprep.subr.mxu0 %v4503
        %v4505 = vand.u32 %v3526, 4294901760
        %v4506 = vsub.f32 %v3526, %v4505
        %v4507 = vand.u32 %v4506, 4294901760
        %4508 = vmatpush1.msra.mxu0 %v4507
        %v4509 = vand.u32 %v3523, 4294901760
        %v4510 = vsub.f32 %v3523, %v4509
        %v4511 = vand.u32 %v4510, 4294901760
        %4512 = vmatprep.subr.mxu0 %v4511
        %v4513 = vand.u32 %v3522, 4294901760
        %v4514 = vsub.f32 %v3522, %v4513
        %v4515 = vand.u32 %v4514, 4294901760
        %4516 = vmatpush1.msra.mxu0 %v4515
        %4517 = vmatprep.subr.mxu0 0.0
        %4518 = vmatpush2.msra.mxu0 0.0
        %4519 = vmatprep.subr.mxu0 0.0
        %4520 = vmatpush2.msra.mxu0 0.0
        %4521 = vmatprep.subr.mxu0 0.0
        %4522 = vmatpush2.msra.mxu0 0.0
        %4523 = vmatprep.subr.mxu0 0.0
        %4524 = vmatpush2.msra.mxu0 0.0
        %4525 = vmatprep.subr.mxu0 0.0
        %4526 = vmatpush2.msra.mxu0 0.0
        %4527 = vmatprep.subr.mxu0 0.0
        %4528 = vmatpush2.msra.mxu0 0.0
        %4529 = vmatprep.subr.mxu0 0.0
        %4530 = vmatpush2.msra.mxu0 0.0
        %4531 = vmatprep.subr.mxu0 0.0
        %4532 = vmatpush2.msra.mxu0 0.0
        %4533 = vmatprep.subr.mxu0 0.0
        %4534 = vmatpush2.msra.mxu0 0.0
        %4535 = vmatprep.subr.mxu0 0.0
        %4536 = vmatpush2.msra.mxu0 0.0
        %4537 = vmatprep.subr.mxu0 0.0
        %4538 = vmatpush2.msra.mxu0 0.0
        %4539 = vmatprep.subr.mxu0 0.0
        %4540 = vmatpush2.msra.mxu0 0.0
        %4541 = vmatprep.subr.mxu0 0.0
        %4542 = vmatpush2.msra.mxu0 0.0
        %4543 = vmatprep.subr.mxu0 0.0
        %4544 = vmatpush2.msra.mxu0 0.0
        %4545 = vmatprep.subr.mxu0 0.0
        %4546 = vmatpush2.msra.mxu0 0.0
        %4547 = vmatprep.subr.mxu0 0.0
        %4548 = vmatpush2.msra.mxu0 0.0
        %4549 = vmatprep.mubr.f32.mxu0 0.0
        %v4550 = vand.u32 %v3549, 4294901760
        %4551 = vmatmul.mubr.f32.gmra.mxu0 %v4550
        %v4552 = vpop.f32.mrf.mxu0
        %v4553 = vadd.f32 %v4457, %v4552
        %v4554 = vpop.f32.mrf.mxu0
        %v4555 = vadd.f32 %v4459, %v4554
        %4556 = vdwg.mxu0
        %4557 = vmatprep.subr.mxu0 0.0
        %4558 = vmatpush1.msra.mxu0 0.0
        %4559 = vmatprep.subr.mxu0 0.0
        %4560 = vmatpush1.msra.mxu0 0.0
        %4561 = vmatprep.subr.mxu0 0.0
        %4562 = vmatpush1.msra.mxu0 0.0
        %4563 = vmatprep.subr.mxu0 0.0
        %4564 = vmatpush1.msra.mxu0 0.0
        %4565 = vmatprep.subr.mxu0 0.0
        %4566 = vmatpush1.msra.mxu0 0.0
        %4567 = vmatprep.subr.mxu0 0.0
        %4568 = vmatpush1.msra.mxu0 0.0
        %4569 = vmatprep.subr.mxu0 0.0
        %4570 = vmatpush1.msra.mxu0 0.0
        %4571 = vmatprep.subr.mxu0 0.0
        %4572 = vmatpush1.msra.mxu0 0.0
        %4573 = vmatprep.subr.mxu0 0.0
        %4574 = vmatpush1.msra.mxu0 0.0
        %4575 = vmatprep.subr.mxu0 0.0
        %4576 = vmatpush1.msra.mxu0 0.0
        %4577 = vmatprep.subr.mxu0 0.0
        %4578 = vmatpush1.msra.mxu0 0.0
        %4579 = vmatprep.subr.mxu0 0.0
        %4580 = vmatpush1.msra.mxu0 0.0
        %v4581 = vand.u32 %v3535, 4294901760
        %4582 = vmatprep.subr.mxu0 %v4581
        %v4583 = vand.u32 %v3534, 4294901760
        %4584 = vmatpush1.msra.mxu0 %v4583
        %v4585 = vand.u32 %v3531, 4294901760
        %4586 = vmatprep.subr.mxu0 %v4585
        %v4587 = vand.u32 %v3530, 4294901760
        %4588 = vmatpush1.msra.mxu0 %v4587
        %v4589 = vand.u32 %v3527, 4294901760
        %4590 = vmatprep.subr.mxu0 %v4589
        %v4591 = vand.u32 %v3526, 4294901760
        %4592 = vmatpush1.msra.mxu0 %v4591
        %v4593 = vand.u32 %v3523, 4294901760
        %4594 = vmatprep.subr.mxu0 %v4593
        %v4595 = vand.u32 %v3522, 4294901760
        %4596 = vmatpush1.msra.mxu0 %v4595
        %4597 = vmatprep.subr.mxu0 0.0
        %4598 = vmatpush2.msra.mxu0 0.0
        %4599 = vmatprep.subr.mxu0 0.0
        %4600 = vmatpush2.msra.mxu0 0.0
        %4601 = vmatprep.subr.mxu0 0.0
        %4602 = vmatpush2.msra.mxu0 0.0
        %4603 = vmatprep.subr.mxu0 0.0
        %4604 = vmatpush2.msra.mxu0 0.0
        %4605 = vmatprep.subr.mxu0 0.0
        %4606 = vmatpush2.msra.mxu0 0.0
        %4607 = vmatprep.subr.mxu0 0.0
        %4608 = vmatpush2.msra.mxu0 0.0
        %4609 = vmatprep.subr.mxu0 0.0
        %4610 = vmatpush2.msra.mxu0 0.0
        %4611 = vmatprep.subr.mxu0 0.0
        %4612 = vmatpush2.msra.mxu0 0.0
        %4613 = vmatprep.subr.mxu0 0.0
        %4614 = vmatpush2.msra.mxu0 0.0
        %4615 = vmatprep.subr.mxu0 0.0
        %4616 = vmatpush2.msra.mxu0 0.0
        %4617 = vmatprep.subr.mxu0 0.0
        %4618 = vmatpush2.msra.mxu0 0.0
        %4619 = vmatprep.subr.mxu0 0.0
        %4620 = vmatpush2.msra.mxu0 0.0
        %4621 = vmatprep.subr.mxu0 0.0
        %4622 = vmatpush2.msra.mxu0 0.0
        %4623 = vmatprep.subr.mxu0 0.0
        %4624 = vmatpush2.msra.mxu0 0.0
        %4625 = vmatprep.subr.mxu0 0.0
        %4626 = vmatpush2.msra.mxu0 0.0
        %4627 = vmatprep.subr.mxu0 0.0
        %4628 = vmatpush2.msra.mxu0 0.0
        %4629 = vmatprep.mubr.f32.mxu0 0.0
        %v4630 = vand.u32 %v3549, 4294901760
        %4631 = vmatmul.mubr.f32.gmra.mxu0 %v4630
        %v4632 = vpop.f32.mrf.mxu0
        %v4633 = vadd.f32 %v4553, %v4632
        %v4634 = vpop.f32.mrf.mxu0
        %v4635 = vadd.f32 %v4555, %v4634
        %4636 = vdwg.mxu0
        %v4641 = vcombine.low %v4090, %v4092
        %v4642 = vcombine.low %v4633, %v4635
        %v4644 = vunpack.c.l.s4 1966171168
        %v4645 = vunpack.c.0.s8 %v4644
        %v4646 = vlaneseq
        %v4647 = vshrl.u32 %v4646, 7
        %v4648 = vsub.s32 %v4645, %v4647
        %v4649 = vrot.slane %v4641, %v4648
        %v4651 = vunpack.c.l.s4 1966171168
        %v4652 = vunpack.c.0.s8 %v4651
        %v4653 = vlaneseq
        %v4654 = vshrl.u32 %v4653, 7
        %v4655 = vsub.s32 %v4652, %v4654
        %v4656 = vrot.slane %v4642, %v4655
        %v4657 = vcombine.low %v4649, %v4656
        %v4659 = vunpack.c.l.s4 1966171168
        %v4660 = vunpack.c.0.s8 %v4659
        %v4661 = vlaneseq
        %v4662 = vshrl.u32 %v4661, 7
        %v4663 = vsub.s32 %v4660, %v4662
        %v4664 = vrot.slane %v4657, %v4663
        %v4666 = vlaneseq
        %vm4667 = vcmp.ge.s32.totalorder %v4666, 0
        %vm4668 = vcmp.lt.s32.totalorder %v4666, 512
        %vm4669 = vmand %vm4667, %vm4668
        %4670 = vst.msk [vmem:[%s420] sm:$0xf] %vm4669, %v4664
        %v4671 = vlaneseq
        %v4672 = vshrl.u32 %v4671, 7
        %v4673 = vsub.s32 0, %v4672
        %v4674 = vrot.slane %v4090, %v4673
        %v4675 = vlaneseq
        %v4676 = vshrl.u32 %v4675, 7
        %v4677 = vsub.s32 0, %v4676
        %v4678 = vrot.slane %v4092, %v4677
        %v4679 = vlaneseq
        %v4680 = vshrl.u32 %v4679, 7
        %v4681 = vsub.s32 0, %v4680
        %v4682 = vrot.slane %v4633, %v4681
        %v4683 = vlaneseq
        %v4684 = vshrl.u32 %v4683, 7
        %v4685 = vsub.s32 0, %v4684
        %v4686 = vrot.slane %v4635, %v4685
        %v4687 = vsel %vm486, %v4674, -1e+30
        %v4688 = vsel %vm487, %v4678, -1e+30
        %v4689 = vsel %vm488, %v4682, -1e+30
        %v4690 = vsel %vm489, %v4686, -1e+30
        %v4691 = vsel %vm490, %v4674, -1e+30
        %v4692 = vsel %vm491, %v4678, -1e+30
        %v4693 = vsel %vm492, %v4682, -1e+30
        %v4694 = vsel %vm493, %v4686, -1e+30
        %v4695 = vsel %vm494, %v4674, -1e+30
        %v4696 = vsel %vm495, %v4678, -1e+30
        %v4697 = vsel %vm496, %v4682, -1e+30
        %v4698 = vsel %vm497, %v4686, -1e+30
        %v4699 = vsel %vm498, %v4674, -1e+30
        %v4700 = vsel %vm499, %v4678, -1e+30
        %v4701 = vsel %vm500, %v4682, -1e+30
        %v4702 = vsel %vm501, %v4686, -1e+30
        %v4703 = vsel %vm502, %v4674, -1e+30
        %v4704 = vsel %vm503, %v4678, -1e+30
        %v4705 = vsel %vm504, %v4682, -1e+30
        %v4706 = vsel %vm505, %v4686, -1e+30
        %v4707 = vsel %vm506, %v4674, -1e+30
        %v4708 = vsel %vm507, %v4678, -1e+30
        %v4709 = vsel %vm508, %v4682, -1e+30
        %v4710 = vsel %vm509, %v4686, -1e+30
        %v4711 = vsel %vm510, %v4674, -1e+30
        %v4712 = vsel %vm511, %v4678, -1e+30
        %v4713 = vsel %vm512, %v4682, -1e+30
        %v4714 = vsel %vm513, %v4686, -1e+30
        %v4715 = vsel %vm514, %v4674, -1e+30
        %v4716 = vsel %vm515, %v4678, -1e+30
        %v4717 = vsel %vm516, %v4682, -1e+30
        %v4718 = vsel %vm517, %v4686, -1e+30
        %v4719 = vld [vmem:[%s10] sm:$0xff]
        %v4720 = vld [vmem:[%s10 + $0x8] sm:$0xff]
        %v4721 = vld [vmem:[%s10 + $0x10] sm:$0xff]
        %v4722 = vld [vmem:[%s10 + $0x18] sm:$0xff]
        %v4723 = vld [vmem:[%s10 + $0x20] sm:$0xff]
        %v4724 = vld [vmem:[%s10 + $0x28] sm:$0xff]
        %v4725 = vld [vmem:[%s10 + $0x30] sm:$0xff]
        %v4726 = vld [vmem:[%s10 + $0x38] sm:$0xff]
        %v4727 = vmax.f32 %v4687, %v4688
        %v4728 = vmax.f32 %v4727, %v4689
        %v4729 = vmax.f32 %v4728, %v4690
        %4730 = vmax.xlane.f32.xlu0 %v4729
        %v4731 = vpop.xlane.xlu0 %4730
        %v4732 = vmax.f32 %v4691, %v4692
        %v4733 = vmax.f32 %v4732, %v4693
        %v4734 = vmax.f32 %v4733, %v4694
        %4735 = vmax.xlane.f32.xlu0 %v4734
        %v4736 = vpop.xlane.xlu0 %4735
        %v4737 = vmax.f32 %v4695, %v4696
        %v4738 = vmax.f32 %v4737, %v4697
        %v4739 = vmax.f32 %v4738, %v4698
        %4740 = vmax.xlane.f32.xlu0 %v4739
        %v4741 = vpop.xlane.xlu0 %4740
        %v4742 = vmax.f32 %v4699, %v4700
        %v4743 = vmax.f32 %v4742, %v4701
        %v4744 = vmax.f32 %v4743, %v4702
        %4745 = vmax.xlane.f32.xlu0 %v4744
        %v4746 = vpop.xlane.xlu0 %4745
        %v4747 = vmax.f32 %v4703, %v4704
        %v4748 = vmax.f32 %v4747, %v4705
        %v4749 = vmax.f32 %v4748, %v4706
        %4750 = vmax.xlane.f32.xlu0 %v4749
        %v4751 = vpop.xlane.xlu0 %4750
        %v4752 = vmax.f32 %v4707, %v4708
        %v4753 = vmax.f32 %v4752, %v4709
        %v4754 = vmax.f32 %v4753, %v4710
        %4755 = vmax.xlane.f32.xlu0 %v4754
        %v4756 = vpop.xlane.xlu0 %4755
        %v4757 = vmax.f32 %v4711, %v4712
        %v4758 = vmax.f32 %v4757, %v4713
        %v4759 = vmax.f32 %v4758, %v4714
        %4760 = vmax.xlane.f32.xlu0 %v4759
        %v4761 = vpop.xlane.xlu0 %4760
        %v4762 = vmax.f32 %v4715, %v4716
        %v4763 = vmax.f32 %v4762, %v4717
        %v4764 = vmax.f32 %v4763, %v4718
        %4765 = vmax.xlane.f32.xlu0 %v4764
        %v4766 = vpop.xlane.xlu0 %4765
        %v4767 = vmax.f32 %v4719, %v4731
        %v4768 = vmax.f32 %v4720, %v4736
        %v4769 = vmax.f32 %v4721, %v4741
        %v4770 = vmax.f32 %v4722, %v4746
        %v4771 = vmax.f32 %v4723, %v4751
        %v4772 = vmax.f32 %v4724, %v4756
        %v4773 = vmax.f32 %v4725, %v4761
        %v4774 = vmax.f32 %v4726, %v4766
        %v4775 = vsub.f32 %v4719, %v4767
        %v4776 = vsub.f32 %v4720, %v4768
        %v4777 = vsub.f32 %v4721, %v4769
        %v4778 = vsub.f32 %v4722, %v4770
        %v4779 = vsub.f32 %v4723, %v4771
        %v4780 = vsub.f32 %v4724, %v4772
        %v4781 = vsub.f32 %v4725, %v4773
        %v4782 = vsub.f32 %v4726, %v4774
        %v4783 = vmul.f32 %v4775, 1.442695
        %v4784 = vpow.pop %v4783
        %v4785 = vmul.f32 %v4776, 1.442695
        %v4786 = vpow.pop %v4785
        %v4787 = vmul.f32 %v4777, 1.442695
        %v4788 = vpow.pop %v4787
        %v4789 = vmul.f32 %v4778, 1.442695
        %v4790 = vpow.pop %v4789
        %v4791 = vmul.f32 %v4779, 1.442695
        %v4792 = vpow.pop %v4791
        %v4793 = vmul.f32 %v4780, 1.442695
        %v4794 = vpow.pop %v4793
        %v4795 = vmul.f32 %v4781, 1.442695
        %v4796 = vpow.pop %v4795
        %v4797 = vmul.f32 %v4782, 1.442695
        %v4798 = vpow.pop %v4797
        %4800 = vset.pattern.permute.xlu0 0
        %4801 = vperm.xlu0 %4800, %v4767
        %v4802 = vpop.permute.xlu0 %4801
        %4805 = vset.pattern.permute.xlu0 0
        %4806 = vperm.xlu0 %4805, %v4768
        %v4807 = vpop.permute.xlu0 %4806
        %4810 = vset.pattern.permute.xlu0 0
        %4811 = vperm.xlu0 %4810, %v4769
        %v4812 = vpop.permute.xlu0 %4811
        %4815 = vset.pattern.permute.xlu0 0
        %4816 = vperm.xlu0 %4815, %v4770
        %v4817 = vpop.permute.xlu0 %4816
        %4820 = vset.pattern.permute.xlu0 0
        %4821 = vperm.xlu0 %4820, %v4771
        %v4822 = vpop.permute.xlu0 %4821
        %4825 = vset.pattern.permute.xlu0 0
        %4826 = vperm.xlu0 %4825, %v4772
        %v4827 = vpop.permute.xlu0 %4826
        %4830 = vset.pattern.permute.xlu0 0
        %4831 = vperm.xlu0 %4830, %v4773
        %v4832 = vpop.permute.xlu0 %4831
        %4835 = vset.pattern.permute.xlu0 0
        %4836 = vperm.xlu0 %4835, %v4774
        %v4837 = vpop.permute.xlu0 %4836
        %v4839 = vsel %vm486, %v4802, 0.0
        %v4840 = vsel %vm487, %v4802, 0.0
        %v4841 = vsel %vm488, %v4802, 0.0
        %v4842 = vsel %vm489, %v4802, 0.0
        %v4843 = vsel %vm490, %v4807, 0.0
        %v4844 = vsel %vm491, %v4807, 0.0
        %v4845 = vsel %vm492, %v4807, 0.0
        %v4846 = vsel %vm493, %v4807, 0.0
        %v4847 = vsel %vm494, %v4812, 0.0
        %v4848 = vsel %vm495, %v4812, 0.0
        %v4849 = vsel %vm496, %v4812, 0.0
        %v4850 = vsel %vm497, %v4812, 0.0
        %v4851 = vsel %vm498, %v4817, 0.0
        %v4852 = vsel %vm499, %v4817, 0.0
        %v4853 = vsel %vm500, %v4817, 0.0
        %v4854 = vsel %vm501, %v4817, 0.0
        %v4855 = vsel %vm502, %v4822, 0.0
        %v4856 = vsel %vm503, %v4822, 0.0
        %v4857 = vsel %vm504, %v4822, 0.0
        %v4858 = vsel %vm505, %v4822, 0.0
        %v4859 = vsel %vm506, %v4827, 0.0
        %v4860 = vsel %vm507, %v4827, 0.0
        %v4861 = vsel %vm508, %v4827, 0.0
        %v4862 = vsel %vm509, %v4827, 0.0
        %v4863 = vsel %vm510, %v4832, 0.0
        %v4864 = vsel %vm511, %v4832, 0.0
        %v4865 = vsel %vm512, %v4832, 0.0
        %v4866 = vsel %vm513, %v4832, 0.0
        %v4867 = vsel %vm514, %v4837, 0.0
        %v4868 = vsel %vm515, %v4837, 0.0
        %v4869 = vsel %vm516, %v4837, 0.0
        %v4870 = vsel %vm517, %v4837, 0.0
        %v4871 = vadd.f32 %v4839, %v4843
        %v4872 = vadd.f32 %v4871, %v4847
        %v4873 = vadd.f32 %v4872, %v4851
        %v4874 = vadd.f32 %v4873, %v4855
        %v4875 = vadd.f32 %v4874, %v4859
        %v4876 = vadd.f32 %v4875, %v4863
        %v4877 = vadd.f32 %v4876, %v4867
        %v4878 = vrot.slane %v4877, 4
        %v4879 = vadd.f32 %v4877, %v4878
        %v4880 = vrot.slane %v4879, 2
        %v4881 = vadd.f32 %v4879, %v4880
        %v4882 = vrot.slane %v4881, 1
        %v4883 = vadd.f32 %v4881, %v4882
        %v4884 = vadd.f32 %v4840, %v4844
        %v4885 = vadd.f32 %v4884, %v4848
        %v4886 = vadd.f32 %v4885, %v4852
        %v4887 = vadd.f32 %v4886, %v4856
        %v4888 = vadd.f32 %v4887, %v4860
        %v4889 = vadd.f32 %v4888, %v4864
        %v4890 = vadd.f32 %v4889, %v4868
        %v4891 = vrot.slane %v4890, 4
        %v4892 = vadd.f32 %v4890, %v4891
        %v4893 = vrot.slane %v4892, 2
        %v4894 = vadd.f32 %v4892, %v4893
        %v4895 = vrot.slane %v4894, 1
        %v4896 = vadd.f32 %v4894, %v4895
        %v4897 = vadd.f32 %v4841, %v4845
        %v4898 = vadd.f32 %v4897, %v4849
        %v4899 = vadd.f32 %v4898, %v4853
        %v4900 = vadd.f32 %v4899, %v4857
        %v4901 = vadd.f32 %v4900, %v4861
        %v4902 = vadd.f32 %v4901, %v4865
        %v4903 = vadd.f32 %v4902, %v4869
        %v4904 = vrot.slane %v4903, 4
        %v4905 = vadd.f32 %v4903, %v4904
        %v4906 = vrot.slane %v4905, 2
        %v4907 = vadd.f32 %v4905, %v4906
        %v4908 = vrot.slane %v4907, 1
        %v4909 = vadd.f32 %v4907, %v4908
        %v4910 = vadd.f32 %v4842, %v4846
        %v4911 = vadd.f32 %v4910, %v4850
        %v4912 = vadd.f32 %v4911, %v4854
        %v4913 = vadd.f32 %v4912, %v4858
        %v4914 = vadd.f32 %v4913, %v4862
        %v4915 = vadd.f32 %v4914, %v4866
        %v4916 = vadd.f32 %v4915, %v4870
        %v4917 = vrot.slane %v4916, 4
        %v4918 = vadd.f32 %v4916, %v4917
        %v4919 = vrot.slane %v4918, 2
        %v4920 = vadd.f32 %v4918, %v4919
        %v4921 = vrot.slane %v4920, 1
        %v4922 = vadd.f32 %v4920, %v4921
        %v4923 = vsub.f32 %v4090, %v4883
        %v4924 = vsub.f32 %v4092, %v4896
        %v4925 = vsub.f32 %v4633, %v4909
        %v4926 = vsub.f32 %v4635, %v4922
        %v4927 = vmul.f32 %v4923, 1.442695
        %v4928 = vpow.pop %v4927
        %v4929 = vmul.f32 %v4924, 1.442695
        %v4930 = vpow.pop %v4929
        %v4931 = vmul.f32 %v4925, 1.442695
        %v4932 = vpow.pop %v4931
        %v4933 = vmul.f32 %v4926, 1.442695
        %v4934 = vpow.pop %v4933
        %v4935 = vlaneseq
        %v4936 = vshrl.u32 %v4935, 7
        %v4937 = vsub.s32 0, %v4936
        %v4938 = vrot.slane %v4928, %v4937
        %v4939 = vlaneseq
        %v4940 = vshrl.u32 %v4939, 7
        %v4941 = vsub.s32 0, %v4940
        %v4942 = vrot.slane %v4930, %v4941
        %v4943 = vlaneseq
        %v4944 = vshrl.u32 %v4943, 7
        %v4945 = vsub.s32 0, %v4944
        %v4946 = vrot.slane %v4932, %v4945
        %v4947 = vlaneseq
        %v4948 = vshrl.u32 %v4947, 7
        %v4949 = vsub.s32 0, %v4948
        %v4950 = vrot.slane %v4934, %v4949
        %v4951 = vmul.f32 %v574, %v4938
        %v4952 = vmul.f32 %v575, %v4942
        %v4953 = vmul.f32 %v576, %v4946
        %v4954 = vmul.f32 %v577, %v4950
        %v4955 = vmul.f32 %v578, %v4938
        %v4956 = vmul.f32 %v579, %v4942
        %v4957 = vmul.f32 %v580, %v4946
        %v4958 = vmul.f32 %v581, %v4950
        %v4959 = vmul.f32 %v582, %v4938
        %v4960 = vmul.f32 %v583, %v4942
        %v4961 = vmul.f32 %v584, %v4946
        %v4962 = vmul.f32 %v585, %v4950
        %v4963 = vmul.f32 %v586, %v4938
        %v4964 = vmul.f32 %v587, %v4942
        %v4965 = vmul.f32 %v588, %v4946
        %v4966 = vmul.f32 %v589, %v4950
        %v4967 = vmul.f32 %v590, %v4938
        %v4968 = vmul.f32 %v591, %v4942
        %v4969 = vmul.f32 %v592, %v4946
        %v4970 = vmul.f32 %v593, %v4950
        %v4971 = vmul.f32 %v594, %v4938
        %v4972 = vmul.f32 %v595, %v4942
        %v4973 = vmul.f32 %v596, %v4946
        %v4974 = vmul.f32 %v597, %v4950
        %v4975 = vmul.f32 %v598, %v4938
        %v4976 = vmul.f32 %v599, %v4942
        %v4977 = vmul.f32 %v600, %v4946
        %v4978 = vmul.f32 %v601, %v4950
        %v4979 = vmul.f32 %v602, %v4938
        %v4980 = vmul.f32 %v603, %v4942
        %v4981 = vmul.f32 %v604, %v4946
        %v4982 = vmul.f32 %v605, %v4950
        %v4983 = vld [vmem:[%s11] sm:$0xff]
        %v4984 = vld [vmem:[%s11 + $0x8] sm:$0xff]
        %v4985 = vld [vmem:[%s11 + $0x10] sm:$0xff]
        %v4986 = vld [vmem:[%s11 + $0x18] sm:$0xff]
        %v4987 = vld [vmem:[%s11 + $0x20] sm:$0xff]
        %v4988 = vld [vmem:[%s11 + $0x28] sm:$0xff]
        %v4989 = vld [vmem:[%s11 + $0x30] sm:$0xff]
        %v4990 = vld [vmem:[%s11 + $0x38] sm:$0xff]
        %v4991 = vmul.f32 %v4784, %v4983
        %v4992 = vmul.f32 %v4786, %v4984
        %v4993 = vmul.f32 %v4788, %v4985
        %v4994 = vmul.f32 %v4790, %v4986
        %v4995 = vmul.f32 %v4792, %v4987
        %v4996 = vmul.f32 %v4794, %v4988
        %v4997 = vmul.f32 %v4796, %v4989
        %v4998 = vmul.f32 %v4798, %v4990
        %v4999 = vadd.f32 %v4951, %v4952
        %v5000 = vadd.f32 %v4999, %v4953
        %v5001 = vadd.f32 %v5000, %v4954
        %5002 = vadd.xlane.f32.xlu0 %v5001
        %v5003 = vpop.xlane.xlu0 %5002
        %v5004 = vadd.f32 %v4955, %v4956
        %v5005 = vadd.f32 %v5004, %v4957
        %v5006 = vadd.f32 %v5005, %v4958
        %5007 = vadd.xlane.f32.xlu0 %v5006
        %v5008 = vpop.xlane.xlu0 %5007
        %v5009 = vadd.f32 %v4959, %v4960
        %v5010 = vadd.f32 %v5009, %v4961
        %v5011 = vadd.f32 %v5010, %v4962
        %5012 = vadd.xlane.f32.xlu0 %v5011
        %v5013 = vpop.xlane.xlu0 %5012
        %v5014 = vadd.f32 %v4963, %v4964
        %v5015 = vadd.f32 %v5014, %v4965
        %v5016 = vadd.f32 %v5015, %v4966
        %5017 = vadd.xlane.f32.xlu0 %v5016
        %v5018 = vpop.xlane.xlu0 %5017
        %v5019 = vadd.f32 %v4967, %v4968
        %v5020 = vadd.f32 %v5019, %v4969
        %v5021 = vadd.f32 %v5020, %v4970
        %5022 = vadd.xlane.f32.xlu0 %v5021
        %v5023 = vpop.xlane.xlu0 %5022
        %v5024 = vadd.f32 %v4971, %v4972
        %v5025 = vadd.f32 %v5024, %v4973
        %v5026 = vadd.f32 %v5025, %v4974
        %5027 = vadd.xlane.f32.xlu0 %v5026
        %v5028 = vpop.xlane.xlu0 %5027
        %v5029 = vadd.f32 %v4975, %v4976
        %v5030 = vadd.f32 %v5029, %v4977
        %v5031 = vadd.f32 %v5030, %v4978
        %5032 = vadd.xlane.f32.xlu0 %v5031
        %v5033 = vpop.xlane.xlu0 %5032
        %v5034 = vadd.f32 %v4979, %v4980
        %v5035 = vadd.f32 %v5034, %v4981
        %v5036 = vadd.f32 %v5035, %v4982
        %5037 = vadd.xlane.f32.xlu0 %v5036
        %v5038 = vpop.xlane.xlu0 %5037
        %v5039 = vadd.f32 %v4991, %v5003
        %v5040 = vadd.f32 %v4992, %v5008
        %v5041 = vadd.f32 %v4993, %v5013
        %v5042 = vadd.f32 %v4994, %v5018
        %v5043 = vadd.f32 %v4995, %v5023
        %v5044 = vadd.f32 %v4996, %v5028
        %v5045 = vadd.f32 %v4997, %v5033
        %v5046 = vadd.f32 %v4998, %v5038
        %vm5047 = vcmask 7168
        %5048 = vst.msk [vmem:[%s11] sm:$0xff] %vm5047, %v5039
        %5049 = vst.msk [vmem:[%s11 + $0x8] sm:$0xff] %vm5047, %v5040
        %5050 = vst.msk [vmem:[%s11 + $0x10] sm:$0xff] %vm5047, %v5041
        %5051 = vst.msk [vmem:[%s11 + $0x18] sm:$0xff] %vm5047, %v5042
        %5052 = vst.msk [vmem:[%s11 + $0x20] sm:$0xff] %vm5047, %v5043
        %5053 = vst.msk [vmem:[%s11 + $0x28] sm:$0xff] %vm5047, %v5044
        %5054 = vst.msk [vmem:[%s11 + $0x30] sm:$0xff] %vm5047, %v5045
        %5055 = vst.msk [vmem:[%s11 + $0x38] sm:$0xff] %vm5047, %v5046
        %5056 = vst.msk [vmem:[%s10] sm:$0xff] %vm5047, %v4767
        %5057 = vst.msk [vmem:[%s10 + $0x8] sm:$0xff] %vm5047, %v4768
        %5058 = vst.msk [vmem:[%s10 + $0x10] sm:$0xff] %vm5047, %v4769
        %5059 = vst.msk [vmem:[%s10 + $0x18] sm:$0xff] %vm5047, %v4770
        %5060 = vst.msk [vmem:[%s10 + $0x20] sm:$0xff] %vm5047, %v4771
        %5061 = vst.msk [vmem:[%s10 + $0x28] sm:$0xff] %vm5047, %v4772
        %5062 = vst.msk [vmem:[%s10 + $0x30] sm:$0xff] %vm5047, %v4773
        %5063 = vst.msk [vmem:[%s10 + $0x38] sm:$0xff] %vm5047, %v4774
        %v5064 = vld [vmem:[#allocation2] sm:$0xff]
        %v5065 = vld [vmem:[#allocation2 + $0x8] sm:$0xff]
        %v5066 = vld [vmem:[#allocation2 + $0x10] sm:$0xff]
        %v5067 = vld [vmem:[#allocation2 + $0x18] sm:$0xff]
        %v5068 = vld [vmem:[#allocation2 + $0x20] sm:$0xff]
        %v5069 = vld [vmem:[#allocation2 + $0x28] sm:$0xff]
        %v5070 = vld [vmem:[#allocation2 + $0x30] sm:$0xff]
        %v5071 = vld [vmem:[#allocation2 + $0x38] sm:$0xff]
        %5073 = vset.pattern.permute.xlu0 0
        %5074 = vperm.xlu0 %5073, %v4784
        %v5075 = vpop.permute.xlu0 %5074
        %5078 = vset.pattern.permute.xlu0 0
        %5079 = vperm.xlu0 %5078, %v4786
        %v5080 = vpop.permute.xlu0 %5079
        %5083 = vset.pattern.permute.xlu0 0
        %5084 = vperm.xlu0 %5083, %v4788
        %v5085 = vpop.permute.xlu0 %5084
        %5088 = vset.pattern.permute.xlu0 0
        %5089 = vperm.xlu0 %5088, %v4790
        %v5090 = vpop.permute.xlu0 %5089
        %5093 = vset.pattern.permute.xlu0 0
        %5094 = vperm.xlu0 %5093, %v4792
        %v5095 = vpop.permute.xlu0 %5094
        %5098 = vset.pattern.permute.xlu0 0
        %5099 = vperm.xlu0 %5098, %v4794
        %v5100 = vpop.permute.xlu0 %5099
        %5103 = vset.pattern.permute.xlu0 0
        %5104 = vperm.xlu0 %5103, %v4796
        %v5105 = vpop.permute.xlu0 %5104
        %5108 = vset.pattern.permute.xlu0 0
        %5109 = vperm.xlu0 %5108, %v4798
        %v5110 = vpop.permute.xlu0 %5109
        %v5112 = vmul.f32 %v5075, %v5064
        %v5113 = vmul.f32 %v5080, %v5065
        %v5114 = vmul.f32 %v5085, %v5066
        %v5115 = vmul.f32 %v5090, %v5067
        %v5116 = vmul.f32 %v5095, %v5068
        %v5117 = vmul.f32 %v5100, %v5069
        %v5118 = vmul.f32 %v5105, %v5070
        %v5119 = vmul.f32 %v5110, %v5071
        %5120 = vmatprep.subr.mxu0 0.0
        %5121 = vmatpush1.xpose.msra.mxu0 0.0
        %5122 = vmatprep.subr.mxu0 0.0
        %5123 = vmatpush1.xpose.msra.mxu0 0.0
        %5124 = vmatprep.subr.mxu0 0.0
        %5125 = vmatpush1.xpose.msra.mxu0 0.0
        %5126 = vmatprep.subr.mxu0 0.0
        %5127 = vmatpush1.xpose.msra.mxu0 0.0
        %5128 = vmatprep.subr.mxu0 0.0
        %5129 = vmatpush1.xpose.msra.mxu0 0.0
        %5130 = vmatprep.subr.mxu0 0.0
        %5131 = vmatpush1.xpose.msra.mxu0 0.0
        %5132 = vmatprep.subr.mxu0 0.0
        %5133 = vmatpush1.xpose.msra.mxu0 0.0
        %5134 = vmatprep.subr.mxu0 0.0
        %5135 = vmatpush1.xpose.msra.mxu0 0.0
        %5136 = vmatprep.subr.mxu0 0.0
        %5137 = vmatpush1.xpose.msra.mxu0 0.0
        %5138 = vmatprep.subr.mxu0 0.0
        %5139 = vmatpush1.xpose.msra.mxu0 0.0
        %5140 = vmatprep.subr.mxu0 0.0
        %5141 = vmatpush1.xpose.msra.mxu0 0.0
        %5142 = vmatprep.subr.mxu0 0.0
        %5143 = vmatpush1.xpose.msra.mxu0 0.0
        %v5144 = vand.u32 %v1279, 4294901760
        %5145 = vmatprep.subr.mxu0 %v5144
        %v5146 = vand.u32 %v1277, 4294901760
        %5147 = vmatpush1.xpose.msra.mxu0 %v5146
        %v5148 = vand.u32 %v1272, 4294901760
        %5149 = vmatprep.subr.mxu0 %v5148
        %v5150 = vand.u32 %v1270, 4294901760
        %5151 = vmatpush1.xpose.msra.mxu0 %v5150
        %v5152 = vand.u32 %v1265, 4294901760
        %5153 = vmatprep.subr.mxu0 %v5152
        %v5154 = vand.u32 %v1263, 4294901760
        %5155 = vmatpush1.xpose.msra.mxu0 %v5154
        %v5156 = vand.u32 %v1258, 4294901760
        %5157 = vmatprep.subr.mxu0 %v5156
        %v5158 = vand.u32 %v1256, 4294901760
        %5159 = vmatpush1.xpose.msra.mxu0 %v5158
        %5160 = vmatprep.subr.mxu0 0.0
        %5161 = vmatpush2.xpose.msra.mxu0 0.0
        %5162 = vmatprep.subr.mxu0 0.0
        %5163 = vmatpush2.xpose.msra.mxu0 0.0
        %5164 = vmatprep.subr.mxu0 0.0
        %5165 = vmatpush2.xpose.msra.mxu0 0.0
        %5166 = vmatprep.subr.mxu0 0.0
        %5167 = vmatpush2.xpose.msra.mxu0 0.0
        %5168 = vmatprep.subr.mxu0 0.0
        %5169 = vmatpush2.xpose.msra.mxu0 0.0
        %5170 = vmatprep.subr.mxu0 0.0
        %5171 = vmatpush2.xpose.msra.mxu0 0.0
        %5172 = vmatprep.subr.mxu0 0.0
        %5173 = vmatpush2.xpose.msra.mxu0 0.0
        %5174 = vmatprep.subr.mxu0 0.0
        %5175 = vmatpush2.xpose.msra.mxu0 0.0
        %5176 = vmatprep.subr.mxu0 0.0
        %5177 = vmatpush2.xpose.msra.mxu0 0.0
        %5178 = vmatprep.subr.mxu0 0.0
        %5179 = vmatpush2.xpose.msra.mxu0 0.0
        %5180 = vmatprep.subr.mxu0 0.0
        %5181 = vmatpush2.xpose.msra.mxu0 0.0
        %5182 = vmatprep.subr.mxu0 0.0
        %5183 = vmatpush2.xpose.msra.mxu0 0.0
        %5184 = vmatprep.subr.mxu0 0.0
        %5185 = vmatpush2.xpose.msra.mxu0 0.0
        %5186 = vmatprep.subr.mxu0 0.0
        %5187 = vmatpush2.xpose.msra.mxu0 0.0
        %5188 = vmatprep.subr.mxu0 0.0
        %5189 = vmatpush2.xpose.msra.mxu0 0.0
        %5190 = vmatprep.subr.mxu0 0.0
        %5191 = vmatpush2.xpose.msra.mxu0 0.0
        %v5192 = vand.u32 %v4952, 4294901760
        %v5193 = vsub.f32 %v4952, %v5192
        %v5194 = vand.u32 %v5193, 4294901760
        %v5195 = vsub.f32 %v5193, %v5194
        %v5196 = vand.u32 %v5195, 4294901760
        %5197 = vmatprep.mubr.f32.mxu0 %v5196
        %v5198 = vand.u32 %v4951, 4294901760
        %v5199 = vsub.f32 %v4951, %v5198
        %v5200 = vand.u32 %v5199, 4294901760
        %v5201 = vsub.f32 %v5199, %v5200
        %v5202 = vand.u32 %v5201, 4294901760
        %5203 = vmatmul.mubr.f32.gmra.mxu0 %v5202
        %v5204 = vpop.f32.mrf.mxu0
        %v5205 = vadd.f32 0.0, %v5204
        %v5206 = vpop.f32.mrf.mxu0
        %v5207 = vand.u32 %v4956, 4294901760
        %v5208 = vsub.f32 %v4956, %v5207
        %v5209 = vand.u32 %v5208, 4294901760
        %v5210 = vsub.f32 %v5208, %v5209
        %v5211 = vand.u32 %v5210, 4294901760
        %5212 = vmatprep.mubr.f32.mxu0 %v5211
        %v5213 = vand.u32 %v4955, 4294901760
        %v5214 = vsub.f32 %v4955, %v5213
        %v5215 = vand.u32 %v5214, 4294901760
        %v5216 = vsub.f32 %v5214, %v5215
        %v5217 = vand.u32 %v5216, 4294901760
        %5218 = vmatmul.mubr.f32.gmra.mxu0 %v5217
        %v5219 = vpop.f32.mrf.mxu0
        %v5220 = vadd.f32 0.0, %v5219
        %v5221 = vpop.f32.mrf.mxu0
        %v5222 = vand.u32 %v4960, 4294901760
        %v5223 = vsub.f32 %v4960, %v5222
        %v5224 = vand.u32 %v5223, 4294901760
        %v5225 = vsub.f32 %v5223, %v5224
        %v5226 = vand.u32 %v5225, 4294901760
        %5227 = vmatprep.mubr.f32.mxu0 %v5226
        %v5228 = vand.u32 %v4959, 4294901760
        %v5229 = vsub.f32 %v4959, %v5228
        %v5230 = vand.u32 %v5229, 4294901760
        %v5231 = vsub.f32 %v5229, %v5230
        %v5232 = vand.u32 %v5231, 4294901760
        %5233 = vmatmul.mubr.f32.gmra.mxu0 %v5232
        %v5234 = vpop.f32.mrf.mxu0
        %v5235 = vadd.f32 0.0, %v5234
        %v5236 = vpop.f32.mrf.mxu0
        %v5237 = vand.u32 %v4964, 4294901760
        %v5238 = vsub.f32 %v4964, %v5237
        %v5239 = vand.u32 %v5238, 4294901760
        %v5240 = vsub.f32 %v5238, %v5239
        %v5241 = vand.u32 %v5240, 4294901760
        %5242 = vmatprep.mubr.f32.mxu0 %v5241
        %v5243 = vand.u32 %v4963, 4294901760
        %v5244 = vsub.f32 %v4963, %v5243
        %v5245 = vand.u32 %v5244, 4294901760
        %v5246 = vsub.f32 %v5244, %v5245
        %v5247 = vand.u32 %v5246, 4294901760
        %5248 = vmatmul.mubr.f32.gmra.mxu0 %v5247
        %v5249 = vpop.f32.mrf.mxu0
        %v5250 = vadd.f32 0.0, %v5249
        %v5251 = vpop.f32.mrf.mxu0
        %v5252 = vand.u32 %v4968, 4294901760
        %v5253 = vsub.f32 %v4968, %v5252
        %v5254 = vand.u32 %v5253, 4294901760
        %v5255 = vsub.f32 %v5253, %v5254
        %v5256 = vand.u32 %v5255, 4294901760
        %5257 = vmatprep.mubr.f32.mxu0 %v5256
        %v5258 = vand.u32 %v4967, 4294901760
        %v5259 = vsub.f32 %v4967, %v5258
        %v5260 = vand.u32 %v5259, 4294901760
        %v5261 = vsub.f32 %v5259, %v5260
        %v5262 = vand.u32 %v5261, 4294901760
        %5263 = vmatmul.mubr.f32.gmra.mxu0 %v5262
        %v5264 = vpop.f32.mrf.mxu0
        %v5265 = vadd.f32 0.0, %v5264
        %v5266 = vpop.f32.mrf.mxu0
        %v5267 = vand.u32 %v4972, 4294901760
        %v5268 = vsub.f32 %v4972, %v5267
        %v5269 = vand.u32 %v5268, 4294901760
        %v5270 = vsub.f32 %v5268, %v5269
        %v5271 = vand.u32 %v5270, 4294901760
        %5272 = vmatprep.mubr.f32.mxu0 %v5271
        %v5273 = vand.u32 %v4971, 4294901760
        %v5274 = vsub.f32 %v4971, %v5273
        %v5275 = vand.u32 %v5274, 4294901760
        %v5276 = vsub.f32 %v5274, %v5275
        %v5277 = vand.u32 %v5276, 4294901760
        %5278 = vmatmul.mubr.f32.gmra.mxu0 %v5277
        %v5279 = vpop.f32.mrf.mxu0
        %v5280 = vadd.f32 0.0, %v5279
        %v5281 = vpop.f32.mrf.mxu0
        %v5282 = vand.u32 %v4976, 4294901760
        %v5283 = vsub.f32 %v4976, %v5282
        %v5284 = vand.u32 %v5283, 4294901760
        %v5285 = vsub.f32 %v5283, %v5284
        %v5286 = vand.u32 %v5285, 4294901760
        %5287 = vmatprep.mubr.f32.mxu0 %v5286
        %v5288 = vand.u32 %v4975, 4294901760
        %v5289 = vsub.f32 %v4975, %v5288
        %v5290 = vand.u32 %v5289, 4294901760
        %v5291 = vsub.f32 %v5289, %v5290
        %v5292 = vand.u32 %v5291, 4294901760
        %5293 = vmatmul.mubr.f32.gmra.mxu0 %v5292
        %v5294 = vpop.f32.mrf.mxu0
        %v5295 = vadd.f32 0.0, %v5294
        %v5296 = vpop.f32.mrf.mxu0
        %v5297 = vand.u32 %v4980, 4294901760
        %v5298 = vsub.f32 %v4980, %v5297
        %v5299 = vand.u32 %v5298, 4294901760
        %v5300 = vsub.f32 %v5298, %v5299
        %v5301 = vand.u32 %v5300, 4294901760
        %5302 = vmatprep.mubr.f32.mxu0 %v5301
        %v5303 = vand.u32 %v4979, 4294901760
        %v5304 = vsub.f32 %v4979, %v5303
        %v5305 = vand.u32 %v5304, 4294901760
        %v5306 = vsub.f32 %v5304, %v5305
        %v5307 = vand.u32 %v5306, 4294901760
        %5308 = vmatmul.mubr.f32.gmra.mxu0 %v5307
        %v5309 = vpop.f32.mrf.mxu0
        %v5310 = vadd.f32 0.0, %v5309
        %v5311 = vpop.f32.mrf.mxu0
        %5312 = vdwg.mxu0
        %5313 = vmatprep.subr.mxu0 0.0
        %5314 = vmatpush1.xpose.msra.mxu0 0.0
        %5315 = vmatprep.subr.mxu0 0.0
        %5316 = vmatpush1.xpose.msra.mxu0 0.0
        %5317 = vmatprep.subr.mxu0 0.0
        %5318 = vmatpush1.xpose.msra.mxu0 0.0
        %5319 = vmatprep.subr.mxu0 0.0
        %5320 = vmatpush1.xpose.msra.mxu0 0.0
        %5321 = vmatprep.subr.mxu0 0.0
        %5322 = vmatpush1.xpose.msra.mxu0 0.0
        %5323 = vmatprep.subr.mxu0 0.0
        %5324 = vmatpush1.xpose.msra.mxu0 0.0
        %5325 = vmatprep.subr.mxu0 0.0
        %5326 = vmatpush1.xpose.msra.mxu0 0.0
        %5327 = vmatprep.subr.mxu0 0.0
        %5328 = vmatpush1.xpose.msra.mxu0 0.0
        %5329 = vmatprep.subr.mxu0 0.0
        %5330 = vmatpush1.xpose.msra.mxu0 0.0
        %5331 = vmatprep.subr.mxu0 0.0
        %5332 = vmatpush1.xpose.msra.mxu0 0.0
        %5333 = vmatprep.subr.mxu0 0.0
        %5334 = vmatpush1.xpose.msra.mxu0 0.0
        %5335 = vmatprep.subr.mxu0 0.0
        %5336 = vmatpush1.xpose.msra.mxu0 0.0
        %v5337 = vand.u32 %v1279, 4294901760
        %v5338 = vsub.f32 %v1279, %v5337
        %v5339 = vand.u32 %v5338, 4294901760
        %v5340 = vsub.f32 %v5338, %v5339
        %v5341 = vand.u32 %v5340, 4294901760
        %5342 = vmatprep.subr.mxu0 %v5341
        %v5343 = vand.u32 %v1277, 4294901760
        %v5344 = vsub.f32 %v1277, %v5343
        %v5345 = vand.u32 %v5344, 4294901760
        %v5346 = vsub.f32 %v5344, %v5345
        %v5347 = vand.u32 %v5346, 4294901760
        %5348 = vmatpush1.xpose.msra.mxu0 %v5347
        %v5349 = vand.u32 %v1272, 4294901760
        %v5350 = vsub.f32 %v1272, %v5349
        %v5351 = vand.u32 %v5350, 4294901760
        %v5352 = vsub.f32 %v5350, %v5351
        %v5353 = vand.u32 %v5352, 4294901760
        %5354 = vmatprep.subr.mxu0 %v5353
        %v5355 = vand.u32 %v1270, 4294901760
        %v5356 = vsub.f32 %v1270, %v5355
        %v5357 = vand.u32 %v5356, 4294901760
        %v5358 = vsub.f32 %v5356, %v5357
        %v5359 = vand.u32 %v5358, 4294901760
        %5360 = vmatpush1.xpose.msra.mxu0 %v5359
        %v5361 = vand.u32 %v1265, 4294901760
        %v5362 = vsub.f32 %v1265, %v5361
        %v5363 = vand.u32 %v5362, 4294901760
        %v5364 = vsub.f32 %v5362, %v5363
        %v5365 = vand.u32 %v5364, 4294901760
        %5366 = vmatprep.subr.mxu0 %v5365
        %v5367 = vand.u32 %v1263, 4294901760
        %v5368 = vsub.f32 %v1263, %v5367
        %v5369 = vand.u32 %v5368, 4294901760
        %v5370 = vsub.f32 %v5368, %v5369
        %v5371 = vand.u32 %v5370, 4294901760
        %5372 = vmatpush1.xpose.msra.mxu0 %v5371
        %v5373 = vand.u32 %v1258, 4294901760
        %v5374 = vsub.f32 %v1258, %v5373
        %v5375 = vand.u32 %v5374, 4294901760
        %v5376 = vsub.f32 %v5374, %v5375
        %v5377 = vand.u32 %v5376, 4294901760
        %5378 = vmatprep.subr.mxu0 %v5377
        %v5379 = vand.u32 %v1256, 4294901760
        %v5380 = vsub.f32 %v1256, %v5379
        %v5381 = vand.u32 %v5380, 4294901760
        %v5382 = vsub.f32 %v5380, %v5381
        %v5383 = vand.u32 %v5382, 4294901760
        %5384 = vmatpush1.xpose.msra.mxu0 %v5383
        %5385 = vmatprep.subr.mxu0 0.0
        %5386 = vmatpush2.xpose.msra.mxu0 0.0
        %5387 = vmatprep.subr.mxu0 0.0
        %5388 = vmatpush2.xpose.msra.mxu0 0.0
        %5389 = vmatprep.subr.mxu0 0.0
        %5390 = vmatpush2.xpose.msra.mxu0 0.0
        %5391 = vmatprep.subr.mxu0 0.0
        %5392 = vmatpush2.xpose.msra.mxu0 0.0
        %5393 = vmatprep.subr.mxu0 0.0
        %5394 = vmatpush2.xpose.msra.mxu0 0.0
        %5395 = vmatprep.subr.mxu0 0.0
        %5396 = vmatpush2.xpose.msra.mxu0 0.0
        %5397 = vmatprep.subr.mxu0 0.0
        %5398 = vmatpush2.xpose.msra.mxu0 0.0
        %5399 = vmatprep.subr.mxu0 0.0
        %5400 = vmatpush2.xpose.msra.mxu0 0.0
        %5401 = vmatprep.subr.mxu0 0.0
        %5402 = vmatpush2.xpose.msra.mxu0 0.0
        %5403 = vmatprep.subr.mxu0 0.0
        %5404 = vmatpush2.xpose.msra.mxu0 0.0
        %5405 = vmatprep.subr.mxu0 0.0
        %5406 = vmatpush2.xpose.msra.mxu0 0.0
        %5407 = vmatprep.subr.mxu0 0.0
        %5408 = vmatpush2.xpose.msra.mxu0 0.0
        %5409 = vmatprep.subr.mxu0 0.0
        %5410 = vmatpush2.xpose.msra.mxu0 0.0
        %5411 = vmatprep.subr.mxu0 0.0
        %5412 = vmatpush2.xpose.msra.mxu0 0.0
        %5413 = vmatprep.subr.mxu0 0.0
        %5414 = vmatpush2.xpose.msra.mxu0 0.0
        %5415 = vmatprep.subr.mxu0 0.0
        %5416 = vmatpush2.xpose.msra.mxu0 0.0
        %v5417 = vand.u32 %v4952, 4294901760
        %5418 = vmatprep.mubr.f32.mxu0 %v5417
        %v5419 = vand.u32 %v4951, 4294901760
        %5420 = vmatmul.mubr.f32.gmra.mxu0 %v5419
        %v5421 = vpop.f32.mrf.mxu0
        %v5422 = vadd.f32 %v5205, %v5421
        %v5423 = vpop.f32.mrf.mxu0
        %v5424 = vand.u32 %v4956, 4294901760
        %5425 = vmatprep.mubr.f32.mxu0 %v5424
        %v5426 = vand.u32 %v4955, 4294901760
        %5427 = vmatmul.mubr.f32.gmra.mxu0 %v5426
        %v5428 = vpop.f32.mrf.mxu0
        %v5429 = vadd.f32 %v5220, %v5428
        %v5430 = vpop.f32.mrf.mxu0
        %v5431 = vand.u32 %v4960, 4294901760
        %5432 = vmatprep.mubr.f32.mxu0 %v5431
        %v5433 = vand.u32 %v4959, 4294901760
        %5434 = vmatmul.mubr.f32.gmra.mxu0 %v5433
        %v5435 = vpop.f32.mrf.mxu0
        %v5436 = vadd.f32 %v5235, %v5435
        %v5437 = vpop.f32.mrf.mxu0
        %v5438 = vand.u32 %v4964, 4294901760
        %5439 = vmatprep.mubr.f32.mxu0 %v5438
        %v5440 = vand.u32 %v4963, 4294901760
        %5441 = vmatmul.mubr.f32.gmra.mxu0 %v5440
        %v5442 = vpop.f32.mrf.mxu0
        %v5443 = vadd.f32 %v5250, %v5442
        %v5444 = vpop.f32.mrf.mxu0
        %v5445 = vand.u32 %v4968, 4294901760
        %5446 = vmatprep.mubr.f32.mxu0 %v5445
        %v5447 = vand.u32 %v4967, 4294901760
        %5448 = vmatmul.mubr.f32.gmra.mxu0 %v5447
        %v5449 = vpop.f32.mrf.mxu0
        %v5450 = vadd.f32 %v5265, %v5449
        %v5451 = vpop.f32.mrf.mxu0
        %v5452 = vand.u32 %v4972, 4294901760
        %5453 = vmatprep.mubr.f32.mxu0 %v5452
        %v5454 = vand.u32 %v4971, 4294901760
        %5455 = vmatmul.mubr.f32.gmra.mxu0 %v5454
        %v5456 = vpop.f32.mrf.mxu0
        %v5457 = vadd.f32 %v5280, %v5456
        %v5458 = vpop.f32.mrf.mxu0
        %v5459 = vand.u32 %v4976, 4294901760
        %5460 = vmatprep.mubr.f32.mxu0 %v5459
        %v5461 = vand.u32 %v4975, 4294901760
        %5462 = vmatmul.mubr.f32.gmra.mxu0 %v5461
        %v5463 = vpop.f32.mrf.mxu0
        %v5464 = vadd.f32 %v5295, %v5463
        %v5465 = vpop.f32.mrf.mxu0
        %v5466 = vand.u32 %v4980, 4294901760
        %5467 = vmatprep.mubr.f32.mxu0 %v5466
        %v5468 = vand.u32 %v4979, 4294901760
        %5469 = vmatmul.mubr.f32.gmra.mxu0 %v5468
        %v5470 = vpop.f32.mrf.mxu0
        %v5471 = vadd.f32 %v5310, %v5470
        %v5472 = vpop.f32.mrf.mxu0
        %5473 = vdwg.mxu0
        %5474 = vmatprep.subr.mxu0 0.0
        %5475 = vmatpush1.xpose.msra.mxu0 0.0
        %5476 = vmatprep.subr.mxu0 0.0
        %5477 = vmatpush1.xpose.msra.mxu0 0.0
        %5478 = vmatprep.subr.mxu0 0.0
        %5479 = vmatpush1.xpose.msra.mxu0 0.0
        %5480 = vmatprep.subr.mxu0 0.0
        %5481 = vmatpush1.xpose.msra.mxu0 0.0
        %5482 = vmatprep.subr.mxu0 0.0
        %5483 = vmatpush1.xpose.msra.mxu0 0.0
        %5484 = vmatprep.subr.mxu0 0.0
        %5485 = vmatpush1.xpose.msra.mxu0 0.0
        %5486 = vmatprep.subr.mxu0 0.0
        %5487 = vmatpush1.xpose.msra.mxu0 0.0
        %5488 = vmatprep.subr.mxu0 0.0
        %5489 = vmatpush1.xpose.msra.mxu0 0.0
        %5490 = vmatprep.subr.mxu0 0.0
        %5491 = vmatpush1.xpose.msra.mxu0 0.0
        %5492 = vmatprep.subr.mxu0 0.0
        %5493 = vmatpush1.xpose.msra.mxu0 0.0
        %5494 = vmatprep.subr.mxu0 0.0
        %5495 = vmatpush1.xpose.msra.mxu0 0.0
        %5496 = vmatprep.subr.mxu0 0.0
        %5497 = vmatpush1.xpose.msra.mxu0 0.0
        %v5498 = vand.u32 %v1279, 4294901760
        %v5499 = vsub.f32 %v1279, %v5498
        %5500 = vmatprep.subr.mxu0 %v5499
        %v5501 = vand.u32 %v1277, 4294901760
        %v5502 = vsub.f32 %v1277, %v5501
        %5503 = vmatpush1.xpose.msra.mxu0 %v5502
        %v5504 = vand.u32 %v1272, 4294901760
        %v5505 = vsub.f32 %v1272, %v5504
        %5506 = vmatprep.subr.mxu0 %v5505
        %v5507 = vand.u32 %v1270, 4294901760
        %v5508 = vsub.f32 %v1270, %v5507
        %5509 = vmatpush1.xpose.msra.mxu0 %v5508
        %v5510 = vand.u32 %v1265, 4294901760
        %v5511 = vsub.f32 %v1265, %v5510
        %5512 = vmatprep.subr.mxu0 %v5511
        %v5513 = vand.u32 %v1263, 4294901760
        %v5514 = vsub.f32 %v1263, %v5513
        %5515 = vmatpush1.xpose.msra.mxu0 %v5514
        %v5516 = vand.u32 %v1258, 4294901760
        %v5517 = vsub.f32 %v1258, %v5516
        %5518 = vmatprep.subr.mxu0 %v5517
        %v5519 = vand.u32 %v1256, 4294901760
        %v5520 = vsub.f32 %v1256, %v5519
        %5521 = vmatpush1.xpose.msra.mxu0 %v5520
        %5522 = vmatprep.subr.mxu0 0.0
        %5523 = vmatpush2.xpose.msra.mxu0 0.0
        %5524 = vmatprep.subr.mxu0 0.0
        %5525 = vmatpush2.xpose.msra.mxu0 0.0
        %5526 = vmatprep.subr.mxu0 0.0
        %5527 = vmatpush2.xpose.msra.mxu0 0.0
        %5528 = vmatprep.subr.mxu0 0.0
        %5529 = vmatpush2.xpose.msra.mxu0 0.0
        %5530 = vmatprep.subr.mxu0 0.0
        %5531 = vmatpush2.xpose.msra.mxu0 0.0
        %5532 = vmatprep.subr.mxu0 0.0
        %5533 = vmatpush2.xpose.msra.mxu0 0.0
        %5534 = vmatprep.subr.mxu0 0.0
        %5535 = vmatpush2.xpose.msra.mxu0 0.0
        %5536 = vmatprep.subr.mxu0 0.0
        %5537 = vmatpush2.xpose.msra.mxu0 0.0
        %5538 = vmatprep.subr.mxu0 0.0
        %5539 = vmatpush2.xpose.msra.mxu0 0.0
        %5540 = vmatprep.subr.mxu0 0.0
        %5541 = vmatpush2.xpose.msra.mxu0 0.0
        %5542 = vmatprep.subr.mxu0 0.0
        %5543 = vmatpush2.xpose.msra.mxu0 0.0
        %5544 = vmatprep.subr.mxu0 0.0
        %5545 = vmatpush2.xpose.msra.mxu0 0.0
        %5546 = vmatprep.subr.mxu0 0.0
        %5547 = vmatpush2.xpose.msra.mxu0 0.0
        %5548 = vmatprep.subr.mxu0 0.0
        %5549 = vmatpush2.xpose.msra.mxu0 0.0
        %5550 = vmatprep.subr.mxu0 0.0
        %5551 = vmatpush2.xpose.msra.mxu0 0.0
        %5552 = vmatprep.subr.mxu0 0.0
        %5553 = vmatpush2.xpose.msra.mxu0 0.0
        %v5554 = vand.u32 %v4952, 4294901760
        %v5555 = vsub.f32 %v4952, %v5554
        %5556 = vmatprep.mubr.f32.mxu0 %v5555
        %v5557 = vand.u32 %v4951, 4294901760
        %v5558 = vsub.f32 %v4951, %v5557
        %5559 = vmatmul.mubr.f32.gmra.mxu0 %v5558
        %v5560 = vpop.f32.mrf.mxu0
        %v5561 = vadd.f32 %v5422, %v5560
        %v5562 = vpop.f32.mrf.mxu0
        %v5563 = vand.u32 %v4956, 4294901760
        %v5564 = vsub.f32 %v4956, %v5563
        %5565 = vmatprep.mubr.f32.mxu0 %v5564
        %v5566 = vand.u32 %v4955, 4294901760
        %v5567 = vsub.f32 %v4955, %v5566
        %5568 = vmatmul.mubr.f32.gmra.mxu0 %v5567
        %v5569 = vpop.f32.mrf.mxu0
        %v5570 = vadd.f32 %v5429, %v5569
        %v5571 = vpop.f32.mrf.mxu0
        %v5572 = vand.u32 %v4960, 4294901760
        %v5573 = vsub.f32 %v4960, %v5572
        %5574 = vmatprep.mubr.f32.mxu0 %v5573
        %v5575 = vand.u32 %v4959, 4294901760
        %v5576 = vsub.f32 %v4959, %v5575
        %5577 = vmatmul.mubr.f32.gmra.mxu0 %v5576
        %v5578 = vpop.f32.mrf.mxu0
        %v5579 = vadd.f32 %v5436, %v5578
        %v5580 = vpop.f32.mrf.mxu0
        %v5581 = vand.u32 %v4964, 4294901760
        %v5582 = vsub.f32 %v4964, %v5581
        %5583 = vmatprep.mubr.f32.mxu0 %v5582
        %v5584 = vand.u32 %v4963, 4294901760
        %v5585 = vsub.f32 %v4963, %v5584
        %5586 = vmatmul.mubr.f32.gmra.mxu0 %v5585
        %v5587 = vpop.f32.mrf.mxu0
        %v5588 = vadd.f32 %v5443, %v5587
        %v5589 = vpop.f32.mrf.mxu0
        %v5590 = vand.u32 %v4968, 4294901760
        %v5591 = vsub.f32 %v4968, %v5590
        %5592 = vmatprep.mubr.f32.mxu0 %v5591
        %v5593 = vand.u32 %v4967, 4294901760
        %v5594 = vsub.f32 %v4967, %v5593
        %5595 = vmatmul.mubr.f32.gmra.mxu0 %v5594
        %v5596 = vpop.f32.mrf.mxu0
        %v5597 = vadd.f32 %v5450, %v5596
        %v5598 = vpop.f32.mrf.mxu0
        %v5599 = vand.u32 %v4972, 4294901760
        %v5600 = vsub.f32 %v4972, %v5599
        %5601 = vmatprep.mubr.f32.mxu0 %v5600
        %v5602 = vand.u32 %v4971, 4294901760
        %v5603 = vsub.f32 %v4971, %v5602
        %5604 = vmatmul.mubr.f32.gmra.mxu0 %v5603
        %v5605 = vpop.f32.mrf.mxu0
        %v5606 = vadd.f32 %v5457, %v5605
        %v5607 = vpop.f32.mrf.mxu0
        %v5608 = vand.u32 %v4976, 4294901760
        %v5609 = vsub.f32 %v4976, %v5608
        %5610 = vmatprep.mubr.f32.mxu0 %v5609
        %v5611 = vand.u32 %v4975, 4294901760
        %v5612 = vsub.f32 %v4975, %v5611
        %5613 = vmatmul.mubr.f32.gmra.mxu0 %v5612
        %v5614 = vpop.f32.mrf.mxu0
        %v5615 = vadd.f32 %v5464, %v5614
        %v5616 = vpop.f32.mrf.mxu0
        %v5617 = vand.u32 %v4980, 4294901760
        %v5618 = vsub.f32 %v4980, %v5617
        %5619 = vmatprep.mubr.f32.mxu0 %v5618
        %v5620 = vand.u32 %v4979, 4294901760
        %v5621 = vsub.f32 %v4979, %v5620
        %5622 = vmatmul.mubr.f32.gmra.mxu0 %v5621
        %v5623 = vpop.f32.mrf.mxu0
        %v5624 = vadd.f32 %v5471, %v5623
        %v5625 = vpop.f32.mrf.mxu0
        %5626 = vdwg.mxu0
        %5627 = vmatprep.subr.mxu0 0.0
        %5628 = vmatpush1.xpose.msra.mxu0 0.0
        %5629 = vmatprep.subr.mxu0 0.0
        %5630 = vmatpush1.xpose.msra.mxu0 0.0
        %5631 = vmatprep.subr.mxu0 0.0
        %5632 = vmatpush1.xpose.msra.mxu0 0.0
        %5633 = vmatprep.subr.mxu0 0.0
        %5634 = vmatpush1.xpose.msra.mxu0 0.0
        %5635 = vmatprep.subr.mxu0 0.0
        %5636 = vmatpush1.xpose.msra.mxu0 0.0
        %5637 = vmatprep.subr.mxu0 0.0
        %5638 = vmatpush1.xpose.msra.mxu0 0.0
        %5639 = vmatprep.subr.mxu0 0.0
        %5640 = vmatpush1.xpose.msra.mxu0 0.0
        %5641 = vmatprep.subr.mxu0 0.0
        %5642 = vmatpush1.xpose.msra.mxu0 0.0
        %5643 = vmatprep.subr.mxu0 0.0
        %5644 = vmatpush1.xpose.msra.mxu0 0.0
        %5645 = vmatprep.subr.mxu0 0.0
        %5646 = vmatpush1.xpose.msra.mxu0 0.0
        %5647 = vmatprep.subr.mxu0 0.0
        %5648 = vmatpush1.xpose.msra.mxu0 0.0
        %5649 = vmatprep.subr.mxu0 0.0
        %5650 = vmatpush1.xpose.msra.mxu0 0.0
        %v5651 = vand.u32 %v1279, 4294901760
        %5652 = vmatprep.subr.mxu0 %v5651
        %v5653 = vand.u32 %v1277, 4294901760
        %5654 = vmatpush1.xpose.msra.mxu0 %v5653
        %v5655 = vand.u32 %v1272, 4294901760
        %5656 = vmatprep.subr.mxu0 %v5655
        %v5657 = vand.u32 %v1270, 4294901760
        %5658 = vmatpush1.xpose.msra.mxu0 %v5657
        %v5659 = vand.u32 %v1265, 4294901760
        %5660 = vmatprep.subr.mxu0 %v5659
        %v5661 = vand.u32 %v1263, 4294901760
        %5662 = vmatpush1.xpose.msra.mxu0 %v5661
        %v5663 = vand.u32 %v1258, 4294901760
        %5664 = vmatprep.subr.mxu0 %v5663
        %v5665 = vand.u32 %v1256, 4294901760
        %5666 = vmatpush1.xpose.msra.mxu0 %v5665
        %5667 = vmatprep.subr.mxu0 0.0
        %5668 = vmatpush2.xpose.msra.mxu0 0.0
        %5669 = vmatprep.subr.mxu0 0.0
        %5670 = vmatpush2.xpose.msra.mxu0 0.0
        %5671 = vmatprep.subr.mxu0 0.0
        %5672 = vmatpush2.xpose.msra.mxu0 0.0
        %5673 = vmatprep.subr.mxu0 0.0
        %5674 = vmatpush2.xpose.msra.mxu0 0.0
        %5675 = vmatprep.subr.mxu0 0.0
        %5676 = vmatpush2.xpose.msra.mxu0 0.0
        %5677 = vmatprep.subr.mxu0 0.0
        %5678 = vmatpush2.xpose.msra.mxu0 0.0
        %5679 = vmatprep.subr.mxu0 0.0
        %5680 = vmatpush2.xpose.msra.mxu0 0.0
        %5681 = vmatprep.subr.mxu0 0.0
        %5682 = vmatpush2.xpose.msra.mxu0 0.0
        %5683 = vmatprep.subr.mxu0 0.0
        %5684 = vmatpush2.xpose.msra.mxu0 0.0
        %5685 = vmatprep.subr.mxu0 0.0
        %5686 = vmatpush2.xpose.msra.mxu0 0.0
        %5687 = vmatprep.subr.mxu0 0.0
        %5688 = vmatpush2.xpose.msra.mxu0 0.0
        %5689 = vmatprep.subr.mxu0 0.0
        %5690 = vmatpush2.xpose.msra.mxu0 0.0
        %5691 = vmatprep.subr.mxu0 0.0
        %5692 = vmatpush2.xpose.msra.mxu0 0.0
        %5693 = vmatprep.subr.mxu0 0.0
        %5694 = vmatpush2.xpose.msra.mxu0 0.0
        %5695 = vmatprep.subr.mxu0 0.0
        %5696 = vmatpush2.xpose.msra.mxu0 0.0
        %5697 = vmatprep.subr.mxu0 0.0
        %5698 = vmatpush2.xpose.msra.mxu0 0.0
        %v5699 = vand.u32 %v4952, 4294901760
        %v5700 = vsub.f32 %v4952, %v5699
        %v5701 = vand.u32 %v5700, 4294901760
        %5702 = vmatprep.mubr.f32.mxu0 %v5701
        %v5703 = vand.u32 %v4951, 4294901760
        %v5704 = vsub.f32 %v4951, %v5703
        %v5705 = vand.u32 %v5704, 4294901760
        %5706 = vmatmul.mubr.f32.gmra.mxu0 %v5705
        %v5707 = vpop.f32.mrf.mxu0
        %v5708 = vadd.f32 %v5561, %v5707
        %v5709 = vpop.f32.mrf.mxu0
        %v5710 = vand.u32 %v4956, 4294901760
        %v5711 = vsub.f32 %v4956, %v5710
        %v5712 = vand.u32 %v5711, 4294901760
        %5713 = vmatprep.mubr.f32.mxu0 %v5712
        %v5714 = vand.u32 %v4955, 4294901760
        %v5715 = vsub.f32 %v4955, %v5714
        %v5716 = vand.u32 %v5715, 4294901760
        %5717 = vmatmul.mubr.f32.gmra.mxu0 %v5716
        %v5718 = vpop.f32.mrf.mxu0
        %v5719 = vadd.f32 %v5570, %v5718
        %v5720 = vpop.f32.mrf.mxu0
        %v5721 = vand.u32 %v4960, 4294901760
        %v5722 = vsub.f32 %v4960, %v5721
        %v5723 = vand.u32 %v5722, 4294901760
        %5724 = vmatprep.mubr.f32.mxu0 %v5723
        %v5725 = vand.u32 %v4959, 4294901760
        %v5726 = vsub.f32 %v4959, %v5725
        %v5727 = vand.u32 %v5726, 4294901760
        %5728 = vmatmul.mubr.f32.gmra.mxu0 %v5727
        %v5729 = vpop.f32.mrf.mxu0
        %v5730 = vadd.f32 %v5579, %v5729
        %v5731 = vpop.f32.mrf.mxu0
        %v5732 = vand.u32 %v4964, 4294901760
        %v5733 = vsub.f32 %v4964, %v5732
        %v5734 = vand.u32 %v5733, 4294901760
        %5735 = vmatprep.mubr.f32.mxu0 %v5734
        %v5736 = vand.u32 %v4963, 4294901760
        %v5737 = vsub.f32 %v4963, %v5736
        %v5738 = vand.u32 %v5737, 4294901760
        %5739 = vmatmul.mubr.f32.gmra.mxu0 %v5738
        %v5740 = vpop.f32.mrf.mxu0
        %v5741 = vadd.f32 %v5588, %v5740
        %v5742 = vpop.f32.mrf.mxu0
        %v5743 = vand.u32 %v4968, 4294901760
        %v5744 = vsub.f32 %v4968, %v5743
        %v5745 = vand.u32 %v5744, 4294901760
        %5746 = vmatprep.mubr.f32.mxu0 %v5745
        %v5747 = vand.u32 %v4967, 4294901760
        %v5748 = vsub.f32 %v4967, %v5747
        %v5749 = vand.u32 %v5748, 4294901760
        %5750 = vmatmul.mubr.f32.gmra.mxu0 %v5749
        %v5751 = vpop.f32.mrf.mxu0
        %v5752 = vadd.f32 %v5597, %v5751
        %v5753 = vpop.f32.mrf.mxu0
        %v5754 = vand.u32 %v4972, 4294901760
        %v5755 = vsub.f32 %v4972, %v5754
        %v5756 = vand.u32 %v5755, 4294901760
        %5757 = vmatprep.mubr.f32.mxu0 %v5756
        %v5758 = vand.u32 %v4971, 4294901760
        %v5759 = vsub.f32 %v4971, %v5758
        %v5760 = vand.u32 %v5759, 4294901760
        %5761 = vmatmul.mubr.f32.gmra.mxu0 %v5760
        %v5762 = vpop.f32.mrf.mxu0
        %v5763 = vadd.f32 %v5606, %v5762
        %v5764 = vpop.f32.mrf.mxu0
        %v5765 = vand.u32 %v4976, 4294901760
        %v5766 = vsub.f32 %v4976, %v5765
        %v5767 = vand.u32 %v5766, 4294901760
        %5768 = vmatprep.mubr.f32.mxu0 %v5767
        %v5769 = vand.u32 %v4975, 4294901760
        %v5770 = vsub.f32 %v4975, %v5769
        %v5771 = vand.u32 %v5770, 4294901760
        %5772 = vmatmul.mubr.f32.gmra.mxu0 %v5771
        %v5773 = vpop.f32.mrf.mxu0
        %v5774 = vadd.f32 %v5615, %v5773
        %v5775 = vpop.f32.mrf.mxu0
        %v5776 = vand.u32 %v4980, 4294901760
        %v5777 = vsub.f32 %v4980, %v5776
        %v5778 = vand.u32 %v5777, 4294901760
        %5779 = vmatprep.mubr.f32.mxu0 %v5778
        %v5780 = vand.u32 %v4979, 4294901760
        %v5781 = vsub.f32 %v4979, %v5780
        %v5782 = vand.u32 %v5781, 4294901760
        %5783 = vmatmul.mubr.f32.gmra.mxu0 %v5782
        %v5784 = vpop.f32.mrf.mxu0
        %v5785 = vadd.f32 %v5624, %v5784
        %v5786 = vpop.f32.mrf.mxu0
        %5787 = vdwg.mxu0
        %5788 = vmatprep.subr.mxu0 0.0
        %5789 = vmatpush1.xpose.msra.mxu0 0.0
        %5790 = vmatprep.subr.mxu0 0.0
        %5791 = vmatpush1.xpose.msra.mxu0 0.0
        %5792 = vmatprep.subr.mxu0 0.0
        %5793 = vmatpush1.xpose.msra.mxu0 0.0
        %5794 = vmatprep.subr.mxu0 0.0
        %5795 = vmatpush1.xpose.msra.mxu0 0.0
        %5796 = vmatprep.subr.mxu0 0.0
        %5797 = vmatpush1.xpose.msra.mxu0 0.0
        %5798 = vmatprep.subr.mxu0 0.0
        %5799 = vmatpush1.xpose.msra.mxu0 0.0
        %5800 = vmatprep.subr.mxu0 0.0
        %5801 = vmatpush1.xpose.msra.mxu0 0.0
        %5802 = vmatprep.subr.mxu0 0.0
        %5803 = vmatpush1.xpose.msra.mxu0 0.0
        %5804 = vmatprep.subr.mxu0 0.0
        %5805 = vmatpush1.xpose.msra.mxu0 0.0
        %5806 = vmatprep.subr.mxu0 0.0
        %5807 = vmatpush1.xpose.msra.mxu0 0.0
        %5808 = vmatprep.subr.mxu0 0.0
        %5809 = vmatpush1.xpose.msra.mxu0 0.0
        %5810 = vmatprep.subr.mxu0 0.0
        %5811 = vmatpush1.xpose.msra.mxu0 0.0
        %v5812 = vand.u32 %v1279, 4294901760
        %v5813 = vsub.f32 %v1279, %v5812
        %v5814 = vand.u32 %v5813, 4294901760
        %5815 = vmatprep.subr.mxu0 %v5814
        %v5816 = vand.u32 %v1277, 4294901760
        %v5817 = vsub.f32 %v1277, %v5816
        %v5818 = vand.u32 %v5817, 4294901760
        %5819 = vmatpush1.xpose.msra.mxu0 %v5818
        %v5820 = vand.u32 %v1272, 4294901760
        %v5821 = vsub.f32 %v1272, %v5820
        %v5822 = vand.u32 %v5821, 4294901760
        %5823 = vmatprep.subr.mxu0 %v5822
        %v5824 = vand.u32 %v1270, 4294901760
        %v5825 = vsub.f32 %v1270, %v5824
        %v5826 = vand.u32 %v5825, 4294901760
        %5827 = vmatpush1.xpose.msra.mxu0 %v5826
        %v5828 = vand.u32 %v1265, 4294901760
        %v5829 = vsub.f32 %v1265, %v5828
        %v5830 = vand.u32 %v5829, 4294901760
        %5831 = vmatprep.subr.mxu0 %v5830
        %v5832 = vand.u32 %v1263, 4294901760
        %v5833 = vsub.f32 %v1263, %v5832
        %v5834 = vand.u32 %v5833, 4294901760
        %5835 = vmatpush1.xpose.msra.mxu0 %v5834
        %v5836 = vand.u32 %v1258, 4294901760
        %v5837 = vsub.f32 %v1258, %v5836
        %v5838 = vand.u32 %v5837, 4294901760
        %5839 = vmatprep.subr.mxu0 %v5838
        %v5840 = vand.u32 %v1256, 4294901760
        %v5841 = vsub.f32 %v1256, %v5840
        %v5842 = vand.u32 %v5841, 4294901760
        %5843 = vmatpush1.xpose.msra.mxu0 %v5842
        %5844 = vmatprep.subr.mxu0 0.0
        %5845 = vmatpush2.xpose.msra.mxu0 0.0
        %5846 = vmatprep.subr.mxu0 0.0
        %5847 = vmatpush2.xpose.msra.mxu0 0.0
        %5848 = vmatprep.subr.mxu0 0.0
        %5849 = vmatpush2.xpose.msra.mxu0 0.0
        %5850 = vmatprep.subr.mxu0 0.0
        %5851 = vmatpush2.xpose.msra.mxu0 0.0
        %5852 = vmatprep.subr.mxu0 0.0
        %5853 = vmatpush2.xpose.msra.mxu0 0.0
        %5854 = vmatprep.subr.mxu0 0.0
        %5855 = vmatpush2.xpose.msra.mxu0 0.0
        %5856 = vmatprep.subr.mxu0 0.0
        %5857 = vmatpush2.xpose.msra.mxu0 0.0
        %5858 = vmatprep.subr.mxu0 0.0
        %5859 = vmatpush2.xpose.msra.mxu0 0.0
        %5860 = vmatprep.subr.mxu0 0.0
        %5861 = vmatpush2.xpose.msra.mxu0 0.0
        %5862 = vmatprep.subr.mxu0 0.0
        %5863 = vmatpush2.xpose.msra.mxu0 0.0
        %5864 = vmatprep.subr.mxu0 0.0
        %5865 = vmatpush2.xpose.msra.mxu0 0.0
        %5866 = vmatprep.subr.mxu0 0.0
        %5867 = vmatpush2.xpose.msra.mxu0 0.0
        %5868 = vmatprep.subr.mxu0 0.0
        %5869 = vmatpush2.xpose.msra.mxu0 0.0
        %5870 = vmatprep.subr.mxu0 0.0
        %5871 = vmatpush2.xpose.msra.mxu0 0.0
        %5872 = vmatprep.subr.mxu0 0.0
        %5873 = vmatpush2.xpose.msra.mxu0 0.0
        %5874 = vmatprep.subr.mxu0 0.0
        %5875 = vmatpush2.xpose.msra.mxu0 0.0
        %v5876 = vand.u32 %v4952, 4294901760
        %5877 = vmatprep.mubr.f32.mxu0 %v5876
        %v5878 = vand.u32 %v4951, 4294901760
        %5879 = vmatmul.mubr.f32.gmra.mxu0 %v5878
        %v5880 = vpop.f32.mrf.mxu0
        %v5881 = vadd.f32 %v5708, %v5880
        %v5882 = vpop.f32.mrf.mxu0
        %v5883 = vand.u32 %v4956, 4294901760
        %5884 = vmatprep.mubr.f32.mxu0 %v5883
        %v5885 = vand.u32 %v4955, 4294901760
        %5886 = vmatmul.mubr.f32.gmra.mxu0 %v5885
        %v5887 = vpop.f32.mrf.mxu0
        %v5888 = vadd.f32 %v5719, %v5887
        %v5889 = vpop.f32.mrf.mxu0
        %v5890 = vand.u32 %v4960, 4294901760
        %5891 = vmatprep.mubr.f32.mxu0 %v5890
        %v5892 = vand.u32 %v4959, 4294901760
        %5893 = vmatmul.mubr.f32.gmra.mxu0 %v5892
        %v5894 = vpop.f32.mrf.mxu0
        %v5895 = vadd.f32 %v5730, %v5894
        %v5896 = vpop.f32.mrf.mxu0
        %v5897 = vand.u32 %v4964, 4294901760
        %5898 = vmatprep.mubr.f32.mxu0 %v5897
        %v5899 = vand.u32 %v4963, 4294901760
        %5900 = vmatmul.mubr.f32.gmra.mxu0 %v5899
        %v5901 = vpop.f32.mrf.mxu0
        %v5902 = vadd.f32 %v5741, %v5901
        %v5903 = vpop.f32.mrf.mxu0
        %v5904 = vand.u32 %v4968, 4294901760
        %5905 = vmatprep.mubr.f32.mxu0 %v5904
        %v5906 = vand.u32 %v4967, 4294901760
        %5907 = vmatmul.mubr.f32.gmra.mxu0 %v5906
        %v5908 = vpop.f32.mrf.mxu0
        %v5909 = vadd.f32 %v5752, %v5908
        %v5910 = vpop.f32.mrf.mxu0
        %v5911 = vand.u32 %v4972, 4294901760
        %5912 = vmatprep.mubr.f32.mxu0 %v5911
        %v5913 = vand.u32 %v4971, 4294901760
        %5914 = vmatmul.mubr.f32.gmra.mxu0 %v5913
        %v5915 = vpop.f32.mrf.mxu0
        %v5916 = vadd.f32 %v5763, %v5915
        %v5917 = vpop.f32.mrf.mxu0
        %v5918 = vand.u32 %v4976, 4294901760
        %5919 = vmatprep.mubr.f32.mxu0 %v5918
        %v5920 = vand.u32 %v4975, 4294901760
        %5921 = vmatmul.mubr.f32.gmra.mxu0 %v5920
        %v5922 = vpop.f32.mrf.mxu0
        %v5923 = vadd.f32 %v5774, %v5922
        %v5924 = vpop.f32.mrf.mxu0
        %v5925 = vand.u32 %v4980, 4294901760
        %5926 = vmatprep.mubr.f32.mxu0 %v5925
        %v5927 = vand.u32 %v4979, 4294901760
        %5928 = vmatmul.mubr.f32.gmra.mxu0 %v5927
        %v5929 = vpop.f32.mrf.mxu0
        %v5930 = vadd.f32 %v5785, %v5929
        %v5931 = vpop.f32.mrf.mxu0
        %5932 = vdwg.mxu0
        %5933 = vmatprep.subr.mxu0 0.0
        %5934 = vmatpush1.xpose.msra.mxu0 0.0
        %5935 = vmatprep.subr.mxu0 0.0
        %5936 = vmatpush1.xpose.msra.mxu0 0.0
        %5937 = vmatprep.subr.mxu0 0.0
        %5938 = vmatpush1.xpose.msra.mxu0 0.0
        %5939 = vmatprep.subr.mxu0 0.0
        %5940 = vmatpush1.xpose.msra.mxu0 0.0
        %5941 = vmatprep.subr.mxu0 0.0
        %5942 = vmatpush1.xpose.msra.mxu0 0.0
        %5943 = vmatprep.subr.mxu0 0.0
        %5944 = vmatpush1.xpose.msra.mxu0 0.0
        %5945 = vmatprep.subr.mxu0 0.0
        %5946 = vmatpush1.xpose.msra.mxu0 0.0
        %5947 = vmatprep.subr.mxu0 0.0
        %5948 = vmatpush1.xpose.msra.mxu0 0.0
        %5949 = vmatprep.subr.mxu0 0.0
        %5950 = vmatpush1.xpose.msra.mxu0 0.0
        %5951 = vmatprep.subr.mxu0 0.0
        %5952 = vmatpush1.xpose.msra.mxu0 0.0
        %5953 = vmatprep.subr.mxu0 0.0
        %5954 = vmatpush1.xpose.msra.mxu0 0.0
        %5955 = vmatprep.subr.mxu0 0.0
        %5956 = vmatpush1.xpose.msra.mxu0 0.0
        %v5957 = vand.u32 %v1279, 4294901760
        %5958 = vmatprep.subr.mxu0 %v5957
        %v5959 = vand.u32 %v1277, 4294901760
        %5960 = vmatpush1.xpose.msra.mxu0 %v5959
        %v5961 = vand.u32 %v1272, 4294901760
        %5962 = vmatprep.subr.mxu0 %v5961
        %v5963 = vand.u32 %v1270, 4294901760
        %5964 = vmatpush1.xpose.msra.mxu0 %v5963
        %v5965 = vand.u32 %v1265, 4294901760
        %5966 = vmatprep.subr.mxu0 %v5965
        %v5967 = vand.u32 %v1263, 4294901760
        %5968 = vmatpush1.xpose.msra.mxu0 %v5967
        %v5969 = vand.u32 %v1258, 4294901760
        %5970 = vmatprep.subr.mxu0 %v5969
        %v5971 = vand.u32 %v1256, 4294901760
        %5972 = vmatpush1.xpose.msra.mxu0 %v5971
        %5973 = vmatprep.subr.mxu0 0.0
        %5974 = vmatpush2.xpose.msra.mxu0 0.0
        %5975 = vmatprep.subr.mxu0 0.0
        %5976 = vmatpush2.xpose.msra.mxu0 0.0
        %5977 = vmatprep.subr.mxu0 0.0
        %5978 = vmatpush2.xpose.msra.mxu0 0.0
        %5979 = vmatprep.subr.mxu0 0.0
        %5980 = vmatpush2.xpose.msra.mxu0 0.0
        %5981 = vmatprep.subr.mxu0 0.0
        %5982 = vmatpush2.xpose.msra.mxu0 0.0
        %5983 = vmatprep.subr.mxu0 0.0
        %5984 = vmatpush2.xpose.msra.mxu0 0.0
        %5985 = vmatprep.subr.mxu0 0.0
        %5986 = vmatpush2.xpose.msra.mxu0 0.0
        %5987 = vmatprep.subr.mxu0 0.0
        %5988 = vmatpush2.xpose.msra.mxu0 0.0
        %5989 = vmatprep.subr.mxu0 0.0
        %5990 = vmatpush2.xpose.msra.mxu0 0.0
        %5991 = vmatprep.subr.mxu0 0.0
        %5992 = vmatpush2.xpose.msra.mxu0 0.0
        %5993 = vmatprep.subr.mxu0 0.0
        %5994 = vmatpush2.xpose.msra.mxu0 0.0
        %5995 = vmatprep.subr.mxu0 0.0
        %5996 = vmatpush2.xpose.msra.mxu0 0.0
        %5997 = vmatprep.subr.mxu0 0.0
        %5998 = vmatpush2.xpose.msra.mxu0 0.0
        %5999 = vmatprep.subr.mxu0 0.0
        %6000 = vmatpush2.xpose.msra.mxu0 0.0
        %6001 = vmatprep.subr.mxu0 0.0
        %6002 = vmatpush2.xpose.msra.mxu0 0.0
        %6003 = vmatprep.subr.mxu0 0.0
        %6004 = vmatpush2.xpose.msra.mxu0 0.0
        %v6005 = vand.u32 %v4952, 4294901760
        %6006 = vmatprep.mubr.f32.mxu0 %v6005
        %v6007 = vand.u32 %v4951, 4294901760
        %6008 = vmatmul.mubr.f32.gmra.mxu0 %v6007
        %v6009 = vpop.f32.mrf.mxu0
        %v6010 = vadd.f32 %v5881, %v6009
        %v6011 = vpop.f32.mrf.mxu0
        %v6012 = vand.u32 %v4956, 4294901760
        %6013 = vmatprep.mubr.f32.mxu0 %v6012
        %v6014 = vand.u32 %v4955, 4294901760
        %6015 = vmatmul.mubr.f32.gmra.mxu0 %v6014
        %v6016 = vpop.f32.mrf.mxu0
        %v6017 = vadd.f32 %v5888, %v6016
        %v6018 = vpop.f32.mrf.mxu0
        %v6019 = vand.u32 %v4960, 4294901760
        %6020 = vmatprep.mubr.f32.mxu0 %v6019
        %v6021 = vand.u32 %v4959, 4294901760
        %6022 = vmatmul.mubr.f32.gmra.mxu0 %v6021
        %v6023 = vpop.f32.mrf.mxu0
        %v6024 = vadd.f32 %v5895, %v6023
        %v6025 = vpop.f32.mrf.mxu0
        %v6026 = vand.u32 %v4964, 4294901760
        %6027 = vmatprep.mubr.f32.mxu0 %v6026
        %v6028 = vand.u32 %v4963, 4294901760
        %6029 = vmatmul.mubr.f32.gmra.mxu0 %v6028
        %v6030 = vpop.f32.mrf.mxu0
        %v6031 = vadd.f32 %v5902, %v6030
        %v6032 = vpop.f32.mrf.mxu0
        %v6033 = vand.u32 %v4968, 4294901760
        %6034 = vmatprep.mubr.f32.mxu0 %v6033
        %v6035 = vand.u32 %v4967, 4294901760
        %6036 = vmatmul.mubr.f32.gmra.mxu0 %v6035
        %v6037 = vpop.f32.mrf.mxu0
        %v6038 = vadd.f32 %v5909, %v6037
        %v6039 = vpop.f32.mrf.mxu0
        %v6040 = vand.u32 %v4972, 4294901760
        %6041 = vmatprep.mubr.f32.mxu0 %v6040
        %v6042 = vand.u32 %v4971, 4294901760
        %6043 = vmatmul.mubr.f32.gmra.mxu0 %v6042
        %v6044 = vpop.f32.mrf.mxu0
        %v6045 = vadd.f32 %v5916, %v6044
        %v6046 = vpop.f32.mrf.mxu0
        %v6047 = vand.u32 %v4976, 4294901760
        %6048 = vmatprep.mubr.f32.mxu0 %v6047
        %v6049 = vand.u32 %v4975, 4294901760
        %6050 = vmatmul.mubr.f32.gmra.mxu0 %v6049
        %v6051 = vpop.f32.mrf.mxu0
        %v6052 = vadd.f32 %v5923, %v6051
        %v6053 = vpop.f32.mrf.mxu0
        %v6054 = vand.u32 %v4980, 4294901760
        %6055 = vmatprep.mubr.f32.mxu0 %v6054
        %v6056 = vand.u32 %v4979, 4294901760
        %6057 = vmatmul.mubr.f32.gmra.mxu0 %v6056
        %v6058 = vpop.f32.mrf.mxu0
        %v6059 = vadd.f32 %v5930, %v6058
        %v6060 = vpop.f32.mrf.mxu0
        %6061 = vdwg.mxu0
        %6062 = vmatprep.subr.mxu0 0.0
        %6063 = vmatpush1.xpose.msra.mxu0 0.0
        %6064 = vmatprep.subr.mxu0 0.0
        %6065 = vmatpush1.xpose.msra.mxu0 0.0
        %6066 = vmatprep.subr.mxu0 0.0
        %6067 = vmatpush1.xpose.msra.mxu0 0.0
        %6068 = vmatprep.subr.mxu0 0.0
        %6069 = vmatpush1.xpose.msra.mxu0 0.0
        %6070 = vmatprep.subr.mxu0 0.0
        %6071 = vmatpush1.xpose.msra.mxu0 0.0
        %6072 = vmatprep.subr.mxu0 0.0
        %6073 = vmatpush1.xpose.msra.mxu0 0.0
        %6074 = vmatprep.subr.mxu0 0.0
        %6075 = vmatpush1.xpose.msra.mxu0 0.0
        %6076 = vmatprep.subr.mxu0 0.0
        %6077 = vmatpush1.xpose.msra.mxu0 0.0
        %6078 = vmatprep.subr.mxu0 0.0
        %6079 = vmatpush1.xpose.msra.mxu0 0.0
        %6080 = vmatprep.subr.mxu0 0.0
        %6081 = vmatpush1.xpose.msra.mxu0 0.0
        %6082 = vmatprep.subr.mxu0 0.0
        %6083 = vmatpush1.xpose.msra.mxu0 0.0
        %6084 = vmatprep.subr.mxu0 0.0
        %6085 = vmatpush1.xpose.msra.mxu0 0.0
        %v6086 = vand.u32 %v1917, 4294901760
        %6087 = vmatprep.subr.mxu0 %v6086
        %v6088 = vand.u32 %v1915, 4294901760
        %6089 = vmatpush1.xpose.msra.mxu0 %v6088
        %v6090 = vand.u32 %v1910, 4294901760
        %6091 = vmatprep.subr.mxu0 %v6090
        %v6092 = vand.u32 %v1908, 4294901760
        %6093 = vmatpush1.xpose.msra.mxu0 %v6092
        %v6094 = vand.u32 %v1903, 4294901760
        %6095 = vmatprep.subr.mxu0 %v6094
        %v6096 = vand.u32 %v1901, 4294901760
        %6097 = vmatpush1.xpose.msra.mxu0 %v6096
        %v6098 = vand.u32 %v1896, 4294901760
        %6099 = vmatprep.subr.mxu0 %v6098
        %v6100 = vand.u32 %v1894, 4294901760
        %6101 = vmatpush1.xpose.msra.mxu0 %v6100
        %6102 = vmatprep.subr.mxu0 0.0
        %6103 = vmatpush2.xpose.msra.mxu0 0.0
        %6104 = vmatprep.subr.mxu0 0.0
        %6105 = vmatpush2.xpose.msra.mxu0 0.0
        %6106 = vmatprep.subr.mxu0 0.0
        %6107 = vmatpush2.xpose.msra.mxu0 0.0
        %6108 = vmatprep.subr.mxu0 0.0
        %6109 = vmatpush2.xpose.msra.mxu0 0.0
        %6110 = vmatprep.subr.mxu0 0.0
        %6111 = vmatpush2.xpose.msra.mxu0 0.0
        %6112 = vmatprep.subr.mxu0 0.0
        %6113 = vmatpush2.xpose.msra.mxu0 0.0
        %6114 = vmatprep.subr.mxu0 0.0
        %6115 = vmatpush2.xpose.msra.mxu0 0.0
        %6116 = vmatprep.subr.mxu0 0.0
        %6117 = vmatpush2.xpose.msra.mxu0 0.0
        %6118 = vmatprep.subr.mxu0 0.0
        %6119 = vmatpush2.xpose.msra.mxu0 0.0
        %6120 = vmatprep.subr.mxu0 0.0
        %6121 = vmatpush2.xpose.msra.mxu0 0.0
        %6122 = vmatprep.subr.mxu0 0.0
        %6123 = vmatpush2.xpose.msra.mxu0 0.0
        %6124 = vmatprep.subr.mxu0 0.0
        %6125 = vmatpush2.xpose.msra.mxu0 0.0
        %6126 = vmatprep.subr.mxu0 0.0
        %6127 = vmatpush2.xpose.msra.mxu0 0.0
        %6128 = vmatprep.subr.mxu0 0.0
        %6129 = vmatpush2.xpose.msra.mxu0 0.0
        %6130 = vmatprep.subr.mxu0 0.0
        %6131 = vmatpush2.xpose.msra.mxu0 0.0
        %6132 = vmatprep.subr.mxu0 0.0
        %6133 = vmatpush2.xpose.msra.mxu0 0.0
        %v6134 = vand.u32 %v4954, 4294901760
        %v6135 = vsub.f32 %v4954, %v6134
        %v6136 = vand.u32 %v6135, 4294901760
        %v6137 = vsub.f32 %v6135, %v6136
        %v6138 = vand.u32 %v6137, 4294901760
        %6139 = vmatprep.mubr.f32.mxu0 %v6138
        %v6140 = vand.u32 %v4953, 4294901760
        %v6141 = vsub.f32 %v4953, %v6140
        %v6142 = vand.u32 %v6141, 4294901760
        %v6143 = vsub.f32 %v6141, %v6142
        %v6144 = vand.u32 %v6143, 4294901760
        %6145 = vmatmul.mubr.f32.gmra.mxu0 %v6144
        %v6146 = vpop.f32.mrf.mxu0
        %v6147 = vadd.f32 %v6010, %v6146
        %v6148 = vpop.f32.mrf.mxu0
        %v6149 = vand.u32 %v4958, 4294901760
        %v6150 = vsub.f32 %v4958, %v6149
        %v6151 = vand.u32 %v6150, 4294901760
        %v6152 = vsub.f32 %v6150, %v6151
        %v6153 = vand.u32 %v6152, 4294901760
        %6154 = vmatprep.mubr.f32.mxu0 %v6153
        %v6155 = vand.u32 %v4957, 4294901760
        %v6156 = vsub.f32 %v4957, %v6155
        %v6157 = vand.u32 %v6156, 4294901760
        %v6158 = vsub.f32 %v6156, %v6157
        %v6159 = vand.u32 %v6158, 4294901760
        %6160 = vmatmul.mubr.f32.gmra.mxu0 %v6159
        %v6161 = vpop.f32.mrf.mxu0
        %v6162 = vadd.f32 %v6017, %v6161
        %v6163 = vpop.f32.mrf.mxu0
        %v6164 = vand.u32 %v4962, 4294901760
        %v6165 = vsub.f32 %v4962, %v6164
        %v6166 = vand.u32 %v6165, 4294901760
        %v6167 = vsub.f32 %v6165, %v6166
        %v6168 = vand.u32 %v6167, 4294901760
        %6169 = vmatprep.mubr.f32.mxu0 %v6168
        %v6170 = vand.u32 %v4961, 4294901760
        %v6171 = vsub.f32 %v4961, %v6170
        %v6172 = vand.u32 %v6171, 4294901760
        %v6173 = vsub.f32 %v6171, %v6172
        %v6174 = vand.u32 %v6173, 4294901760
        %6175 = vmatmul.mubr.f32.gmra.mxu0 %v6174
        %v6176 = vpop.f32.mrf.mxu0
        %v6177 = vadd.f32 %v6024, %v6176
        %v6178 = vpop.f32.mrf.mxu0
        %v6179 = vand.u32 %v4966, 4294901760
        %v6180 = vsub.f32 %v4966, %v6179
        %v6181 = vand.u32 %v6180, 4294901760
        %v6182 = vsub.f32 %v6180, %v6181
        %v6183 = vand.u32 %v6182, 4294901760
        %6184 = vmatprep.mubr.f32.mxu0 %v6183
        %v6185 = vand.u32 %v4965, 4294901760
        %v6186 = vsub.f32 %v4965, %v6185
        %v6187 = vand.u32 %v6186, 4294901760
        %v6188 = vsub.f32 %v6186, %v6187
        %v6189 = vand.u32 %v6188, 4294901760
        %6190 = vmatmul.mubr.f32.gmra.mxu0 %v6189
        %v6191 = vpop.f32.mrf.mxu0
        %v6192 = vadd.f32 %v6031, %v6191
        %v6193 = vpop.f32.mrf.mxu0
        %v6194 = vand.u32 %v4970, 4294901760
        %v6195 = vsub.f32 %v4970, %v6194
        %v6196 = vand.u32 %v6195, 4294901760
        %v6197 = vsub.f32 %v6195, %v6196
        %v6198 = vand.u32 %v6197, 4294901760
        %6199 = vmatprep.mubr.f32.mxu0 %v6198
        %v6200 = vand.u32 %v4969, 4294901760
        %v6201 = vsub.f32 %v4969, %v6200
        %v6202 = vand.u32 %v6201, 4294901760
        %v6203 = vsub.f32 %v6201, %v6202
        %v6204 = vand.u32 %v6203, 4294901760
        %6205 = vmatmul.mubr.f32.gmra.mxu0 %v6204
        %v6206 = vpop.f32.mrf.mxu0
        %v6207 = vadd.f32 %v6038, %v6206
        %v6208 = vpop.f32.mrf.mxu0
        %v6209 = vand.u32 %v4974, 4294901760
        %v6210 = vsub.f32 %v4974, %v6209
        %v6211 = vand.u32 %v6210, 4294901760
        %v6212 = vsub.f32 %v6210, %v6211
        %v6213 = vand.u32 %v6212, 4294901760
        %6214 = vmatprep.mubr.f32.mxu0 %v6213
        %v6215 = vand.u32 %v4973, 4294901760
        %v6216 = vsub.f32 %v4973, %v6215
        %v6217 = vand.u32 %v6216, 4294901760
        %v6218 = vsub.f32 %v6216, %v6217
        %v6219 = vand.u32 %v6218, 4294901760
        %6220 = vmatmul.mubr.f32.gmra.mxu0 %v6219
        %v6221 = vpop.f32.mrf.mxu0
        %v6222 = vadd.f32 %v6045, %v6221
        %v6223 = vpop.f32.mrf.mxu0
        %v6224 = vand.u32 %v4978, 4294901760
        %v6225 = vsub.f32 %v4978, %v6224
        %v6226 = vand.u32 %v6225, 4294901760
        %v6227 = vsub.f32 %v6225, %v6226
        %v6228 = vand.u32 %v6227, 4294901760
        %6229 = vmatprep.mubr.f32.mxu0 %v6228
        %v6230 = vand.u32 %v4977, 4294901760
        %v6231 = vsub.f32 %v4977, %v6230
        %v6232 = vand.u32 %v6231, 4294901760
        %v6233 = vsub.f32 %v6231, %v6232
        %v6234 = vand.u32 %v6233, 4294901760
        %6235 = vmatmul.mubr.f32.gmra.mxu0 %v6234
        %v6236 = vpop.f32.mrf.mxu0
        %v6237 = vadd.f32 %v6052, %v6236
        %v6238 = vpop.f32.mrf.mxu0
        %v6239 = vand.u32 %v4982, 4294901760
        %v6240 = vsub.f32 %v4982, %v6239
        %v6241 = vand.u32 %v6240, 4294901760
        %v6242 = vsub.f32 %v6240, %v6241
        %v6243 = vand.u32 %v6242, 4294901760
        %6244 = vmatprep.mubr.f32.mxu0 %v6243
        %v6245 = vand.u32 %v4981, 4294901760
        %v6246 = vsub.f32 %v4981, %v6245
        %v6247 = vand.u32 %v6246, 4294901760
        %v6248 = vsub.f32 %v6246, %v6247
        %v6249 = vand.u32 %v6248, 4294901760
        %6250 = vmatmul.mubr.f32.gmra.mxu0 %v6249
        %v6251 = vpop.f32.mrf.mxu0
        %v6252 = vadd.f32 %v6059, %v6251
        %v6253 = vpop.f32.mrf.mxu0
        %6254 = vdwg.mxu0
        %6255 = vmatprep.subr.mxu0 0.0
        %6256 = vmatpush1.xpose.msra.mxu0 0.0
        %6257 = vmatprep.subr.mxu0 0.0
        %6258 = vmatpush1.xpose.msra.mxu0 0.0
        %6259 = vmatprep.subr.mxu0 0.0
        %6260 = vmatpush1.xpose.msra.mxu0 0.0
        %6261 = vmatprep.subr.mxu0 0.0
        %6262 = vmatpush1.xpose.msra.mxu0 0.0
        %6263 = vmatprep.subr.mxu0 0.0
        %6264 = vmatpush1.xpose.msra.mxu0 0.0
        %6265 = vmatprep.subr.mxu0 0.0
        %6266 = vmatpush1.xpose.msra.mxu0 0.0
        %6267 = vmatprep.subr.mxu0 0.0
        %6268 = vmatpush1.xpose.msra.mxu0 0.0
        %6269 = vmatprep.subr.mxu0 0.0
        %6270 = vmatpush1.xpose.msra.mxu0 0.0
        %6271 = vmatprep.subr.mxu0 0.0
        %6272 = vmatpush1.xpose.msra.mxu0 0.0
        %6273 = vmatprep.subr.mxu0 0.0
        %6274 = vmatpush1.xpose.msra.mxu0 0.0
        %6275 = vmatprep.subr.mxu0 0.0
        %6276 = vmatpush1.xpose.msra.mxu0 0.0
        %6277 = vmatprep.subr.mxu0 0.0
        %6278 = vmatpush1.xpose.msra.mxu0 0.0
        %v6279 = vand.u32 %v1917, 4294901760
        %v6280 = vsub.f32 %v1917, %v6279
        %v6281 = vand.u32 %v6280, 4294901760
        %v6282 = vsub.f32 %v6280, %v6281
        %v6283 = vand.u32 %v6282, 4294901760
        %6284 = vmatprep.subr.mxu0 %v6283
        %v6285 = vand.u32 %v1915, 4294901760
        %v6286 = vsub.f32 %v1915, %v6285
        %v6287 = vand.u32 %v6286, 4294901760
        %v6288 = vsub.f32 %v6286, %v6287
        %v6289 = vand.u32 %v6288, 4294901760
        %6290 = vmatpush1.xpose.msra.mxu0 %v6289
        %v6291 = vand.u32 %v1910, 4294901760
        %v6292 = vsub.f32 %v1910, %v6291
        %v6293 = vand.u32 %v6292, 4294901760
        %v6294 = vsub.f32 %v6292, %v6293
        %v6295 = vand.u32 %v6294, 4294901760
        %6296 = vmatprep.subr.mxu0 %v6295
        %v6297 = vand.u32 %v1908, 4294901760
        %v6298 = vsub.f32 %v1908, %v6297
        %v6299 = vand.u32 %v6298, 4294901760
        %v6300 = vsub.f32 %v6298, %v6299
        %v6301 = vand.u32 %v6300, 4294901760
        %6302 = vmatpush1.xpose.msra.mxu0 %v6301
        %v6303 = vand.u32 %v1903, 4294901760
        %v6304 = vsub.f32 %v1903, %v6303
        %v6305 = vand.u32 %v6304, 4294901760
        %v6306 = vsub.f32 %v6304, %v6305
        %v6307 = vand.u32 %v6306, 4294901760
        %6308 = vmatprep.subr.mxu0 %v6307
        %v6309 = vand.u32 %v1901, 4294901760
        %v6310 = vsub.f32 %v1901, %v6309
        %v6311 = vand.u32 %v6310, 4294901760
        %v6312 = vsub.f32 %v6310, %v6311
        %v6313 = vand.u32 %v6312, 4294901760
        %6314 = vmatpush1.xpose.msra.mxu0 %v6313
        %v6315 = vand.u32 %v1896, 4294901760
        %v6316 = vsub.f32 %v1896, %v6315
        %v6317 = vand.u32 %v6316, 4294901760
        %v6318 = vsub.f32 %v6316, %v6317
        %v6319 = vand.u32 %v6318, 4294901760
        %6320 = vmatprep.subr.mxu0 %v6319
        %v6321 = vand.u32 %v1894, 4294901760
        %v6322 = vsub.f32 %v1894, %v6321
        %v6323 = vand.u32 %v6322, 4294901760
        %v6324 = vsub.f32 %v6322, %v6323
        %v6325 = vand.u32 %v6324, 4294901760
        %6326 = vmatpush1.xpose.msra.mxu0 %v6325
        %6327 = vmatprep.subr.mxu0 0.0
        %6328 = vmatpush2.xpose.msra.mxu0 0.0
        %6329 = vmatprep.subr.mxu0 0.0
        %6330 = vmatpush2.xpose.msra.mxu0 0.0
        %6331 = vmatprep.subr.mxu0 0.0
        %6332 = vmatpush2.xpose.msra.mxu0 0.0
        %6333 = vmatprep.subr.mxu0 0.0
        %6334 = vmatpush2.xpose.msra.mxu0 0.0
        %6335 = vmatprep.subr.mxu0 0.0
        %6336 = vmatpush2.xpose.msra.mxu0 0.0
        %6337 = vmatprep.subr.mxu0 0.0
        %6338 = vmatpush2.xpose.msra.mxu0 0.0
        %6339 = vmatprep.subr.mxu0 0.0
        %6340 = vmatpush2.xpose.msra.mxu0 0.0
        %6341 = vmatprep.subr.mxu0 0.0
        %6342 = vmatpush2.xpose.msra.mxu0 0.0
        %6343 = vmatprep.subr.mxu0 0.0
        %6344 = vmatpush2.xpose.msra.mxu0 0.0
        %6345 = vmatprep.subr.mxu0 0.0
        %6346 = vmatpush2.xpose.msra.mxu0 0.0
        %6347 = vmatprep.subr.mxu0 0.0
        %6348 = vmatpush2.xpose.msra.mxu0 0.0
        %6349 = vmatprep.subr.mxu0 0.0
        %6350 = vmatpush2.xpose.msra.mxu0 0.0
        %6351 = vmatprep.subr.mxu0 0.0
        %6352 = vmatpush2.xpose.msra.mxu0 0.0
        %6353 = vmatprep.subr.mxu0 0.0
        %6354 = vmatpush2.xpose.msra.mxu0 0.0
        %6355 = vmatprep.subr.mxu0 0.0
        %6356 = vmatpush2.xpose.msra.mxu0 0.0
        %6357 = vmatprep.subr.mxu0 0.0
        %6358 = vmatpush2.xpose.msra.mxu0 0.0
        %v6359 = vand.u32 %v4954, 4294901760
        %6360 = vmatprep.mubr.f32.mxu0 %v6359
        %v6361 = vand.u32 %v4953, 4294901760
        %6362 = vmatmul.mubr.f32.gmra.mxu0 %v6361
        %v6363 = vpop.f32.mrf.mxu0
        %v6364 = vadd.f32 %v6147, %v6363
        %v6365 = vpop.f32.mrf.mxu0
        %v6366 = vand.u32 %v4958, 4294901760
        %6367 = vmatprep.mubr.f32.mxu0 %v6366
        %v6368 = vand.u32 %v4957, 4294901760
        %6369 = vmatmul.mubr.f32.gmra.mxu0 %v6368
        %v6370 = vpop.f32.mrf.mxu0
        %v6371 = vadd.f32 %v6162, %v6370
        %v6372 = vpop.f32.mrf.mxu0
        %v6373 = vand.u32 %v4962, 4294901760
        %6374 = vmatprep.mubr.f32.mxu0 %v6373
        %v6375 = vand.u32 %v4961, 4294901760
        %6376 = vmatmul.mubr.f32.gmra.mxu0 %v6375
        %v6377 = vpop.f32.mrf.mxu0
        %v6378 = vadd.f32 %v6177, %v6377
        %v6379 = vpop.f32.mrf.mxu0
        %v6380 = vand.u32 %v4966, 4294901760
        %6381 = vmatprep.mubr.f32.mxu0 %v6380
        %v6382 = vand.u32 %v4965, 4294901760
        %6383 = vmatmul.mubr.f32.gmra.mxu0 %v6382
        %v6384 = vpop.f32.mrf.mxu0
        %v6385 = vadd.f32 %v6192, %v6384
        %v6386 = vpop.f32.mrf.mxu0
        %v6387 = vand.u32 %v4970, 4294901760
        %6388 = vmatprep.mubr.f32.mxu0 %v6387
        %v6389 = vand.u32 %v4969, 4294901760
        %6390 = vmatmul.mubr.f32.gmra.mxu0 %v6389
        %v6391 = vpop.f32.mrf.mxu0
        %v6392 = vadd.f32 %v6207, %v6391
        %v6393 = vpop.f32.mrf.mxu0
        %v6394 = vand.u32 %v4974, 4294901760
        %6395 = vmatprep.mubr.f32.mxu0 %v6394
        %v6396 = vand.u32 %v4973, 4294901760
        %6397 = vmatmul.mubr.f32.gmra.mxu0 %v6396
        %v6398 = vpop.f32.mrf.mxu0
        %v6399 = vadd.f32 %v6222, %v6398
        %v6400 = vpop.f32.mrf.mxu0
        %v6401 = vand.u32 %v4978, 4294901760
        %6402 = vmatprep.mubr.f32.mxu0 %v6401
        %v6403 = vand.u32 %v4977, 4294901760
        %6404 = vmatmul.mubr.f32.gmra.mxu0 %v6403
        %v6405 = vpop.f32.mrf.mxu0
        %v6406 = vadd.f32 %v6237, %v6405
        %v6407 = vpop.f32.mrf.mxu0
        %v6408 = vand.u32 %v4982, 4294901760
        %6409 = vmatprep.mubr.f32.mxu0 %v6408
        %v6410 = vand.u32 %v4981, 4294901760
        %6411 = vmatmul.mubr.f32.gmra.mxu0 %v6410
        %v6412 = vpop.f32.mrf.mxu0
        %v6413 = vadd.f32 %v6252, %v6412
        %v6414 = vpop.f32.mrf.mxu0
        %6415 = vdwg.mxu0
        %6416 = vmatprep.subr.mxu0 0.0
        %6417 = vmatpush1.xpose.msra.mxu0 0.0
        %6418 = vmatprep.subr.mxu0 0.0
        %6419 = vmatpush1.xpose.msra.mxu0 0.0
        %6420 = vmatprep.subr.mxu0 0.0
        %6421 = vmatpush1.xpose.msra.mxu0 0.0
        %6422 = vmatprep.subr.mxu0 0.0
        %6423 = vmatpush1.xpose.msra.mxu0 0.0
        %6424 = vmatprep.subr.mxu0 0.0
        %6425 = vmatpush1.xpose.msra.mxu0 0.0
        %6426 = vmatprep.subr.mxu0 0.0
        %6427 = vmatpush1.xpose.msra.mxu0 0.0
        %6428 = vmatprep.subr.mxu0 0.0
        %6429 = vmatpush1.xpose.msra.mxu0 0.0
        %6430 = vmatprep.subr.mxu0 0.0
        %6431 = vmatpush1.xpose.msra.mxu0 0.0
        %6432 = vmatprep.subr.mxu0 0.0
        %6433 = vmatpush1.xpose.msra.mxu0 0.0
        %6434 = vmatprep.subr.mxu0 0.0
        %6435 = vmatpush1.xpose.msra.mxu0 0.0
        %6436 = vmatprep.subr.mxu0 0.0
        %6437 = vmatpush1.xpose.msra.mxu0 0.0
        %6438 = vmatprep.subr.mxu0 0.0
        %6439 = vmatpush1.xpose.msra.mxu0 0.0
        %v6440 = vand.u32 %v1917, 4294901760
        %v6441 = vsub.f32 %v1917, %v6440
        %6442 = vmatprep.subr.mxu0 %v6441
        %v6443 = vand.u32 %v1915, 4294901760
        %v6444 = vsub.f32 %v1915, %v6443
        %6445 = vmatpush1.xpose.msra.mxu0 %v6444
        %v6446 = vand.u32 %v1910, 4294901760
        %v6447 = vsub.f32 %v1910, %v6446
        %6448 = vmatprep.subr.mxu0 %v6447
        %v6449 = vand.u32 %v1908, 4294901760
        %v6450 = vsub.f32 %v1908, %v6449
        %6451 = vmatpush1.xpose.msra.mxu0 %v6450
        %v6452 = vand.u32 %v1903, 4294901760
        %v6453 = vsub.f32 %v1903, %v6452
        %6454 = vmatprep.subr.mxu0 %v6453
        %v6455 = vand.u32 %v1901, 4294901760
        %v6456 = vsub.f32 %v1901, %v6455
        %6457 = vmatpush1.xpose.msra.mxu0 %v6456
        %v6458 = vand.u32 %v1896, 4294901760
        %v6459 = vsub.f32 %v1896, %v6458
        %6460 = vmatprep.subr.mxu0 %v6459
        %v6461 = vand.u32 %v1894, 4294901760
        %v6462 = vsub.f32 %v1894, %v6461
        %6463 = vmatpush1.xpose.msra.mxu0 %v6462
        %6464 = vmatprep.subr.mxu0 0.0
        %6465 = vmatpush2.xpose.msra.mxu0 0.0
        %6466 = vmatprep.subr.mxu0 0.0
        %6467 = vmatpush2.xpose.msra.mxu0 0.0
        %6468 = vmatprep.subr.mxu0 0.0
        %6469 = vmatpush2.xpose.msra.mxu0 0.0
        %6470 = vmatprep.subr.mxu0 0.0
        %6471 = vmatpush2.xpose.msra.mxu0 0.0
        %6472 = vmatprep.subr.mxu0 0.0
        %6473 = vmatpush2.xpose.msra.mxu0 0.0
        %6474 = vmatprep.subr.mxu0 0.0
        %6475 = vmatpush2.xpose.msra.mxu0 0.0
        %6476 = vmatprep.subr.mxu0 0.0
        %6477 = vmatpush2.xpose.msra.mxu0 0.0
        %6478 = vmatprep.subr.mxu0 0.0
        %6479 = vmatpush2.xpose.msra.mxu0 0.0
        %6480 = vmatprep.subr.mxu0 0.0
        %6481 = vmatpush2.xpose.msra.mxu0 0.0
        %6482 = vmatprep.subr.mxu0 0.0
        %6483 = vmatpush2.xpose.msra.mxu0 0.0
        %6484 = vmatprep.subr.mxu0 0.0
        %6485 = vmatpush2.xpose.msra.mxu0 0.0
        %6486 = vmatprep.subr.mxu0 0.0
        %6487 = vmatpush2.xpose.msra.mxu0 0.0
        %6488 = vmatprep.subr.mxu0 0.0
        %6489 = vmatpush2.xpose.msra.mxu0 0.0
        %6490 = vmatprep.subr.mxu0 0.0
        %6491 = vmatpush2.xpose.msra.mxu0 0.0
        %6492 = vmatprep.subr.mxu0 0.0
        %6493 = vmatpush2.xpose.msra.mxu0 0.0
        %6494 = vmatprep.subr.mxu0 0.0
        %6495 = vmatpush2.xpose.msra.mxu0 0.0
        %v6496 = vand.u32 %v4954, 4294901760
        %v6497 = vsub.f32 %v4954, %v6496
        %6498 = vmatprep.mubr.f32.mxu0 %v6497
        %v6499 = vand.u32 %v4953, 4294901760
        %v6500 = vsub.f32 %v4953, %v6499
        %6501 = vmatmul.mubr.f32.gmra.mxu0 %v6500
        %v6502 = vpop.f32.mrf.mxu0
        %v6503 = vadd.f32 %v6364, %v6502
        %v6504 = vpop.f32.mrf.mxu0
        %v6505 = vand.u32 %v4958, 4294901760
        %v6506 = vsub.f32 %v4958, %v6505
        %6507 = vmatprep.mubr.f32.mxu0 %v6506
        %v6508 = vand.u32 %v4957, 4294901760
        %v6509 = vsub.f32 %v4957, %v6508
        %6510 = vmatmul.mubr.f32.gmra.mxu0 %v6509
        %v6511 = vpop.f32.mrf.mxu0
        %v6512 = vadd.f32 %v6371, %v6511
        %v6513 = vpop.f32.mrf.mxu0
        %v6514 = vand.u32 %v4962, 4294901760
        %v6515 = vsub.f32 %v4962, %v6514
        %6516 = vmatprep.mubr.f32.mxu0 %v6515
        %v6517 = vand.u32 %v4961, 4294901760
        %v6518 = vsub.f32 %v4961, %v6517
        %6519 = vmatmul.mubr.f32.gmra.mxu0 %v6518
        %v6520 = vpop.f32.mrf.mxu0
        %v6521 = vadd.f32 %v6378, %v6520
        %v6522 = vpop.f32.mrf.mxu0
        %v6523 = vand.u32 %v4966, 4294901760
        %v6524 = vsub.f32 %v4966, %v6523
        %6525 = vmatprep.mubr.f32.mxu0 %v6524
        %v6526 = vand.u32 %v4965, 4294901760
        %v6527 = vsub.f32 %v4965, %v6526
        %6528 = vmatmul.mubr.f32.gmra.mxu0 %v6527
        %v6529 = vpop.f32.mrf.mxu0
        %v6530 = vadd.f32 %v6385, %v6529
        %v6531 = vpop.f32.mrf.mxu0
        %v6532 = vand.u32 %v4970, 4294901760
        %v6533 = vsub.f32 %v4970, %v6532
        %6534 = vmatprep.mubr.f32.mxu0 %v6533
        %v6535 = vand.u32 %v4969, 4294901760
        %v6536 = vsub.f32 %v4969, %v6535
        %6537 = vmatmul.mubr.f32.gmra.mxu0 %v6536
        %v6538 = vpop.f32.mrf.mxu0
        %v6539 = vadd.f32 %v6392, %v6538
        %v6540 = vpop.f32.mrf.mxu0
        %v6541 = vand.u32 %v4974, 4294901760
        %v6542 = vsub.f32 %v4974, %v6541
        %6543 = vmatprep.mubr.f32.mxu0 %v6542
        %v6544 = vand.u32 %v4973, 4294901760
        %v6545 = vsub.f32 %v4973, %v6544
        %6546 = vmatmul.mubr.f32.gmra.mxu0 %v6545
        %v6547 = vpop.f32.mrf.mxu0
        %v6548 = vadd.f32 %v6399, %v6547
        %v6549 = vpop.f32.mrf.mxu0
        %v6550 = vand.u32 %v4978, 4294901760
        %v6551 = vsub.f32 %v4978, %v6550
        %6552 = vmatprep.mubr.f32.mxu0 %v6551
        %v6553 = vand.u32 %v4977, 4294901760
        %v6554 = vsub.f32 %v4977, %v6553
        %6555 = vmatmul.mubr.f32.gmra.mxu0 %v6554
        %v6556 = vpop.f32.mrf.mxu0
        %v6557 = vadd.f32 %v6406, %v6556
        %v6558 = vpop.f32.mrf.mxu0
        %v6559 = vand.u32 %v4982, 4294901760
        %v6560 = vsub.f32 %v4982, %v6559
        %6561 = vmatprep.mubr.f32.mxu0 %v6560
        %v6562 = vand.u32 %v4981, 4294901760
        %v6563 = vsub.f32 %v4981, %v6562
        %6564 = vmatmul.mubr.f32.gmra.mxu0 %v6563
        %v6565 = vpop.f32.mrf.mxu0
        %v6566 = vadd.f32 %v6413, %v6565
        %v6567 = vpop.f32.mrf.mxu0
        %6568 = vdwg.mxu0
        %6569 = vmatprep.subr.mxu0 0.0
        %6570 = vmatpush1.xpose.msra.mxu0 0.0
        %6571 = vmatprep.subr.mxu0 0.0
        %6572 = vmatpush1.xpose.msra.mxu0 0.0
        %6573 = vmatprep.subr.mxu0 0.0
        %6574 = vmatpush1.xpose.msra.mxu0 0.0
        %6575 = vmatprep.subr.mxu0 0.0
        %6576 = vmatpush1.xpose.msra.mxu0 0.0
        %6577 = vmatprep.subr.mxu0 0.0
        %6578 = vmatpush1.xpose.msra.mxu0 0.0
        %6579 = vmatprep.subr.mxu0 0.0
        %6580 = vmatpush1.xpose.msra.mxu0 0.0
        %6581 = vmatprep.subr.mxu0 0.0
        %6582 = vmatpush1.xpose.msra.mxu0 0.0
        %6583 = vmatprep.subr.mxu0 0.0
        %6584 = vmatpush1.xpose.msra.mxu0 0.0
        %6585 = vmatprep.subr.mxu0 0.0
        %6586 = vmatpush1.xpose.msra.mxu0 0.0
        %6587 = vmatprep.subr.mxu0 0.0
        %6588 = vmatpush1.xpose.msra.mxu0 0.0
        %6589 = vmatprep.subr.mxu0 0.0
        %6590 = vmatpush1.xpose.msra.mxu0 0.0
        %6591 = vmatprep.subr.mxu0 0.0
        %6592 = vmatpush1.xpose.msra.mxu0 0.0
        %v6593 = vand.u32 %v1917, 4294901760
        %6594 = vmatprep.subr.mxu0 %v6593
        %v6595 = vand.u32 %v1915, 4294901760
        %6596 = vmatpush1.xpose.msra.mxu0 %v6595
        %v6597 = vand.u32 %v1910, 4294901760
        %6598 = vmatprep.subr.mxu0 %v6597
        %v6599 = vand.u32 %v1908, 4294901760
        %6600 = vmatpush1.xpose.msra.mxu0 %v6599
        %v6601 = vand.u32 %v1903, 4294901760
        %6602 = vmatprep.subr.mxu0 %v6601
        %v6603 = vand.u32 %v1901, 4294901760
        %6604 = vmatpush1.xpose.msra.mxu0 %v6603
        %v6605 = vand.u32 %v1896, 4294901760
        %6606 = vmatprep.subr.mxu0 %v6605
        %v6607 = vand.u32 %v1894, 4294901760
        %6608 = vmatpush1.xpose.msra.mxu0 %v6607
        %6609 = vmatprep.subr.mxu0 0.0
        %6610 = vmatpush2.xpose.msra.mxu0 0.0
        %6611 = vmatprep.subr.mxu0 0.0
        %6612 = vmatpush2.xpose.msra.mxu0 0.0
        %6613 = vmatprep.subr.mxu0 0.0
        %6614 = vmatpush2.xpose.msra.mxu0 0.0
        %6615 = vmatprep.subr.mxu0 0.0
        %6616 = vmatpush2.xpose.msra.mxu0 0.0
        %6617 = vmatprep.subr.mxu0 0.0
        %6618 = vmatpush2.xpose.msra.mxu0 0.0
        %6619 = vmatprep.subr.mxu0 0.0
        %6620 = vmatpush2.xpose.msra.mxu0 0.0
        %6621 = vmatprep.subr.mxu0 0.0
        %6622 = vmatpush2.xpose.msra.mxu0 0.0
        %6623 = vmatprep.subr.mxu0 0.0
        %6624 = vmatpush2.xpose.msra.mxu0 0.0
        %6625 = vmatprep.subr.mxu0 0.0
        %6626 = vmatpush2.xpose.msra.mxu0 0.0
        %6627 = vmatprep.subr.mxu0 0.0
        %6628 = vmatpush2.xpose.msra.mxu0 0.0
        %6629 = vmatprep.subr.mxu0 0.0
        %6630 = vmatpush2.xpose.msra.mxu0 0.0
        %6631 = vmatprep.subr.mxu0 0.0
        %6632 = vmatpush2.xpose.msra.mxu0 0.0
        %6633 = vmatprep.subr.mxu0 0.0
        %6634 = vmatpush2.xpose.msra.mxu0 0.0
        %6635 = vmatprep.subr.mxu0 0.0
        %6636 = vmatpush2.xpose.msra.mxu0 0.0
        %6637 = vmatprep.subr.mxu0 0.0
        %6638 = vmatpush2.xpose.msra.mxu0 0.0
        %6639 = vmatprep.subr.mxu0 0.0
        %6640 = vmatpush2.xpose.msra.mxu0 0.0
        %v6641 = vand.u32 %v4954, 4294901760
        %v6642 = vsub.f32 %v4954, %v6641
        %v6643 = vand.u32 %v6642, 4294901760
        %6644 = vmatprep.mubr.f32.mxu0 %v6643
        %v6645 = vand.u32 %v4953, 4294901760
        %v6646 = vsub.f32 %v4953, %v6645
        %v6647 = vand.u32 %v6646, 4294901760
        %6648 = vmatmul.mubr.f32.gmra.mxu0 %v6647
        %v6649 = vpop.f32.mrf.mxu0
        %v6650 = vadd.f32 %v6503, %v6649
        %v6651 = vpop.f32.mrf.mxu0
        %v6652 = vand.u32 %v4958, 4294901760
        %v6653 = vsub.f32 %v4958, %v6652
        %v6654 = vand.u32 %v6653, 4294901760
        %6655 = vmatprep.mubr.f32.mxu0 %v6654
        %v6656 = vand.u32 %v4957, 4294901760
        %v6657 = vsub.f32 %v4957, %v6656
        %v6658 = vand.u32 %v6657, 4294901760
        %6659 = vmatmul.mubr.f32.gmra.mxu0 %v6658
        %v6660 = vpop.f32.mrf.mxu0
        %v6661 = vadd.f32 %v6512, %v6660
        %v6662 = vpop.f32.mrf.mxu0
        %v6663 = vand.u32 %v4962, 4294901760
        %v6664 = vsub.f32 %v4962, %v6663
        %v6665 = vand.u32 %v6664, 4294901760
        %6666 = vmatprep.mubr.f32.mxu0 %v6665
        %v6667 = vand.u32 %v4961, 4294901760
        %v6668 = vsub.f32 %v4961, %v6667
        %v6669 = vand.u32 %v6668, 4294901760
        %6670 = vmatmul.mubr.f32.gmra.mxu0 %v6669
        %v6671 = vpop.f32.mrf.mxu0
        %v6672 = vadd.f32 %v6521, %v6671
        %v6673 = vpop.f32.mrf.mxu0
        %v6674 = vand.u32 %v4966, 4294901760
        %v6675 = vsub.f32 %v4966, %v6674
        %v6676 = vand.u32 %v6675, 4294901760
        %6677 = vmatprep.mubr.f32.mxu0 %v6676
        %v6678 = vand.u32 %v4965, 4294901760
        %v6679 = vsub.f32 %v4965, %v6678
        %v6680 = vand.u32 %v6679, 4294901760
        %6681 = vmatmul.mubr.f32.gmra.mxu0 %v6680
        %v6682 = vpop.f32.mrf.mxu0
        %v6683 = vadd.f32 %v6530, %v6682
        %v6684 = vpop.f32.mrf.mxu0
        %v6685 = vand.u32 %v4970, 4294901760
        %v6686 = vsub.f32 %v4970, %v6685
        %v6687 = vand.u32 %v6686, 4294901760
        %6688 = vmatprep.mubr.f32.mxu0 %v6687
        %v6689 = vand.u32 %v4969, 4294901760
        %v6690 = vsub.f32 %v4969, %v6689
        %v6691 = vand.u32 %v6690, 4294901760
        %6692 = vmatmul.mubr.f32.gmra.mxu0 %v6691
        %v6693 = vpop.f32.mrf.mxu0
        %v6694 = vadd.f32 %v6539, %v6693
        %v6695 = vpop.f32.mrf.mxu0
        %v6696 = vand.u32 %v4974, 4294901760
        %v6697 = vsub.f32 %v4974, %v6696
        %v6698 = vand.u32 %v6697, 4294901760
        %6699 = vmatprep.mubr.f32.mxu0 %v6698
        %v6700 = vand.u32 %v4973, 4294901760
        %v6701 = vsub.f32 %v4973, %v6700
        %v6702 = vand.u32 %v6701, 4294901760
        %6703 = vmatmul.mubr.f32.gmra.mxu0 %v6702
        %v6704 = vpop.f32.mrf.mxu0
        %v6705 = vadd.f32 %v6548, %v6704
        %v6706 = vpop.f32.mrf.mxu0
        %v6707 = vand.u32 %v4978, 4294901760
        %v6708 = vsub.f32 %v4978, %v6707
        %v6709 = vand.u32 %v6708, 4294901760
        %6710 = vmatprep.mubr.f32.mxu0 %v6709
        %v6711 = vand.u32 %v4977, 4294901760
        %v6712 = vsub.f32 %v4977, %v6711
        %v6713 = vand.u32 %v6712, 4294901760
        %6714 = vmatmul.mubr.f32.gmra.mxu0 %v6713
        %v6715 = vpop.f32.mrf.mxu0
        %v6716 = vadd.f32 %v6557, %v6715
        %v6717 = vpop.f32.mrf.mxu0
        %v6718 = vand.u32 %v4982, 4294901760
        %v6719 = vsub.f32 %v4982, %v6718
        %v6720 = vand.u32 %v6719, 4294901760
        %6721 = vmatprep.mubr.f32.mxu0 %v6720
        %v6722 = vand.u32 %v4981, 4294901760
        %v6723 = vsub.f32 %v4981, %v6722
        %v6724 = vand.u32 %v6723, 4294901760
        %6725 = vmatmul.mubr.f32.gmra.mxu0 %v6724
        %v6726 = vpop.f32.mrf.mxu0
        %v6727 = vadd.f32 %v6566, %v6726
        %v6728 = vpop.f32.mrf.mxu0
        %6729 = vdwg.mxu0
        %6730 = vmatprep.subr.mxu0 0.0
        %6731 = vmatpush1.xpose.msra.mxu0 0.0
        %6732 = vmatprep.subr.mxu0 0.0
        %6733 = vmatpush1.xpose.msra.mxu0 0.0
        %6734 = vmatprep.subr.mxu0 0.0
        %6735 = vmatpush1.xpose.msra.mxu0 0.0
        %6736 = vmatprep.subr.mxu0 0.0
        %6737 = vmatpush1.xpose.msra.mxu0 0.0
        %6738 = vmatprep.subr.mxu0 0.0
        %6739 = vmatpush1.xpose.msra.mxu0 0.0
        %6740 = vmatprep.subr.mxu0 0.0
        %6741 = vmatpush1.xpose.msra.mxu0 0.0
        %6742 = vmatprep.subr.mxu0 0.0
        %6743 = vmatpush1.xpose.msra.mxu0 0.0
        %6744 = vmatprep.subr.mxu0 0.0
        %6745 = vmatpush1.xpose.msra.mxu0 0.0
        %6746 = vmatprep.subr.mxu0 0.0
        %6747 = vmatpush1.xpose.msra.mxu0 0.0
        %6748 = vmatprep.subr.mxu0 0.0
        %6749 = vmatpush1.xpose.msra.mxu0 0.0
        %6750 = vmatprep.subr.mxu0 0.0
        %6751 = vmatpush1.xpose.msra.mxu0 0.0
        %6752 = vmatprep.subr.mxu0 0.0
        %6753 = vmatpush1.xpose.msra.mxu0 0.0
        %v6754 = vand.u32 %v1917, 4294901760
        %v6755 = vsub.f32 %v1917, %v6754
        %v6756 = vand.u32 %v6755, 4294901760
        %6757 = vmatprep.subr.mxu0 %v6756
        %v6758 = vand.u32 %v1915, 4294901760
        %v6759 = vsub.f32 %v1915, %v6758
        %v6760 = vand.u32 %v6759, 4294901760
        %6761 = vmatpush1.xpose.msra.mxu0 %v6760
        %v6762 = vand.u32 %v1910, 4294901760
        %v6763 = vsub.f32 %v1910, %v6762
        %v6764 = vand.u32 %v6763, 4294901760
        %6765 = vmatprep.subr.mxu0 %v6764
        %v6766 = vand.u32 %v1908, 4294901760
        %v6767 = vsub.f32 %v1908, %v6766
        %v6768 = vand.u32 %v6767, 4294901760
        %6769 = vmatpush1.xpose.msra.mxu0 %v6768
        %v6770 = vand.u32 %v1903, 4294901760
        %v6771 = vsub.f32 %v1903, %v6770
        %v6772 = vand.u32 %v6771, 4294901760
        %6773 = vmatprep.subr.mxu0 %v6772
        %v6774 = vand.u32 %v1901, 4294901760
        %v6775 = vsub.f32 %v1901, %v6774
        %v6776 = vand.u32 %v6775, 4294901760
        %6777 = vmatpush1.xpose.msra.mxu0 %v6776
        %v6778 = vand.u32 %v1896, 4294901760
        %v6779 = vsub.f32 %v1896, %v6778
        %v6780 = vand.u32 %v6779, 4294901760
        %6781 = vmatprep.subr.mxu0 %v6780
        %v6782 = vand.u32 %v1894, 4294901760
        %v6783 = vsub.f32 %v1894, %v6782
        %v6784 = vand.u32 %v6783, 4294901760
        %6785 = vmatpush1.xpose.msra.mxu0 %v6784
        %6786 = vmatprep.subr.mxu0 0.0
        %6787 = vmatpush2.xpose.msra.mxu0 0.0
        %6788 = vmatprep.subr.mxu0 0.0
        %6789 = vmatpush2.xpose.msra.mxu0 0.0
        %6790 = vmatprep.subr.mxu0 0.0
        %6791 = vmatpush2.xpose.msra.mxu0 0.0
        %6792 = vmatprep.subr.mxu0 0.0
        %6793 = vmatpush2.xpose.msra.mxu0 0.0
        %6794 = vmatprep.subr.mxu0 0.0
        %6795 = vmatpush2.xpose.msra.mxu0 0.0
        %6796 = vmatprep.subr.mxu0 0.0
        %6797 = vmatpush2.xpose.msra.mxu0 0.0
        %6798 = vmatprep.subr.mxu0 0.0
        %6799 = vmatpush2.xpose.msra.mxu0 0.0
        %6800 = vmatprep.subr.mxu0 0.0
        %6801 = vmatpush2.xpose.msra.mxu0 0.0
        %6802 = vmatprep.subr.mxu0 0.0
        %6803 = vmatpush2.xpose.msra.mxu0 0.0
        %6804 = vmatprep.subr.mxu0 0.0
        %6805 = vmatpush2.xpose.msra.mxu0 0.0
        %6806 = vmatprep.subr.mxu0 0.0
        %6807 = vmatpush2.xpose.msra.mxu0 0.0
        %6808 = vmatprep.subr.mxu0 0.0
        %6809 = vmatpush2.xpose.msra.mxu0 0.0
        %6810 = vmatprep.subr.mxu0 0.0
        %6811 = vmatpush2.xpose.msra.mxu0 0.0
        %6812 = vmatprep.subr.mxu0 0.0
        %6813 = vmatpush2.xpose.msra.mxu0 0.0
        %6814 = vmatprep.subr.mxu0 0.0
        %6815 = vmatpush2.xpose.msra.mxu0 0.0
        %6816 = vmatprep.subr.mxu0 0.0
        %6817 = vmatpush2.xpose.msra.mxu0 0.0
        %v6818 = vand.u32 %v4954, 4294901760
        %6819 = vmatprep.mubr.f32.mxu0 %v6818
        %v6820 = vand.u32 %v4953, 4294901760
        %6821 = vmatmul.mubr.f32.gmra.mxu0 %v6820
        %v6822 = vpop.f32.mrf.mxu0
        %v6823 = vadd.f32 %v6650, %v6822
        %v6824 = vpop.f32.mrf.mxu0
        %v6825 = vand.u32 %v4958, 4294901760
        %6826 = vmatprep.mubr.f32.mxu0 %v6825
        %v6827 = vand.u32 %v4957, 4294901760
        %6828 = vmatmul.mubr.f32.gmra.mxu0 %v6827
        %v6829 = vpop.f32.mrf.mxu0
        %v6830 = vadd.f32 %v6661, %v6829
        %v6831 = vpop.f32.mrf.mxu0
        %v6832 = vand.u32 %v4962, 4294901760
        %6833 = vmatprep.mubr.f32.mxu0 %v6832
        %v6834 = vand.u32 %v4961, 4294901760
        %6835 = vmatmul.mubr.f32.gmra.mxu0 %v6834
        %v6836 = vpop.f32.mrf.mxu0
        %v6837 = vadd.f32 %v6672, %v6836
        %v6838 = vpop.f32.mrf.mxu0
        %v6839 = vand.u32 %v4966, 4294901760
        %6840 = vmatprep.mubr.f32.mxu0 %v6839
        %v6841 = vand.u32 %v4965, 4294901760
        %6842 = vmatmul.mubr.f32.gmra.mxu0 %v6841
        %v6843 = vpop.f32.mrf.mxu0
        %v6844 = vadd.f32 %v6683, %v6843
        %v6845 = vpop.f32.mrf.mxu0
        %v6846 = vand.u32 %v4970, 4294901760
        %6847 = vmatprep.mubr.f32.mxu0 %v6846
        %v6848 = vand.u32 %v4969, 4294901760
        %6849 = vmatmul.mubr.f32.gmra.mxu0 %v6848
        %v6850 = vpop.f32.mrf.mxu0
        %v6851 = vadd.f32 %v6694, %v6850
        %v6852 = vpop.f32.mrf.mxu0
        %v6853 = vand.u32 %v4974, 4294901760
        %6854 = vmatprep.mubr.f32.mxu0 %v6853
        %v6855 = vand.u32 %v4973, 4294901760
        %6856 = vmatmul.mubr.f32.gmra.mxu0 %v6855
        %v6857 = vpop.f32.mrf.mxu0
        %v6858 = vadd.f32 %v6705, %v6857
        %v6859 = vpop.f32.mrf.mxu0
        %v6860 = vand.u32 %v4978, 4294901760
        %6861 = vmatprep.mubr.f32.mxu0 %v6860
        %v6862 = vand.u32 %v4977, 4294901760
        %6863 = vmatmul.mubr.f32.gmra.mxu0 %v6862
        %v6864 = vpop.f32.mrf.mxu0
        %v6865 = vadd.f32 %v6716, %v6864
        %v6866 = vpop.f32.mrf.mxu0
        %v6867 = vand.u32 %v4982, 4294901760
        %6868 = vmatprep.mubr.f32.mxu0 %v6867
        %v6869 = vand.u32 %v4981, 4294901760
        %6870 = vmatmul.mubr.f32.gmra.mxu0 %v6869
        %v6871 = vpop.f32.mrf.mxu0
        %v6872 = vadd.f32 %v6727, %v6871
        %v6873 = vpop.f32.mrf.mxu0
        %6874 = vdwg.mxu0
        %6875 = vmatprep.subr.mxu0 0.0
        %6876 = vmatpush1.xpose.msra.mxu0 0.0
        %6877 = vmatprep.subr.mxu0 0.0
        %6878 = vmatpush1.xpose.msra.mxu0 0.0
        %6879 = vmatprep.subr.mxu0 0.0
        %6880 = vmatpush1.xpose.msra.mxu0 0.0
        %6881 = vmatprep.subr.mxu0 0.0
        %6882 = vmatpush1.xpose.msra.mxu0 0.0
        %6883 = vmatprep.subr.mxu0 0.0
        %6884 = vmatpush1.xpose.msra.mxu0 0.0
        %6885 = vmatprep.subr.mxu0 0.0
        %6886 = vmatpush1.xpose.msra.mxu0 0.0
        %6887 = vmatprep.subr.mxu0 0.0
        %6888 = vmatpush1.xpose.msra.mxu0 0.0
        %6889 = vmatprep.subr.mxu0 0.0
        %6890 = vmatpush1.xpose.msra.mxu0 0.0
        %6891 = vmatprep.subr.mxu0 0.0
        %6892 = vmatpush1.xpose.msra.mxu0 0.0
        %6893 = vmatprep.subr.mxu0 0.0
        %6894 = vmatpush1.xpose.msra.mxu0 0.0
        %6895 = vmatprep.subr.mxu0 0.0
        %6896 = vmatpush1.xpose.msra.mxu0 0.0
        %6897 = vmatprep.subr.mxu0 0.0
        %6898 = vmatpush1.xpose.msra.mxu0 0.0
        %v6899 = vand.u32 %v1917, 4294901760
        %6900 = vmatprep.subr.mxu0 %v6899
        %v6901 = vand.u32 %v1915, 4294901760
        %6902 = vmatpush1.xpose.msra.mxu0 %v6901
        %v6903 = vand.u32 %v1910, 4294901760
        %6904 = vmatprep.subr.mxu0 %v6903
        %v6905 = vand.u32 %v1908, 4294901760
        %6906 = vmatpush1.xpose.msra.mxu0 %v6905
        %v6907 = vand.u32 %v1903, 4294901760
        %6908 = vmatprep.subr.mxu0 %v6907
        %v6909 = vand.u32 %v1901, 4294901760
        %6910 = vmatpush1.xpose.msra.mxu0 %v6909
        %v6911 = vand.u32 %v1896, 4294901760
        %6912 = vmatprep.subr.mxu0 %v6911
        %v6913 = vand.u32 %v1894, 4294901760
        %6914 = vmatpush1.xpose.msra.mxu0 %v6913
        %6915 = vmatprep.subr.mxu0 0.0
        %6916 = vmatpush2.xpose.msra.mxu0 0.0
        %6917 = vmatprep.subr.mxu0 0.0
        %6918 = vmatpush2.xpose.msra.mxu0 0.0
        %6919 = vmatprep.subr.mxu0 0.0
        %6920 = vmatpush2.xpose.msra.mxu0 0.0
        %6921 = vmatprep.subr.mxu0 0.0
        %6922 = vmatpush2.xpose.msra.mxu0 0.0
        %6923 = vmatprep.subr.mxu0 0.0
        %6924 = vmatpush2.xpose.msra.mxu0 0.0
        %6925 = vmatprep.subr.mxu0 0.0
        %6926 = vmatpush2.xpose.msra.mxu0 0.0
        %6927 = vmatprep.subr.mxu0 0.0
        %6928 = vmatpush2.xpose.msra.mxu0 0.0
        %6929 = vmatprep.subr.mxu0 0.0
        %6930 = vmatpush2.xpose.msra.mxu0 0.0
        %6931 = vmatprep.subr.mxu0 0.0
        %6932 = vmatpush2.xpose.msra.mxu0 0.0
        %6933 = vmatprep.subr.mxu0 0.0
        %6934 = vmatpush2.xpose.msra.mxu0 0.0
        %6935 = vmatprep.subr.mxu0 0.0
        %6936 = vmatpush2.xpose.msra.mxu0 0.0
        %6937 = vmatprep.subr.mxu0 0.0
        %6938 = vmatpush2.xpose.msra.mxu0 0.0
        %6939 = vmatprep.subr.mxu0 0.0
        %6940 = vmatpush2.xpose.msra.mxu0 0.0
        %6941 = vmatprep.subr.mxu0 0.0
        %6942 = vmatpush2.xpose.msra.mxu0 0.0
        %6943 = vmatprep.subr.mxu0 0.0
        %6944 = vmatpush2.xpose.msra.mxu0 0.0
        %6945 = vmatprep.subr.mxu0 0.0
        %6946 = vmatpush2.xpose.msra.mxu0 0.0
        %v6947 = vand.u32 %v4954, 4294901760
        %6948 = vmatprep.mubr.f32.mxu0 %v6947
        %v6949 = vand.u32 %v4953, 4294901760
        %6950 = vmatmul.mubr.f32.gmra.mxu0 %v6949
        %v6951 = vpop.f32.mrf.mxu0
        %v6952 = vadd.f32 %v6823, %v6951
        %v6953 = vpop.f32.mrf.mxu0
        %v6954 = vand.u32 %v4958, 4294901760
        %6955 = vmatprep.mubr.f32.mxu0 %v6954
        %v6956 = vand.u32 %v4957, 4294901760
        %6957 = vmatmul.mubr.f32.gmra.mxu0 %v6956
        %v6958 = vpop.f32.mrf.mxu0
        %v6959 = vadd.f32 %v6830, %v6958
        %v6960 = vpop.f32.mrf.mxu0
        %v6961 = vand.u32 %v4962, 4294901760
        %6962 = vmatprep.mubr.f32.mxu0 %v6961
        %v6963 = vand.u32 %v4961, 4294901760
        %6964 = vmatmul.mubr.f32.gmra.mxu0 %v6963
        %v6965 = vpop.f32.mrf.mxu0
        %v6966 = vadd.f32 %v6837, %v6965
        %v6967 = vpop.f32.mrf.mxu0
        %v6968 = vand.u32 %v4966, 4294901760
        %6969 = vmatprep.mubr.f32.mxu0 %v6968
        %v6970 = vand.u32 %v4965, 4294901760
        %6971 = vmatmul.mubr.f32.gmra.mxu0 %v6970
        %v6972 = vpop.f32.mrf.mxu0
        %v6973 = vadd.f32 %v6844, %v6972
        %v6974 = vpop.f32.mrf.mxu0
        %v6975 = vand.u32 %v4970, 4294901760
        %6976 = vmatprep.mubr.f32.mxu0 %v6975
        %v6977 = vand.u32 %v4969, 4294901760
        %6978 = vmatmul.mubr.f32.gmra.mxu0 %v6977
        %v6979 = vpop.f32.mrf.mxu0
        %v6980 = vadd.f32 %v6851, %v6979
        %v6981 = vpop.f32.mrf.mxu0
        %v6982 = vand.u32 %v4974, 4294901760
        %6983 = vmatprep.mubr.f32.mxu0 %v6982
        %v6984 = vand.u32 %v4973, 4294901760
        %6985 = vmatmul.mubr.f32.gmra.mxu0 %v6984
        %v6986 = vpop.f32.mrf.mxu0
        %v6987 = vadd.f32 %v6858, %v6986
        %v6988 = vpop.f32.mrf.mxu0
        %v6989 = vand.u32 %v4978, 4294901760
        %6990 = vmatprep.mubr.f32.mxu0 %v6989
        %v6991 = vand.u32 %v4977, 4294901760
        %6992 = vmatmul.mubr.f32.gmra.mxu0 %v6991
        %v6993 = vpop.f32.mrf.mxu0
        %v6994 = vadd.f32 %v6865, %v6993
        %v6995 = vpop.f32.mrf.mxu0
        %v6996 = vand.u32 %v4982, 4294901760
        %6997 = vmatprep.mubr.f32.mxu0 %v6996
        %v6998 = vand.u32 %v4981, 4294901760
        %6999 = vmatmul.mubr.f32.gmra.mxu0 %v6998
        %v7000 = vpop.f32.mrf.mxu0
        %v7001 = vadd.f32 %v6872, %v7000
        %v7002 = vpop.f32.mrf.mxu0
        %7003 = vdwg.mxu0
        %v7004 = vadd.f32 %v5112, %v6952
        %v7005 = vadd.f32 %v5113, %v6959
        %v7006 = vadd.f32 %v5114, %v6966
        %v7007 = vadd.f32 %v5115, %v6973
        %v7008 = vadd.f32 %v5116, %v6980
        %v7009 = vadd.f32 %v5117, %v6987
        %v7010 = vadd.f32 %v5118, %v6994
        %v7011 = vadd.f32 %v5119, %v7001
        %7012 = vst.msk [vmem:[#allocation2] sm:$0xff] %vm3547, %v7004
        %7013 = vst.msk [vmem:[#allocation2 + $0x8] sm:$0xff] %vm3547, %v7005
        %7014 = vst.msk [vmem:[#allocation2 + $0x10] sm:$0xff] %vm3547, %v7006
        %7015 = vst.msk [vmem:[#allocation2 + $0x18] sm:$0xff] %vm3547, %v7007
        %7016 = vst.msk [vmem:[#allocation2 + $0x20] sm:$0xff] %vm3547, %v7008
        %7017 = vst.msk [vmem:[#allocation2 + $0x28] sm:$0xff] %vm3547, %v7009
        %7018 = vst.msk [vmem:[#allocation2 + $0x30] sm:$0xff] %vm3547, %v7010
        %7019 = vst.msk [vmem:[#allocation2 + $0x38] sm:$0xff] %vm3547, %v7011
        %p7020 = scmp.eq.s32.totalorder %s32, 3
        // Predicated region
        $region65: #{tpu_custom_call.1} parent=51 // pred_check
          %p7021 = pneg %p7020
        $region66: #{tpu_custom_call.1} parent=51 // pred_check_branch
          %7023 = sbr.rel (%p7021) target = $region68
        $region67: #{tpu_custom_call.1} parent=51 // pred_region
          %v7024 = vld [vmem:[%s11] sm:$0xff]
          %v7025 = vld [vmem:[%s11 + $0x8] sm:$0xff]
          %v7026 = vld [vmem:[%s11 + $0x10] sm:$0xff]
          %v7027 = vld [vmem:[%s11 + $0x18] sm:$0xff]
          %v7028 = vld [vmem:[%s11 + $0x20] sm:$0xff]
          %v7029 = vld [vmem:[%s11 + $0x28] sm:$0xff]
          %v7030 = vld [vmem:[%s11 + $0x30] sm:$0xff]
          %v7031 = vld [vmem:[%s11 + $0x38] sm:$0xff]
          %vm7032 = vcmp.gt.f32.partialorder %v7024, 0.0
          %vm7033 = vcmp.gt.f32.partialorder %v7025, 0.0
          %vm7034 = vcmp.gt.f32.partialorder %v7026, 0.0
          %vm7035 = vcmp.gt.f32.partialorder %v7027, 0.0
          %vm7036 = vcmp.gt.f32.partialorder %v7028, 0.0
          %vm7037 = vcmp.gt.f32.partialorder %v7029, 0.0
          %vm7038 = vcmp.gt.f32.partialorder %v7030, 0.0
          %vm7039 = vcmp.gt.f32.partialorder %v7031, 0.0
          %v7040 = vrcp.pop %v7024
          %v7041 = vmul.f32 1.0, %v7040
          %v7042 = vrcp.pop %v7025
          %v7043 = vmul.f32 1.0, %v7042
          %v7044 = vrcp.pop %v7026
          %v7045 = vmul.f32 1.0, %v7044
          %v7046 = vrcp.pop %v7027
          %v7047 = vmul.f32 1.0, %v7046
          %v7048 = vrcp.pop %v7028
          %v7049 = vmul.f32 1.0, %v7048
          %v7050 = vrcp.pop %v7029
          %v7051 = vmul.f32 1.0, %v7050
          %v7052 = vrcp.pop %v7030
          %v7053 = vmul.f32 1.0, %v7052
          %v7054 = vrcp.pop %v7031
          %v7055 = vmul.f32 1.0, %v7054
          %v7056 = vsel %vm7032, %v7041, 0.0
          %v7057 = vsel %vm7033, %v7043, 0.0
          %v7058 = vsel %vm7034, %v7045, 0.0
          %v7059 = vsel %vm7035, %v7047, 0.0
          %v7060 = vsel %vm7036, %v7049, 0.0
          %v7061 = vsel %vm7037, %v7051, 0.0
          %v7062 = vsel %vm7038, %v7053, 0.0
          %v7063 = vsel %vm7039, %v7055, 0.0
          %v7064 = vld [vmem:[#allocation2] sm:$0xff]
          %v7065 = vld [vmem:[#allocation2 + $0x8] sm:$0xff]
          %v7066 = vld [vmem:[#allocation2 + $0x10] sm:$0xff]
          %v7067 = vld [vmem:[#allocation2 + $0x18] sm:$0xff]
          %v7068 = vld [vmem:[#allocation2 + $0x20] sm:$0xff]
          %v7069 = vld [vmem:[#allocation2 + $0x28] sm:$0xff]
          %v7070 = vld [vmem:[#allocation2 + $0x30] sm:$0xff]
          %v7071 = vld [vmem:[#allocation2 + $0x38] sm:$0xff]
          %7073 = vset.pattern.permute.xlu0 0
          %7074 = vperm.xlu0 %7073, %v7056
          %v7075 = vpop.permute.xlu0 %7074
          %7078 = vset.pattern.permute.xlu0 0
          %7079 = vperm.xlu0 %7078, %v7057
          %v7080 = vpop.permute.xlu0 %7079
          %7083 = vset.pattern.permute.xlu0 0
          %7084 = vperm.xlu0 %7083, %v7058
          %v7085 = vpop.permute.xlu0 %7084
          %7088 = vset.pattern.permute.xlu0 0
          %7089 = vperm.xlu0 %7088, %v7059
          %v7090 = vpop.permute.xlu0 %7089
          %7093 = vset.pattern.permute.xlu0 0
          %7094 = vperm.xlu0 %7093, %v7060
          %v7095 = vpop.permute.xlu0 %7094
          %7098 = vset.pattern.permute.xlu0 0
          %7099 = vperm.xlu0 %7098, %v7061
          %v7100 = vpop.permute.xlu0 %7099
          %7103 = vset.pattern.permute.xlu0 0
          %7104 = vperm.xlu0 %7103, %v7062
          %v7105 = vpop.permute.xlu0 %7104
          %7108 = vset.pattern.permute.xlu0 0
          %7109 = vperm.xlu0 %7108, %v7063
          %v7110 = vpop.permute.xlu0 %7109
          %v7112 = vmul.f32 %v7064, %v7075
          %v7113 = vmul.f32 %v7065, %v7080
          %v7114 = vmul.f32 %v7066, %v7085
          %v7115 = vmul.f32 %v7067, %v7090
          %v7116 = vmul.f32 %v7068, %v7095
          %v7117 = vmul.f32 %v7069, %v7100
          %v7118 = vmul.f32 %v7070, %v7105
          %v7119 = vmul.f32 %v7071, %v7110
          %v7120 = vld [vmem:[#allocation7] sm:$0xff]
          %v7121 = vld [vmem:[#allocation7 + $0x8] sm:$0xff]
          %v7122 = vld [vmem:[#allocation7 + $0x10] sm:$0xff]
          %v7123 = vld [vmem:[#allocation7 + $0x18] sm:$0xff]
          %v7124 = vld [vmem:[%s7] sm:$0x1]
          %v7126 = vlaneseq
          %v7127 = vshrl.u32 %v7126, 7
          %v7128 = vsub.s32 0, %v7127
          %v7129 = vrot.slane %v7124, %v7128
          %v7132 = vsel %vm3547, %v7112, 0
          %v7135 = vsel %vm3547, %v7113, 0
          %v7138 = vsel %vm3547, %v7114, 0
          %v7141 = vsel %vm3547, %v7115, 0
          %v7144 = vsel %vm3547, %v7116, 0
          %v7147 = vsel %vm3547, %v7117, 0
          %v7150 = vsel %vm3547, %v7118, 0
          %v7153 = vsel %vm3547, %v7119, 0
          %7155 = vmatprep.subr.mxu0 0.0
          %7156 = vmatpush1.msra.mxu0 0.0
          %7157 = vmatprep.subr.mxu0 0.0
          %7158 = vmatpush1.msra.mxu0 0.0
          %7159 = vmatprep.subr.mxu0 0.0
          %7160 = vmatpush1.msra.mxu0 0.0
          %7161 = vmatprep.subr.mxu0 0.0
          %7162 = vmatpush1.msra.mxu0 0.0
          %7163 = vmatprep.subr.mxu0 0.0
          %7164 = vmatpush1.msra.mxu0 0.0
          %7165 = vmatprep.subr.mxu0 0.0
          %7166 = vmatpush1.msra.mxu0 0.0
          %7167 = vmatprep.subr.mxu0 0.0
          %7168 = vmatpush1.msra.mxu0 0.0
          %7169 = vmatprep.subr.mxu0 0.0
          %7170 = vmatpush1.msra.mxu0 0.0
          %7171 = vmatprep.subr.mxu0 0.0
          %7172 = vmatpush1.msra.mxu0 0.0
          %7173 = vmatprep.subr.mxu0 0.0
          %7174 = vmatpush1.msra.mxu0 0.0
          %7175 = vmatprep.subr.mxu0 0.0
          %7176 = vmatpush1.msra.mxu0 0.0
          %7177 = vmatprep.subr.mxu0 0.0
          %7178 = vmatpush1.msra.mxu0 0.0
          %7179 = vmatprep.subr.mxu0 0.0
          %v7180 = vand.u32 %v7123, 4294901760
          %7181 = vmatpush1.msra.mxu0 %v7180
          %7182 = vmatprep.subr.mxu0 0.0
          %v7183 = vand.u32 %v7122, 4294901760
          %7184 = vmatpush1.msra.mxu0 %v7183
          %7185 = vmatprep.subr.mxu0 0.0
          %v7186 = vand.u32 %v7121, 4294901760
          %7187 = vmatpush1.msra.mxu0 %v7186
          %7188 = vmatprep.subr.mxu0 0.0
          %v7189 = vand.u32 %v7120, 4294901760
          %7190 = vmatpush1.msra.mxu0 %v7189
          %7191 = vmatprep.subr.mxu0 0.0
          %7192 = vmatpush2.msra.mxu0 0.0
          %7193 = vmatprep.subr.mxu0 0.0
          %7194 = vmatpush2.msra.mxu0 0.0
          %7195 = vmatprep.subr.mxu0 0.0
          %7196 = vmatpush2.msra.mxu0 0.0
          %7197 = vmatprep.subr.mxu0 0.0
          %7198 = vmatpush2.msra.mxu0 0.0
          %7199 = vmatprep.subr.mxu0 0.0
          %7200 = vmatpush2.msra.mxu0 0.0
          %7201 = vmatprep.subr.mxu0 0.0
          %7202 = vmatpush2.msra.mxu0 0.0
          %7203 = vmatprep.subr.mxu0 0.0
          %7204 = vmatpush2.msra.mxu0 0.0
          %7205 = vmatprep.subr.mxu0 0.0
          %7206 = vmatpush2.msra.mxu0 0.0
          %7207 = vmatprep.subr.mxu0 0.0
          %7208 = vmatpush2.msra.mxu0 0.0
          %7209 = vmatprep.subr.mxu0 0.0
          %7210 = vmatpush2.msra.mxu0 0.0
          %7211 = vmatprep.subr.mxu0 0.0
          %7212 = vmatpush2.msra.mxu0 0.0
          %7213 = vmatprep.subr.mxu0 0.0
          %7214 = vmatpush2.msra.mxu0 0.0
          %7215 = vmatprep.subr.mxu0 0.0
          %7216 = vmatpush2.msra.mxu0 0.0
          %7217 = vmatprep.subr.mxu0 0.0
          %7218 = vmatpush2.msra.mxu0 0.0
          %7219 = vmatprep.subr.mxu0 0.0
          %7220 = vmatpush2.msra.mxu0 0.0
          %7221 = vmatprep.subr.mxu0 0.0
          %7222 = vmatpush2.msra.mxu0 0.0
          %7223 = vmatprep.mubr.f32.mxu0 0.0
          %v7224 = vand.u32 %v7132, 4294901760
          %v7225 = vsub.f32 %v7132, %v7224
          %v7226 = vand.u32 %v7225, 4294901760
          %v7227 = vsub.f32 %v7225, %v7226
          %v7228 = vand.u32 %v7227, 4294901760
          %7229 = vmatmul.mubr.f32.gmra.mxu0 %v7228
          %v7230 = vpop.f32.mrf.mxu0
          %v7231 = vadd.f32 %v7129, %v7230
          %v7232 = vpop.f32.mrf.mxu0
          %7233 = vmatprep.mubr.f32.mxu0 0.0
          %v7234 = vand.u32 %v7135, 4294901760
          %v7235 = vsub.f32 %v7135, %v7234
          %v7236 = vand.u32 %v7235, 4294901760
          %v7237 = vsub.f32 %v7235, %v7236
          %v7238 = vand.u32 %v7237, 4294901760
          %7239 = vmatmul.mubr.f32.gmra.mxu0 %v7238
          %v7240 = vpop.f32.mrf.mxu0
          %v7241 = vadd.f32 %v7129, %v7240
          %v7242 = vpop.f32.mrf.mxu0
          %7243 = vmatprep.mubr.f32.mxu0 0.0
          %v7244 = vand.u32 %v7138, 4294901760
          %v7245 = vsub.f32 %v7138, %v7244
          %v7246 = vand.u32 %v7245, 4294901760
          %v7247 = vsub.f32 %v7245, %v7246
          %v7248 = vand.u32 %v7247, 4294901760
          %7249 = vmatmul.mubr.f32.gmra.mxu0 %v7248
          %v7250 = vpop.f32.mrf.mxu0
          %v7251 = vadd.f32 %v7129, %v7250
          %v7252 = vpop.f32.mrf.mxu0
          %7253 = vmatprep.mubr.f32.mxu0 0.0
          %v7254 = vand.u32 %v7141, 4294901760
          %v7255 = vsub.f32 %v7141, %v7254
          %v7256 = vand.u32 %v7255, 4294901760
          %v7257 = vsub.f32 %v7255, %v7256
          %v7258 = vand.u32 %v7257, 4294901760
          %7259 = vmatmul.mubr.f32.gmra.mxu0 %v7258
          %v7260 = vpop.f32.mrf.mxu0
          %v7261 = vadd.f32 %v7129, %v7260
          %v7262 = vpop.f32.mrf.mxu0
          %7263 = vmatprep.mubr.f32.mxu0 0.0
          %v7264 = vand.u32 %v7144, 4294901760
          %v7265 = vsub.f32 %v7144, %v7264
          %v7266 = vand.u32 %v7265, 4294901760
          %v7267 = vsub.f32 %v7265, %v7266
          %v7268 = vand.u32 %v7267, 4294901760
          %7269 = vmatmul.mubr.f32.gmra.mxu0 %v7268
          %v7270 = vpop.f32.mrf.mxu0
          %v7271 = vadd.f32 %v7129, %v7270
          %v7272 = vpop.f32.mrf.mxu0
          %7273 = vmatprep.mubr.f32.mxu0 0.0
          %v7274 = vand.u32 %v7147, 4294901760
          %v7275 = vsub.f32 %v7147, %v7274
          %v7276 = vand.u32 %v7275, 4294901760
          %v7277 = vsub.f32 %v7275, %v7276
          %v7278 = vand.u32 %v7277, 4294901760
          %7279 = vmatmul.mubr.f32.gmra.mxu0 %v7278
          %v7280 = vpop.f32.mrf.mxu0
          %v7281 = vadd.f32 %v7129, %v7280
          %v7282 = vpop.f32.mrf.mxu0
          %7283 = vmatprep.mubr.f32.mxu0 0.0
          %v7284 = vand.u32 %v7150, 4294901760
          %v7285 = vsub.f32 %v7150, %v7284
          %v7286 = vand.u32 %v7285, 4294901760
          %v7287 = vsub.f32 %v7285, %v7286
          %v7288 = vand.u32 %v7287, 4294901760
          %7289 = vmatmul.mubr.f32.gmra.mxu0 %v7288
          %v7290 = vpop.f32.mrf.mxu0
          %v7291 = vadd.f32 %v7129, %v7290
          %v7292 = vpop.f32.mrf.mxu0
          %7293 = vmatprep.mubr.f32.mxu0 0.0
          %v7294 = vand.u32 %v7153, 4294901760
          %v7295 = vsub.f32 %v7153, %v7294
          %v7296 = vand.u32 %v7295, 4294901760
          %v7297 = vsub.f32 %v7295, %v7296
          %v7298 = vand.u32 %v7297, 4294901760
          %7299 = vmatmul.mubr.f32.gmra.mxu0 %v7298
          %v7300 = vpop.f32.mrf.mxu0
          %v7301 = vadd.f32 %v7129, %v7300
          %v7302 = vpop.f32.mrf.mxu0
          %7303 = vdwg.mxu0
          %7304 = vmatprep.subr.mxu0 0.0
          %7305 = vmatpush1.msra.mxu0 0.0
          %7306 = vmatprep.subr.mxu0 0.0
          %7307 = vmatpush1.msra.mxu0 0.0
          %7308 = vmatprep.subr.mxu0 0.0
          %7309 = vmatpush1.msra.mxu0 0.0
          %7310 = vmatprep.subr.mxu0 0.0
          %7311 = vmatpush1.msra.mxu0 0.0
          %7312 = vmatprep.subr.mxu0 0.0
          %7313 = vmatpush1.msra.mxu0 0.0
          %7314 = vmatprep.subr.mxu0 0.0
          %7315 = vmatpush1.msra.mxu0 0.0
          %7316 = vmatprep.subr.mxu0 0.0
          %7317 = vmatpush1.msra.mxu0 0.0
          %7318 = vmatprep.subr.mxu0 0.0
          %7319 = vmatpush1.msra.mxu0 0.0
          %7320 = vmatprep.subr.mxu0 0.0
          %7321 = vmatpush1.msra.mxu0 0.0
          %7322 = vmatprep.subr.mxu0 0.0
          %7323 = vmatpush1.msra.mxu0 0.0
          %7324 = vmatprep.subr.mxu0 0.0
          %7325 = vmatpush1.msra.mxu0 0.0
          %7326 = vmatprep.subr.mxu0 0.0
          %7327 = vmatpush1.msra.mxu0 0.0
          %7328 = vmatprep.subr.mxu0 0.0
          %v7329 = vand.u32 %v7123, 4294901760
          %v7330 = vsub.f32 %v7123, %v7329
          %v7331 = vand.u32 %v7330, 4294901760
          %v7332 = vsub.f32 %v7330, %v7331
          %v7333 = vand.u32 %v7332, 4294901760
          %7334 = vmatpush1.msra.mxu0 %v7333
          %7335 = vmatprep.subr.mxu0 0.0
          %v7336 = vand.u32 %v7122, 4294901760
          %v7337 = vsub.f32 %v7122, %v7336
          %v7338 = vand.u32 %v7337, 4294901760
          %v7339 = vsub.f32 %v7337, %v7338
          %v7340 = vand.u32 %v7339, 4294901760
          %7341 = vmatpush1.msra.mxu0 %v7340
          %7342 = vmatprep.subr.mxu0 0.0
          %v7343 = vand.u32 %v7121, 4294901760
          %v7344 = vsub.f32 %v7121, %v7343
          %v7345 = vand.u32 %v7344, 4294901760
          %v7346 = vsub.f32 %v7344, %v7345
          %v7347 = vand.u32 %v7346, 4294901760
          %7348 = vmatpush1.msra.mxu0 %v7347
          %7349 = vmatprep.subr.mxu0 0.0
          %v7350 = vand.u32 %v7120, 4294901760
          %v7351 = vsub.f32 %v7120, %v7350
          %v7352 = vand.u32 %v7351, 4294901760
          %v7353 = vsub.f32 %v7351, %v7352
          %v7354 = vand.u32 %v7353, 4294901760
          %7355 = vmatpush1.msra.mxu0 %v7354
          %7356 = vmatprep.subr.mxu0 0.0
          %7357 = vmatpush2.msra.mxu0 0.0
          %7358 = vmatprep.subr.mxu0 0.0
          %7359 = vmatpush2.msra.mxu0 0.0
          %7360 = vmatprep.subr.mxu0 0.0
          %7361 = vmatpush2.msra.mxu0 0.0
          %7362 = vmatprep.subr.mxu0 0.0
          %7363 = vmatpush2.msra.mxu0 0.0
          %7364 = vmatprep.subr.mxu0 0.0
          %7365 = vmatpush2.msra.mxu0 0.0
          %7366 = vmatprep.subr.mxu0 0.0
          %7367 = vmatpush2.msra.mxu0 0.0
          %7368 = vmatprep.subr.mxu0 0.0
          %7369 = vmatpush2.msra.mxu0 0.0
          %7370 = vmatprep.subr.mxu0 0.0
          %7371 = vmatpush2.msra.mxu0 0.0
          %7372 = vmatprep.subr.mxu0 0.0
          %7373 = vmatpush2.msra.mxu0 0.0
          %7374 = vmatprep.subr.mxu0 0.0
          %7375 = vmatpush2.msra.mxu0 0.0
          %7376 = vmatprep.subr.mxu0 0.0
          %7377 = vmatpush2.msra.mxu0 0.0
          %7378 = vmatprep.subr.mxu0 0.0
          %7379 = vmatpush2.msra.mxu0 0.0
          %7380 = vmatprep.subr.mxu0 0.0
          %7381 = vmatpush2.msra.mxu0 0.0
          %7382 = vmatprep.subr.mxu0 0.0
          %7383 = vmatpush2.msra.mxu0 0.0
          %7384 = vmatprep.subr.mxu0 0.0
          %7385 = vmatpush2.msra.mxu0 0.0
          %7386 = vmatprep.subr.mxu0 0.0
          %7387 = vmatpush2.msra.mxu0 0.0
          %7388 = vmatprep.mubr.f32.mxu0 0.0
          %v7389 = vand.u32 %v7132, 4294901760
          %7390 = vmatmul.mubr.f32.gmra.mxu0 %v7389
          %v7391 = vpop.f32.mrf.mxu0
          %v7392 = vadd.f32 %v7231, %v7391
          %v7393 = vpop.f32.mrf.mxu0
          %7394 = vmatprep.mubr.f32.mxu0 0.0
          %v7395 = vand.u32 %v7135, 4294901760
          %7396 = vmatmul.mubr.f32.gmra.mxu0 %v7395
          %v7397 = vpop.f32.mrf.mxu0
          %v7398 = vadd.f32 %v7241, %v7397
          %v7399 = vpop.f32.mrf.mxu0
          %7400 = vmatprep.mubr.f32.mxu0 0.0
          %v7401 = vand.u32 %v7138, 4294901760
          %7402 = vmatmul.mubr.f32.gmra.mxu0 %v7401
          %v7403 = vpop.f32.mrf.mxu0
          %v7404 = vadd.f32 %v7251, %v7403
          %v7405 = vpop.f32.mrf.mxu0
          %7406 = vmatprep.mubr.f32.mxu0 0.0
          %v7407 = vand.u32 %v7141, 4294901760
          %7408 = vmatmul.mubr.f32.gmra.mxu0 %v7407
          %v7409 = vpop.f32.mrf.mxu0
          %v7410 = vadd.f32 %v7261, %v7409
          %v7411 = vpop.f32.mrf.mxu0
          %7412 = vmatprep.mubr.f32.mxu0 0.0
          %v7413 = vand.u32 %v7144, 4294901760
          %7414 = vmatmul.mubr.f32.gmra.mxu0 %v7413
          %v7415 = vpop.f32.mrf.mxu0
          %v7416 = vadd.f32 %v7271, %v7415
          %v7417 = vpop.f32.mrf.mxu0
          %7418 = vmatprep.mubr.f32.mxu0 0.0
          %v7419 = vand.u32 %v7147, 4294901760
          %7420 = vmatmul.mubr.f32.gmra.mxu0 %v7419
          %v7421 = vpop.f32.mrf.mxu0
          %v7422 = vadd.f32 %v7281, %v7421
          %v7423 = vpop.f32.mrf.mxu0
          %7424 = vmatprep.mubr.f32.mxu0 0.0
          %v7425 = vand.u32 %v7150, 4294901760
          %7426 = vmatmul.mubr.f32.gmra.mxu0 %v7425
          %v7427 = vpop.f32.mrf.mxu0
          %v7428 = vadd.f32 %v7291, %v7427
          %v7429 = vpop.f32.mrf.mxu0
          %7430 = vmatprep.mubr.f32.mxu0 0.0
          %v7431 = vand.u32 %v7153, 4294901760
          %7432 = vmatmul.mubr.f32.gmra.mxu0 %v7431
          %v7433 = vpop.f32.mrf.mxu0
          %v7434 = vadd.f32 %v7301, %v7433
          %v7435 = vpop.f32.mrf.mxu0
          %7436 = vdwg.mxu0
          %7437 = vmatprep.subr.mxu0 0.0
          %7438 = vmatpush1.msra.mxu0 0.0
          %7439 = vmatprep.subr.mxu0 0.0
          %7440 = vmatpush1.msra.mxu0 0.0
          %7441 = vmatprep.subr.mxu0 0.0
          %7442 = vmatpush1.msra.mxu0 0.0
          %7443 = vmatprep.subr.mxu0 0.0
          %7444 = vmatpush1.msra.mxu0 0.0
          %7445 = vmatprep.subr.mxu0 0.0
          %7446 = vmatpush1.msra.mxu0 0.0
          %7447 = vmatprep.subr.mxu0 0.0
          %7448 = vmatpush1.msra.mxu0 0.0
          %7449 = vmatprep.subr.mxu0 0.0
          %7450 = vmatpush1.msra.mxu0 0.0
          %7451 = vmatprep.subr.mxu0 0.0
          %7452 = vmatpush1.msra.mxu0 0.0
          %7453 = vmatprep.subr.mxu0 0.0
          %7454 = vmatpush1.msra.mxu0 0.0
          %7455 = vmatprep.subr.mxu0 0.0
          %7456 = vmatpush1.msra.mxu0 0.0
          %7457 = vmatprep.subr.mxu0 0.0
          %7458 = vmatpush1.msra.mxu0 0.0
          %7459 = vmatprep.subr.mxu0 0.0
          %7460 = vmatpush1.msra.mxu0 0.0
          %7461 = vmatprep.subr.mxu0 0.0
          %v7462 = vand.u32 %v7123, 4294901760
          %v7463 = vsub.f32 %v7123, %v7462
          %7464 = vmatpush1.msra.mxu0 %v7463
          %7465 = vmatprep.subr.mxu0 0.0
          %v7466 = vand.u32 %v7122, 4294901760
          %v7467 = vsub.f32 %v7122, %v7466
          %7468 = vmatpush1.msra.mxu0 %v7467
          %7469 = vmatprep.subr.mxu0 0.0
          %v7470 = vand.u32 %v7121, 4294901760
          %v7471 = vsub.f32 %v7121, %v7470
          %7472 = vmatpush1.msra.mxu0 %v7471
          %7473 = vmatprep.subr.mxu0 0.0
          %v7474 = vand.u32 %v7120, 4294901760
          %v7475 = vsub.f32 %v7120, %v7474
          %7476 = vmatpush1.msra.mxu0 %v7475
          %7477 = vmatprep.subr.mxu0 0.0
          %7478 = vmatpush2.msra.mxu0 0.0
          %7479 = vmatprep.subr.mxu0 0.0
          %7480 = vmatpush2.msra.mxu0 0.0
          %7481 = vmatprep.subr.mxu0 0.0
          %7482 = vmatpush2.msra.mxu0 0.0
          %7483 = vmatprep.subr.mxu0 0.0
          %7484 = vmatpush2.msra.mxu0 0.0
          %7485 = vmatprep.subr.mxu0 0.0
          %7486 = vmatpush2.msra.mxu0 0.0
          %7487 = vmatprep.subr.mxu0 0.0
          %7488 = vmatpush2.msra.mxu0 0.0
          %7489 = vmatprep.subr.mxu0 0.0
          %7490 = vmatpush2.msra.mxu0 0.0
          %7491 = vmatprep.subr.mxu0 0.0
          %7492 = vmatpush2.msra.mxu0 0.0
          %7493 = vmatprep.subr.mxu0 0.0
          %7494 = vmatpush2.msra.mxu0 0.0
          %7495 = vmatprep.subr.mxu0 0.0
          %7496 = vmatpush2.msra.mxu0 0.0
          %7497 = vmatprep.subr.mxu0 0.0
          %7498 = vmatpush2.msra.mxu0 0.0
          %7499 = vmatprep.subr.mxu0 0.0
          %7500 = vmatpush2.msra.mxu0 0.0
          %7501 = vmatprep.subr.mxu0 0.0
          %7502 = vmatpush2.msra.mxu0 0.0
          %7503 = vmatprep.subr.mxu0 0.0
          %7504 = vmatpush2.msra.mxu0 0.0
          %7505 = vmatprep.subr.mxu0 0.0
          %7506 = vmatpush2.msra.mxu0 0.0
          %7507 = vmatprep.subr.mxu0 0.0
          %7508 = vmatpush2.msra.mxu0 0.0
          %7509 = vmatprep.mubr.f32.mxu0 0.0
          %v7510 = vand.u32 %v7132, 4294901760
          %v7511 = vsub.f32 %v7132, %v7510
          %7512 = vmatmul.mubr.f32.gmra.mxu0 %v7511
          %v7513 = vpop.f32.mrf.mxu0
          %v7514 = vadd.f32 %v7392, %v7513
          %v7515 = vpop.f32.mrf.mxu0
          %7516 = vmatprep.mubr.f32.mxu0 0.0
          %v7517 = vand.u32 %v7135, 4294901760
          %v7518 = vsub.f32 %v7135, %v7517
          %7519 = vmatmul.mubr.f32.gmra.mxu0 %v7518
          %v7520 = vpop.f32.mrf.mxu0
          %v7521 = vadd.f32 %v7398, %v7520
          %v7522 = vpop.f32.mrf.mxu0
          %7523 = vmatprep.mubr.f32.mxu0 0.0
          %v7524 = vand.u32 %v7138, 4294901760
          %v7525 = vsub.f32 %v7138, %v7524
          %7526 = vmatmul.mubr.f32.gmra.mxu0 %v7525
          %v7527 = vpop.f32.mrf.mxu0
          %v7528 = vadd.f32 %v7404, %v7527
          %v7529 = vpop.f32.mrf.mxu0
          %7530 = vmatprep.mubr.f32.mxu0 0.0
          %v7531 = vand.u32 %v7141, 4294901760
          %v7532 = vsub.f32 %v7141, %v7531
          %7533 = vmatmul.mubr.f32.gmra.mxu0 %v7532
          %v7534 = vpop.f32.mrf.mxu0
          %v7535 = vadd.f32 %v7410, %v7534
          %v7536 = vpop.f32.mrf.mxu0
          %7537 = vmatprep.mubr.f32.mxu0 0.0
          %v7538 = vand.u32 %v7144, 4294901760
          %v7539 = vsub.f32 %v7144, %v7538
          %7540 = vmatmul.mubr.f32.gmra.mxu0 %v7539
          %v7541 = vpop.f32.mrf.mxu0
          %v7542 = vadd.f32 %v7416, %v7541
          %v7543 = vpop.f32.mrf.mxu0
          %7544 = vmatprep.mubr.f32.mxu0 0.0
          %v7545 = vand.u32 %v7147, 4294901760
          %v7546 = vsub.f32 %v7147, %v7545
          %7547 = vmatmul.mubr.f32.gmra.mxu0 %v7546
          %v7548 = vpop.f32.mrf.mxu0
          %v7549 = vadd.f32 %v7422, %v7548
          %v7550 = vpop.f32.mrf.mxu0
          %7551 = vmatprep.mubr.f32.mxu0 0.0
          %v7552 = vand.u32 %v7150, 4294901760
          %v7553 = vsub.f32 %v7150, %v7552
          %7554 = vmatmul.mubr.f32.gmra.mxu0 %v7553
          %v7555 = vpop.f32.mrf.mxu0
          %v7556 = vadd.f32 %v7428, %v7555
          %v7557 = vpop.f32.mrf.mxu0
          %7558 = vmatprep.mubr.f32.mxu0 0.0
          %v7559 = vand.u32 %v7153, 4294901760
          %v7560 = vsub.f32 %v7153, %v7559
          %7561 = vmatmul.mubr.f32.gmra.mxu0 %v7560
          %v7562 = vpop.f32.mrf.mxu0
          %v7563 = vadd.f32 %v7434, %v7562
          %v7564 = vpop.f32.mrf.mxu0
          %7565 = vdwg.mxu0
          %7566 = vmatprep.subr.mxu0 0.0
          %7567 = vmatpush1.msra.mxu0 0.0
          %7568 = vmatprep.subr.mxu0 0.0
          %7569 = vmatpush1.msra.mxu0 0.0
          %7570 = vmatprep.subr.mxu0 0.0
          %7571 = vmatpush1.msra.mxu0 0.0
          %7572 = vmatprep.subr.mxu0 0.0
          %7573 = vmatpush1.msra.mxu0 0.0
          %7574 = vmatprep.subr.mxu0 0.0
          %7575 = vmatpush1.msra.mxu0 0.0
          %7576 = vmatprep.subr.mxu0 0.0
          %7577 = vmatpush1.msra.mxu0 0.0
          %7578 = vmatprep.subr.mxu0 0.0
          %7579 = vmatpush1.msra.mxu0 0.0
          %7580 = vmatprep.subr.mxu0 0.0
          %7581 = vmatpush1.msra.mxu0 0.0
          %7582 = vmatprep.subr.mxu0 0.0
          %7583 = vmatpush1.msra.mxu0 0.0
          %7584 = vmatprep.subr.mxu0 0.0
          %7585 = vmatpush1.msra.mxu0 0.0
          %7586 = vmatprep.subr.mxu0 0.0
          %7587 = vmatpush1.msra.mxu0 0.0
          %7588 = vmatprep.subr.mxu0 0.0
          %7589 = vmatpush1.msra.mxu0 0.0
          %7590 = vmatprep.subr.mxu0 0.0
          %v7591 = vand.u32 %v7123, 4294901760
          %7592 = vmatpush1.msra.mxu0 %v7591
          %7593 = vmatprep.subr.mxu0 0.0
          %v7594 = vand.u32 %v7122, 4294901760
          %7595 = vmatpush1.msra.mxu0 %v7594
          %7596 = vmatprep.subr.mxu0 0.0
          %v7597 = vand.u32 %v7121, 4294901760
          %7598 = vmatpush1.msra.mxu0 %v7597
          %7599 = vmatprep.subr.mxu0 0.0
          %v7600 = vand.u32 %v7120, 4294901760
          %7601 = vmatpush1.msra.mxu0 %v7600
          %7602 = vmatprep.subr.mxu0 0.0
          %7603 = vmatpush2.msra.mxu0 0.0
          %7604 = vmatprep.subr.mxu0 0.0
          %7605 = vmatpush2.msra.mxu0 0.0
          %7606 = vmatprep.subr.mxu0 0.0
          %7607 = vmatpush2.msra.mxu0 0.0
          %7608 = vmatprep.subr.mxu0 0.0
          %7609 = vmatpush2.msra.mxu0 0.0
          %7610 = vmatprep.subr.mxu0 0.0
          %7611 = vmatpush2.msra.mxu0 0.0
          %7612 = vmatprep.subr.mxu0 0.0
          %7613 = vmatpush2.msra.mxu0 0.0
          %7614 = vmatprep.subr.mxu0 0.0
          %7615 = vmatpush2.msra.mxu0 0.0
          %7616 = vmatprep.subr.mxu0 0.0
          %7617 = vmatpush2.msra.mxu0 0.0
          %7618 = vmatprep.subr.mxu0 0.0
          %7619 = vmatpush2.msra.mxu0 0.0
          %7620 = vmatprep.subr.mxu0 0.0
          %7621 = vmatpush2.msra.mxu0 0.0
          %7622 = vmatprep.subr.mxu0 0.0
          %7623 = vmatpush2.msra.mxu0 0.0
          %7624 = vmatprep.subr.mxu0 0.0
          %7625 = vmatpush2.msra.mxu0 0.0
          %7626 = vmatprep.subr.mxu0 0.0
          %7627 = vmatpush2.msra.mxu0 0.0
          %7628 = vmatprep.subr.mxu0 0.0
          %7629 = vmatpush2.msra.mxu0 0.0
          %7630 = vmatprep.subr.mxu0 0.0
          %7631 = vmatpush2.msra.mxu0 0.0
          %7632 = vmatprep.subr.mxu0 0.0
          %7633 = vmatpush2.msra.mxu0 0.0
          %7634 = vmatprep.mubr.f32.mxu0 0.0
          %v7635 = vand.u32 %v7132, 4294901760
          %v7636 = vsub.f32 %v7132, %v7635
          %v7637 = vand.u32 %v7636, 4294901760
          %7638 = vmatmul.mubr.f32.gmra.mxu0 %v7637
          %v7639 = vpop.f32.mrf.mxu0
          %v7640 = vadd.f32 %v7514, %v7639
          %v7641 = vpop.f32.mrf.mxu0
          %7642 = vmatprep.mubr.f32.mxu0 0.0
          %v7643 = vand.u32 %v7135, 4294901760
          %v7644 = vsub.f32 %v7135, %v7643
          %v7645 = vand.u32 %v7644, 4294901760
          %7646 = vmatmul.mubr.f32.gmra.mxu0 %v7645
          %v7647 = vpop.f32.mrf.mxu0
          %v7648 = vadd.f32 %v7521, %v7647
          %v7649 = vpop.f32.mrf.mxu0
          %7650 = vmatprep.mubr.f32.mxu0 0.0
          %v7651 = vand.u32 %v7138, 4294901760
          %v7652 = vsub.f32 %v7138, %v7651
          %v7653 = vand.u32 %v7652, 4294901760
          %7654 = vmatmul.mubr.f32.gmra.mxu0 %v7653
          %v7655 = vpop.f32.mrf.mxu0
          %v7656 = vadd.f32 %v7528, %v7655
          %v7657 = vpop.f32.mrf.mxu0
          %7658 = vmatprep.mubr.f32.mxu0 0.0
          %v7659 = vand.u32 %v7141, 4294901760
          %v7660 = vsub.f32 %v7141, %v7659
          %v7661 = vand.u32 %v7660, 4294901760
          %7662 = vmatmul.mubr.f32.gmra.mxu0 %v7661
          %v7663 = vpop.f32.mrf.mxu0
          %v7664 = vadd.f32 %v7535, %v7663
          %v7665 = vpop.f32.mrf.mxu0
          %7666 = vmatprep.mubr.f32.mxu0 0.0
          %v7667 = vand.u32 %v7144, 4294901760
          %v7668 = vsub.f32 %v7144, %v7667
          %v7669 = vand.u32 %v7668, 4294901760
          %7670 = vmatmul.mubr.f32.gmra.mxu0 %v7669
          %v7671 = vpop.f32.mrf.mxu0
          %v7672 = vadd.f32 %v7542, %v7671
          %v7673 = vpop.f32.mrf.mxu0
          %7674 = vmatprep.mubr.f32.mxu0 0.0
          %v7675 = vand.u32 %v7147, 4294901760
          %v7676 = vsub.f32 %v7147, %v7675
          %v7677 = vand.u32 %v7676, 4294901760
          %7678 = vmatmul.mubr.f32.gmra.mxu0 %v7677
          %v7679 = vpop.f32.mrf.mxu0
          %v7680 = vadd.f32 %v7549, %v7679
          %v7681 = vpop.f32.mrf.mxu0
          %7682 = vmatprep.mubr.f32.mxu0 0.0
          %v7683 = vand.u32 %v7150, 4294901760
          %v7684 = vsub.f32 %v7150, %v7683
          %v7685 = vand.u32 %v7684, 4294901760
          %7686 = vmatmul.mubr.f32.gmra.mxu0 %v7685
          %v7687 = vpop.f32.mrf.mxu0
          %v7688 = vadd.f32 %v7556, %v7687
          %v7689 = vpop.f32.mrf.mxu0
          %7690 = vmatprep.mubr.f32.mxu0 0.0
          %v7691 = vand.u32 %v7153, 4294901760
          %v7692 = vsub.f32 %v7153, %v7691
          %v7693 = vand.u32 %v7692, 4294901760
          %7694 = vmatmul.mubr.f32.gmra.mxu0 %v7693
          %v7695 = vpop.f32.mrf.mxu0
          %v7696 = vadd.f32 %v7563, %v7695
          %v7697 = vpop.f32.mrf.mxu0
          %7698 = vdwg.mxu0
          %7699 = vmatprep.subr.mxu0 0.0
          %7700 = vmatpush1.msra.mxu0 0.0
          %7701 = vmatprep.subr.mxu0 0.0
          %7702 = vmatpush1.msra.mxu0 0.0
          %7703 = vmatprep.subr.mxu0 0.0
          %7704 = vmatpush1.msra.mxu0 0.0
          %7705 = vmatprep.subr.mxu0 0.0
          %7706 = vmatpush1.msra.mxu0 0.0
          %7707 = vmatprep.subr.mxu0 0.0
          %7708 = vmatpush1.msra.mxu0 0.0
          %7709 = vmatprep.subr.mxu0 0.0
          %7710 = vmatpush1.msra.mxu0 0.0
          %7711 = vmatprep.subr.mxu0 0.0
          %7712 = vmatpush1.msra.mxu0 0.0
          %7713 = vmatprep.subr.mxu0 0.0
          %7714 = vmatpush1.msra.mxu0 0.0
          %7715 = vmatprep.subr.mxu0 0.0
          %7716 = vmatpush1.msra.mxu0 0.0
          %7717 = vmatprep.subr.mxu0 0.0
          %7718 = vmatpush1.msra.mxu0 0.0
          %7719 = vmatprep.subr.mxu0 0.0
          %7720 = vmatpush1.msra.mxu0 0.0
          %7721 = vmatprep.subr.mxu0 0.0
          %7722 = vmatpush1.msra.mxu0 0.0
          %7723 = vmatprep.subr.mxu0 0.0
          %v7724 = vand.u32 %v7123, 4294901760
          %v7725 = vsub.f32 %v7123, %v7724
          %v7726 = vand.u32 %v7725, 4294901760
          %7727 = vmatpush1.msra.mxu0 %v7726
          %7728 = vmatprep.subr.mxu0 0.0
          %v7729 = vand.u32 %v7122, 4294901760
          %v7730 = vsub.f32 %v7122, %v7729
          %v7731 = vand.u32 %v7730, 4294901760
          %7732 = vmatpush1.msra.mxu0 %v7731
          %7733 = vmatprep.subr.mxu0 0.0
          %v7734 = vand.u32 %v7121, 4294901760
          %v7735 = vsub.f32 %v7121, %v7734
          %v7736 = vand.u32 %v7735, 4294901760
          %7737 = vmatpush1.msra.mxu0 %v7736
          %7738 = vmatprep.subr.mxu0 0.0
          %v7739 = vand.u32 %v7120, 4294901760
          %v7740 = vsub.f32 %v7120, %v7739
          %v7741 = vand.u32 %v7740, 4294901760
          %7742 = vmatpush1.msra.mxu0 %v7741
          %7743 = vmatprep.subr.mxu0 0.0
          %7744 = vmatpush2.msra.mxu0 0.0
          %7745 = vmatprep.subr.mxu0 0.0
          %7746 = vmatpush2.msra.mxu0 0.0
          %7747 = vmatprep.subr.mxu0 0.0
          %7748 = vmatpush2.msra.mxu0 0.0
          %7749 = vmatprep.subr.mxu0 0.0
          %7750 = vmatpush2.msra.mxu0 0.0
          %7751 = vmatprep.subr.mxu0 0.0
          %7752 = vmatpush2.msra.mxu0 0.0
          %7753 = vmatprep.subr.mxu0 0.0
          %7754 = vmatpush2.msra.mxu0 0.0
          %7755 = vmatprep.subr.mxu0 0.0
          %7756 = vmatpush2.msra.mxu0 0.0
          %7757 = vmatprep.subr.mxu0 0.0
          %7758 = vmatpush2.msra.mxu0 0.0
          %7759 = vmatprep.subr.mxu0 0.0
          %7760 = vmatpush2.msra.mxu0 0.0
          %7761 = vmatprep.subr.mxu0 0.0
          %7762 = vmatpush2.msra.mxu0 0.0
          %7763 = vmatprep.subr.mxu0 0.0
          %7764 = vmatpush2.msra.mxu0 0.0
          %7765 = vmatprep.subr.mxu0 0.0
          %7766 = vmatpush2.msra.mxu0 0.0
          %7767 = vmatprep.subr.mxu0 0.0
          %7768 = vmatpush2.msra.mxu0 0.0
          %7769 = vmatprep.subr.mxu0 0.0
          %7770 = vmatpush2.msra.mxu0 0.0
          %7771 = vmatprep.subr.mxu0 0.0
          %7772 = vmatpush2.msra.mxu0 0.0
          %7773 = vmatprep.subr.mxu0 0.0
          %7774 = vmatpush2.msra.mxu0 0.0
          %7775 = vmatprep.mubr.f32.mxu0 0.0
          %v7776 = vand.u32 %v7132, 4294901760
          %7777 = vmatmul.mubr.f32.gmra.mxu0 %v7776
          %v7778 = vpop.f32.mrf.mxu0
          %v7779 = vadd.f32 %v7640, %v7778
          %v7780 = vpop.f32.mrf.mxu0
          %7781 = vmatprep.mubr.f32.mxu0 0.0
          %v7782 = vand.u32 %v7135, 4294901760
          %7783 = vmatmul.mubr.f32.gmra.mxu0 %v7782
          %v7784 = vpop.f32.mrf.mxu0
          %v7785 = vadd.f32 %v7648, %v7784
          %v7786 = vpop.f32.mrf.mxu0
          %7787 = vmatprep.mubr.f32.mxu0 0.0
          %v7788 = vand.u32 %v7138, 4294901760
          %7789 = vmatmul.mubr.f32.gmra.mxu0 %v7788
          %v7790 = vpop.f32.mrf.mxu0
          %v7791 = vadd.f32 %v7656, %v7790
          %v7792 = vpop.f32.mrf.mxu0
          %7793 = vmatprep.mubr.f32.mxu0 0.0
          %v7794 = vand.u32 %v7141, 4294901760
          %7795 = vmatmul.mubr.f32.gmra.mxu0 %v7794
          %v7796 = vpop.f32.mrf.mxu0
          %v7797 = vadd.f32 %v7664, %v7796
          %v7798 = vpop.f32.mrf.mxu0
          %7799 = vmatprep.mubr.f32.mxu0 0.0
          %v7800 = vand.u32 %v7144, 4294901760
          %7801 = vmatmul.mubr.f32.gmra.mxu0 %v7800
          %v7802 = vpop.f32.mrf.mxu0
          %v7803 = vadd.f32 %v7672, %v7802
          %v7804 = vpop.f32.mrf.mxu0
          %7805 = vmatprep.mubr.f32.mxu0 0.0
          %v7806 = vand.u32 %v7147, 4294901760
          %7807 = vmatmul.mubr.f32.gmra.mxu0 %v7806
          %v7808 = vpop.f32.mrf.mxu0
          %v7809 = vadd.f32 %v7680, %v7808
          %v7810 = vpop.f32.mrf.mxu0
          %7811 = vmatprep.mubr.f32.mxu0 0.0
          %v7812 = vand.u32 %v7150, 4294901760
          %7813 = vmatmul.mubr.f32.gmra.mxu0 %v7812
          %v7814 = vpop.f32.mrf.mxu0
          %v7815 = vadd.f32 %v7688, %v7814
          %v7816 = vpop.f32.mrf.mxu0
          %7817 = vmatprep.mubr.f32.mxu0 0.0
          %v7818 = vand.u32 %v7153, 4294901760
          %7819 = vmatmul.mubr.f32.gmra.mxu0 %v7818
          %v7820 = vpop.f32.mrf.mxu0
          %v7821 = vadd.f32 %v7696, %v7820
          %v7822 = vpop.f32.mrf.mxu0
          %7823 = vdwg.mxu0
          %7824 = vmatprep.subr.mxu0 0.0
          %7825 = vmatpush1.msra.mxu0 0.0
          %7826 = vmatprep.subr.mxu0 0.0
          %7827 = vmatpush1.msra.mxu0 0.0
          %7828 = vmatprep.subr.mxu0 0.0
          %7829 = vmatpush1.msra.mxu0 0.0
          %7830 = vmatprep.subr.mxu0 0.0
          %7831 = vmatpush1.msra.mxu0 0.0
          %7832 = vmatprep.subr.mxu0 0.0
          %7833 = vmatpush1.msra.mxu0 0.0
          %7834 = vmatprep.subr.mxu0 0.0
          %7835 = vmatpush1.msra.mxu0 0.0
          %7836 = vmatprep.subr.mxu0 0.0
          %7837 = vmatpush1.msra.mxu0 0.0
          %7838 = vmatprep.subr.mxu0 0.0
          %7839 = vmatpush1.msra.mxu0 0.0
          %7840 = vmatprep.subr.mxu0 0.0
          %7841 = vmatpush1.msra.mxu0 0.0
          %7842 = vmatprep.subr.mxu0 0.0
          %7843 = vmatpush1.msra.mxu0 0.0
          %7844 = vmatprep.subr.mxu0 0.0
          %7845 = vmatpush1.msra.mxu0 0.0
          %7846 = vmatprep.subr.mxu0 0.0
          %7847 = vmatpush1.msra.mxu0 0.0
          %7848 = vmatprep.subr.mxu0 0.0
          %v7849 = vand.u32 %v7123, 4294901760
          %7850 = vmatpush1.msra.mxu0 %v7849
          %7851 = vmatprep.subr.mxu0 0.0
          %v7852 = vand.u32 %v7122, 4294901760
          %7853 = vmatpush1.msra.mxu0 %v7852
          %7854 = vmatprep.subr.mxu0 0.0
          %v7855 = vand.u32 %v7121, 4294901760
          %7856 = vmatpush1.msra.mxu0 %v7855
          %7857 = vmatprep.subr.mxu0 0.0
          %v7858 = vand.u32 %v7120, 4294901760
          %7859 = vmatpush1.msra.mxu0 %v7858
          %7860 = vmatprep.subr.mxu0 0.0
          %7861 = vmatpush2.msra.mxu0 0.0
          %7862 = vmatprep.subr.mxu0 0.0
          %7863 = vmatpush2.msra.mxu0 0.0
          %7864 = vmatprep.subr.mxu0 0.0
          %7865 = vmatpush2.msra.mxu0 0.0
          %7866 = vmatprep.subr.mxu0 0.0
          %7867 = vmatpush2.msra.mxu0 0.0
          %7868 = vmatprep.subr.mxu0 0.0
          %7869 = vmatpush2.msra.mxu0 0.0
          %7870 = vmatprep.subr.mxu0 0.0
          %7871 = vmatpush2.msra.mxu0 0.0
          %7872 = vmatprep.subr.mxu0 0.0
          %7873 = vmatpush2.msra.mxu0 0.0
          %7874 = vmatprep.subr.mxu0 0.0
          %7875 = vmatpush2.msra.mxu0 0.0
          %7876 = vmatprep.subr.mxu0 0.0
          %7877 = vmatpush2.msra.mxu0 0.0
          %7878 = vmatprep.subr.mxu0 0.0
          %7879 = vmatpush2.msra.mxu0 0.0
          %7880 = vmatprep.subr.mxu0 0.0
          %7881 = vmatpush2.msra.mxu0 0.0
          %7882 = vmatprep.subr.mxu0 0.0
          %7883 = vmatpush2.msra.mxu0 0.0
          %7884 = vmatprep.subr.mxu0 0.0
          %7885 = vmatpush2.msra.mxu0 0.0
          %7886 = vmatprep.subr.mxu0 0.0
          %7887 = vmatpush2.msra.mxu0 0.0
          %7888 = vmatprep.subr.mxu0 0.0
          %7889 = vmatpush2.msra.mxu0 0.0
          %7890 = vmatprep.subr.mxu0 0.0
          %7891 = vmatpush2.msra.mxu0 0.0
          %7892 = vmatprep.mubr.f32.mxu0 0.0
          %v7893 = vand.u32 %v7132, 4294901760
          %7894 = vmatmul.mubr.f32.gmra.mxu0 %v7893
          %v7895 = vpop.f32.mrf.mxu0
          %v7896 = vadd.f32 %v7779, %v7895
          %v7897 = vpop.f32.mrf.mxu0
          %7898 = vmatprep.mubr.f32.mxu0 0.0
          %v7899 = vand.u32 %v7135, 4294901760
          %7900 = vmatmul.mubr.f32.gmra.mxu0 %v7899
          %v7901 = vpop.f32.mrf.mxu0
          %v7902 = vadd.f32 %v7785, %v7901
          %v7903 = vpop.f32.mrf.mxu0
          %7904 = vmatprep.mubr.f32.mxu0 0.0
          %v7905 = vand.u32 %v7138, 4294901760
          %7906 = vmatmul.mubr.f32.gmra.mxu0 %v7905
          %v7907 = vpop.f32.mrf.mxu0
          %v7908 = vadd.f32 %v7791, %v7907
          %v7909 = vpop.f32.mrf.mxu0
          %7910 = vmatprep.mubr.f32.mxu0 0.0
          %v7911 = vand.u32 %v7141, 4294901760
          %7912 = vmatmul.mubr.f32.gmra.mxu0 %v7911
          %v7913 = vpop.f32.mrf.mxu0
          %v7914 = vadd.f32 %v7797, %v7913
          %v7915 = vpop.f32.mrf.mxu0
          %7916 = vmatprep.mubr.f32.mxu0 0.0
          %v7917 = vand.u32 %v7144, 4294901760
          %7918 = vmatmul.mubr.f32.gmra.mxu0 %v7917
          %v7919 = vpop.f32.mrf.mxu0
          %v7920 = vadd.f32 %v7803, %v7919
          %v7921 = vpop.f32.mrf.mxu0
          %7922 = vmatprep.mubr.f32.mxu0 0.0
          %v7923 = vand.u32 %v7147, 4294901760
          %7924 = vmatmul.mubr.f32.gmra.mxu0 %v7923
          %v7925 = vpop.f32.mrf.mxu0
          %v7926 = vadd.f32 %v7809, %v7925
          %v7927 = vpop.f32.mrf.mxu0
          %7928 = vmatprep.mubr.f32.mxu0 0.0
          %v7929 = vand.u32 %v7150, 4294901760
          %7930 = vmatmul.mubr.f32.gmra.mxu0 %v7929
          %v7931 = vpop.f32.mrf.mxu0
          %v7932 = vadd.f32 %v7815, %v7931
          %v7933 = vpop.f32.mrf.mxu0
          %7934 = vmatprep.mubr.f32.mxu0 0.0
          %v7935 = vand.u32 %v7153, 4294901760
          %7936 = vmatmul.mubr.f32.gmra.mxu0 %v7935
          %v7937 = vpop.f32.mrf.mxu0
          %v7938 = vadd.f32 %v7821, %v7937
          %v7939 = vpop.f32.mrf.mxu0
          %7940 = vdwg.mxu0
          %7941 = vst.msk [vmem:[%s8] sm:$0xff] %vm3547, %v7896
          %7942 = vst.msk [vmem:[%s8 + $0x8] sm:$0xff] %vm3547, %v7902
          %7943 = vst.msk [vmem:[%s8 + $0x10] sm:$0xff] %vm3547, %v7908
          %7944 = vst.msk [vmem:[%s8 + $0x18] sm:$0xff] %vm3547, %v7914
          %7945 = vst.msk [vmem:[%s8 + $0x20] sm:$0xff] %vm3547, %v7920
          %7946 = vst.msk [vmem:[%s8 + $0x28] sm:$0xff] %vm3547, %v7926
          %7947 = vst.msk [vmem:[%s8 + $0x30] sm:$0xff] %vm3547, %v7932
          %7948 = vst.msk [vmem:[%s8 + $0x38] sm:$0xff] %vm3547, %v7938
        $region68: #{tpu_custom_call.1} parent=51 // pred_fallthru
          _
        %s7949 = sand.u32 %s239, 1
        %s7950 = scalar_lea.sflag [#allocation6], %s7949
        %s7951 = sand.u32 %s239, 1
        %s7952 = smul.addr %s7951, 4
        %s7953 = scalar_lea.vmem [#allocation9], %s7952
        // Predicated region
        $region69: #{tpu_custom_call.1} parent=51 // pred_check
          %p7954 = pneg %p223
        $region70: #{tpu_custom_call.1} parent=51 // pred_check_branch
          %7956 = sbr.rel (%p7954) target = $region72
        $region71: #{tpu_custom_call.1} parent=51 // pred_region
          _
        $region72: #{tpu_custom_call.1} parent=51 // pred_fallthru
          _
        // Predicated region
        $region73: #{tpu_custom_call.1} parent=51 // pred_check
          %p7957 = pneg %p249
        $region74: #{tpu_custom_call.1} parent=51 // pred_check_branch
          %7959 = sbr.rel (%p7957) target = $region76
        $region75: #{tpu_custom_call.1} parent=51 // pred_region
          %s7961 = ssub.s32 64, 64
          %7962 = vsyncadd %s7950, %s7961
          %s7963 = smul.addr %s32, 4
          %s7964 = smul.addr %s7963, 16
          %s7965 = scalar_lea.hbm %s9, %s7964
          %s7967 = sshll.u32 %s7953, 4
          %s7968 = int_to_ptr.vmem [resolvable:$true] %s7967
          %7970 = dma.vmem_to_hbm [thread:$0]  %s7968, 64, %s7965, %s7950
        $region76: #{tpu_custom_call.1} parent=51 // pred_fallthru
          _
        // Predicated region
        $region77: #{tpu_custom_call.1} parent=51 // pred_check
          %p7971 = pneg %p270
        $region78: #{tpu_custom_call.1} parent=51 // pred_check_branch
          %7973 = sbr.rel (%p7971) target = $region80
        $region79: #{tpu_custom_call.1} parent=51 // pred_region
          _
        $region80: #{tpu_custom_call.1} parent=51 // pred_fallthru
          _
        // Predicated region
        $region81: #{tpu_custom_call.1} parent=51 // pred_check
          %p7974 = pneg %p291
        $region82: #{tpu_custom_call.1} parent=51 // pred_check_branch
          %7976 = sbr.rel (%p7974) target = $region84
        $region83: #{tpu_custom_call.1} parent=51 // pred_region
          _
        $region84: #{tpu_custom_call.1} parent=51 // pred_fallthru
          _
        // Predicated region
        $region85: #{tpu_custom_call.1} parent=51 // pred_check
          %p7977 = pneg %p223
        $region86: #{tpu_custom_call.1} parent=51 // pred_check_branch
          %7979 = sbr.rel (%p7977) target = $region88
        $region87: #{tpu_custom_call.1} parent=51 // pred_region
          _
        $region88: #{tpu_custom_call.1} parent=51 // pred_fallthru
          _
        // Predicated region
        $region89: #{tpu_custom_call.1} parent=51 // pred_check
          %p7980 = pneg %p270
        $region90: #{tpu_custom_call.1} parent=51 // pred_check_branch
          %7982 = sbr.rel (%p7980) target = $region92
        $region91: #{tpu_custom_call.1} parent=51 // pred_region
          _
        $region92: #{tpu_custom_call.1} parent=51 // pred_fallthru
          _
        // Predicated region
        $region93: #{tpu_custom_call.1} parent=51 // pred_check
          %p7983 = pneg %p291
        $region94: #{tpu_custom_call.1} parent=51 // pred_check_branch
          %7985 = sbr.rel (%p7983) target = $region96
        $region95: #{tpu_custom_call.1} parent=51 // pred_region
          _
        $region96: #{tpu_custom_call.1} parent=51 // pred_fallthru
          _
      $region52: #{tpu_custom_call.1} parent=5 // pred_fallthru
        _
      %p7986 = scmp.le.s32.totalorder 2, %s27
      // Predicated region
      $region97: #{tpu_custom_call.1} parent=5 // pred_check
        %p7987 = pneg %p7986
      $region98: #{tpu_custom_call.1} parent=5 // pred_check_branch
        %7989 = sbr.rel (%p7987) target = $region100
      $region99: #{tpu_custom_call.1} parent=5 // pred_region
        %s7990 = ssub.s32 %s27, 2
        // Predicated region
        $region101: #{tpu_custom_call.1} parent=99 // pred_check
          %p7991 = pneg %p255
        $region102: #{tpu_custom_call.1} parent=99 // pred_check_branch
          %7993 = sbr.rel (%p7991) target = $region104
        $region103: #{tpu_custom_call.1} parent=99 // pred_region
          %s7994 = sand.u32 %s240, 1
          %s7995 = scalar_lea.sflag [#allocation6], %s7994
          %s7996 = sand.u32 %s240, 1
          %s7997 = smul.addr %s7996, 4
          %s7998 = scalar_lea.vmem [#allocation9], %s7997
          %7999 = dma.done %s7995, 64
        $region104: #{tpu_custom_call.1} parent=99 // pred_fallthru
          _
      $region100: #{tpu_custom_call.1} parent=5 // pred_fallthru
        _
    $region6: #{tpu_custom_call.1} parent=1 // loop_footer
      %s31 = sadd.s32 1, %s27
    $region7: #{tpu_custom_call.1} parent=1 // loop_footer_branch
      %26 = sbr.rel target = $region3
    $region8: #{tpu_custom_call.1} parent=1 // loop_exit
      _
    %8000 = vsyncpa [#allocation5], 1
    %s8001 = scalar_lea.sflag [#allocation5], 1
    %8002 = vsyncpa %s8001, 1
    %8003 = vsyncpa [#allocation8], 1
    %8004 = vsyncpa [#allocation6], 1
    %s8005 = scalar_lea.sflag [#allocation6], 1
    %8006 = vsyncpa %s8005, 1

</llo_original>
